<compile_context>
chip_gen: v7x
topology: tpu7x:2x2x1
jax: 0.10.0
libtpu: 0.0.40
codegen_flags: <defaults>
</compile_context>

<pallas_src>
import functools

import jax
import jax.numpy as jnp
from jax.experimental import pallas as pl
from jax.experimental.pallas import tpu as pltpu  # noqa: F401  (TPU backend module)

# ---- model hyper-parameters (module __init__ args) ----
ROBOT_STATE = 16          # robot_state_size (GRU hidden)
DIMS = 4                  # dimensions
NBFUNCS = 8               # basis_functions
CNFEAT = 5                # cnfeatures_size
SCALE = 0.012             # BasisModelTorch scale
XSHAPE = ROBOT_STATE + CNFEAT
KHID = DIMS * NBFUNCS
PHID = ROBOT_STATE // 2


# ----------------------------------------------------------------------------
# Pallas kernel: whole recurrent rollout in one invocation (no grid).
# ----------------------------------------------------------------------------
def _fbc_kernel(x_ref, h0_ref, cf_ref, dtc_ref,
                wg_ref, bg_ref,
                wk1c_ref, wk1h_ref, bk1_ref,
                wk2_ref, bk2_ref, wk3_ref, bk3_ref,
                wp1c_ref, wp1h_ref, bp1_ref,
                wp2_ref, bp2_ref,
                ct_ref, sel_ref,
                act_ref, ph_ref, wseq_ref, gru_ref,
                *, T, H, D, NB, scale):
    # ---- time-invariant terms, hoisted out of the recurrence ----
    # cn_features contribution to kin L1 / phase L1 (folds the biases too).
    cfk1 = jnp.dot(cf_ref[...], wk1c_ref[...],
                   preferred_element_type=jnp.float32) + bk1_ref[...]      # (B, KH)
    cfp1 = jnp.dot(cf_ref[...], wp1c_ref[...],
                   preferred_element_type=jnp.float32) + bp1_ref[...]      # (B, PH)
    dt = 1.0 / (500.0 * dtc_ref[...])                                      # (B, 1)
    ct = ct_ref[...]                                                       # (1, D*NB) tiled centers

    h = h0_ref[...]                                                        # (B, H) carried hidden

    for t in range(T):            # static, fully unrolled recurrence (T is small & static)
        x = x_ref[t]              # (B, D) current time-step input (resident VMEM block)

        # ---- fused nn.GRUCell: g = [x|h] @ blockdiag(Wih^T, Whh^T) + [b_ih|b_hh] ----
        xh = jnp.concatenate([x, h], axis=1)                               # (B, D+H)
        g = jnp.dot(xh, wg_ref[...],
                    preferred_element_type=jnp.float32) + bg_ref[...]      # (B, 6H)
        gi = g[:, :3 * H]                                                  # x @ Wih^T + b_ih
        gh = g[:, 3 * H:]                                                  # h @ Whh^T + b_hh
        rz = jax.nn.sigmoid(gi[:, :2 * H] + gh[:, :2 * H])                 # r and z in one EUP pass
        r = rz[:, :H]
        z = rz[:, H:]
        n = jnp.tanh(gi[:, 2 * H:] + r * gh[:, 2 * H:])
        h = (1.0 - z) * n + z * h                                          # new hidden state

        # ---- kin_model: Linear -> ReLU -> Linear -> ReLU -> Linear ----
        k1 = jnp.maximum(
            jnp.dot(h, wk1h_ref[...], preferred_element_type=jnp.float32) + cfk1, 0.0)
        k2 = jnp.maximum(
            jnp.dot(k1, wk2_ref[...], preferred_element_type=jnp.float32) + bk2_ref[...], 0.0)
        k3 = jnp.dot(k2, wk3_ref[...],
                     preferred_element_type=jnp.float32) + bk3_ref[...]    # (B, D*NB)

        # ---- phase_model: Linear -> ReLU -> Linear -> Hardsigmoid, then + dt ----
        p1 = jnp.maximum(
            jnp.dot(h, wp1h_ref[...], preferred_element_type=jnp.float32) + cfp1, 0.0)
        p2 = jnp.dot(p1, wp2_ref[...],
                     preferred_element_type=jnp.float32) + bp2_ref[...]    # (B, 1)
        phase = jnp.clip(p2 / 6.0 + 0.5, 0.0, 1.0) + dt                    # hardsigmoid + dt

        # ---- basis model: normalized Gaussian RBFs, evaluated lane-wide ----
        psi = jnp.exp(-((phase - ct) ** 2) / (2.0 * scale))                # (B, D*NB), col m -> psi_{m%NB}
        denom = jnp.sum(psi[:, :NB], axis=1, keepdims=True)                # (B, 1)
        # flat weights k3 are (d-major, j-minor): column m -> (d = m//NB, j = m%NB)
        action = jnp.dot(k3 * psi, sel_ref[...],
                         preferred_element_type=jnp.float32) / denom       # (B, D)

        act_ref[t] = action
        ph_ref[t] = phase
        wseq_ref[t] = k3            # flat; reshaped to (D, NB) in the wrapper

    gru_ref[...] = h                # final hidden state, written once


# ----------------------------------------------------------------------------
# Wrapper: parameter layout plumbing + pallas_call (single invocation, no grid)
# ----------------------------------------------------------------------------
@jax.jit
def feedback_controller_forward(params, seq_inputs, h0, cn_features, cn_delta_t):
    B, T, D = seq_inputs.shape
    H, NB, KH, PH = ROBOT_STATE, NBFUNCS, KHID, PHID

    x_tm = jnp.transpose(seq_inputs, (1, 0, 2)).astype(jnp.float32)        # (T, B, D) time-major

    # fused, block-diagonal GRU weight (in, out) and concatenated bias
    wg = jnp.zeros((D + H, 6 * H), jnp.float32)
    wg = wg.at[:D, :3 * H].set(params["w_ih"].T)
    wg = wg.at[D:, 3 * H:].set(params["w_hh"].T)
    bg = jnp.concatenate([params["b_ih"], params["b_hh"]]).reshape(1, 6 * H)

    # kin / phase L1 split into constant (cn_features) and recurrent (h) parts
    wk1c = params["wk1"][:, :CNFEAT].T                                      # (CNFEAT, KH)
    wk1h = params["wk1"][:, CNFEAT:].T                                      # (H, KH)
    bk1 = params["bk1"].reshape(1, KH)
    wk2, bk2 = params["wk2"].T, params["bk2"].reshape(1, KH)
    wk3, bk3 = params["wk3"].T, params["bk3"].reshape(1, KH)
    wp1c = params["wp1"][:, :CNFEAT].T                                      # (CNFEAT, PH)
    wp1h = params["wp1"][:, CNFEAT:].T                                      # (H, PH)
    bp1 = params["bp1"].reshape(1, PH)
    wp2, bp2 = params["wp2"].T, params["bp2"].reshape(1, 1)

    centers = jnp.linspace(0.0, 1.0, NB, dtype=jnp.float32)
    ct = jnp.tile(centers, D).reshape(1, KH)          # column m -> centers[m % NB]
    # selector S[m, d] = 1 if m // NB == d   (segment-sum matrix over the basis index)
    sel = (jnp.arange(KH)[:, None] // NB == jnp.arange(D)[None, :]).astype(jnp.float32)

    kernel = functools.partial(_fbc_kernel, T=T, H=H, D=D, NB=NB, scale=SCALE)

    out_shapes = (
        jax.ShapeDtypeStruct((T, B, D), jnp.float32),    # actions (time-major)
        jax.ShapeDtypeStruct((T, B, 1), jnp.float32),    # phase   (time-major)
        jax.ShapeDtypeStruct((T, B, KH), jnp.float32),   # flat basis weights (time-major)
        jax.ShapeDtypeStruct((B, H), jnp.float32),       # final GRU hidden state
    )

    # No grid: every input/output is one whole-array VMEM block (total footprint
    # is a few tens of KiB), so there is exactly one DMA in/out per array.
    actions_tm, phase_tm, weights_tm, gru_out = pl.pallas_call(
        kernel,
        out_shape=out_shapes,
    )(x_tm, h0, cn_features, cn_delta_t,
      wg, bg,
      wk1c, wk1h, bk1, wk2, bk2, wk3, bk3,
      wp1c, wp1h, bp1, wp2, bp2,
      ct, sel)

    actions_seq = jnp.transpose(actions_tm, (1, 0, 2))                       # (B, T, D)
    phase_seq = jnp.transpose(phase_tm, (1, 0, 2))                           # (B, T, 1)
    weights_seq = jnp.transpose(weights_tm, (1, 0, 2)).reshape(B, T, D, NB)  # (B, T, D, NB)
    return actions_seq, phase_seq, weights_seq, gru_out


# ----------------------------------------------------------------------------
# Pure-JAX reference (mirrors the PyTorch forward, training=False) for checking
# ----------------------------------------------------------------------------
def reference_forward(params, seq_inputs, h0, cn_features, cn_delta_t):
    B, T, D = seq_inputs.shape
    H, NB = ROBOT_STATE, NBFUNCS
    centers = jnp.linspace(0.0, 1.0, NB, dtype=jnp.float32)
    h = h0
    actions, phases, weights_l = [], [], []
    for t in range(T):
        x = seq_inputs[:, t, :]
        gi = x @ params["w_ih"].T + params["b_ih"]
        gh = h @ params["w_hh"].T + params["b_hh"]
        r = jax.nn.sigmoid(gi[:, :H] + gh[:, :H])
        z = jax.nn.sigmoid(gi[:, H:2 * H] + gh[:, H:2 * H])
        n = jnp.tanh(gi[:, 2 * H:] + r * gh[:, 2 * H:])
        h = (1.0 - z) * n + z * h
        xc = jnp.concatenate([cn_features, h], axis=1)
        k = jnp.maximum(xc @ params["wk1"].T + params["bk1"], 0.0)
        k = jnp.maximum(k @ params["wk2"].T + params["bk2"], 0.0)
        k = k @ params["wk3"].T + params["bk3"]
        w = k.reshape(B, D, NB)
        p = jnp.maximum(xc @ params["wp1"].T + params["bp1"], 0.0)
        p = p @ params["wp2"].T + params["bp2"]
        phase = jnp.clip(p / 6.0 + 0.5, 0.0, 1.0) + 1.0 / (500.0 * cn_delta_t)
        psi = jnp.exp(-((phase - centers[None, :]) ** 2) / (2.0 * SCALE))
        action = jnp.sum(w * psi[:, None, :], axis=2) / jnp.sum(psi, axis=1, keepdims=True)
        actions.append(action)
        phases.append(phase)
        weights_l.append(w)
    return (jnp.stack(actions, 1), jnp.stack(phases, 1), jnp.stack(weights_l, 1), h)


# ----------------------------------------------------------------------------
# Deterministic parameter init (PyTorch-default-like uniform(-1/sqrt(fan), ...))
# ----------------------------------------------------------------------------
def init_params(key):
    H, D, NB, XS, KH, PH = ROBOT_STATE, DIMS, NBFUNCS, XSHAPE, KHID, PHID
    ks = jax.random.split(key, 16)

    def unif(k, shape, fan):
        b = 1.0 / jnp.sqrt(jnp.float32(fan))
        return jax.random.uniform(k, shape, jnp.float32, -b, b)

    return {
        "w_ih": unif(ks[0], (3 * H, D), H),
        "w_hh": unif(ks[1], (3 * H, H), H),
        "b_ih": unif(ks[2], (3 * H,), H),
        "b_hh": unif(ks[3], (3 * H,), H),
        "wk1": unif(ks[4], (KH, XS), XS), "bk1": unif(ks[5], (KH,), XS),
        "wk2": unif(ks[6], (KH, KH), KH), "bk2": unif(ks[7], (KH,), KH),
        "wk3": unif(ks[8], (KH, KH), KH), "bk3": unif(ks[9], (KH,), KH),
        "wp1": unif(ks[10], (PH, XS), XS), "bp1": unif(ks[11], (PH,), XS),
        "wp2": unif(ks[12], (1, PH), PH), "bp2": unif(ks[13], (1,), PH),
    }


if __name__ == "__main__":
    key = jax.random.PRNGKey(0)
    kp, kx, kh, kc, kd = jax.random.split(key, 5)

    # batch != 2 on purpose (so the torch `len(gru_output) == 2` LSTM branch is not hit)
    B, T = 4, 8
    params = init_params(kp)
    seq_inputs = jax.random.normal(kx, (B, T, DIMS), jnp.float32)
    h0 = jax.random.normal(kh, (B, ROBOT_STATE), jnp.float32)           # states[1]
    cn_features = jax.random.normal(kc, (B, CNFEAT), jnp.float32)       # constants[0]
    cn_delta_t = jax.random.uniform(kd, (B, 1), jnp.float32, 0.5, 1.5)  # constants[1]

    out = feedback_controller_forward(params, seq_inputs, h0, cn_features, cn_delta_t)
    out = jax.block_until_ready(out)

    ref = reference_forward(params, seq_inputs, h0, cn_features, cn_delta_t)
    names = ("actions_seq", "phase_seq", "weights_seq", "gru_output")
    for name, a, b in zip(names, out, ref):
        assert a.shape == b.shape, (name, a.shape, b.shape)
        assert jnp.allclose(a, b, atol=1e-4, rtol=1e-4), (name, float(jnp.max(jnp.abs(a - b))))

    print("KERNEL_OK")
</pallas_src>

<mosaic_0001>
module attributes {stable_mosaic.version = 11 : i64} {
  func.func @_fbc_kernel(%arg0: memref<8x4x4xf32, #tpu.memory_space<vmem>>, %arg1: memref<4x16xf32, #tpu.memory_space<vmem>>, %arg2: memref<4x5xf32, #tpu.memory_space<vmem>>, %arg3: memref<4x1xf32, #tpu.memory_space<vmem>>, %arg4: memref<20x96xf32, #tpu.memory_space<vmem>>, %arg5: memref<1x96xf32, #tpu.memory_space<vmem>>, %arg6: memref<5x32xf32, #tpu.memory_space<vmem>>, %arg7: memref<16x32xf32, #tpu.memory_space<vmem>>, %arg8: memref<1x32xf32, #tpu.memory_space<vmem>>, %arg9: memref<32x32xf32, #tpu.memory_space<vmem>>, %arg10: memref<1x32xf32, #tpu.memory_space<vmem>>, %arg11: memref<32x32xf32, #tpu.memory_space<vmem>>, %arg12: memref<1x32xf32, #tpu.memory_space<vmem>>, %arg13: memref<5x8xf32, #tpu.memory_space<vmem>>, %arg14: memref<16x8xf32, #tpu.memory_space<vmem>>, %arg15: memref<1x8xf32, #tpu.memory_space<vmem>>, %arg16: memref<8x1xf32, #tpu.memory_space<vmem>>, %arg17: memref<1x1xf32, #tpu.memory_space<vmem>>, %arg18: memref<1x32xf32, #tpu.memory_space<vmem>>, %arg19: memref<32x4xf32, #tpu.memory_space<vmem>>, %arg20: memref<8x4x4xf32, #tpu.memory_space<vmem>>, %arg21: memref<8x4x1xf32, #tpu.memory_space<vmem>>, %arg22: memref<8x4x32xf32, #tpu.memory_space<vmem>>, %arg23: memref<4x16xf32, #tpu.memory_space<vmem>>) attributes {dimension_semantics = [], scalar_prefetch = 0 : i64, scratch_operands = 0 : i64, tpu.core_type = #tpu.core_type<tc>} {
    %c0 = arith.constant 0 : index
    %c0_0 = arith.constant 0 : index
    %0 = vector.load %arg2[%c0, %c0_0] : memref<4x5xf32, #tpu.memory_space<vmem>>, vector<4x5xf32>
    %c0_1 = arith.constant 0 : index
    %c0_2 = arith.constant 0 : index
    %1 = vector.load %arg6[%c0_1, %c0_2] : memref<5x32xf32, #tpu.memory_space<vmem>>, vector<5x32xf32>
    %cst = arith.constant dense<0.000000e+00> : vector<4x32xf32>
    %2 = tpu.matmul %0, %1, %cst {dimension_numbers = #tpu.dot_dimension_numbers<[1], [0], [0], [1], [0, 0, 1, 1], [], []>} : vector<4x5xf32>, vector<5x32xf32>, vector<4x32xf32> -> vector<4x32xf32>
    %c0_3 = arith.constant 0 : index
    %c0_4 = arith.constant 0 : index
    %3 = vector.load %arg8[%c0_3, %c0_4] : memref<1x32xf32, #tpu.memory_space<vmem>>, vector<1x32xf32>
    %4 = vector.broadcast %3 : vector<1x32xf32> to vector<4x32xf32>
    %5 = arith.addf %2, %4 : vector<4x32xf32>
    %c0_5 = arith.constant 0 : index
    %c0_6 = arith.constant 0 : index
    %6 = vector.load %arg2[%c0_5, %c0_6] : memref<4x5xf32, #tpu.memory_space<vmem>>, vector<4x5xf32>
    %c0_7 = arith.constant 0 : index
    %c0_8 = arith.constant 0 : index
    %7 = vector.load %arg13[%c0_7, %c0_8] : memref<5x8xf32, #tpu.memory_space<vmem>>, vector<5x8xf32>
    %cst_9 = arith.constant dense<0.000000e+00> : vector<4x8xf32>
    %8 = tpu.matmul %6, %7, %cst_9 {dimension_numbers = #tpu.dot_dimension_numbers<[1], [0], [0], [1], [0, 0, 1, 1], [], []>} : vector<4x5xf32>, vector<5x8xf32>, vector<4x8xf32> -> vector<4x8xf32>
    %c0_10 = arith.constant 0 : index
    %c0_11 = arith.constant 0 : index
    %9 = vector.load %arg15[%c0_10, %c0_11] : memref<1x8xf32, #tpu.memory_space<vmem>>, vector<1x8xf32>
    %10 = vector.broadcast %9 : vector<1x8xf32> to vector<4x8xf32>
    %11 = arith.addf %8, %10 : vector<4x8xf32>
    %c0_12 = arith.constant 0 : index
    %c0_13 = arith.constant 0 : index
    %12 = vector.load %arg3[%c0_12, %c0_13] : memref<4x1xf32, #tpu.memory_space<vmem>>, vector<4x1xf32>
    %cst_14 = arith.constant 5.000000e+02 : f32
    %13 = vector.broadcast %cst_14 : f32 to vector<4x1xf32>
    %14 = arith.mulf %13, %12 : vector<4x1xf32>
    %cst_15 = arith.constant 1.000000e+00 : f32
    %15 = vector.broadcast %cst_15 : f32 to vector<4x1xf32>
    %16 = arith.divf %15, %14 : vector<4x1xf32>
    %c0_16 = arith.constant 0 : index
    %c0_17 = arith.constant 0 : index
    %17 = vector.load %arg18[%c0_16, %c0_17] : memref<1x32xf32, #tpu.memory_space<vmem>>, vector<1x32xf32>
    %c0_18 = arith.constant 0 : index
    %c0_19 = arith.constant 0 : index
    %18 = vector.load %arg1[%c0_18, %c0_19] : memref<4x16xf32, #tpu.memory_space<vmem>>, vector<4x16xf32>
    %c0_20 = arith.constant 0 : index
    %c0_21 = arith.constant 0 : index
    %c0_22 = arith.constant 0 : index
    %19 = vector.load %arg0[%c0_20, %c0_21, %c0_22] : memref<8x4x4xf32, #tpu.memory_space<vmem>>, vector<1x4x4xf32>
    %20 = vector.shape_cast %19 : vector<1x4x4xf32> to vector<4x4xf32>
    %21 = tpu.concatenate %20, %18 in 1 : vector<4x4xf32>, vector<4x16xf32> -> vector<4x20xf32>
    %c0_23 = arith.constant 0 : index
    %c0_24 = arith.constant 0 : index
    %22 = vector.load %arg4[%c0_23, %c0_24] : memref<20x96xf32, #tpu.memory_space<vmem>>, vector<20x96xf32>
    %cst_25 = arith.constant dense<0.000000e+00> : vector<4x96xf32>
    %23 = tpu.matmul %21, %22, %cst_25 {dimension_numbers = #tpu.dot_dimension_numbers<[1], [0], [0], [1], [0, 0, 1, 1], [], []>} : vector<4x20xf32>, vector<20x96xf32>, vector<4x96xf32> -> vector<4x96xf32>
    %c0_26 = arith.constant 0 : index
    %c0_27 = arith.constant 0 : index
    %24 = vector.load %arg5[%c0_26, %c0_27] : memref<1x96xf32, #tpu.memory_space<vmem>>, vector<1x96xf32>
    %25 = vector.broadcast %24 : vector<1x96xf32> to vector<4x96xf32>
    %26 = arith.addf %23, %25 : vector<4x96xf32>
    %27 = vector.extract_strided_slice %26 {offsets = [0, 0], sizes = [4, 48], strides = [1, 1]} : vector<4x96xf32> to vector<4x48xf32>
    %28 = vector.extract_strided_slice %26 {offsets = [0, 48], sizes = [4, 48], strides = [1, 1]} : vector<4x96xf32> to vector<4x48xf32>
    %29 = vector.extract_strided_slice %27 {offsets = [0, 0], sizes = [4, 32], strides = [1, 1]} : vector<4x48xf32> to vector<4x32xf32>
    %30 = vector.extract_strided_slice %28 {offsets = [0, 0], sizes = [4, 32], strides = [1, 1]} : vector<4x48xf32> to vector<4x32xf32>
    %31 = arith.addf %29, %30 : vector<4x32xf32>
    %32 = arith.negf %31 : vector<4x32xf32>
    %33 = math.exp %32 : vector<4x32xf32>
    %cst_28 = arith.constant 1.000000e+00 : f32
    %34 = vector.broadcast %cst_28 : f32 to vector<4x32xf32>
    %35 = arith.addf %34, %33 : vector<4x32xf32>
    %36 = arith.divf %34, %35 : vector<4x32xf32>
    %37 = vector.extract_strided_slice %36 {offsets = [0, 0], sizes = [4, 16], strides = [1, 1]} : vector<4x32xf32> to vector<4x16xf32>
    %38 = vector.extract_strided_slice %36 {offsets = [0, 16], sizes = [4, 16], strides = [1, 1]} : vector<4x32xf32> to vector<4x16xf32>
    %39 = vector.extract_strided_slice %27 {offsets = [0, 32], sizes = [4, 16], strides = [1, 1]} : vector<4x48xf32> to vector<4x16xf32>
    %40 = vector.extract_strided_slice %28 {offsets = [0, 32], sizes = [4, 16], strides = [1, 1]} : vector<4x48xf32> to vector<4x16xf32>
    %41 = arith.mulf %37, %40 : vector<4x16xf32>
    %42 = arith.addf %39, %41 : vector<4x16xf32>
    %43 = math.tanh %42 : vector<4x16xf32>
    %cst_29 = arith.constant 1.000000e+00 : f32
    %44 = vector.broadcast %cst_29 : f32 to vector<4x16xf32>
    %45 = arith.subf %44, %38 : vector<4x16xf32>
    %46 = arith.mulf %45, %43 : vector<4x16xf32>
    %47 = arith.mulf %38, %18 : vector<4x16xf32>
    %48 = arith.addf %46, %47 : vector<4x16xf32>
    %c0_30 = arith.constant 0 : index
    %c0_31 = arith.constant 0 : index
    %49 = vector.load %arg7[%c0_30, %c0_31] : memref<16x32xf32, #tpu.memory_space<vmem>>, vector<16x32xf32>
    %cst_32 = arith.constant dense<0.000000e+00> : vector<4x32xf32>
    %50 = tpu.matmul %48, %49, %cst_32 {dimension_numbers = #tpu.dot_dimension_numbers<[1], [0], [0], [1], [0, 0, 1, 1], [], []>} : vector<4x16xf32>, vector<16x32xf32>, vector<4x32xf32> -> vector<4x32xf32>
    %51 = arith.addf %50, %5 : vector<4x32xf32>
    %cst_33 = arith.constant 0.000000e+00 : f32
    %52 = vector.broadcast %cst_33 : f32 to vector<4x32xf32>
    %53 = arith.maximumf %51, %52 : vector<4x32xf32>
    %c0_34 = arith.constant 0 : index
    %c0_35 = arith.constant 0 : index
    %54 = vector.load %arg9[%c0_34, %c0_35] : memref<32x32xf32, #tpu.memory_space<vmem>>, vector<32x32xf32>
    %cst_36 = arith.constant dense<0.000000e+00> : vector<4x32xf32>
    %55 = tpu.matmul %53, %54, %cst_36 {dimension_numbers = #tpu.dot_dimension_numbers<[1], [0], [0], [1], [0, 0, 1, 1], [], []>} : vector<4x32xf32>, vector<32x32xf32>, vector<4x32xf32> -> vector<4x32xf32>
    %c0_37 = arith.constant 0 : index
    %c0_38 = arith.constant 0 : index
    %56 = vector.load %arg10[%c0_37, %c0_38] : memref<1x32xf32, #tpu.memory_space<vmem>>, vector<1x32xf32>
    %57 = vector.broadcast %56 : vector<1x32xf32> to vector<4x32xf32>
    %58 = arith.addf %55, %57 : vector<4x32xf32>
    %cst_39 = arith.constant 0.000000e+00 : f32
    %59 = vector.broadcast %cst_39 : f32 to vector<4x32xf32>
    %60 = arith.maximumf %58, %59 : vector<4x32xf32>
    %c0_40 = arith.constant 0 : index
    %c0_41 = arith.constant 0 : index
    %61 = vector.load %arg11[%c0_40, %c0_41] : memref<32x32xf32, #tpu.memory_space<vmem>>, vector<32x32xf32>
    %cst_42 = arith.constant dense<0.000000e+00> : vector<4x32xf32>
    %62 = tpu.matmul %60, %61, %cst_42 {dimension_numbers = #tpu.dot_dimension_numbers<[1], [0], [0], [1], [0, 0, 1, 1], [], []>} : vector<4x32xf32>, vector<32x32xf32>, vector<4x32xf32> -> vector<4x32xf32>
    %c0_43 = arith.constant 0 : index
    %c0_44 = arith.constant 0 : index
    %63 = vector.load %arg12[%c0_43, %c0_44] : memref<1x32xf32, #tpu.memory_space<vmem>>, vector<1x32xf32>
    %64 = vector.broadcast %63 : vector<1x32xf32> to vector<4x32xf32>
    %65 = arith.addf %62, %64 : vector<4x32xf32>
    %c0_45 = arith.constant 0 : index
    %c0_46 = arith.constant 0 : index
    %66 = vector.load %arg14[%c0_45, %c0_46] : memref<16x8xf32, #tpu.memory_space<vmem>>, vector<16x8xf32>
    %cst_47 = arith.constant dense<0.000000e+00> : vector<4x8xf32>
    %67 = tpu.matmul %48, %66, %cst_47 {dimension_numbers = #tpu.dot_dimension_numbers<[1], [0], [0], [1], [0, 0, 1, 1], [], []>} : vector<4x16xf32>, vector<16x8xf32>, vector<4x8xf32> -> vector<4x8xf32>
    %68 = arith.addf %67, %11 : vector<4x8xf32>
    %cst_48 = arith.constant 0.000000e+00 : f32
    %69 = vector.broadcast %cst_48 : f32 to vector<4x8xf32>
    %70 = arith.maximumf %68, %69 : vector<4x8xf32>
    %c0_49 = arith.constant 0 : index
    %c0_50 = arith.constant 0 : index
    %71 = vector.load %arg16[%c0_49, %c0_50] : memref<8x1xf32, #tpu.memory_space<vmem>>, vector<8x1xf32>
    %cst_51 = arith.constant dense<0.000000e+00> : vector<4x1xf32>
    %72 = tpu.matmul %70, %71, %cst_51 {dimension_numbers = #tpu.dot_dimension_numbers<[1], [0], [0], [1], [0, 0, 1, 1], [], []>} : vector<4x8xf32>, vector<8x1xf32>, vector<4x1xf32> -> vector<4x1xf32>
    %c0_52 = arith.constant 0 : index
    %c0_53 = arith.constant 0 : index
    %73 = vector.load %arg17[%c0_52, %c0_53] : memref<1x1xf32, #tpu.memory_space<vmem>>, vector<1x1xf32>
    %74 = vector.broadcast %73 : vector<1x1xf32> to vector<4x1xf32>
    %75 = arith.addf %72, %74 : vector<4x1xf32>
    %cst_54 = arith.constant 6.000000e+00 : f32
    %76 = vector.broadcast %cst_54 : f32 to vector<4x1xf32>
    %77 = arith.divf %75, %76 : vector<4x1xf32>
    %cst_55 = arith.constant 5.000000e-01 : f32
    %78 = vector.broadcast %cst_55 : f32 to vector<4x1xf32>
    %79 = arith.addf %77, %78 : vector<4x1xf32>
    %cst_56 = arith.constant 0.000000e+00 : f32
    %cst_57 = arith.constant 1.000000e+00 : f32
    %80 = vector.broadcast %cst_56 : f32 to vector<4x1xf32>
    %81 = arith.maximumf %80, %79 : vector<4x1xf32>
    %82 = vector.broadcast %cst_57 : f32 to vector<4x1xf32>
    %83 = arith.minimumf %82, %81 : vector<4x1xf32>
    %84 = arith.addf %83, %16 : vector<4x1xf32>
    %85 = vector.broadcast %84 : vector<4x1xf32> to vector<4x32xf32>
    %86 = vector.broadcast %17 : vector<1x32xf32> to vector<4x32xf32>
    %87 = arith.subf %85, %86 : vector<4x32xf32>
    %88 = arith.mulf %87, %87 : vector<4x32xf32>
    %cst_58 = arith.constant 0.000000e+00 : f32
    %89 = vector.broadcast %cst_58 : f32 to vector<4x32xf32>
    %90 = arith.subf %89, %88 : vector<4x32xf32>
    %cst_59 = arith.constant 2.400000e-02 : f32
    %91 = vector.broadcast %cst_59 : f32 to vector<4x32xf32>
    %92 = arith.divf %90, %91 : vector<4x32xf32>
    %93 = math.exp %92 : vector<4x32xf32>
    %94 = vector.extract_strided_slice %93 {offsets = [0, 0], sizes = [4, 8], strides = [1, 1]} : vector<4x32xf32> to vector<4x8xf32>
    %cst_60 = arith.constant dense<0.000000e+00> : vector<4xf32>
    %95 = vector.multi_reduction <add>, %94, %cst_60 [1] : vector<4x8xf32> to vector<4xf32>
    %96 = vector.shape_cast %95 : vector<4xf32> to vector<4x1xf32>
    %97 = arith.mulf %65, %93 : vector<4x32xf32>
    %c0_61 = arith.constant 0 : index
    %c0_62 = arith.constant 0 : index
    %98 = vector.load %arg19[%c0_61, %c0_62] : memref<32x4xf32, #tpu.memory_space<vmem>>, vector<32x4xf32>
    %cst_63 = arith.constant dense<0.000000e+00> : vector<4x4xf32>
    %99 = tpu.matmul %97, %98, %cst_63 {dimension_numbers = #tpu.dot_dimension_numbers<[1], [0], [0], [1], [0, 0, 1, 1], [], []>} : vector<4x32xf32>, vector<32x4xf32>, vector<4x4xf32> -> vector<4x4xf32>
    %100 = vector.broadcast %96 : vector<4x1xf32> to vector<4x4xf32>
    %101 = arith.divf %99, %100 : vector<4x4xf32>
    %c0_64 = arith.constant 0 : index
    %c0_65 = arith.constant 0 : index
    %c0_66 = arith.constant 0 : index
    %102 = vector.load %arg20[%c0_64, %c0_65, %c0_66] : memref<8x4x4xf32, #tpu.memory_space<vmem>>, vector<1x4x4xf32>
    %103 = vector.shape_cast %102 : vector<1x4x4xf32> to vector<4x4xf32>
    %104 = vector.shape_cast %101 : vector<4x4xf32> to vector<1x4x4xf32>
    tpu.vector_store %arg20[%c0_64, %c0_65, %c0_66], %104 {strides = array<i32>} : memref<8x4x4xf32, #tpu.memory_space<vmem>>, vector<1x4x4xf32>,
    %c0_67 = arith.constant 0 : index
    %c0_68 = arith.constant 0 : index
    %c0_69 = arith.constant 0 : index
    %105 = vector.load %arg21[%c0_67, %c0_68, %c0_69] : memref<8x4x1xf32, #tpu.memory_space<vmem>>, vector<1x4x1xf32>
    %106 = vector.shape_cast %105 : vector<1x4x1xf32> to vector<4x1xf32>
    %107 = vector.shape_cast %84 : vector<4x1xf32> to vector<1x4x1xf32>
    tpu.vector_store %arg21[%c0_67, %c0_68, %c0_69], %107 {strides = array<i32>} : memref<8x4x1xf32, #tpu.memory_space<vmem>>, vector<1x4x1xf32>,
    %c0_70 = arith.constant 0 : index
    %c0_71 = arith.constant 0 : index
    %c0_72 = arith.constant 0 : index
    %108 = vector.load %arg22[%c0_70, %c0_71, %c0_72] : memref<8x4x32xf32, #tpu.memory_space<vmem>>, vector<1x4x32xf32>
    %109 = vector.shape_cast %108 : vector<1x4x32xf32> to vector<4x32xf32>
    %110 = vector.shape_cast %65 : vector<4x32xf32> to vector<1x4x32xf32>
    tpu.vector_store %arg22[%c0_70, %c0_71, %c0_72], %110 {strides = array<i32>} : memref<8x4x32xf32, #tpu.memory_space<vmem>>, vector<1x4x32xf32>,
    %c1 = arith.constant 1 : index
    %c0_73 = arith.constant 0 : index
    %c0_74 = arith.constant 0 : index
    %111 = vector.load %arg0[%c1, %c0_73, %c0_74] : memref<8x4x4xf32, #tpu.memory_space<vmem>>, vector<1x4x4xf32>
    %112 = vector.shape_cast %111 : vector<1x4x4xf32> to vector<4x4xf32>
    %113 = tpu.concatenate %112, %48 in 1 : vector<4x4xf32>, vector<4x16xf32> -> vector<4x20xf32>
    %c0_75 = arith.constant 0 : index
    %c0_76 = arith.constant 0 : index
    %114 = vector.load %arg4[%c0_75, %c0_76] : memref<20x96xf32, #tpu.memory_space<vmem>>, vector<20x96xf32>
    %cst_77 = arith.constant dense<0.000000e+00> : vector<4x96xf32>
    %115 = tpu.matmul %113, %114, %cst_77 {dimension_numbers = #tpu.dot_dimension_numbers<[1], [0], [0], [1], [0, 0, 1, 1], [], []>} : vector<4x20xf32>, vector<20x96xf32>, vector<4x96xf32> -> vector<4x96xf32>
    %c0_78 = arith.constant 0 : index
    %c0_79 = arith.constant 0 : index
    %116 = vector.load %arg5[%c0_78, %c0_79] : memref<1x96xf32, #tpu.memory_space<vmem>>, vector<1x96xf32>
    %117 = vector.broadcast %116 : vector<1x96xf32> to vector<4x96xf32>
    %118 = arith.addf %115, %117 : vector<4x96xf32>
    %119 = vector.extract_strided_slice %118 {offsets = [0, 0], sizes = [4, 48], strides = [1, 1]} : vector<4x96xf32> to vector<4x48xf32>
    %120 = vector.extract_strided_slice %118 {offsets = [0, 48], sizes = [4, 48], strides = [1, 1]} : vector<4x96xf32> to vector<4x48xf32>
    %121 = vector.extract_strided_slice %119 {offsets = [0, 0], sizes = [4, 32], strides = [1, 1]} : vector<4x48xf32> to vector<4x32xf32>
    %122 = vector.extract_strided_slice %120 {offsets = [0, 0], sizes = [4, 32], strides = [1, 1]} : vector<4x48xf32> to vector<4x32xf32>
    %123 = arith.addf %121, %122 : vector<4x32xf32>
    %124 = arith.negf %123 : vector<4x32xf32>
    %125 = math.exp %124 : vector<4x32xf32>
    %cst_80 = arith.constant 1.000000e+00 : f32
    %126 = vector.broadcast %cst_80 : f32 to vector<4x32xf32>
    %127 = arith.addf %126, %125 : vector<4x32xf32>
    %128 = arith.divf %126, %127 : vector<4x32xf32>
    %129 = vector.extract_strided_slice %128 {offsets = [0, 0], sizes = [4, 16], strides = [1, 1]} : vector<4x32xf32> to vector<4x16xf32>
    %130 = vector.extract_strided_slice %128 {offsets = [0, 16], sizes = [4, 16], strides = [1, 1]} : vector<4x32xf32> to vector<4x16xf32>
    %131 = vector.extract_strided_slice %119 {offsets = [0, 32], sizes = [4, 16], strides = [1, 1]} : vector<4x48xf32> to vector<4x16xf32>
    %132 = vector.extract_strided_slice %120 {offsets = [0, 32], sizes = [4, 16], strides = [1, 1]} : vector<4x48xf32> to vector<4x16xf32>
    %133 = arith.mulf %129, %132 : vector<4x16xf32>
    %134 = arith.addf %131, %133 : vector<4x16xf32>
    %135 = math.tanh %134 : vector<4x16xf32>
    %cst_81 = arith.constant 1.000000e+00 : f32
    %136 = vector.broadcast %cst_81 : f32 to vector<4x16xf32>
    %137 = arith.subf %136, %130 : vector<4x16xf32>
    %138 = arith.mulf %137, %135 : vector<4x16xf32>
    %139 = arith.mulf %130, %48 : vector<4x16xf32>
    %140 = arith.addf %138, %139 : vector<4x16xf32>
    %c0_82 = arith.constant 0 : index
    %c0_83 = arith.constant 0 : index
    %141 = vector.load %arg7[%c0_82, %c0_83] : memref<16x32xf32, #tpu.memory_space<vmem>>, vector<16x32xf32>
    %cst_84 = arith.constant dense<0.000000e+00> : vector<4x32xf32>
    %142 = tpu.matmul %140, %141, %cst_84 {dimension_numbers = #tpu.dot_dimension_numbers<[1], [0], [0], [1], [0, 0, 1, 1], [], []>} : vector<4x16xf32>, vector<16x32xf32>, vector<4x32xf32> -> vector<4x32xf32>
    %143 = arith.addf %142, %5 : vector<4x32xf32>
    %cst_85 = arith.constant 0.000000e+00 : f32
    %144 = vector.broadcast %cst_85 : f32 to vector<4x32xf32>
    %145 = arith.maximumf %143, %144 : vector<4x32xf32>
    %c0_86 = arith.constant 0 : index
    %c0_87 = arith.constant 0 : index
    %146 = vector.load %arg9[%c0_86, %c0_87] : memref<32x32xf32, #tpu.memory_space<vmem>>, vector<32x32xf32>
    %cst_88 = arith.constant dense<0.000000e+00> : vector<4x32xf32>
    %147 = tpu.matmul %145, %146, %cst_88 {dimension_numbers = #tpu.dot_dimension_numbers<[1], [0], [0], [1], [0, 0, 1, 1], [], []>} : vector<4x32xf32>, vector<32x32xf32>, vector<4x32xf32> -> vector<4x32xf32>
    %c0_89 = arith.constant 0 : index
    %c0_90 = arith.constant 0 : index
    %148 = vector.load %arg10[%c0_89, %c0_90] : memref<1x32xf32, #tpu.memory_space<vmem>>, vector<1x32xf32>
    %149 = vector.broadcast %148 : vector<1x32xf32> to vector<4x32xf32>
    %150 = arith.addf %147, %149 : vector<4x32xf32>
    %cst_91 = arith.constant 0.000000e+00 : f32
    %151 = vector.broadcast %cst_91 : f32 to vector<4x32xf32>
    %152 = arith.maximumf %150, %151 : vector<4x32xf32>
    %c0_92 = arith.constant 0 : index
    %c0_93 = arith.constant 0 : index
    %153 = vector.load %arg11[%c0_92, %c0_93] : memref<32x32xf32, #tpu.memory_space<vmem>>, vector<32x32xf32>
    %cst_94 = arith.constant dense<0.000000e+00> : vector<4x32xf32>
    %154 = tpu.matmul %152, %153, %cst_94 {dimension_numbers = #tpu.dot_dimension_numbers<[1], [0], [0], [1], [0, 0, 1, 1], [], []>} : vector<4x32xf32>, vector<32x32xf32>, vector<4x32xf32> -> vector<4x32xf32>
    %c0_95 = arith.constant 0 : index
    %c0_96 = arith.constant 0 : index
    %155 = vector.load %arg12[%c0_95, %c0_96] : memref<1x32xf32, #tpu.memory_space<vmem>>, vector<1x32xf32>
    %156 = vector.broadcast %155 : vector<1x32xf32> to vector<4x32xf32>
    %157 = arith.addf %154, %156 : vector<4x32xf32>
    %c0_97 = arith.constant 0 : index
    %c0_98 = arith.constant 0 : index
    %158 = vector.load %arg14[%c0_97, %c0_98] : memref<16x8xf32, #tpu.memory_space<vmem>>, vector<16x8xf32>
    %cst_99 = arith.constant dense<0.000000e+00> : vector<4x8xf32>
    %159 = tpu.matmul %140, %158, %cst_99 {dimension_numbers = #tpu.dot_dimension_numbers<[1], [0], [0], [1], [0, 0, 1, 1], [], []>} : vector<4x16xf32>, vector<16x8xf32>, vector<4x8xf32> -> vector<4x8xf32>
    %160 = arith.addf %159, %11 : vector<4x8xf32>
    %cst_100 = arith.constant 0.000000e+00 : f32
    %161 = vector.broadcast %cst_100 : f32 to vector<4x8xf32>
    %162 = arith.maximumf %160, %161 : vector<4x8xf32>
    %c0_101 = arith.constant 0 : index
    %c0_102 = arith.constant 0 : index
    %163 = vector.load %arg16[%c0_101, %c0_102] : memref<8x1xf32, #tpu.memory_space<vmem>>, vector<8x1xf32>
    %cst_103 = arith.constant dense<0.000000e+00> : vector<4x1xf32>
    %164 = tpu.matmul %162, %163, %cst_103 {dimension_numbers = #tpu.dot_dimension_numbers<[1], [0], [0], [1], [0, 0, 1, 1], [], []>} : vector<4x8xf32>, vector<8x1xf32>, vector<4x1xf32> -> vector<4x1xf32>
    %c0_104 = arith.constant 0 : index
    %c0_105 = arith.constant 0 : index
    %165 = vector.load %arg17[%c0_104, %c0_105] : memref<1x1xf32, #tpu.memory_space<vmem>>, vector<1x1xf32>
    %166 = vector.broadcast %165 : vector<1x1xf32> to vector<4x1xf32>
    %167 = arith.addf %164, %166 : vector<4x1xf32>
    %cst_106 = arith.constant 6.000000e+00 : f32
    %168 = vector.broadcast %cst_106 : f32 to vector<4x1xf32>
    %169 = arith.divf %167, %168 : vector<4x1xf32>
    %cst_107 = arith.constant 5.000000e-01 : f32
    %170 = vector.broadcast %cst_107 : f32 to vector<4x1xf32>
    %171 = arith.addf %169, %170 : vector<4x1xf32>
    %cst_108 = arith.constant 0.000000e+00 : f32
    %cst_109 = arith.constant 1.000000e+00 : f32
    %172 = vector.broadcast %cst_108 : f32 to vector<4x1xf32>
    %173 = arith.maximumf %172, %171 : vector<4x1xf32>
    %174 = vector.broadcast %cst_109 : f32 to vector<4x1xf32>
    %175 = arith.minimumf %174, %173 : vector<4x1xf32>
    %176 = arith.addf %175, %16 : vector<4x1xf32>
    %177 = vector.broadcast %176 : vector<4x1xf32> to vector<4x32xf32>
    %178 = vector.broadcast %17 : vector<1x32xf32> to vector<4x32xf32>
    %179 = arith.subf %177, %178 : vector<4x32xf32>
    %180 = arith.mulf %179, %179 : vector<4x32xf32>
    %cst_110 = arith.constant 0.000000e+00 : f32
    %181 = vector.broadcast %cst_110 : f32 to vector<4x32xf32>
    %182 = arith.subf %181, %180 : vector<4x32xf32>
    %cst_111 = arith.constant 2.400000e-02 : f32
    %183 = vector.broadcast %cst_111 : f32 to vector<4x32xf32>
    %184 = arith.divf %182, %183 : vector<4x32xf32>
    %185 = math.exp %184 : vector<4x32xf32>
    %186 = vector.extract_strided_slice %185 {offsets = [0, 0], sizes = [4, 8], strides = [1, 1]} : vector<4x32xf32> to vector<4x8xf32>
    %cst_112 = arith.constant dense<0.000000e+00> : vector<4xf32>
    %187 = vector.multi_reduction <add>, %186, %cst_112 [1] : vector<4x8xf32> to vector<4xf32>
    %188 = vector.shape_cast %187 : vector<4xf32> to vector<4x1xf32>
    %189 = arith.mulf %157, %185 : vector<4x32xf32>
    %c0_113 = arith.constant 0 : index
    %c0_114 = arith.constant 0 : index
    %190 = vector.load %arg19[%c0_113, %c0_114] : memref<32x4xf32, #tpu.memory_space<vmem>>, vector<32x4xf32>
    %cst_115 = arith.constant dense<0.000000e+00> : vector<4x4xf32>
    %191 = tpu.matmul %189, %190, %cst_115 {dimension_numbers = #tpu.dot_dimension_numbers<[1], [0], [0], [1], [0, 0, 1, 1], [], []>} : vector<4x32xf32>, vector<32x4xf32>, vector<4x4xf32> -> vector<4x4xf32>
    %192 = vector.broadcast %188 : vector<4x1xf32> to vector<4x4xf32>
    %193 = arith.divf %191, %192 : vector<4x4xf32>
    %c1_116 = arith.constant 1 : index
    %c0_117 = arith.constant 0 : index
    %c0_118 = arith.constant 0 : index
    %194 = vector.load %arg20[%c1_116, %c0_117, %c0_118] : memref<8x4x4xf32, #tpu.memory_space<vmem>>, vector<1x4x4xf32>
    %195 = vector.shape_cast %194 : vector<1x4x4xf32> to vector<4x4xf32>
    %196 = vector.shape_cast %193 : vector<4x4xf32> to vector<1x4x4xf32>
    tpu.vector_store %arg20[%c1_116, %c0_117, %c0_118], %196 {strides = array<i32>} : memref<8x4x4xf32, #tpu.memory_space<vmem>>, vector<1x4x4xf32>,
    %c1_119 = arith.constant 1 : index
    %c0_120 = arith.constant 0 : index
    %c0_121 = arith.constant 0 : index
    %197 = vector.load %arg21[%c1_119, %c0_120, %c0_121] : memref<8x4x1xf32, #tpu.memory_space<vmem>>, vector<1x4x1xf32>
    %198 = vector.shape_cast %197 : vector<1x4x1xf32> to vector<4x1xf32>
    %199 = vector.shape_cast %176 : vector<4x1xf32> to vector<1x4x1xf32>
    tpu.vector_store %arg21[%c1_119, %c0_120, %c0_121], %199 {strides = array<i32>} : memref<8x4x1xf32, #tpu.memory_space<vmem>>, vector<1x4x1xf32>,
    %c1_122 = arith.constant 1 : index
    %c0_123 = arith.constant 0 : index
    %c0_124 = arith.constant 0 : index
    %200 = vector.load %arg22[%c1_122, %c0_123, %c0_124] : memref<8x4x32xf32, #tpu.memory_space<vmem>>, vector<1x4x32xf32>
    %201 = vector.shape_cast %200 : vector<1x4x32xf32> to vector<4x32xf32>
    %202 = vector.shape_cast %157 : vector<4x32xf32> to vector<1x4x32xf32>
    tpu.vector_store %arg22[%c1_122, %c0_123, %c0_124], %202 {strides = array<i32>} : memref<8x4x32xf32, #tpu.memory_space<vmem>>, vector<1x4x32xf32>,
    %c2 = arith.constant 2 : index
    %c0_125 = arith.constant 0 : index
    %c0_126 = arith.constant 0 : index
    %203 = vector.load %arg0[%c2, %c0_125, %c0_126] : memref<8x4x4xf32, #tpu.memory_space<vmem>>, vector<1x4x4xf32>
    %204 = vector.shape_cast %203 : vector<1x4x4xf32> to vector<4x4xf32>
    %205 = tpu.concatenate %204, %140 in 1 : vector<4x4xf32>, vector<4x16xf32> -> vector<4x20xf32>
    %c0_127 = arith.constant 0 : index
    %c0_128 = arith.constant 0 : index
    %206 = vector.load %arg4[%c0_127, %c0_128] : memref<20x96xf32, #tpu.memory_space<vmem>>, vector<20x96xf32>
    %cst_129 = arith.constant dense<0.000000e+00> : vector<4x96xf32>
    %207 = tpu.matmul %205, %206, %cst_129 {dimension_numbers = #tpu.dot_dimension_numbers<[1], [0], [0], [1], [0, 0, 1, 1], [], []>} : vector<4x20xf32>, vector<20x96xf32>, vector<4x96xf32> -> vector<4x96xf32>
    %c0_130 = arith.constant 0 : index
    %c0_131 = arith.constant 0 : index
    %208 = vector.load %arg5[%c0_130, %c0_131] : memref<1x96xf32, #tpu.memory_space<vmem>>, vector<1x96xf32>
    %209 = vector.broadcast %208 : vector<1x96xf32> to vector<4x96xf32>
    %210 = arith.addf %207, %209 : vector<4x96xf32>
    %211 = vector.extract_strided_slice %210 {offsets = [0, 0], sizes = [4, 48], strides = [1, 1]} : vector<4x96xf32> to vector<4x48xf32>
    %212 = vector.extract_strided_slice %210 {offsets = [0, 48], sizes = [4, 48], strides = [1, 1]} : vector<4x96xf32> to vector<4x48xf32>
    %213 = vector.extract_strided_slice %211 {offsets = [0, 0], sizes = [4, 32], strides = [1, 1]} : vector<4x48xf32> to vector<4x32xf32>
    %214 = vector.extract_strided_slice %212 {offsets = [0, 0], sizes = [4, 32], strides = [1, 1]} : vector<4x48xf32> to vector<4x32xf32>
    %215 = arith.addf %213, %214 : vector<4x32xf32>
    %216 = arith.negf %215 : vector<4x32xf32>
    %217 = math.exp %216 : vector<4x32xf32>
    %cst_132 = arith.constant 1.000000e+00 : f32
    %218 = vector.broadcast %cst_132 : f32 to vector<4x32xf32>
    %219 = arith.addf %218, %217 : vector<4x32xf32>
    %220 = arith.divf %218, %219 : vector<4x32xf32>
    %221 = vector.extract_strided_slice %220 {offsets = [0, 0], sizes = [4, 16], strides = [1, 1]} : vector<4x32xf32> to vector<4x16xf32>
    %222 = vector.extract_strided_slice %220 {offsets = [0, 16], sizes = [4, 16], strides = [1, 1]} : vector<4x32xf32> to vector<4x16xf32>
    %223 = vector.extract_strided_slice %211 {offsets = [0, 32], sizes = [4, 16], strides = [1, 1]} : vector<4x48xf32> to vector<4x16xf32>
    %224 = vector.extract_strided_slice %212 {offsets = [0, 32], sizes = [4, 16], strides = [1, 1]} : vector<4x48xf32> to vector<4x16xf32>
    %225 = arith.mulf %221, %224 : vector<4x16xf32>
    %226 = arith.addf %223, %225 : vector<4x16xf32>
    %227 = math.tanh %226 : vector<4x16xf32>
    %cst_133 = arith.constant 1.000000e+00 : f32
    %228 = vector.broadcast %cst_133 : f32 to vector<4x16xf32>
    %229 = arith.subf %228, %222 : vector<4x16xf32>
    %230 = arith.mulf %229, %227 : vector<4x16xf32>
    %231 = arith.mulf %222, %140 : vector<4x16xf32>
    %232 = arith.addf %230, %231 : vector<4x16xf32>
    %c0_134 = arith.constant 0 : index
    %c0_135 = arith.constant 0 : index
    %233 = vector.load %arg7[%c0_134, %c0_135] : memref<16x32xf32, #tpu.memory_space<vmem>>, vector<16x32xf32>
    %cst_136 = arith.constant dense<0.000000e+00> : vector<4x32xf32>
    %234 = tpu.matmul %232, %233, %cst_136 {dimension_numbers = #tpu.dot_dimension_numbers<[1], [0], [0], [1], [0, 0, 1, 1], [], []>} : vector<4x16xf32>, vector<16x32xf32>, vector<4x32xf32> -> vector<4x32xf32>
    %235 = arith.addf %234, %5 : vector<4x32xf32>
    %cst_137 = arith.constant 0.000000e+00 : f32
    %236 = vector.broadcast %cst_137 : f32 to vector<4x32xf32>
    %237 = arith.maximumf %235, %236 : vector<4x32xf32>
    %c0_138 = arith.constant 0 : index
    %c0_139 = arith.constant 0 : index
    %238 = vector.load %arg9[%c0_138, %c0_139] : memref<32x32xf32, #tpu.memory_space<vmem>>, vector<32x32xf32>
    %cst_140 = arith.constant dense<0.000000e+00> : vector<4x32xf32>
    %239 = tpu.matmul %237, %238, %cst_140 {dimension_numbers = #tpu.dot_dimension_numbers<[1], [0], [0], [1], [0, 0, 1, 1], [], []>} : vector<4x32xf32>, vector<32x32xf32>, vector<4x32xf32> -> vector<4x32xf32>
    %c0_141 = arith.constant 0 : index
    %c0_142 = arith.constant 0 : index
    %240 = vector.load %arg10[%c0_141, %c0_142] : memref<1x32xf32, #tpu.memory_space<vmem>>, vector<1x32xf32>
    %241 = vector.broadcast %240 : vector<1x32xf32> to vector<4x32xf32>
    %242 = arith.addf %239, %241 : vector<4x32xf32>
    %cst_143 = arith.constant 0.000000e+00 : f32
    %243 = vector.broadcast %cst_143 : f32 to vector<4x32xf32>
    %244 = arith.maximumf %242, %243 : vector<4x32xf32>
    %c0_144 = arith.constant 0 : index
    %c0_145 = arith.constant 0 : index
    %245 = vector.load %arg11[%c0_144, %c0_145] : memref<32x32xf32, #tpu.memory_space<vmem>>, vector<32x32xf32>
    %cst_146 = arith.constant dense<0.000000e+00> : vector<4x32xf32>
    %246 = tpu.matmul %244, %245, %cst_146 {dimension_numbers = #tpu.dot_dimension_numbers<[1], [0], [0], [1], [0, 0, 1, 1], [], []>} : vector<4x32xf32>, vector<32x32xf32>, vector<4x32xf32> -> vector<4x32xf32>
    %c0_147 = arith.constant 0 : index
    %c0_148 = arith.constant 0 : index
    %247 = vector.load %arg12[%c0_147, %c0_148] : memref<1x32xf32, #tpu.memory_space<vmem>>, vector<1x32xf32>
    %248 = vector.broadcast %247 : vector<1x32xf32> to vector<4x32xf32>
    %249 = arith.addf %246, %248 : vector<4x32xf32>
    %c0_149 = arith.constant 0 : index
    %c0_150 = arith.constant 0 : index
    %250 = vector.load %arg14[%c0_149, %c0_150] : memref<16x8xf32, #tpu.memory_space<vmem>>, vector<16x8xf32>
    %cst_151 = arith.constant dense<0.000000e+00> : vector<4x8xf32>
    %251 = tpu.matmul %232, %250, %cst_151 {dimension_numbers = #tpu.dot_dimension_numbers<[1], [0], [0], [1], [0, 0, 1, 1], [], []>} : vector<4x16xf32>, vector<16x8xf32>, vector<4x8xf32> -> vector<4x8xf32>
    %252 = arith.addf %251, %11 : vector<4x8xf32>
    %cst_152 = arith.constant 0.000000e+00 : f32
    %253 = vector.broadcast %cst_152 : f32 to vector<4x8xf32>
    %254 = arith.maximumf %252, %253 : vector<4x8xf32>
    %c0_153 = arith.constant 0 : index
    %c0_154 = arith.constant 0 : index
    %255 = vector.load %arg16[%c0_153, %c0_154] : memref<8x1xf32, #tpu.memory_space<vmem>>, vector<8x1xf32>
    %cst_155 = arith.constant dense<0.000000e+00> : vector<4x1xf32>
    %256 = tpu.matmul %254, %255, %cst_155 {dimension_numbers = #tpu.dot_dimension_numbers<[1], [0], [0], [1], [0, 0, 1, 1], [], []>} : vector<4x8xf32>, vector<8x1xf32>, vector<4x1xf32> -> vector<4x1xf32>
    %c0_156 = arith.constant 0 : index
    %c0_157 = arith.constant 0 : index
    %257 = vector.load %arg17[%c0_156, %c0_157] : memref<1x1xf32, #tpu.memory_space<vmem>>, vector<1x1xf32>
    %258 = vector.broadcast %257 : vector<1x1xf32> to vector<4x1xf32>
    %259 = arith.addf %256, %258 : vector<4x1xf32>
    %cst_158 = arith.constant 6.000000e+00 : f32
    %260 = vector.broadcast %cst_158 : f32 to vector<4x1xf32>
    %261 = arith.divf %259, %260 : vector<4x1xf32>
    %cst_159 = arith.constant 5.000000e-01 : f32
    %262 = vector.broadcast %cst_159 : f32 to vector<4x1xf32>
    %263 = arith.addf %261, %262 : vector<4x1xf32>
    %cst_160 = arith.constant 0.000000e+00 : f32
    %cst_161 = arith.constant 1.000000e+00 : f32
    %264 = vector.broadcast %cst_160 : f32 to vector<4x1xf32>
    %265 = arith.maximumf %264, %263 : vector<4x1xf32>
    %266 = vector.broadcast %cst_161 : f32 to vector<4x1xf32>
    %267 = arith.minimumf %266, %265 : vector<4x1xf32>
    %268 = arith.addf %267, %16 : vector<4x1xf32>
    %269 = vector.broadcast %268 : vector<4x1xf32> to vector<4x32xf32>
    %270 = vector.broadcast %17 : vector<1x32xf32> to vector<4x32xf32>
    %271 = arith.subf %269, %270 : vector<4x32xf32>
    %272 = arith.mulf %271, %271 : vector<4x32xf32>
    %cst_162 = arith.constant 0.000000e+00 : f32
    %273 = vector.broadcast %cst_162 : f32 to vector<4x32xf32>
    %274 = arith.subf %273, %272 : vector<4x32xf32>
    %cst_163 = arith.constant 2.400000e-02 : f32
    %275 = vector.broadcast %cst_163 : f32 to vector<4x32xf32>
    %276 = arith.divf %274, %275 : vector<4x32xf32>
    %277 = math.exp %276 : vector<4x32xf32>
    %278 = vector.extract_strided_slice %277 {offsets = [0, 0], sizes = [4, 8], strides = [1, 1]} : vector<4x32xf32> to vector<4x8xf32>
    %cst_164 = arith.constant dense<0.000000e+00> : vector<4xf32>
    %279 = vector.multi_reduction <add>, %278, %cst_164 [1] : vector<4x8xf32> to vector<4xf32>
    %280 = vector.shape_cast %279 : vector<4xf32> to vector<4x1xf32>
    %281 = arith.mulf %249, %277 : vector<4x32xf32>
    %c0_165 = arith.constant 0 : index
    %c0_166 = arith.constant 0 : index
    %282 = vector.load %arg19[%c0_165, %c0_166] : memref<32x4xf32, #tpu.memory_space<vmem>>, vector<32x4xf32>
    %cst_167 = arith.constant dense<0.000000e+00> : vector<4x4xf32>
    %283 = tpu.matmul %281, %282, %cst_167 {dimension_numbers = #tpu.dot_dimension_numbers<[1], [0], [0], [1], [0, 0, 1, 1], [], []>} : vector<4x32xf32>, vector<32x4xf32>, vector<4x4xf32> -> vector<4x4xf32>
    %284 = vector.broadcast %280 : vector<4x1xf32> to vector<4x4xf32>
    %285 = arith.divf %283, %284 : vector<4x4xf32>
    %c2_168 = arith.constant 2 : index
    %c0_169 = arith.constant 0 : index
    %c0_170 = arith.constant 0 : index
    %286 = vector.load %arg20[%c2_168, %c0_169, %c0_170] : memref<8x4x4xf32, #tpu.memory_space<vmem>>, vector<1x4x4xf32>
    %287 = vector.shape_cast %286 : vector<1x4x4xf32> to vector<4x4xf32>
    %288 = vector.shape_cast %285 : vector<4x4xf32> to vector<1x4x4xf32>
    tpu.vector_store %arg20[%c2_168, %c0_169, %c0_170], %288 {strides = array<i32>} : memref<8x4x4xf32, #tpu.memory_space<vmem>>, vector<1x4x4xf32>,
    %c2_171 = arith.constant 2 : index
    %c0_172 = arith.constant 0 : index
    %c0_173 = arith.constant 0 : index
    %289 = vector.load %arg21[%c2_171, %c0_172, %c0_173] : memref<8x4x1xf32, #tpu.memory_space<vmem>>, vector<1x4x1xf32>
    %290 = vector.shape_cast %289 : vector<1x4x1xf32> to vector<4x1xf32>
    %291 = vector.shape_cast %268 : vector<4x1xf32> to vector<1x4x1xf32>
    tpu.vector_store %arg21[%c2_171, %c0_172, %c0_173], %291 {strides = array<i32>} : memref<8x4x1xf32, #tpu.memory_space<vmem>>, vector<1x4x1xf32>,
    %c2_174 = arith.constant 2 : index
    %c0_175 = arith.constant 0 : index
    %c0_176 = arith.constant 0 : index
    %292 = vector.load %arg22[%c2_174, %c0_175, %c0_176] : memref<8x4x32xf32, #tpu.memory_space<vmem>>, vector<1x4x32xf32>
    %293 = vector.shape_cast %292 : vector<1x4x32xf32> to vector<4x32xf32>
    %294 = vector.shape_cast %249 : vector<4x32xf32> to vector<1x4x32xf32>
    tpu.vector_store %arg22[%c2_174, %c0_175, %c0_176], %294 {strides = array<i32>} : memref<8x4x32xf32, #tpu.memory_space<vmem>>, vector<1x4x32xf32>,
    %c3 = arith.constant 3 : index
    %c0_177 = arith.constant 0 : index
    %c0_178 = arith.constant 0 : index
    %295 = vector.load %arg0[%c3, %c0_177, %c0_178] : memref<8x4x4xf32, #tpu.memory_space<vmem>>, vector<1x4x4xf32>
    %296 = vector.shape_cast %295 : vector<1x4x4xf32> to vector<4x4xf32>
    %297 = tpu.concatenate %296, %232 in 1 : vector<4x4xf32>, vector<4x16xf32> -> vector<4x20xf32>
    %c0_179 = arith.constant 0 : index
    %c0_180 = arith.constant 0 : index
    %298 = vector.load %arg4[%c0_179, %c0_180] : memref<20x96xf32, #tpu.memory_space<vmem>>, vector<20x96xf32>
    %cst_181 = arith.constant dense<0.000000e+00> : vector<4x96xf32>
    %299 = tpu.matmul %297, %298, %cst_181 {dimension_numbers = #tpu.dot_dimension_numbers<[1], [0], [0], [1], [0, 0, 1, 1], [], []>} : vector<4x20xf32>, vector<20x96xf32>, vector<4x96xf32> -> vector<4x96xf32>
    %c0_182 = arith.constant 0 : index
    %c0_183 = arith.constant 0 : index
    %300 = vector.load %arg5[%c0_182, %c0_183] : memref<1x96xf32, #tpu.memory_space<vmem>>, vector<1x96xf32>
    %301 = vector.broadcast %300 : vector<1x96xf32> to vector<4x96xf32>
    %302 = arith.addf %299, %301 : vector<4x96xf32>
    %303 = vector.extract_strided_slice %302 {offsets = [0, 0], sizes = [4, 48], strides = [1, 1]} : vector<4x96xf32> to vector<4x48xf32>
    %304 = vector.extract_strided_slice %302 {offsets = [0, 48], sizes = [4, 48], strides = [1, 1]} : vector<4x96xf32> to vector<4x48xf32>
    %305 = vector.extract_strided_slice %303 {offsets = [0, 0], sizes = [4, 32], strides = [1, 1]} : vector<4x48xf32> to vector<4x32xf32>
    %306 = vector.extract_strided_slice %304 {offsets = [0, 0], sizes = [4, 32], strides = [1, 1]} : vector<4x48xf32> to vector<4x32xf32>
    %307 = arith.addf %305, %306 : vector<4x32xf32>
    %308 = arith.negf %307 : vector<4x32xf32>
    %309 = math.exp %308 : vector<4x32xf32>
    %cst_184 = arith.constant 1.000000e+00 : f32
    %310 = vector.broadcast %cst_184 : f32 to vector<4x32xf32>
    %311 = arith.addf %310, %309 : vector<4x32xf32>
    %312 = arith.divf %310, %311 : vector<4x32xf32>
    %313 = vector.extract_strided_slice %312 {offsets = [0, 0], sizes = [4, 16], strides = [1, 1]} : vector<4x32xf32> to vector<4x16xf32>
    %314 = vector.extract_strided_slice %312 {offsets = [0, 16], sizes = [4, 16], strides = [1, 1]} : vector<4x32xf32> to vector<4x16xf32>
    %315 = vector.extract_strided_slice %303 {offsets = [0, 32], sizes = [4, 16], strides = [1, 1]} : vector<4x48xf32> to vector<4x16xf32>
    %316 = vector.extract_strided_slice %304 {offsets = [0, 32], sizes = [4, 16], strides = [1, 1]} : vector<4x48xf32> to vector<4x16xf32>
    %317 = arith.mulf %313, %316 : vector<4x16xf32>
    %318 = arith.addf %315, %317 : vector<4x16xf32>
    %319 = math.tanh %318 : vector<4x16xf32>
    %cst_185 = arith.constant 1.000000e+00 : f32
    %320 = vector.broadcast %cst_185 : f32 to vector<4x16xf32>
    %321 = arith.subf %320, %314 : vector<4x16xf32>
    %322 = arith.mulf %321, %319 : vector<4x16xf32>
    %323 = arith.mulf %314, %232 : vector<4x16xf32>
    %324 = arith.addf %322, %323 : vector<4x16xf32>
    %c0_186 = arith.constant 0 : index
    %c0_187 = arith.constant 0 : index
    %325 = vector.load %arg7[%c0_186, %c0_187] : memref<16x32xf32, #tpu.memory_space<vmem>>, vector<16x32xf32>
    %cst_188 = arith.constant dense<0.000000e+00> : vector<4x32xf32>
    %326 = tpu.matmul %324, %325, %cst_188 {dimension_numbers = #tpu.dot_dimension_numbers<[1], [0], [0], [1], [0, 0, 1, 1], [], []>} : vector<4x16xf32>, vector<16x32xf32>, vector<4x32xf32> -> vector<4x32xf32>
    %327 = arith.addf %326, %5 : vector<4x32xf32>
    %cst_189 = arith.constant 0.000000e+00 : f32
    %328 = vector.broadcast %cst_189 : f32 to vector<4x32xf32>
    %329 = arith.maximumf %327, %328 : vector<4x32xf32>
    %c0_190 = arith.constant 0 : index
    %c0_191 = arith.constant 0 : index
    %330 = vector.load %arg9[%c0_190, %c0_191] : memref<32x32xf32, #tpu.memory_space<vmem>>, vector<32x32xf32>
    %cst_192 = arith.constant dense<0.000000e+00> : vector<4x32xf32>
    %331 = tpu.matmul %329, %330, %cst_192 {dimension_numbers = #tpu.dot_dimension_numbers<[1], [0], [0], [1], [0, 0, 1, 1], [], []>} : vector<4x32xf32>, vector<32x32xf32>, vector<4x32xf32> -> vector<4x32xf32>
    %c0_193 = arith.constant 0 : index
    %c0_194 = arith.constant 0 : index
    %332 = vector.load %arg10[%c0_193, %c0_194] : memref<1x32xf32, #tpu.memory_space<vmem>>, vector<1x32xf32>
    %333 = vector.broadcast %332 : vector<1x32xf32> to vector<4x32xf32>
    %334 = arith.addf %331, %333 : vector<4x32xf32>
    %cst_195 = arith.constant 0.000000e+00 : f32
    %335 = vector.broadcast %cst_195 : f32 to vector<4x32xf32>
    %336 = arith.maximumf %334, %335 : vector<4x32xf32>
    %c0_196 = arith.constant 0 : index
    %c0_197 = arith.constant 0 : index
    %337 = vector.load %arg11[%c0_196, %c0_197] : memref<32x32xf32, #tpu.memory_space<vmem>>, vector<32x32xf32>
    %cst_198 = arith.constant dense<0.000000e+00> : vector<4x32xf32>
    %338 = tpu.matmul %336, %337, %cst_198 {dimension_numbers = #tpu.dot_dimension_numbers<[1], [0], [0], [1], [0, 0, 1, 1], [], []>} : vector<4x32xf32>, vector<32x32xf32>, vector<4x32xf32> -> vector<4x32xf32>
    %c0_199 = arith.constant 0 : index
    %c0_200 = arith.constant 0 : index
    %339 = vector.load %arg12[%c0_199, %c0_200] : memref<1x32xf32, #tpu.memory_space<vmem>>, vector<1x32xf32>
    %340 = vector.broadcast %339 : vector<1x32xf32> to vector<4x32xf32>
    %341 = arith.addf %338, %340 : vector<4x32xf32>
    %c0_201 = arith.constant 0 : index
    %c0_202 = arith.constant 0 : index
    %342 = vector.load %arg14[%c0_201, %c0_202] : memref<16x8xf32, #tpu.memory_space<vmem>>, vector<16x8xf32>
    %cst_203 = arith.constant dense<0.000000e+00> : vector<4x8xf32>
    %343 = tpu.matmul %324, %342, %cst_203 {dimension_numbers = #tpu.dot_dimension_numbers<[1], [0], [0], [1], [0, 0, 1, 1], [], []>} : vector<4x16xf32>, vector<16x8xf32>, vector<4x8xf32> -> vector<4x8xf32>
    %344 = arith.addf %343, %11 : vector<4x8xf32>
    %cst_204 = arith.constant 0.000000e+00 : f32
    %345 = vector.broadcast %cst_204 : f32 to vector<4x8xf32>
    %346 = arith.maximumf %344, %345 : vector<4x8xf32>
    %c0_205 = arith.constant 0 : index
    %c0_206 = arith.constant 0 : index
    %347 = vector.load %arg16[%c0_205, %c0_206] : memref<8x1xf32, #tpu.memory_space<vmem>>, vector<8x1xf32>
    %cst_207 = arith.constant dense<0.000000e+00> : vector<4x1xf32>
    %348 = tpu.matmul %346, %347, %cst_207 {dimension_numbers = #tpu.dot_dimension_numbers<[1], [0], [0], [1], [0, 0, 1, 1], [], []>} : vector<4x8xf32>, vector<8x1xf32>, vector<4x1xf32> -> vector<4x1xf32>
    %c0_208 = arith.constant 0 : index
    %c0_209 = arith.constant 0 : index
    %349 = vector.load %arg17[%c0_208, %c0_209] : memref<1x1xf32, #tpu.memory_space<vmem>>, vector<1x1xf32>
    %350 = vector.broadcast %349 : vector<1x1xf32> to vector<4x1xf32>
    %351 = arith.addf %348, %350 : vector<4x1xf32>
    %cst_210 = arith.constant 6.000000e+00 : f32
    %352 = vector.broadcast %cst_210 : f32 to vector<4x1xf32>
    %353 = arith.divf %351, %352 : vector<4x1xf32>
    %cst_211 = arith.constant 5.000000e-01 : f32
    %354 = vector.broadcast %cst_211 : f32 to vector<4x1xf32>
    %355 = arith.addf %353, %354 : vector<4x1xf32>
    %cst_212 = arith.constant 0.000000e+00 : f32
    %cst_213 = arith.constant 1.000000e+00 : f32
    %356 = vector.broadcast %cst_212 : f32 to vector<4x1xf32>
    %357 = arith.maximumf %356, %355 : vector<4x1xf32>
    %358 = vector.broadcast %cst_213 : f32 to vector<4x1xf32>
    %359 = arith.minimumf %358, %357 : vector<4x1xf32>
    %360 = arith.addf %359, %16 : vector<4x1xf32>
    %361 = vector.broadcast %360 : vector<4x1xf32> to vector<4x32xf32>
    %362 = vector.broadcast %17 : vector<1x32xf32> to vector<4x32xf32>
    %363 = arith.subf %361, %362 : vector<4x32xf32>
    %364 = arith.mulf %363, %363 : vector<4x32xf32>
    %cst_214 = arith.constant 0.000000e+00 : f32
    %365 = vector.broadcast %cst_214 : f32 to vector<4x32xf32>
    %366 = arith.subf %365, %364 : vector<4x32xf32>
    %cst_215 = arith.constant 2.400000e-02 : f32
    %367 = vector.broadcast %cst_215 : f32 to vector<4x32xf32>
    %368 = arith.divf %366, %367 : vector<4x32xf32>
    %369 = math.exp %368 : vector<4x32xf32>
    %370 = vector.extract_strided_slice %369 {offsets = [0, 0], sizes = [4, 8], strides = [1, 1]} : vector<4x32xf32> to vector<4x8xf32>
    %cst_216 = arith.constant dense<0.000000e+00> : vector<4xf32>
    %371 = vector.multi_reduction <add>, %370, %cst_216 [1] : vector<4x8xf32> to vector<4xf32>
    %372 = vector.shape_cast %371 : vector<4xf32> to vector<4x1xf32>
    %373 = arith.mulf %341, %369 : vector<4x32xf32>
    %c0_217 = arith.constant 0 : index
    %c0_218 = arith.constant 0 : index
    %374 = vector.load %arg19[%c0_217, %c0_218] : memref<32x4xf32, #tpu.memory_space<vmem>>, vector<32x4xf32>
    %cst_219 = arith.constant dense<0.000000e+00> : vector<4x4xf32>
    %375 = tpu.matmul %373, %374, %cst_219 {dimension_numbers = #tpu.dot_dimension_numbers<[1], [0], [0], [1], [0, 0, 1, 1], [], []>} : vector<4x32xf32>, vector<32x4xf32>, vector<4x4xf32> -> vector<4x4xf32>
    %376 = vector.broadcast %372 : vector<4x1xf32> to vector<4x4xf32>
    %377 = arith.divf %375, %376 : vector<4x4xf32>
    %c3_220 = arith.constant 3 : index
    %c0_221 = arith.constant 0 : index
    %c0_222 = arith.constant 0 : index
    %378 = vector.load %arg20[%c3_220, %c0_221, %c0_222] : memref<8x4x4xf32, #tpu.memory_space<vmem>>, vector<1x4x4xf32>
    %379 = vector.shape_cast %378 : vector<1x4x4xf32> to vector<4x4xf32>
    %380 = vector.shape_cast %377 : vector<4x4xf32> to vector<1x4x4xf32>
    tpu.vector_store %arg20[%c3_220, %c0_221, %c0_222], %380 {strides = array<i32>} : memref<8x4x4xf32, #tpu.memory_space<vmem>>, vector<1x4x4xf32>,
    %c3_223 = arith.constant 3 : index
    %c0_224 = arith.constant 0 : index
    %c0_225 = arith.constant 0 : index
    %381 = vector.load %arg21[%c3_223, %c0_224, %c0_225] : memref<8x4x1xf32, #tpu.memory_space<vmem>>, vector<1x4x1xf32>
    %382 = vector.shape_cast %381 : vector<1x4x1xf32> to vector<4x1xf32>
    %383 = vector.shape_cast %360 : vector<4x1xf32> to vector<1x4x1xf32>
    tpu.vector_store %arg21[%c3_223, %c0_224, %c0_225], %383 {strides = array<i32>} : memref<8x4x1xf32, #tpu.memory_space<vmem>>, vector<1x4x1xf32>,
    %c3_226 = arith.constant 3 : index
    %c0_227 = arith.constant 0 : index
    %c0_228 = arith.constant 0 : index
    %384 = vector.load %arg22[%c3_226, %c0_227, %c0_228] : memref<8x4x32xf32, #tpu.memory_space<vmem>>, vector<1x4x32xf32>
    %385 = vector.shape_cast %384 : vector<1x4x32xf32> to vector<4x32xf32>
    %386 = vector.shape_cast %341 : vector<4x32xf32> to vector<1x4x32xf32>
    tpu.vector_store %arg22[%c3_226, %c0_227, %c0_228], %386 {strides = array<i32>} : memref<8x4x32xf32, #tpu.memory_space<vmem>>, vector<1x4x32xf32>,
    %c4 = arith.constant 4 : index
    %c0_229 = arith.constant 0 : index
    %c0_230 = arith.constant 0 : index
    %387 = vector.load %arg0[%c4, %c0_229, %c0_230] : memref<8x4x4xf32, #tpu.memory_space<vmem>>, vector<1x4x4xf32>
    %388 = vector.shape_cast %387 : vector<1x4x4xf32> to vector<4x4xf32>
    %389 = tpu.concatenate %388, %324 in 1 : vector<4x4xf32>, vector<4x16xf32> -> vector<4x20xf32>
    %c0_231 = arith.constant 0 : index
    %c0_232 = arith.constant 0 : index
    %390 = vector.load %arg4[%c0_231, %c0_232] : memref<20x96xf32, #tpu.memory_space<vmem>>, vector<20x96xf32>
    %cst_233 = arith.constant dense<0.000000e+00> : vector<4x96xf32>
    %391 = tpu.matmul %389, %390, %cst_233 {dimension_numbers = #tpu.dot_dimension_numbers<[1], [0], [0], [1], [0, 0, 1, 1], [], []>} : vector<4x20xf32>, vector<20x96xf32>, vector<4x96xf32> -> vector<4x96xf32>
    %c0_234 = arith.constant 0 : index
    %c0_235 = arith.constant 0 : index
    %392 = vector.load %arg5[%c0_234, %c0_235] : memref<1x96xf32, #tpu.memory_space<vmem>>, vector<1x96xf32>
    %393 = vector.broadcast %392 : vector<1x96xf32> to vector<4x96xf32>
    %394 = arith.addf %391, %393 : vector<4x96xf32>
    %395 = vector.extract_strided_slice %394 {offsets = [0, 0], sizes = [4, 48], strides = [1, 1]} : vector<4x96xf32> to vector<4x48xf32>
    %396 = vector.extract_strided_slice %394 {offsets = [0, 48], sizes = [4, 48], strides = [1, 1]} : vector<4x96xf32> to vector<4x48xf32>
    %397 = vector.extract_strided_slice %395 {offsets = [0, 0], sizes = [4, 32], strides = [1, 1]} : vector<4x48xf32> to vector<4x32xf32>
    %398 = vector.extract_strided_slice %396 {offsets = [0, 0], sizes = [4, 32], strides = [1, 1]} : vector<4x48xf32> to vector<4x32xf32>
    %399 = arith.addf %397, %398 : vector<4x32xf32>
    %400 = arith.negf %399 : vector<4x32xf32>
    %401 = math.exp %400 : vector<4x32xf32>
    %cst_236 = arith.constant 1.000000e+00 : f32
    %402 = vector.broadcast %cst_236 : f32 to vector<4x32xf32>
    %403 = arith.addf %402, %401 : vector<4x32xf32>
    %404 = arith.divf %402, %403 : vector<4x32xf32>
    %405 = vector.extract_strided_slice %404 {offsets = [0, 0], sizes = [4, 16], strides = [1, 1]} : vector<4x32xf32> to vector<4x16xf32>
    %406 = vector.extract_strided_slice %404 {offsets = [0, 16], sizes = [4, 16], strides = [1, 1]} : vector<4x32xf32> to vector<4x16xf32>
    %407 = vector.extract_strided_slice %395 {offsets = [0, 32], sizes = [4, 16], strides = [1, 1]} : vector<4x48xf32> to vector<4x16xf32>
    %408 = vector.extract_strided_slice %396 {offsets = [0, 32], sizes = [4, 16], strides = [1, 1]} : vector<4x48xf32> to vector<4x16xf32>
    %409 = arith.mulf %405, %408 : vector<4x16xf32>
    %410 = arith.addf %407, %409 : vector<4x16xf32>
    %411 = math.tanh %410 : vector<4x16xf32>
    %cst_237 = arith.constant 1.000000e+00 : f32
    %412 = vector.broadcast %cst_237 : f32 to vector<4x16xf32>
    %413 = arith.subf %412, %406 : vector<4x16xf32>
    %414 = arith.mulf %413, %411 : vector<4x16xf32>
    %415 = arith.mulf %406, %324 : vector<4x16xf32>
    %416 = arith.addf %414, %415 : vector<4x16xf32>
    %c0_238 = arith.constant 0 : index
    %c0_239 = arith.constant 0 : index
    %417 = vector.load %arg7[%c0_238, %c0_239] : memref<16x32xf32, #tpu.memory_space<vmem>>, vector<16x32xf32>
    %cst_240 = arith.constant dense<0.000000e+00> : vector<4x32xf32>
    %418 = tpu.matmul %416, %417, %cst_240 {dimension_numbers = #tpu.dot_dimension_numbers<[1], [0], [0], [1], [0, 0, 1, 1], [], []>} : vector<4x16xf32>, vector<16x32xf32>, vector<4x32xf32> -> vector<4x32xf32>
    %419 = arith.addf %418, %5 : vector<4x32xf32>
    %cst_241 = arith.constant 0.000000e+00 : f32
    %420 = vector.broadcast %cst_241 : f32 to vector<4x32xf32>
    %421 = arith.maximumf %419, %420 : vector<4x32xf32>
    %c0_242 = arith.constant 0 : index
    %c0_243 = arith.constant 0 : index
    %422 = vector.load %arg9[%c0_242, %c0_243] : memref<32x32xf32, #tpu.memory_space<vmem>>, vector<32x32xf32>
    %cst_244 = arith.constant dense<0.000000e+00> : vector<4x32xf32>
    %423 = tpu.matmul %421, %422, %cst_244 {dimension_numbers = #tpu.dot_dimension_numbers<[1], [0], [0], [1], [0, 0, 1, 1], [], []>} : vector<4x32xf32>, vector<32x32xf32>, vector<4x32xf32> -> vector<4x32xf32>
    %c0_245 = arith.constant 0 : index
    %c0_246 = arith.constant 0 : index
    %424 = vector.load %arg10[%c0_245, %c0_246] : memref<1x32xf32, #tpu.memory_space<vmem>>, vector<1x32xf32>
    %425 = vector.broadcast %424 : vector<1x32xf32> to vector<4x32xf32>
    %426 = arith.addf %423, %425 : vector<4x32xf32>
    %cst_247 = arith.constant 0.000000e+00 : f32
    %427 = vector.broadcast %cst_247 : f32 to vector<4x32xf32>
    %428 = arith.maximumf %426, %427 : vector<4x32xf32>
    %c0_248 = arith.constant 0 : index
    %c0_249 = arith.constant 0 : index
    %429 = vector.load %arg11[%c0_248, %c0_249] : memref<32x32xf32, #tpu.memory_space<vmem>>, vector<32x32xf32>
    %cst_250 = arith.constant dense<0.000000e+00> : vector<4x32xf32>
    %430 = tpu.matmul %428, %429, %cst_250 {dimension_numbers = #tpu.dot_dimension_numbers<[1], [0], [0], [1], [0, 0, 1, 1], [], []>} : vector<4x32xf32>, vector<32x32xf32>, vector<4x32xf32> -> vector<4x32xf32>
    %c0_251 = arith.constant 0 : index
    %c0_252 = arith.constant 0 : index
    %431 = vector.load %arg12[%c0_251, %c0_252] : memref<1x32xf32, #tpu.memory_space<vmem>>, vector<1x32xf32>
    %432 = vector.broadcast %431 : vector<1x32xf32> to vector<4x32xf32>
    %433 = arith.addf %430, %432 : vector<4x32xf32>
    %c0_253 = arith.constant 0 : index
    %c0_254 = arith.constant 0 : index
    %434 = vector.load %arg14[%c0_253, %c0_254] : memref<16x8xf32, #tpu.memory_space<vmem>>, vector<16x8xf32>
    %cst_255 = arith.constant dense<0.000000e+00> : vector<4x8xf32>
    %435 = tpu.matmul %416, %434, %cst_255 {dimension_numbers = #tpu.dot_dimension_numbers<[1], [0], [0], [1], [0, 0, 1, 1], [], []>} : vector<4x16xf32>, vector<16x8xf32>, vector<4x8xf32> -> vector<4x8xf32>
    %436 = arith.addf %435, %11 : vector<4x8xf32>
    %cst_256 = arith.constant 0.000000e+00 : f32
    %437 = vector.broadcast %cst_256 : f32 to vector<4x8xf32>
    %438 = arith.maximumf %436, %437 : vector<4x8xf32>
    %c0_257 = arith.constant 0 : index
    %c0_258 = arith.constant 0 : index
    %439 = vector.load %arg16[%c0_257, %c0_258] : memref<8x1xf32, #tpu.memory_space<vmem>>, vector<8x1xf32>
    %cst_259 = arith.constant dense<0.000000e+00> : vector<4x1xf32>
    %440 = tpu.matmul %438, %439, %cst_259 {dimension_numbers = #tpu.dot_dimension_numbers<[1], [0], [0], [1], [0, 0, 1, 1], [], []>} : vector<4x8xf32>, vector<8x1xf32>, vector<4x1xf32> -> vector<4x1xf32>
    %c0_260 = arith.constant 0 : index
    %c0_261 = arith.constant 0 : index
    %441 = vector.load %arg17[%c0_260, %c0_261] : memref<1x1xf32, #tpu.memory_space<vmem>>, vector<1x1xf32>
    %442 = vector.broadcast %441 : vector<1x1xf32> to vector<4x1xf32>
    %443 = arith.addf %440, %442 : vector<4x1xf32>
    %cst_262 = arith.constant 6.000000e+00 : f32
    %444 = vector.broadcast %cst_262 : f32 to vector<4x1xf32>
    %445 = arith.divf %443, %444 : vector<4x1xf32>
    %cst_263 = arith.constant 5.000000e-01 : f32
    %446 = vector.broadcast %cst_263 : f32 to vector<4x1xf32>
    %447 = arith.addf %445, %446 : vector<4x1xf32>
    %cst_264 = arith.constant 0.000000e+00 : f32
    %cst_265 = arith.constant 1.000000e+00 : f32
    %448 = vector.broadcast %cst_264 : f32 to vector<4x1xf32>
    %449 = arith.maximumf %448, %447 : vector<4x1xf32>
    %450 = vector.broadcast %cst_265 : f32 to vector<4x1xf32>
    %451 = arith.minimumf %450, %449 : vector<4x1xf32>
    %452 = arith.addf %451, %16 : vector<4x1xf32>
    %453 = vector.broadcast %452 : vector<4x1xf32> to vector<4x32xf32>
    %454 = vector.broadcast %17 : vector<1x32xf32> to vector<4x32xf32>
    %455 = arith.subf %453, %454 : vector<4x32xf32>
    %456 = arith.mulf %455, %455 : vector<4x32xf32>
    %cst_266 = arith.constant 0.000000e+00 : f32
    %457 = vector.broadcast %cst_266 : f32 to vector<4x32xf32>
    %458 = arith.subf %457, %456 : vector<4x32xf32>
    %cst_267 = arith.constant 2.400000e-02 : f32
    %459 = vector.broadcast %cst_267 : f32 to vector<4x32xf32>
    %460 = arith.divf %458, %459 : vector<4x32xf32>
    %461 = math.exp %460 : vector<4x32xf32>
    %462 = vector.extract_strided_slice %461 {offsets = [0, 0], sizes = [4, 8], strides = [1, 1]} : vector<4x32xf32> to vector<4x8xf32>
    %cst_268 = arith.constant dense<0.000000e+00> : vector<4xf32>
    %463 = vector.multi_reduction <add>, %462, %cst_268 [1] : vector<4x8xf32> to vector<4xf32>
    %464 = vector.shape_cast %463 : vector<4xf32> to vector<4x1xf32>
    %465 = arith.mulf %433, %461 : vector<4x32xf32>
    %c0_269 = arith.constant 0 : index
    %c0_270 = arith.constant 0 : index
    %466 = vector.load %arg19[%c0_269, %c0_270] : memref<32x4xf32, #tpu.memory_space<vmem>>, vector<32x4xf32>
    %cst_271 = arith.constant dense<0.000000e+00> : vector<4x4xf32>
    %467 = tpu.matmul %465, %466, %cst_271 {dimension_numbers = #tpu.dot_dimension_numbers<[1], [0], [0], [1], [0, 0, 1, 1], [], []>} : vector<4x32xf32>, vector<32x4xf32>, vector<4x4xf32> -> vector<4x4xf32>
    %468 = vector.broadcast %464 : vector<4x1xf32> to vector<4x4xf32>
    %469 = arith.divf %467, %468 : vector<4x4xf32>
    %c4_272 = arith.constant 4 : index
    %c0_273 = arith.constant 0 : index
    %c0_274 = arith.constant 0 : index
    %470 = vector.load %arg20[%c4_272, %c0_273, %c0_274] : memref<8x4x4xf32, #tpu.memory_space<vmem>>, vector<1x4x4xf32>
    %471 = vector.shape_cast %470 : vector<1x4x4xf32> to vector<4x4xf32>
    %472 = vector.shape_cast %469 : vector<4x4xf32> to vector<1x4x4xf32>
    tpu.vector_store %arg20[%c4_272, %c0_273, %c0_274], %472 {strides = array<i32>} : memref<8x4x4xf32, #tpu.memory_space<vmem>>, vector<1x4x4xf32>,
    %c4_275 = arith.constant 4 : index
    %c0_276 = arith.constant 0 : index
    %c0_277 = arith.constant 0 : index
    %473 = vector.load %arg21[%c4_275, %c0_276, %c0_277] : memref<8x4x1xf32, #tpu.memory_space<vmem>>, vector<1x4x1xf32>
    %474 = vector.shape_cast %473 : vector<1x4x1xf32> to vector<4x1xf32>
    %475 = vector.shape_cast %452 : vector<4x1xf32> to vector<1x4x1xf32>
    tpu.vector_store %arg21[%c4_275, %c0_276, %c0_277], %475 {strides = array<i32>} : memref<8x4x1xf32, #tpu.memory_space<vmem>>, vector<1x4x1xf32>,
    %c4_278 = arith.constant 4 : index
    %c0_279 = arith.constant 0 : index
    %c0_280 = arith.constant 0 : index
    %476 = vector.load %arg22[%c4_278, %c0_279, %c0_280] : memref<8x4x32xf32, #tpu.memory_space<vmem>>, vector<1x4x32xf32>
    %477 = vector.shape_cast %476 : vector<1x4x32xf32> to vector<4x32xf32>
    %478 = vector.shape_cast %433 : vector<4x32xf32> to vector<1x4x32xf32>
    tpu.vector_store %arg22[%c4_278, %c0_279, %c0_280], %478 {strides = array<i32>} : memref<8x4x32xf32, #tpu.memory_space<vmem>>, vector<1x4x32xf32>,
    %c5 = arith.constant 5 : index
    %c0_281 = arith.constant 0 : index
    %c0_282 = arith.constant 0 : index
    %479 = vector.load %arg0[%c5, %c0_281, %c0_282] : memref<8x4x4xf32, #tpu.memory_space<vmem>>, vector<1x4x4xf32>
    %480 = vector.shape_cast %479 : vector<1x4x4xf32> to vector<4x4xf32>
    %481 = tpu.concatenate %480, %416 in 1 : vector<4x4xf32>, vector<4x16xf32> -> vector<4x20xf32>
    %c0_283 = arith.constant 0 : index
    %c0_284 = arith.constant 0 : index
    %482 = vector.load %arg4[%c0_283, %c0_284] : memref<20x96xf32, #tpu.memory_space<vmem>>, vector<20x96xf32>
    %cst_285 = arith.constant dense<0.000000e+00> : vector<4x96xf32>
    %483 = tpu.matmul %481, %482, %cst_285 {dimension_numbers = #tpu.dot_dimension_numbers<[1], [0], [0], [1], [0, 0, 1, 1], [], []>} : vector<4x20xf32>, vector<20x96xf32>, vector<4x96xf32> -> vector<4x96xf32>
    %c0_286 = arith.constant 0 : index
    %c0_287 = arith.constant 0 : index
    %484 = vector.load %arg5[%c0_286, %c0_287] : memref<1x96xf32, #tpu.memory_space<vmem>>, vector<1x96xf32>
    %485 = vector.broadcast %484 : vector<1x96xf32> to vector<4x96xf32>
    %486 = arith.addf %483, %485 : vector<4x96xf32>
    %487 = vector.extract_strided_slice %486 {offsets = [0, 0], sizes = [4, 48], strides = [1, 1]} : vector<4x96xf32> to vector<4x48xf32>
    %488 = vector.extract_strided_slice %486 {offsets = [0, 48], sizes = [4, 48], strides = [1, 1]} : vector<4x96xf32> to vector<4x48xf32>
    %489 = vector.extract_strided_slice %487 {offsets = [0, 0], sizes = [4, 32], strides = [1, 1]} : vector<4x48xf32> to vector<4x32xf32>
    %490 = vector.extract_strided_slice %488 {offsets = [0, 0], sizes = [4, 32], strides = [1, 1]} : vector<4x48xf32> to vector<4x32xf32>
    %491 = arith.addf %489, %490 : vector<4x32xf32>
    %492 = arith.negf %491 : vector<4x32xf32>
    %493 = math.exp %492 : vector<4x32xf32>
    %cst_288 = arith.constant 1.000000e+00 : f32
    %494 = vector.broadcast %cst_288 : f32 to vector<4x32xf32>
    %495 = arith.addf %494, %493 : vector<4x32xf32>
    %496 = arith.divf %494, %495 : vector<4x32xf32>
    %497 = vector.extract_strided_slice %496 {offsets = [0, 0], sizes = [4, 16], strides = [1, 1]} : vector<4x32xf32> to vector<4x16xf32>
    %498 = vector.extract_strided_slice %496 {offsets = [0, 16], sizes = [4, 16], strides = [1, 1]} : vector<4x32xf32> to vector<4x16xf32>
    %499 = vector.extract_strided_slice %487 {offsets = [0, 32], sizes = [4, 16], strides = [1, 1]} : vector<4x48xf32> to vector<4x16xf32>
    %500 = vector.extract_strided_slice %488 {offsets = [0, 32], sizes = [4, 16], strides = [1, 1]} : vector<4x48xf32> to vector<4x16xf32>
    %501 = arith.mulf %497, %500 : vector<4x16xf32>
    %502 = arith.addf %499, %501 : vector<4x16xf32>
    %503 = math.tanh %502 : vector<4x16xf32>
    %cst_289 = arith.constant 1.000000e+00 : f32
    %504 = vector.broadcast %cst_289 : f32 to vector<4x16xf32>
    %505 = arith.subf %504, %498 : vector<4x16xf32>
    %506 = arith.mulf %505, %503 : vector<4x16xf32>
    %507 = arith.mulf %498, %416 : vector<4x16xf32>
    %508 = arith.addf %506, %507 : vector<4x16xf32>
    %c0_290 = arith.constant 0 : index
    %c0_291 = arith.constant 0 : index
    %509 = vector.load %arg7[%c0_290, %c0_291] : memref<16x32xf32, #tpu.memory_space<vmem>>, vector<16x32xf32>
    %cst_292 = arith.constant dense<0.000000e+00> : vector<4x32xf32>
    %510 = tpu.matmul %508, %509, %cst_292 {dimension_numbers = #tpu.dot_dimension_numbers<[1], [0], [0], [1], [0, 0, 1, 1], [], []>} : vector<4x16xf32>, vector<16x32xf32>, vector<4x32xf32> -> vector<4x32xf32>
    %511 = arith.addf %510, %5 : vector<4x32xf32>
    %cst_293 = arith.constant 0.000000e+00 : f32
    %512 = vector.broadcast %cst_293 : f32 to vector<4x32xf32>
    %513 = arith.maximumf %511, %512 : vector<4x32xf32>
    %c0_294 = arith.constant 0 : index
    %c0_295 = arith.constant 0 : index
    %514 = vector.load %arg9[%c0_294, %c0_295] : memref<32x32xf32, #tpu.memory_space<vmem>>, vector<32x32xf32>
    %cst_296 = arith.constant dense<0.000000e+00> : vector<4x32xf32>
    %515 = tpu.matmul %513, %514, %cst_296 {dimension_numbers = #tpu.dot_dimension_numbers<[1], [0], [0], [1], [0, 0, 1, 1], [], []>} : vector<4x32xf32>, vector<32x32xf32>, vector<4x32xf32> -> vector<4x32xf32>
    %c0_297 = arith.constant 0 : index
    %c0_298 = arith.constant 0 : index
    %516 = vector.load %arg10[%c0_297, %c0_298] : memref<1x32xf32, #tpu.memory_space<vmem>>, vector<1x32xf32>
    %517 = vector.broadcast %516 : vector<1x32xf32> to vector<4x32xf32>
    %518 = arith.addf %515, %517 : vector<4x32xf32>
    %cst_299 = arith.constant 0.000000e+00 : f32
    %519 = vector.broadcast %cst_299 : f32 to vector<4x32xf32>
    %520 = arith.maximumf %518, %519 : vector<4x32xf32>
    %c0_300 = arith.constant 0 : index
    %c0_301 = arith.constant 0 : index
    %521 = vector.load %arg11[%c0_300, %c0_301] : memref<32x32xf32, #tpu.memory_space<vmem>>, vector<32x32xf32>
    %cst_302 = arith.constant dense<0.000000e+00> : vector<4x32xf32>
    %522 = tpu.matmul %520, %521, %cst_302 {dimension_numbers = #tpu.dot_dimension_numbers<[1], [0], [0], [1], [0, 0, 1, 1], [], []>} : vector<4x32xf32>, vector<32x32xf32>, vector<4x32xf32> -> vector<4x32xf32>
    %c0_303 = arith.constant 0 : index
    %c0_304 = arith.constant 0 : index
    %523 = vector.load %arg12[%c0_303, %c0_304] : memref<1x32xf32, #tpu.memory_space<vmem>>, vector<1x32xf32>
    %524 = vector.broadcast %523 : vector<1x32xf32> to vector<4x32xf32>
    %525 = arith.addf %522, %524 : vector<4x32xf32>
    %c0_305 = arith.constant 0 : index
    %c0_306 = arith.constant 0 : index
    %526 = vector.load %arg14[%c0_305, %c0_306] : memref<16x8xf32, #tpu.memory_space<vmem>>, vector<16x8xf32>
    %cst_307 = arith.constant dense<0.000000e+00> : vector<4x8xf32>
    %527 = tpu.matmul %508, %526, %cst_307 {dimension_numbers = #tpu.dot_dimension_numbers<[1], [0], [0], [1], [0, 0, 1, 1], [], []>} : vector<4x16xf32>, vector<16x8xf32>, vector<4x8xf32> -> vector<4x8xf32>
    %528 = arith.addf %527, %11 : vector<4x8xf32>
    %cst_308 = arith.constant 0.000000e+00 : f32
    %529 = vector.broadcast %cst_308 : f32 to vector<4x8xf32>
    %530 = arith.maximumf %528, %529 : vector<4x8xf32>
    %c0_309 = arith.constant 0 : index
    %c0_310 = arith.constant 0 : index
    %531 = vector.load %arg16[%c0_309, %c0_310] : memref<8x1xf32, #tpu.memory_space<vmem>>, vector<8x1xf32>
    %cst_311 = arith.constant dense<0.000000e+00> : vector<4x1xf32>
    %532 = tpu.matmul %530, %531, %cst_311 {dimension_numbers = #tpu.dot_dimension_numbers<[1], [0], [0], [1], [0, 0, 1, 1], [], []>} : vector<4x8xf32>, vector<8x1xf32>, vector<4x1xf32> -> vector<4x1xf32>
    %c0_312 = arith.constant 0 : index
    %c0_313 = arith.constant 0 : index
    %533 = vector.load %arg17[%c0_312, %c0_313] : memref<1x1xf32, #tpu.memory_space<vmem>>, vector<1x1xf32>
    %534 = vector.broadcast %533 : vector<1x1xf32> to vector<4x1xf32>
    %535 = arith.addf %532, %534 : vector<4x1xf32>
    %cst_314 = arith.constant 6.000000e+00 : f32
    %536 = vector.broadcast %cst_314 : f32 to vector<4x1xf32>
    %537 = arith.divf %535, %536 : vector<4x1xf32>
    %cst_315 = arith.constant 5.000000e-01 : f32
    %538 = vector.broadcast %cst_315 : f32 to vector<4x1xf32>
    %539 = arith.addf %537, %538 : vector<4x1xf32>
    %cst_316 = arith.constant 0.000000e+00 : f32
    %cst_317 = arith.constant 1.000000e+00 : f32
    %540 = vector.broadcast %cst_316 : f32 to vector<4x1xf32>
    %541 = arith.maximumf %540, %539 : vector<4x1xf32>
    %542 = vector.broadcast %cst_317 : f32 to vector<4x1xf32>
    %543 = arith.minimumf %542, %541 : vector<4x1xf32>
    %544 = arith.addf %543, %16 : vector<4x1xf32>
    %545 = vector.broadcast %544 : vector<4x1xf32> to vector<4x32xf32>
    %546 = vector.broadcast %17 : vector<1x32xf32> to vector<4x32xf32>
    %547 = arith.subf %545, %546 : vector<4x32xf32>
    %548 = arith.mulf %547, %547 : vector<4x32xf32>
    %cst_318 = arith.constant 0.000000e+00 : f32
    %549 = vector.broadcast %cst_318 : f32 to vector<4x32xf32>
    %550 = arith.subf %549, %548 : vector<4x32xf32>
    %cst_319 = arith.constant 2.400000e-02 : f32
    %551 = vector.broadcast %cst_319 : f32 to vector<4x32xf32>
    %552 = arith.divf %550, %551 : vector<4x32xf32>
    %553 = math.exp %552 : vector<4x32xf32>
    %554 = vector.extract_strided_slice %553 {offsets = [0, 0], sizes = [4, 8], strides = [1, 1]} : vector<4x32xf32> to vector<4x8xf32>
    %cst_320 = arith.constant dense<0.000000e+00> : vector<4xf32>
    %555 = vector.multi_reduction <add>, %554, %cst_320 [1] : vector<4x8xf32> to vector<4xf32>
    %556 = vector.shape_cast %555 : vector<4xf32> to vector<4x1xf32>
    %557 = arith.mulf %525, %553 : vector<4x32xf32>
    %c0_321 = arith.constant 0 : index
    %c0_322 = arith.constant 0 : index
    %558 = vector.load %arg19[%c0_321, %c0_322] : memref<32x4xf32, #tpu.memory_space<vmem>>, vector<32x4xf32>
    %cst_323 = arith.constant dense<0.000000e+00> : vector<4x4xf32>
    %559 = tpu.matmul %557, %558, %cst_323 {dimension_numbers = #tpu.dot_dimension_numbers<[1], [0], [0], [1], [0, 0, 1, 1], [], []>} : vector<4x32xf32>, vector<32x4xf32>, vector<4x4xf32> -> vector<4x4xf32>
    %560 = vector.broadcast %556 : vector<4x1xf32> to vector<4x4xf32>
    %561 = arith.divf %559, %560 : vector<4x4xf32>
    %c5_324 = arith.constant 5 : index
    %c0_325 = arith.constant 0 : index
    %c0_326 = arith.constant 0 : index
    %562 = vector.load %arg20[%c5_324, %c0_325, %c0_326] : memref<8x4x4xf32, #tpu.memory_space<vmem>>, vector<1x4x4xf32>
    %563 = vector.shape_cast %562 : vector<1x4x4xf32> to vector<4x4xf32>
    %564 = vector.shape_cast %561 : vector<4x4xf32> to vector<1x4x4xf32>
    tpu.vector_store %arg20[%c5_324, %c0_325, %c0_326], %564 {strides = array<i32>} : memref<8x4x4xf32, #tpu.memory_space<vmem>>, vector<1x4x4xf32>,
    %c5_327 = arith.constant 5 : index
    %c0_328 = arith.constant 0 : index
    %c0_329 = arith.constant 0 : index
    %565 = vector.load %arg21[%c5_327, %c0_328, %c0_329] : memref<8x4x1xf32, #tpu.memory_space<vmem>>, vector<1x4x1xf32>
    %566 = vector.shape_cast %565 : vector<1x4x1xf32> to vector<4x1xf32>
    %567 = vector.shape_cast %544 : vector<4x1xf32> to vector<1x4x1xf32>
    tpu.vector_store %arg21[%c5_327, %c0_328, %c0_329], %567 {strides = array<i32>} : memref<8x4x1xf32, #tpu.memory_space<vmem>>, vector<1x4x1xf32>,
    %c5_330 = arith.constant 5 : index
    %c0_331 = arith.constant 0 : index
    %c0_332 = arith.constant 0 : index
    %568 = vector.load %arg22[%c5_330, %c0_331, %c0_332] : memref<8x4x32xf32, #tpu.memory_space<vmem>>, vector<1x4x32xf32>
    %569 = vector.shape_cast %568 : vector<1x4x32xf32> to vector<4x32xf32>
    %570 = vector.shape_cast %525 : vector<4x32xf32> to vector<1x4x32xf32>
    tpu.vector_store %arg22[%c5_330, %c0_331, %c0_332], %570 {strides = array<i32>} : memref<8x4x32xf32, #tpu.memory_space<vmem>>, vector<1x4x32xf32>,
    %c6 = arith.constant 6 : index
    %c0_333 = arith.constant 0 : index
    %c0_334 = arith.constant 0 : index
    %571 = vector.load %arg0[%c6, %c0_333, %c0_334] : memref<8x4x4xf32, #tpu.memory_space<vmem>>, vector<1x4x4xf32>
    %572 = vector.shape_cast %571 : vector<1x4x4xf32> to vector<4x4xf32>
    %573 = tpu.concatenate %572, %508 in 1 : vector<4x4xf32>, vector<4x16xf32> -> vector<4x20xf32>
    %c0_335 = arith.constant 0 : index
    %c0_336 = arith.constant 0 : index
    %574 = vector.load %arg4[%c0_335, %c0_336] : memref<20x96xf32, #tpu.memory_space<vmem>>, vector<20x96xf32>
    %cst_337 = arith.constant dense<0.000000e+00> : vector<4x96xf32>
    %575 = tpu.matmul %573, %574, %cst_337 {dimension_numbers = #tpu.dot_dimension_numbers<[1], [0], [0], [1], [0, 0, 1, 1], [], []>} : vector<4x20xf32>, vector<20x96xf32>, vector<4x96xf32> -> vector<4x96xf32>
    %c0_338 = arith.constant 0 : index
    %c0_339 = arith.constant 0 : index
    %576 = vector.load %arg5[%c0_338, %c0_339] : memref<1x96xf32, #tpu.memory_space<vmem>>, vector<1x96xf32>
    %577 = vector.broadcast %576 : vector<1x96xf32> to vector<4x96xf32>
    %578 = arith.addf %575, %577 : vector<4x96xf32>
    %579 = vector.extract_strided_slice %578 {offsets = [0, 0], sizes = [4, 48], strides = [1, 1]} : vector<4x96xf32> to vector<4x48xf32>
    %580 = vector.extract_strided_slice %578 {offsets = [0, 48], sizes = [4, 48], strides = [1, 1]} : vector<4x96xf32> to vector<4x48xf32>
    %581 = vector.extract_strided_slice %579 {offsets = [0, 0], sizes = [4, 32], strides = [1, 1]} : vector<4x48xf32> to vector<4x32xf32>
    %582 = vector.extract_strided_slice %580 {offsets = [0, 0], sizes = [4, 32], strides = [1, 1]} : vector<4x48xf32> to vector<4x32xf32>
    %583 = arith.addf %581, %582 : vector<4x32xf32>
    %584 = arith.negf %583 : vector<4x32xf32>
    %585 = math.exp %584 : vector<4x32xf32>
    %cst_340 = arith.constant 1.000000e+00 : f32
    %586 = vector.broadcast %cst_340 : f32 to vector<4x32xf32>
    %587 = arith.addf %586, %585 : vector<4x32xf32>
    %588 = arith.divf %586, %587 : vector<4x32xf32>
    %589 = vector.extract_strided_slice %588 {offsets = [0, 0], sizes = [4, 16], strides = [1, 1]} : vector<4x32xf32> to vector<4x16xf32>
    %590 = vector.extract_strided_slice %588 {offsets = [0, 16], sizes = [4, 16], strides = [1, 1]} : vector<4x32xf32> to vector<4x16xf32>
    %591 = vector.extract_strided_slice %579 {offsets = [0, 32], sizes = [4, 16], strides = [1, 1]} : vector<4x48xf32> to vector<4x16xf32>
    %592 = vector.extract_strided_slice %580 {offsets = [0, 32], sizes = [4, 16], strides = [1, 1]} : vector<4x48xf32> to vector<4x16xf32>
    %593 = arith.mulf %589, %592 : vector<4x16xf32>
    %594 = arith.addf %591, %593 : vector<4x16xf32>
    %595 = math.tanh %594 : vector<4x16xf32>
    %cst_341 = arith.constant 1.000000e+00 : f32
    %596 = vector.broadcast %cst_341 : f32 to vector<4x16xf32>
    %597 = arith.subf %596, %590 : vector<4x16xf32>
    %598 = arith.mulf %597, %595 : vector<4x16xf32>
    %599 = arith.mulf %590, %508 : vector<4x16xf32>
    %600 = arith.addf %598, %599 : vector<4x16xf32>
    %c0_342 = arith.constant 0 : index
    %c0_343 = arith.constant 0 : index
    %601 = vector.load %arg7[%c0_342, %c0_343] : memref<16x32xf32, #tpu.memory_space<vmem>>, vector<16x32xf32>
    %cst_344 = arith.constant dense<0.000000e+00> : vector<4x32xf32>
    %602 = tpu.matmul %600, %601, %cst_344 {dimension_numbers = #tpu.dot_dimension_numbers<[1], [0], [0], [1], [0, 0, 1, 1], [], []>} : vector<4x16xf32>, vector<16x32xf32>, vector<4x32xf32> -> vector<4x32xf32>
    %603 = arith.addf %602, %5 : vector<4x32xf32>
    %cst_345 = arith.constant 0.000000e+00 : f32
    %604 = vector.broadcast %cst_345 : f32 to vector<4x32xf32>
    %605 = arith.maximumf %603, %604 : vector<4x32xf32>
    %c0_346 = arith.constant 0 : index
    %c0_347 = arith.constant 0 : index
    %606 = vector.load %arg9[%c0_346, %c0_347] : memref<32x32xf32, #tpu.memory_space<vmem>>, vector<32x32xf32>
    %cst_348 = arith.constant dense<0.000000e+00> : vector<4x32xf32>
    %607 = tpu.matmul %605, %606, %cst_348 {dimension_numbers = #tpu.dot_dimension_numbers<[1], [0], [0], [1], [0, 0, 1, 1], [], []>} : vector<4x32xf32>, vector<32x32xf32>, vector<4x32xf32> -> vector<4x32xf32>
    %c0_349 = arith.constant 0 : index
    %c0_350 = arith.constant 0 : index
    %608 = vector.load %arg10[%c0_349, %c0_350] : memref<1x32xf32, #tpu.memory_space<vmem>>, vector<1x32xf32>
    %609 = vector.broadcast %608 : vector<1x32xf32> to vector<4x32xf32>
    %610 = arith.addf %607, %609 : vector<4x32xf32>
    %cst_351 = arith.constant 0.000000e+00 : f32
    %611 = vector.broadcast %cst_351 : f32 to vector<4x32xf32>
    %612 = arith.maximumf %610, %611 : vector<4x32xf32>
    %c0_352 = arith.constant 0 : index
    %c0_353 = arith.constant 0 : index
    %613 = vector.load %arg11[%c0_352, %c0_353] : memref<32x32xf32, #tpu.memory_space<vmem>>, vector<32x32xf32>
    %cst_354 = arith.constant dense<0.000000e+00> : vector<4x32xf32>
    %614 = tpu.matmul %612, %613, %cst_354 {dimension_numbers = #tpu.dot_dimension_numbers<[1], [0], [0], [1], [0, 0, 1, 1], [], []>} : vector<4x32xf32>, vector<32x32xf32>, vector<4x32xf32> -> vector<4x32xf32>
    %c0_355 = arith.constant 0 : index
    %c0_356 = arith.constant 0 : index
    %615 = vector.load %arg12[%c0_355, %c0_356] : memref<1x32xf32, #tpu.memory_space<vmem>>, vector<1x32xf32>
    %616 = vector.broadcast %615 : vector<1x32xf32> to vector<4x32xf32>
    %617 = arith.addf %614, %616 : vector<4x32xf32>
    %c0_357 = arith.constant 0 : index
    %c0_358 = arith.constant 0 : index
    %618 = vector.load %arg14[%c0_357, %c0_358] : memref<16x8xf32, #tpu.memory_space<vmem>>, vector<16x8xf32>
    %cst_359 = arith.constant dense<0.000000e+00> : vector<4x8xf32>
    %619 = tpu.matmul %600, %618, %cst_359 {dimension_numbers = #tpu.dot_dimension_numbers<[1], [0], [0], [1], [0, 0, 1, 1], [], []>} : vector<4x16xf32>, vector<16x8xf32>, vector<4x8xf32> -> vector<4x8xf32>
    %620 = arith.addf %619, %11 : vector<4x8xf32>
    %cst_360 = arith.constant 0.000000e+00 : f32
    %621 = vector.broadcast %cst_360 : f32 to vector<4x8xf32>
    %622 = arith.maximumf %620, %621 : vector<4x8xf32>
    %c0_361 = arith.constant 0 : index
    %c0_362 = arith.constant 0 : index
    %623 = vector.load %arg16[%c0_361, %c0_362] : memref<8x1xf32, #tpu.memory_space<vmem>>, vector<8x1xf32>
    %cst_363 = arith.constant dense<0.000000e+00> : vector<4x1xf32>
    %624 = tpu.matmul %622, %623, %cst_363 {dimension_numbers = #tpu.dot_dimension_numbers<[1], [0], [0], [1], [0, 0, 1, 1], [], []>} : vector<4x8xf32>, vector<8x1xf32>, vector<4x1xf32> -> vector<4x1xf32>
    %c0_364 = arith.constant 0 : index
    %c0_365 = arith.constant 0 : index
    %625 = vector.load %arg17[%c0_364, %c0_365] : memref<1x1xf32, #tpu.memory_space<vmem>>, vector<1x1xf32>
    %626 = vector.broadcast %625 : vector<1x1xf32> to vector<4x1xf32>
    %627 = arith.addf %624, %626 : vector<4x1xf32>
    %cst_366 = arith.constant 6.000000e+00 : f32
    %628 = vector.broadcast %cst_366 : f32 to vector<4x1xf32>
    %629 = arith.divf %627, %628 : vector<4x1xf32>
    %cst_367 = arith.constant 5.000000e-01 : f32
    %630 = vector.broadcast %cst_367 : f32 to vector<4x1xf32>
    %631 = arith.addf %629, %630 : vector<4x1xf32>
    %cst_368 = arith.constant 0.000000e+00 : f32
    %cst_369 = arith.constant 1.000000e+00 : f32
    %632 = vector.broadcast %cst_368 : f32 to vector<4x1xf32>
    %633 = arith.maximumf %632, %631 : vector<4x1xf32>
    %634 = vector.broadcast %cst_369 : f32 to vector<4x1xf32>
    %635 = arith.minimumf %634, %633 : vector<4x1xf32>
    %636 = arith.addf %635, %16 : vector<4x1xf32>
    %637 = vector.broadcast %636 : vector<4x1xf32> to vector<4x32xf32>
    %638 = vector.broadcast %17 : vector<1x32xf32> to vector<4x32xf32>
    %639 = arith.subf %637, %638 : vector<4x32xf32>
    %640 = arith.mulf %639, %639 : vector<4x32xf32>
    %cst_370 = arith.constant 0.000000e+00 : f32
    %641 = vector.broadcast %cst_370 : f32 to vector<4x32xf32>
    %642 = arith.subf %641, %640 : vector<4x32xf32>
    %cst_371 = arith.constant 2.400000e-02 : f32
    %643 = vector.broadcast %cst_371 : f32 to vector<4x32xf32>
    %644 = arith.divf %642, %643 : vector<4x32xf32>
    %645 = math.exp %644 : vector<4x32xf32>
    %646 = vector.extract_strided_slice %645 {offsets = [0, 0], sizes = [4, 8], strides = [1, 1]} : vector<4x32xf32> to vector<4x8xf32>
    %cst_372 = arith.constant dense<0.000000e+00> : vector<4xf32>
    %647 = vector.multi_reduction <add>, %646, %cst_372 [1] : vector<4x8xf32> to vector<4xf32>
    %648 = vector.shape_cast %647 : vector<4xf32> to vector<4x1xf32>
    %649 = arith.mulf %617, %645 : vector<4x32xf32>
    %c0_373 = arith.constant 0 : index
    %c0_374 = arith.constant 0 : index
    %650 = vector.load %arg19[%c0_373, %c0_374] : memref<32x4xf32, #tpu.memory_space<vmem>>, vector<32x4xf32>
    %cst_375 = arith.constant dense<0.000000e+00> : vector<4x4xf32>
    %651 = tpu.matmul %649, %650, %cst_375 {dimension_numbers = #tpu.dot_dimension_numbers<[1], [0], [0], [1], [0, 0, 1, 1], [], []>} : vector<4x32xf32>, vector<32x4xf32>, vector<4x4xf32> -> vector<4x4xf32>
    %652 = vector.broadcast %648 : vector<4x1xf32> to vector<4x4xf32>
    %653 = arith.divf %651, %652 : vector<4x4xf32>
    %c6_376 = arith.constant 6 : index
    %c0_377 = arith.constant 0 : index
    %c0_378 = arith.constant 0 : index
    %654 = vector.load %arg20[%c6_376, %c0_377, %c0_378] : memref<8x4x4xf32, #tpu.memory_space<vmem>>, vector<1x4x4xf32>
    %655 = vector.shape_cast %654 : vector<1x4x4xf32> to vector<4x4xf32>
    %656 = vector.shape_cast %653 : vector<4x4xf32> to vector<1x4x4xf32>
    tpu.vector_store %arg20[%c6_376, %c0_377, %c0_378], %656 {strides = array<i32>} : memref<8x4x4xf32, #tpu.memory_space<vmem>>, vector<1x4x4xf32>,
    %c6_379 = arith.constant 6 : index
    %c0_380 = arith.constant 0 : index
    %c0_381 = arith.constant 0 : index
    %657 = vector.load %arg21[%c6_379, %c0_380, %c0_381] : memref<8x4x1xf32, #tpu.memory_space<vmem>>, vector<1x4x1xf32>
    %658 = vector.shape_cast %657 : vector<1x4x1xf32> to vector<4x1xf32>
    %659 = vector.shape_cast %636 : vector<4x1xf32> to vector<1x4x1xf32>
    tpu.vector_store %arg21[%c6_379, %c0_380, %c0_381], %659 {strides = array<i32>} : memref<8x4x1xf32, #tpu.memory_space<vmem>>, vector<1x4x1xf32>,
    %c6_382 = arith.constant 6 : index
    %c0_383 = arith.constant 0 : index
    %c0_384 = arith.constant 0 : index
    %660 = vector.load %arg22[%c6_382, %c0_383, %c0_384] : memref<8x4x32xf32, #tpu.memory_space<vmem>>, vector<1x4x32xf32>
    %661 = vector.shape_cast %660 : vector<1x4x32xf32> to vector<4x32xf32>
    %662 = vector.shape_cast %617 : vector<4x32xf32> to vector<1x4x32xf32>
    tpu.vector_store %arg22[%c6_382, %c0_383, %c0_384], %662 {strides = array<i32>} : memref<8x4x32xf32, #tpu.memory_space<vmem>>, vector<1x4x32xf32>,
    %c7 = arith.constant 7 : index
    %c0_385 = arith.constant 0 : index
    %c0_386 = arith.constant 0 : index
    %663 = vector.load %arg0[%c7, %c0_385, %c0_386] : memref<8x4x4xf32, #tpu.memory_space<vmem>>, vector<1x4x4xf32>
    %664 = vector.shape_cast %663 : vector<1x4x4xf32> to vector<4x4xf32>
    %665 = tpu.concatenate %664, %600 in 1 : vector<4x4xf32>, vector<4x16xf32> -> vector<4x20xf32>
    %c0_387 = arith.constant 0 : index
    %c0_388 = arith.constant 0 : index
    %666 = vector.load %arg4[%c0_387, %c0_388] : memref<20x96xf32, #tpu.memory_space<vmem>>, vector<20x96xf32>
    %cst_389 = arith.constant dense<0.000000e+00> : vector<4x96xf32>
    %667 = tpu.matmul %665, %666, %cst_389 {dimension_numbers = #tpu.dot_dimension_numbers<[1], [0], [0], [1], [0, 0, 1, 1], [], []>} : vector<4x20xf32>, vector<20x96xf32>, vector<4x96xf32> -> vector<4x96xf32>
    %c0_390 = arith.constant 0 : index
    %c0_391 = arith.constant 0 : index
    %668 = vector.load %arg5[%c0_390, %c0_391] : memref<1x96xf32, #tpu.memory_space<vmem>>, vector<1x96xf32>
    %669 = vector.broadcast %668 : vector<1x96xf32> to vector<4x96xf32>
    %670 = arith.addf %667, %669 : vector<4x96xf32>
    %671 = vector.extract_strided_slice %670 {offsets = [0, 0], sizes = [4, 48], strides = [1, 1]} : vector<4x96xf32> to vector<4x48xf32>
    %672 = vector.extract_strided_slice %670 {offsets = [0, 48], sizes = [4, 48], strides = [1, 1]} : vector<4x96xf32> to vector<4x48xf32>
    %673 = vector.extract_strided_slice %671 {offsets = [0, 0], sizes = [4, 32], strides = [1, 1]} : vector<4x48xf32> to vector<4x32xf32>
    %674 = vector.extract_strided_slice %672 {offsets = [0, 0], sizes = [4, 32], strides = [1, 1]} : vector<4x48xf32> to vector<4x32xf32>
    %675 = arith.addf %673, %674 : vector<4x32xf32>
    %676 = arith.negf %675 : vector<4x32xf32>
    %677 = math.exp %676 : vector<4x32xf32>
    %cst_392 = arith.constant 1.000000e+00 : f32
    %678 = vector.broadcast %cst_392 : f32 to vector<4x32xf32>
    %679 = arith.addf %678, %677 : vector<4x32xf32>
    %680 = arith.divf %678, %679 : vector<4x32xf32>
    %681 = vector.extract_strided_slice %680 {offsets = [0, 0], sizes = [4, 16], strides = [1, 1]} : vector<4x32xf32> to vector<4x16xf32>
    %682 = vector.extract_strided_slice %680 {offsets = [0, 16], sizes = [4, 16], strides = [1, 1]} : vector<4x32xf32> to vector<4x16xf32>
    %683 = vector.extract_strided_slice %671 {offsets = [0, 32], sizes = [4, 16], strides = [1, 1]} : vector<4x48xf32> to vector<4x16xf32>
    %684 = vector.extract_strided_slice %672 {offsets = [0, 32], sizes = [4, 16], strides = [1, 1]} : vector<4x48xf32> to vector<4x16xf32>
    %685 = arith.mulf %681, %684 : vector<4x16xf32>
    %686 = arith.addf %683, %685 : vector<4x16xf32>
    %687 = math.tanh %686 : vector<4x16xf32>
    %cst_393 = arith.constant 1.000000e+00 : f32
    %688 = vector.broadcast %cst_393 : f32 to vector<4x16xf32>
    %689 = arith.subf %688, %682 : vector<4x16xf32>
    %690 = arith.mulf %689, %687 : vector<4x16xf32>
    %691 = arith.mulf %682, %600 : vector<4x16xf32>
    %692 = arith.addf %690, %691 : vector<4x16xf32>
    %c0_394 = arith.constant 0 : index
    %c0_395 = arith.constant 0 : index
    %693 = vector.load %arg7[%c0_394, %c0_395] : memref<16x32xf32, #tpu.memory_space<vmem>>, vector<16x32xf32>
    %cst_396 = arith.constant dense<0.000000e+00> : vector<4x32xf32>
    %694 = tpu.matmul %692, %693, %cst_396 {dimension_numbers = #tpu.dot_dimension_numbers<[1], [0], [0], [1], [0, 0, 1, 1], [], []>} : vector<4x16xf32>, vector<16x32xf32>, vector<4x32xf32> -> vector<4x32xf32>
    %695 = arith.addf %694, %5 : vector<4x32xf32>
    %cst_397 = arith.constant 0.000000e+00 : f32
    %696 = vector.broadcast %cst_397 : f32 to vector<4x32xf32>
    %697 = arith.maximumf %695, %696 : vector<4x32xf32>
    %c0_398 = arith.constant 0 : index
    %c0_399 = arith.constant 0 : index
    %698 = vector.load %arg9[%c0_398, %c0_399] : memref<32x32xf32, #tpu.memory_space<vmem>>, vector<32x32xf32>
    %cst_400 = arith.constant dense<0.000000e+00> : vector<4x32xf32>
    %699 = tpu.matmul %697, %698, %cst_400 {dimension_numbers = #tpu.dot_dimension_numbers<[1], [0], [0], [1], [0, 0, 1, 1], [], []>} : vector<4x32xf32>, vector<32x32xf32>, vector<4x32xf32> -> vector<4x32xf32>
    %c0_401 = arith.constant 0 : index
    %c0_402 = arith.constant 0 : index
    %700 = vector.load %arg10[%c0_401, %c0_402] : memref<1x32xf32, #tpu.memory_space<vmem>>, vector<1x32xf32>
    %701 = vector.broadcast %700 : vector<1x32xf32> to vector<4x32xf32>
    %702 = arith.addf %699, %701 : vector<4x32xf32>
    %cst_403 = arith.constant 0.000000e+00 : f32
    %703 = vector.broadcast %cst_403 : f32 to vector<4x32xf32>
    %704 = arith.maximumf %702, %703 : vector<4x32xf32>
    %c0_404 = arith.constant 0 : index
    %c0_405 = arith.constant 0 : index
    %705 = vector.load %arg11[%c0_404, %c0_405] : memref<32x32xf32, #tpu.memory_space<vmem>>, vector<32x32xf32>
    %cst_406 = arith.constant dense<0.000000e+00> : vector<4x32xf32>
    %706 = tpu.matmul %704, %705, %cst_406 {dimension_numbers = #tpu.dot_dimension_numbers<[1], [0], [0], [1], [0, 0, 1, 1], [], []>} : vector<4x32xf32>, vector<32x32xf32>, vector<4x32xf32> -> vector<4x32xf32>
    %c0_407 = arith.constant 0 : index
    %c0_408 = arith.constant 0 : index
    %707 = vector.load %arg12[%c0_407, %c0_408] : memref<1x32xf32, #tpu.memory_space<vmem>>, vector<1x32xf32>
    %708 = vector.broadcast %707 : vector<1x32xf32> to vector<4x32xf32>
    %709 = arith.addf %706, %708 : vector<4x32xf32>
    %c0_409 = arith.constant 0 : index
    %c0_410 = arith.constant 0 : index
    %710 = vector.load %arg14[%c0_409, %c0_410] : memref<16x8xf32, #tpu.memory_space<vmem>>, vector<16x8xf32>
    %cst_411 = arith.constant dense<0.000000e+00> : vector<4x8xf32>
    %711 = tpu.matmul %692, %710, %cst_411 {dimension_numbers = #tpu.dot_dimension_numbers<[1], [0], [0], [1], [0, 0, 1, 1], [], []>} : vector<4x16xf32>, vector<16x8xf32>, vector<4x8xf32> -> vector<4x8xf32>
    %712 = arith.addf %711, %11 : vector<4x8xf32>
    %cst_412 = arith.constant 0.000000e+00 : f32
    %713 = vector.broadcast %cst_412 : f32 to vector<4x8xf32>
    %714 = arith.maximumf %712, %713 : vector<4x8xf32>
    %c0_413 = arith.constant 0 : index
    %c0_414 = arith.constant 0 : index
    %715 = vector.load %arg16[%c0_413, %c0_414] : memref<8x1xf32, #tpu.memory_space<vmem>>, vector<8x1xf32>
    %cst_415 = arith.constant dense<0.000000e+00> : vector<4x1xf32>
    %716 = tpu.matmul %714, %715, %cst_415 {dimension_numbers = #tpu.dot_dimension_numbers<[1], [0], [0], [1], [0, 0, 1, 1], [], []>} : vector<4x8xf32>, vector<8x1xf32>, vector<4x1xf32> -> vector<4x1xf32>
    %c0_416 = arith.constant 0 : index
    %c0_417 = arith.constant 0 : index
    %717 = vector.load %arg17[%c0_416, %c0_417] : memref<1x1xf32, #tpu.memory_space<vmem>>, vector<1x1xf32>
    %718 = vector.broadcast %717 : vector<1x1xf32> to vector<4x1xf32>
    %719 = arith.addf %716, %718 : vector<4x1xf32>
    %cst_418 = arith.constant 6.000000e+00 : f32
    %720 = vector.broadcast %cst_418 : f32 to vector<4x1xf32>
    %721 = arith.divf %719, %720 : vector<4x1xf32>
    %cst_419 = arith.constant 5.000000e-01 : f32
    %722 = vector.broadcast %cst_419 : f32 to vector<4x1xf32>
    %723 = arith.addf %721, %722 : vector<4x1xf32>
    %cst_420 = arith.constant 0.000000e+00 : f32
    %cst_421 = arith.constant 1.000000e+00 : f32
    %724 = vector.broadcast %cst_420 : f32 to vector<4x1xf32>
    %725 = arith.maximumf %724, %723 : vector<4x1xf32>
    %726 = vector.broadcast %cst_421 : f32 to vector<4x1xf32>
    %727 = arith.minimumf %726, %725 : vector<4x1xf32>
    %728 = arith.addf %727, %16 : vector<4x1xf32>
    %729 = vector.broadcast %728 : vector<4x1xf32> to vector<4x32xf32>
    %730 = vector.broadcast %17 : vector<1x32xf32> to vector<4x32xf32>
    %731 = arith.subf %729, %730 : vector<4x32xf32>
    %732 = arith.mulf %731, %731 : vector<4x32xf32>
    %cst_422 = arith.constant 0.000000e+00 : f32
    %733 = vector.broadcast %cst_422 : f32 to vector<4x32xf32>
    %734 = arith.subf %733, %732 : vector<4x32xf32>
    %cst_423 = arith.constant 2.400000e-02 : f32
    %735 = vector.broadcast %cst_423 : f32 to vector<4x32xf32>
    %736 = arith.divf %734, %735 : vector<4x32xf32>
    %737 = math.exp %736 : vector<4x32xf32>
    %738 = vector.extract_strided_slice %737 {offsets = [0, 0], sizes = [4, 8], strides = [1, 1]} : vector<4x32xf32> to vector<4x8xf32>
    %cst_424 = arith.constant dense<0.000000e+00> : vector<4xf32>
    %739 = vector.multi_reduction <add>, %738, %cst_424 [1] : vector<4x8xf32> to vector<4xf32>
    %740 = vector.shape_cast %739 : vector<4xf32> to vector<4x1xf32>
    %741 = arith.mulf %709, %737 : vector<4x32xf32>
    %c0_425 = arith.constant 0 : index
    %c0_426 = arith.constant 0 : index
    %742 = vector.load %arg19[%c0_425, %c0_426] : memref<32x4xf32, #tpu.memory_space<vmem>>, vector<32x4xf32>
    %cst_427 = arith.constant dense<0.000000e+00> : vector<4x4xf32>
    %743 = tpu.matmul %741, %742, %cst_427 {dimension_numbers = #tpu.dot_dimension_numbers<[1], [0], [0], [1], [0, 0, 1, 1], [], []>} : vector<4x32xf32>, vector<32x4xf32>, vector<4x4xf32> -> vector<4x4xf32>
    %744 = vector.broadcast %740 : vector<4x1xf32> to vector<4x4xf32>
    %745 = arith.divf %743, %744 : vector<4x4xf32>
    %c7_428 = arith.constant 7 : index
    %c0_429 = arith.constant 0 : index
    %c0_430 = arith.constant 0 : index
    %746 = vector.load %arg20[%c7_428, %c0_429, %c0_430] : memref<8x4x4xf32, #tpu.memory_space<vmem>>, vector<1x4x4xf32>
    %747 = vector.shape_cast %746 : vector<1x4x4xf32> to vector<4x4xf32>
    %748 = vector.shape_cast %745 : vector<4x4xf32> to vector<1x4x4xf32>
    tpu.vector_store %arg20[%c7_428, %c0_429, %c0_430], %748 {strides = array<i32>} : memref<8x4x4xf32, #tpu.memory_space<vmem>>, vector<1x4x4xf32>,
    %c7_431 = arith.constant 7 : index
    %c0_432 = arith.constant 0 : index
    %c0_433 = arith.constant 0 : index
    %749 = vector.load %arg21[%c7_431, %c0_432, %c0_433] : memref<8x4x1xf32, #tpu.memory_space<vmem>>, vector<1x4x1xf32>
    %750 = vector.shape_cast %749 : vector<1x4x1xf32> to vector<4x1xf32>
    %751 = vector.shape_cast %728 : vector<4x1xf32> to vector<1x4x1xf32>
    tpu.vector_store %arg21[%c7_431, %c0_432, %c0_433], %751 {strides = array<i32>} : memref<8x4x1xf32, #tpu.memory_space<vmem>>, vector<1x4x1xf32>,
    %c7_434 = arith.constant 7 : index
    %c0_435 = arith.constant 0 : index
    %c0_436 = arith.constant 0 : index
    %752 = vector.load %arg22[%c7_434, %c0_435, %c0_436] : memref<8x4x32xf32, #tpu.memory_space<vmem>>, vector<1x4x32xf32>
    %753 = vector.shape_cast %752 : vector<1x4x32xf32> to vector<4x32xf32>
    %754 = vector.shape_cast %709 : vector<4x32xf32> to vector<1x4x32xf32>
    tpu.vector_store %arg22[%c7_434, %c0_435, %c0_436], %754 {strides = array<i32>} : memref<8x4x32xf32, #tpu.memory_space<vmem>>, vector<1x4x32xf32>,
    %c0_437 = arith.constant 0 : index
    %c0_438 = arith.constant 0 : index
    %755 = vector.load %arg23[%c0_437, %c0_438] : memref<4x16xf32, #tpu.memory_space<vmem>>, vector<4x16xf32>
    tpu.vector_store %arg23[%c0_437, %c0_438], %692 {strides = array<i32>} : memref<4x16xf32, #tpu.memory_space<vmem>>, vector<4x16xf32>,
    return
  }
}

</mosaic_0001>

<llo_original>
// kernel: tile.8
$region0: #{tile.8}
  #allocation0 [shape = 's32[1]{0}', space=sflag, size = 0x4, scoped, tag = 'scoped memory for tile.8']
  %s0 = inlined_call_operand.vmem [shape: f32[8], index: 0, kind: input, shape index: {}]
  %s1 = inlined_call_operand.vmem [shape: f32[4,8], index: 1, kind: output, shape index: {}]
  // Predicated region
  $region2: #{tile.8} parent=0 // pred_check
    _
  $region3: #{tile.8} parent=0 // pred_check_branch
    %3 = sbr.rel (0) target = $region5
  $region4: #{tile.8} parent=0 // pred_region
    _
  $region5: #{tile.8} parent=0 // pred_fallthru
    _
  %v4 = vld [vmem:[%s0] ss:$0 sm:$0xff]
  %5 = vst [vmem:[%s1] sm:$0xf] %v4

// kernel: tile.9
$region0: #{tile.9}
  %s0 = inlined_call_operand.vmem [shape: f32[4,8], index: 0, kind: input, shape index: {}]
  %s1 = inlined_call_operand.vmem [shape: f32[1,32], index: 1, kind: output, shape index: {}]
  $region1: #{tile.9} parent=0
    #allocation0 [shape = 'u8[4096]{0}', space=vmem, size = 0x1000, scoped, tag = 'scoped mem for output reshape']
    #allocation1 [shape = 'u8[4096]{0}', space=vmem, size = 0x1000, scoped, tag = 'scoped mem for input reshape']
    %s3 = sshllo.u32 0, 4
    %v4 = vld [vmem:[%s0] sm:%s3]
    %5 = vst [vmem:[#allocation1] sm:%s3] %v4
    %v6 = vld [vmem:[#allocation1] sm:$0x1]
    %vm7 = vcmask 64512
    %8 = vst.msk [vmem:[#allocation0] sm:$0x1] %vm7, %v6
    %s9 = scalar_lea.vmem [#allocation1], 3
    %v10 = vld [vmem:[%s9] sm:$0x1]
    %11 = vrot.lane.b32.xlu0 %v10, 24
    %v12 = vpop.permute.xlu0 %11
    %vm13 = vcmask 261312
    %14 = vst.msk [vmem:[#allocation0] sm:$0x1] %vm13, %v12
    %s15 = scalar_lea.vmem [#allocation1], 2
    %v16 = vld [vmem:[%s15] sm:$0x1]
    %17 = vrot.lane.b32.xlu0 %v16, 16
    %v18 = vpop.permute.xlu0 %17
    %vm19 = vcmask 195712
    %20 = vst.msk [vmem:[#allocation0] sm:$0x1] %vm19, %v18
    %s21 = scalar_lea.vmem [#allocation1], 1
    %v22 = vld [vmem:[%s21] sm:$0x1]
    %23 = vrot.lane.b32.xlu0 %v22, 8
    %v24 = vpop.permute.xlu0 %23
    %vm25 = vcmask 130112
    %26 = vst.msk [vmem:[#allocation0] sm:$0x1] %vm25, %v24
    %s28 = sshllo.u32 0, 1
    %v30 = vld [vmem:[#allocation0] sm:%s28]
    %s31 = sshllo.u32 0, 1
    %32 = vst [vmem:[%s1] sm:%s31] %v30

// kernel: feedback_controller_forward.1
$region0: #{feedback_controller_forward.1}
  #allocation0 [shape = 'u32[]', space=smem, size = 0x4, offset = 0x4, fixed_abs, tag = 'smem constant byte address 0x4 - core index']
  #allocation1 [shape = 'u32[144,128]{1,0:T(1,128)}', space=vmem, size = 0x12000, scoped, tag = 'internal scratch']
  #allocation2 [shape = 'f32[1,1]{1,0:T(1,128)S(1)}', space=vmem, size = 0x200, scoped, tag = 'scoped memory for feedback_controller_forward.1']
  %s0 = inlined_call_operand.vmem [shape: f32[8,4,4], index: 0, kind: input, shape index: {}]
  %s1 = inlined_call_operand.vmem [shape: f32[4,16], index: 1, kind: input, shape index: {}]
  %s2 = inlined_call_operand.vmem [shape: f32[4,5], index: 2, kind: input, shape index: {}]
  %s3 = inlined_call_operand.vmem [shape: f32[4,1], index: 3, kind: input, shape index: {}]
  %s4 = inlined_call_operand.vmem [shape: f32[20,96], index: 4, kind: input, shape index: {}]
  %s5 = inlined_call_operand.vmem [shape: f32[1,96], index: 5, kind: input, shape index: {}]
  %s6 = inlined_call_operand.vmem [shape: f32[5,32], index: 6, kind: input, shape index: {}]
  %s7 = inlined_call_operand.vmem [shape: f32[16,32], index: 7, kind: input, shape index: {}]
  %s8 = inlined_call_operand.vmem [shape: f32[1,32], index: 8, kind: input, shape index: {}]
  %s9 = inlined_call_operand.vmem [shape: f32[32,32], index: 9, kind: input, shape index: {}]
  %s10 = inlined_call_operand.vmem [shape: f32[1,32], index: 10, kind: input, shape index: {}]
  %s11 = inlined_call_operand.vmem [shape: f32[32,32], index: 11, kind: input, shape index: {}]
  %s12 = inlined_call_operand.vmem [shape: f32[1,32], index: 12, kind: input, shape index: {}]
  %s13 = inlined_call_operand.vmem [shape: f32[5,8], index: 13, kind: input, shape index: {}]
  %s14 = inlined_call_operand.vmem [shape: f32[16,8], index: 14, kind: input, shape index: {}]
  %s15 = inlined_call_operand.vmem [shape: f32[1,8], index: 15, kind: input, shape index: {}]
  %s16 = inlined_call_operand.vmem [shape: f32[8,1], index: 16, kind: input, shape index: {}]
  %s17 = inlined_call_operand.<no memory space> [shape: f32[1,1], index: 17, kind: input, shape index: {}]
  %s18 = inlined_call_operand.vmem [shape: f32[1,32], index: 18, kind: input, shape index: {}]
  %s19 = inlined_call_operand.vmem [shape: f32[32,4], index: 19, kind: input, shape index: {}]
  %s20 = inlined_call_operand.vmem [shape: f32[8,4,4], index: 20, kind: output, shape index: {0}]
  %s21 = inlined_call_operand.vmem [shape: f32[8,4,1], index: 21, kind: output, shape index: {1}]
  %s22 = inlined_call_operand.vmem [shape: f32[8,4,32], index: 22, kind: output, shape index: {2}]
  %s23 = inlined_call_operand.hbm [shape: f32[4,16], index: 23, kind: output, shape index: {3}]
  %24 = xla_tuple %s20, %s21, %s22, %s23
  %s25 = sld [smem:[#allocation0]]
  $region114: #{feedback_controller_forward.1} parent=0
    _
  %s27 = ssub.s32 1, %s25
  %s28 = scalar_select 0, %s27, %s25
  %v29 = vstv %s17
  %30 = vst [vmem:[#allocation2] sm:$0x1] %v29
  $region1: #{feedback_controller_forward.1} parent=0
    #allocation3 [shape = 'u8[2048]{0}', space=vmem, size = 0x800, scoped, tag = 'output window, operand 3, single buffered']
    #allocation4 [shape = 's32[1]{0}', space=sflag, size = 0x4, scoped, tag = 'scoped memory for feedback_controller_forward.1']
    %31 = vsyncpa [#allocation4], 0
    // Predicated region
    $region2: #{feedback_controller_forward.1} parent=1 // pred_check
      _
    $region3: #{feedback_controller_forward.1} parent=1 // pred_check_branch
      %33 = sbr.rel (0) target = $region5
    $region4: #{feedback_controller_forward.1} parent=1 // pred_region
      _
    $region5: #{feedback_controller_forward.1} parent=1 // pred_fallthru
      _
    // Predicated region
    $region6: #{feedback_controller_forward.1} parent=1 // pred_check
      _
    $region7: #{feedback_controller_forward.1} parent=1 // pred_check_branch
      %35 = sbr.rel (0) target = $region9
    $region8: #{feedback_controller_forward.1} parent=1 // pred_region
      _
    $region9: #{feedback_controller_forward.1} parent=1 // pred_fallthru
      _
    // Predicated region
    $region10: #{feedback_controller_forward.1} parent=1 // pred_check
      _
    $region11: #{feedback_controller_forward.1} parent=1 // pred_check_branch
      %37 = sbr.rel (0) target = $region13
    $region12: #{feedback_controller_forward.1} parent=1 // pred_region
      _
    $region13: #{feedback_controller_forward.1} parent=1 // pred_fallthru
      _
    // Predicated region
    $region14: #{feedback_controller_forward.1} parent=1 // pred_check
      _
    $region15: #{feedback_controller_forward.1} parent=1 // pred_check_branch
      %39 = sbr.rel (0) target = $region17
    $region16: #{feedback_controller_forward.1} parent=1 // pred_region
      _
    $region17: #{feedback_controller_forward.1} parent=1 // pred_fallthru
      _
    // Predicated region
    $region18: #{feedback_controller_forward.1} parent=1 // pred_check
      _
    $region19: #{feedback_controller_forward.1} parent=1 // pred_check_branch
      %41 = sbr.rel (0) target = $region21
    $region20: #{feedback_controller_forward.1} parent=1 // pred_region
      _
    $region21: #{feedback_controller_forward.1} parent=1 // pred_fallthru
      _
    // Predicated region
    $region22: #{feedback_controller_forward.1} parent=1 // pred_check
      _
    $region23: #{feedback_controller_forward.1} parent=1 // pred_check_branch
      %43 = sbr.rel (0) target = $region25
    $region24: #{feedback_controller_forward.1} parent=1 // pred_region
      _
    $region25: #{feedback_controller_forward.1} parent=1 // pred_fallthru
      _
    // Predicated region
    $region26: #{feedback_controller_forward.1} parent=1 // pred_check
      _
    $region27: #{feedback_controller_forward.1} parent=1 // pred_check_branch
      %45 = sbr.rel (0) target = $region29
    $region28: #{feedback_controller_forward.1} parent=1 // pred_region
      _
    $region29: #{feedback_controller_forward.1} parent=1 // pred_fallthru
      _
    // Predicated region
    $region30: #{feedback_controller_forward.1} parent=1 // pred_check
      _
    $region31: #{feedback_controller_forward.1} parent=1 // pred_check_branch
      %47 = sbr.rel (0) target = $region33
    $region32: #{feedback_controller_forward.1} parent=1 // pred_region
      _
    $region33: #{feedback_controller_forward.1} parent=1 // pred_fallthru
      _
    // Predicated region
    $region34: #{feedback_controller_forward.1} parent=1 // pred_check
      _
    $region35: #{feedback_controller_forward.1} parent=1 // pred_check_branch
      %49 = sbr.rel (0) target = $region37
    $region36: #{feedback_controller_forward.1} parent=1 // pred_region
      _
    $region37: #{feedback_controller_forward.1} parent=1 // pred_fallthru
      _
    // Predicated region
    $region38: #{feedback_controller_forward.1} parent=1 // pred_check
      _
    $region39: #{feedback_controller_forward.1} parent=1 // pred_check_branch
      %51 = sbr.rel (0) target = $region41
    $region40: #{feedback_controller_forward.1} parent=1 // pred_region
      _
    $region41: #{feedback_controller_forward.1} parent=1 // pred_fallthru
      _
    // Predicated region
    $region42: #{feedback_controller_forward.1} parent=1 // pred_check
      _
    $region43: #{feedback_controller_forward.1} parent=1 // pred_check_branch
      %53 = sbr.rel (0) target = $region45
    $region44: #{feedback_controller_forward.1} parent=1 // pred_region
      _
    $region45: #{feedback_controller_forward.1} parent=1 // pred_fallthru
      _
    // Predicated region
    $region46: #{feedback_controller_forward.1} parent=1 // pred_check
      _
    $region47: #{feedback_controller_forward.1} parent=1 // pred_check_branch
      %55 = sbr.rel (0) target = $region49
    $region48: #{feedback_controller_forward.1} parent=1 // pred_region
      _
    $region49: #{feedback_controller_forward.1} parent=1 // pred_fallthru
      _
    // Predicated region
    $region50: #{feedback_controller_forward.1} parent=1 // pred_check
      _
    $region51: #{feedback_controller_forward.1} parent=1 // pred_check_branch
      %57 = sbr.rel (0) target = $region53
    $region52: #{feedback_controller_forward.1} parent=1 // pred_region
      _
    $region53: #{feedback_controller_forward.1} parent=1 // pred_fallthru
      _
    // Predicated region
    $region54: #{feedback_controller_forward.1} parent=1 // pred_check
      _
    $region55: #{feedback_controller_forward.1} parent=1 // pred_check_branch
      %59 = sbr.rel (0) target = $region57
    $region56: #{feedback_controller_forward.1} parent=1 // pred_region
      _
    $region57: #{feedback_controller_forward.1} parent=1 // pred_fallthru
      _
    // Predicated region
    $region58: #{feedback_controller_forward.1} parent=1 // pred_check
      _
    $region59: #{feedback_controller_forward.1} parent=1 // pred_check_branch
      %61 = sbr.rel (0) target = $region61
    $region60: #{feedback_controller_forward.1} parent=1 // pred_region
      _
    $region61: #{feedback_controller_forward.1} parent=1 // pred_fallthru
      _
    // Predicated region
    $region62: #{feedback_controller_forward.1} parent=1 // pred_check
      _
    $region63: #{feedback_controller_forward.1} parent=1 // pred_check_branch
      %63 = sbr.rel (0) target = $region65
    $region64: #{feedback_controller_forward.1} parent=1 // pred_region
      _
    $region65: #{feedback_controller_forward.1} parent=1 // pred_fallthru
      _
    // Predicated region
    $region66: #{feedback_controller_forward.1} parent=1 // pred_check
      _
    $region67: #{feedback_controller_forward.1} parent=1 // pred_check_branch
      %65 = sbr.rel (0) target = $region69
    $region68: #{feedback_controller_forward.1} parent=1 // pred_region
      _
    $region69: #{feedback_controller_forward.1} parent=1 // pred_fallthru
      _
    // Predicated region
    $region70: #{feedback_controller_forward.1} parent=1 // pred_check
      _
    $region71: #{feedback_controller_forward.1} parent=1 // pred_check_branch
      %67 = sbr.rel (0) target = $region73
    $region72: #{feedback_controller_forward.1} parent=1 // pred_region
      _
    $region73: #{feedback_controller_forward.1} parent=1 // pred_fallthru
      _
    // Predicated region
    $region74: #{feedback_controller_forward.1} parent=1 // pred_check
      _
    $region75: #{feedback_controller_forward.1} parent=1 // pred_check_branch
      %69 = sbr.rel (0) target = $region77
    $region76: #{feedback_controller_forward.1} parent=1 // pred_region
      _
    $region77: #{feedback_controller_forward.1} parent=1 // pred_fallthru
      _
    // Predicated region
    $region78: #{feedback_controller_forward.1} parent=1 // pred_check
      _
    $region79: #{feedback_controller_forward.1} parent=1 // pred_check_branch
      %71 = sbr.rel (0) target = $region81
    $region80: #{feedback_controller_forward.1} parent=1 // pred_region
      _
    $region81: #{feedback_controller_forward.1} parent=1 // pred_fallthru
      _
    %v72 = vld [vmem:[%s2] sm:$0xf]
    %v73 = vld [vmem:[%s6] sm:$0x1f]
    %v74 = vld [vmem:[%s8] sm:$0x1]
    %v76 = vlaneseq
    %v77 = vshrl.u32 %v76, 7
    %v78 = vsub.s32 0, %v77
    %v79 = vrot.slane %v74, %v78
    %vm81 = vcmask 39936
    %v83 = vsel %vm81, %v72, 0
    %vm85 = vcmask 1044480
    %v87 = vsel %vm85, %v73, 0
    %89 = vmatprep.subr.mxu0 0.0
    %90 = vmatpush1.msra.mxu0 %v87
    %91 = vmatprep.subr.mxu0 0.0
    %92 = vmatpush1.msra.mxu0 0.0
    %93 = vmatprep.subr.mxu0 0.0
    %94 = vmatpush1.msra.mxu0 0.0
    %95 = vmatprep.subr.mxu0 0.0
    %96 = vmatpush1.msra.mxu0 0.0
    %97 = vmatprep.subr.mxu0 0.0
    %98 = vmatpush1.msra.mxu0 0.0
    %99 = vmatprep.subr.mxu0 0.0
    %100 = vmatpush1.msra.mxu0 0.0
    %101 = vmatprep.subr.mxu0 0.0
    %102 = vmatpush1.msra.mxu0 0.0
    %103 = vmatprep.subr.mxu0 0.0
    %104 = vmatpush1.msra.mxu0 0.0
    %105 = vmatprep.subr.mxu0 0.0
    %106 = vmatpush1.msra.mxu0 0.0
    %107 = vmatprep.subr.mxu0 0.0
    %108 = vmatpush1.msra.mxu0 0.0
    %109 = vmatprep.subr.mxu0 0.0
    %110 = vmatpush1.msra.mxu0 0.0
    %111 = vmatprep.subr.mxu0 0.0
    %112 = vmatpush1.msra.mxu0 0.0
    %113 = vmatprep.subr.mxu0 0.0
    %114 = vmatpush1.msra.mxu0 0.0
    %115 = vmatprep.subr.mxu0 0.0
    %116 = vmatpush1.msra.mxu0 0.0
    %117 = vmatprep.subr.mxu0 0.0
    %118 = vmatpush1.msra.mxu0 0.0
    %119 = vmatprep.subr.mxu0 0.0
    %120 = vmatpush1.msra.mxu0 0.0
    %121 = vmatprep.subr.mxu0 0.0
    %122 = vmatpush1.msra.mxu0 0.0
    %123 = vmatprep.subr.mxu0 0.0
    %124 = vmatpush1.msra.mxu0 0.0
    %125 = vmatprep.subr.mxu0 0.0
    %126 = vmatpush1.msra.mxu0 0.0
    %127 = vmatprep.subr.mxu0 0.0
    %128 = vmatpush1.msra.mxu0 0.0
    %129 = vmatprep.subr.mxu0 0.0
    %130 = vmatpush1.msra.mxu0 0.0
    %131 = vmatprep.subr.mxu0 0.0
    %132 = vmatpush1.msra.mxu0 0.0
    %133 = vmatprep.subr.mxu0 0.0
    %134 = vmatpush1.msra.mxu0 0.0
    %135 = vmatprep.subr.mxu0 0.0
    %136 = vmatpush1.msra.mxu0 0.0
    %137 = vmatprep.subr.mxu0 0.0
    %138 = vmatpush1.msra.mxu0 0.0
    %139 = vmatprep.subr.mxu0 0.0
    %140 = vmatpush1.msra.mxu0 0.0
    %141 = vmatprep.subr.mxu0 0.0
    %142 = vmatpush1.msra.mxu0 0.0
    %143 = vmatprep.subr.mxu0 0.0
    %144 = vmatpush1.msra.mxu0 0.0
    %145 = vmatprep.subr.mxu0 0.0
    %146 = vmatpush1.msra.mxu0 0.0
    %147 = vmatprep.subr.mxu0 0.0
    %148 = vmatpush1.msra.mxu0 0.0
    %149 = vmatprep.subr.mxu0 0.0
    %150 = vmatpush1.msra.mxu0 0.0
    %151 = vmatprep.subr.mxu0 0.0
    %152 = vmatpush1.msra.mxu0 0.0
    %153 = vmatprep.mubr.f32.mxu0 0.0
    %154 = vmatmul.mubr.f32.gmra.mrb[0].mxu0 %v83
    %v155 = vpop.f32.mrb[0].mxu0
    %v156 = vadd.f32 %v79, %v155
    %v157 = vpop.f32.mrb[0].mxu0
    %158 = vdwg.mxu0
    %v159 = vld [vmem:[%s13] sm:$0x1f]
    %v160 = vld [vmem:[%s15] sm:$0x1]
    %v162 = vlaneseq
    %v163 = vshrl.u32 %v162, 7
    %v164 = vsub.s32 0, %v163
    %v165 = vrot.slane %v160, %v164
    %v168 = vsel %vm85, %v159, 0
    %170 = vmatprep.subr.mxu0 0.0
    %171 = vmatpush1.msra.mxu0 %v168
    %172 = vmatprep.subr.mxu0 0.0
    %173 = vmatpush1.msra.mxu0 0.0
    %174 = vmatprep.subr.mxu0 0.0
    %175 = vmatpush1.msra.mxu0 0.0
    %176 = vmatprep.subr.mxu0 0.0
    %177 = vmatpush1.msra.mxu0 0.0
    %178 = vmatprep.subr.mxu0 0.0
    %179 = vmatpush1.msra.mxu0 0.0
    %180 = vmatprep.subr.mxu0 0.0
    %181 = vmatpush1.msra.mxu0 0.0
    %182 = vmatprep.subr.mxu0 0.0
    %183 = vmatpush1.msra.mxu0 0.0
    %184 = vmatprep.subr.mxu0 0.0
    %185 = vmatpush1.msra.mxu0 0.0
    %186 = vmatprep.subr.mxu0 0.0
    %187 = vmatpush1.msra.mxu0 0.0
    %188 = vmatprep.subr.mxu0 0.0
    %189 = vmatpush1.msra.mxu0 0.0
    %190 = vmatprep.subr.mxu0 0.0
    %191 = vmatpush1.msra.mxu0 0.0
    %192 = vmatprep.subr.mxu0 0.0
    %193 = vmatpush1.msra.mxu0 0.0
    %194 = vmatprep.subr.mxu0 0.0
    %195 = vmatpush1.msra.mxu0 0.0
    %196 = vmatprep.subr.mxu0 0.0
    %197 = vmatpush1.msra.mxu0 0.0
    %198 = vmatprep.subr.mxu0 0.0
    %199 = vmatpush1.msra.mxu0 0.0
    %200 = vmatprep.subr.mxu0 0.0
    %201 = vmatpush1.msra.mxu0 0.0
    %202 = vmatprep.subr.mxu0 0.0
    %203 = vmatpush1.msra.mxu0 0.0
    %204 = vmatprep.subr.mxu0 0.0
    %205 = vmatpush1.msra.mxu0 0.0
    %206 = vmatprep.subr.mxu0 0.0
    %207 = vmatpush1.msra.mxu0 0.0
    %208 = vmatprep.subr.mxu0 0.0
    %209 = vmatpush1.msra.mxu0 0.0
    %210 = vmatprep.subr.mxu0 0.0
    %211 = vmatpush1.msra.mxu0 0.0
    %212 = vmatprep.subr.mxu0 0.0
    %213 = vmatpush1.msra.mxu0 0.0
    %214 = vmatprep.subr.mxu0 0.0
    %215 = vmatpush1.msra.mxu0 0.0
    %216 = vmatprep.subr.mxu0 0.0
    %217 = vmatpush1.msra.mxu0 0.0
    %218 = vmatprep.subr.mxu0 0.0
    %219 = vmatpush1.msra.mxu0 0.0
    %220 = vmatprep.subr.mxu0 0.0
    %221 = vmatpush1.msra.mxu0 0.0
    %222 = vmatprep.subr.mxu0 0.0
    %223 = vmatpush1.msra.mxu0 0.0
    %224 = vmatprep.subr.mxu0 0.0
    %225 = vmatpush1.msra.mxu0 0.0
    %226 = vmatprep.subr.mxu0 0.0
    %227 = vmatpush1.msra.mxu0 0.0
    %228 = vmatprep.subr.mxu0 0.0
    %229 = vmatpush1.msra.mxu0 0.0
    %230 = vmatprep.subr.mxu0 0.0
    %231 = vmatpush1.msra.mxu0 0.0
    %232 = vmatprep.subr.mxu0 0.0
    %233 = vmatpush1.msra.mxu0 0.0
    %234 = vmatprep.mubr.f32.mxu0 0.0
    %235 = vmatmul.mubr.f32.gmra.mrb[0].mxu0 %v83
    %v236 = vpop.f32.mrb[0].mxu0
    %v237 = vadd.f32 %v165, %v236
    %v238 = vpop.f32.mrb[0].mxu0
    %239 = vdwg.mxu0
    %v240 = vld [vmem:[%s3] sm:$0xf]
    %v241 = vmul.f32 %v240, 500.0
    %v242 = vrcp.pop %v241
    %v243 = vmul.f32 1.0, %v242
    %v244 = vld [vmem:[%s18] sm:$0x1]
    %v245 = vld [vmem:[%s1] sm:$0xf]
    %v246 = vld [vmem:[%s0] sm:$0xf]
    %248 = vrot.lane.b32.xlu0 %v245, 4
    %v249 = vpop.permute.xlu0 %248
    %vm251 = vcmask 31744
    %v252 = vsel %vm251, %v246, %v249
    %v253 = vld [vmem:[%s4] sm:$0xff]
    %v254 = vld [vmem:[%s4 + $0x8] sm:$0xff]
    %v255 = vld [vmem:[%s4 + $0x10] sm:$0xf]
    %v256 = vld [vmem:[%s5] sm:$0x1]
    %v258 = vlaneseq
    %v259 = vshrl.u32 %v258, 7
    %v260 = vsub.s32 0, %v259
    %v261 = vrot.slane %v256, %v260
    %vm263 = vcmask 162816
    %v265 = vsel %vm263, %v252, 0
    %vm267 = vcmask 1043456
    %v269 = vsel %vm267, %v255, 0
    %271 = vmatprep.subr.mxu0 0.0
    %272 = vmatpush1.msra.mxu0 %v253
    %273 = vmatprep.subr.mxu0 0.0
    %274 = vmatpush1.msra.mxu0 %v254
    %275 = vmatprep.subr.mxu0 0.0
    %276 = vmatpush1.msra.mxu0 %v269
    %277 = vmatprep.subr.mxu0 0.0
    %278 = vmatpush1.msra.mxu0 0.0
    %279 = vmatprep.subr.mxu0 0.0
    %280 = vmatpush1.msra.mxu0 0.0
    %281 = vmatprep.subr.mxu0 0.0
    %282 = vmatpush1.msra.mxu0 0.0
    %283 = vmatprep.subr.mxu0 0.0
    %284 = vmatpush1.msra.mxu0 0.0
    %285 = vmatprep.subr.mxu0 0.0
    %286 = vmatpush1.msra.mxu0 0.0
    %287 = vmatprep.subr.mxu0 0.0
    %288 = vmatpush1.msra.mxu0 0.0
    %289 = vmatprep.subr.mxu0 0.0
    %290 = vmatpush1.msra.mxu0 0.0
    %291 = vmatprep.subr.mxu0 0.0
    %292 = vmatpush1.msra.mxu0 0.0
    %293 = vmatprep.subr.mxu0 0.0
    %294 = vmatpush1.msra.mxu0 0.0
    %295 = vmatprep.subr.mxu0 0.0
    %296 = vmatpush1.msra.mxu0 0.0
    %297 = vmatprep.subr.mxu0 0.0
    %298 = vmatpush1.msra.mxu0 0.0
    %299 = vmatprep.subr.mxu0 0.0
    %300 = vmatpush1.msra.mxu0 0.0
    %301 = vmatprep.subr.mxu0 0.0
    %302 = vmatpush1.msra.mxu0 0.0
    %303 = vmatprep.subr.mxu0 0.0
    %304 = vmatpush1.msra.mxu0 0.0
    %305 = vmatprep.subr.mxu0 0.0
    %306 = vmatpush1.msra.mxu0 0.0
    %307 = vmatprep.subr.mxu0 0.0
    %308 = vmatpush1.msra.mxu0 0.0
    %309 = vmatprep.subr.mxu0 0.0
    %310 = vmatpush1.msra.mxu0 0.0
    %311 = vmatprep.subr.mxu0 0.0
    %312 = vmatpush1.msra.mxu0 0.0
    %313 = vmatprep.subr.mxu0 0.0
    %314 = vmatpush1.msra.mxu0 0.0
    %315 = vmatprep.subr.mxu0 0.0
    %316 = vmatpush1.msra.mxu0 0.0
    %317 = vmatprep.subr.mxu0 0.0
    %318 = vmatpush1.msra.mxu0 0.0
    %319 = vmatprep.subr.mxu0 0.0
    %320 = vmatpush1.msra.mxu0 0.0
    %321 = vmatprep.subr.mxu0 0.0
    %322 = vmatpush1.msra.mxu0 0.0
    %323 = vmatprep.subr.mxu0 0.0
    %324 = vmatpush1.msra.mxu0 0.0
    %325 = vmatprep.subr.mxu0 0.0
    %326 = vmatpush1.msra.mxu0 0.0
    %327 = vmatprep.subr.mxu0 0.0
    %328 = vmatpush1.msra.mxu0 0.0
    %329 = vmatprep.subr.mxu0 0.0
    %330 = vmatpush1.msra.mxu0 0.0
    %331 = vmatprep.subr.mxu0 0.0
    %332 = vmatpush1.msra.mxu0 0.0
    %333 = vmatprep.subr.mxu0 0.0
    %334 = vmatpush1.msra.mxu0 0.0
    %335 = vmatprep.mubr.f32.mxu0 0.0
    %336 = vmatmul.mubr.f32.gmra.mrb[0].mxu0 %v265
    %v337 = vpop.f32.mrb[0].mxu0
    %v338 = vadd.f32 %v261, %v337
    %v339 = vpop.f32.mrb[0].mxu0
    %340 = vdwg.mxu0
    %342 = vrot.lane.b32.xlu0 %v338, 80
    %v343 = vpop.permute.xlu0 %342
    %v345 = vadd.f32 %v338, %v343
    %v346 = vxor.u32 %v345, 2147483648
    %v347 = vmul.f32 %v346, 1.442695
    %v348 = vpow.pop %v347
    %v349 = vadd.f32 %v348, 1.0
    %v350 = vrcp.pop %v349
    %v351 = vmul.f32 1.0, %v350
    %352 = vrot.lane.b32.xlu0 %v338, 48
    %v353 = vpop.permute.xlu0 %352
    %v355 = vmul.f32 %v351, %v353
    %357 = vrot.lane.b32.xlu0 %v355, 32
    %v358 = vpop.permute.xlu0 %357
    %v360 = vadd.f32 %v338, %v358
    %v361 = vtanh.pop %v360
    %v362 = vsub.f32 1.0, %v351
    %364 = vrot.lane.b32.xlu0 %v361, 112
    %v365 = vpop.permute.xlu0 %364
    %v367 = vmul.f32 %v362, %v365
    %368 = vrot.lane.b32.xlu0 %v245, 16
    %v369 = vpop.permute.xlu0 %368
    %v371 = vmul.f32 %v351, %v369
    %v372 = vadd.f32 %v367, %v371
    %v373 = vld [vmem:[%s7] sm:$0xff]
    %v374 = vld [vmem:[%s7 + $0x8] sm:$0xff]
    %376 = vrot.lane.b32.xlu0 %v372, 112
    %v377 = vpop.permute.xlu0 %376
    %vm378 = vcmask 130048
    %v379 = vsel %vm378, %v377, 0
    %381 = vmatprep.subr.mxu0 0.0
    %382 = vmatpush1.msra.mxu0 %v373
    %383 = vmatprep.subr.mxu0 0.0
    %384 = vmatpush1.msra.mxu0 %v374
    %385 = vmatprep.subr.mxu0 0.0
    %386 = vmatpush1.msra.mxu0 0.0
    %387 = vmatprep.subr.mxu0 0.0
    %388 = vmatpush1.msra.mxu0 0.0
    %389 = vmatprep.subr.mxu0 0.0
    %390 = vmatpush1.msra.mxu0 0.0
    %391 = vmatprep.subr.mxu0 0.0
    %392 = vmatpush1.msra.mxu0 0.0
    %393 = vmatprep.subr.mxu0 0.0
    %394 = vmatpush1.msra.mxu0 0.0
    %395 = vmatprep.subr.mxu0 0.0
    %396 = vmatpush1.msra.mxu0 0.0
    %397 = vmatprep.subr.mxu0 0.0
    %398 = vmatpush1.msra.mxu0 0.0
    %399 = vmatprep.subr.mxu0 0.0
    %400 = vmatpush1.msra.mxu0 0.0
    %401 = vmatprep.subr.mxu0 0.0
    %402 = vmatpush1.msra.mxu0 0.0
    %403 = vmatprep.subr.mxu0 0.0
    %404 = vmatpush1.msra.mxu0 0.0
    %405 = vmatprep.subr.mxu0 0.0
    %406 = vmatpush1.msra.mxu0 0.0
    %407 = vmatprep.subr.mxu0 0.0
    %408 = vmatpush1.msra.mxu0 0.0
    %409 = vmatprep.subr.mxu0 0.0
    %410 = vmatpush1.msra.mxu0 0.0
    %411 = vmatprep.subr.mxu0 0.0
    %412 = vmatpush1.msra.mxu0 0.0
    %413 = vmatprep.subr.mxu0 0.0
    %414 = vmatpush1.msra.mxu0 0.0
    %415 = vmatprep.subr.mxu0 0.0
    %416 = vmatpush1.msra.mxu0 0.0
    %417 = vmatprep.subr.mxu0 0.0
    %418 = vmatpush1.msra.mxu0 0.0
    %419 = vmatprep.subr.mxu0 0.0
    %420 = vmatpush1.msra.mxu0 0.0
    %421 = vmatprep.subr.mxu0 0.0
    %422 = vmatpush1.msra.mxu0 0.0
    %423 = vmatprep.subr.mxu0 0.0
    %424 = vmatpush1.msra.mxu0 0.0
    %425 = vmatprep.subr.mxu0 0.0
    %426 = vmatpush1.msra.mxu0 0.0
    %427 = vmatprep.subr.mxu0 0.0
    %428 = vmatpush1.msra.mxu0 0.0
    %429 = vmatprep.subr.mxu0 0.0
    %430 = vmatpush1.msra.mxu0 0.0
    %431 = vmatprep.subr.mxu0 0.0
    %432 = vmatpush1.msra.mxu0 0.0
    %433 = vmatprep.subr.mxu0 0.0
    %434 = vmatpush1.msra.mxu0 0.0
    %435 = vmatprep.subr.mxu0 0.0
    %436 = vmatpush1.msra.mxu0 0.0
    %437 = vmatprep.subr.mxu0 0.0
    %438 = vmatpush1.msra.mxu0 0.0
    %439 = vmatprep.subr.mxu0 0.0
    %440 = vmatpush1.msra.mxu0 0.0
    %441 = vmatprep.subr.mxu0 0.0
    %442 = vmatpush1.msra.mxu0 0.0
    %443 = vmatprep.subr.mxu0 0.0
    %444 = vmatpush1.msra.mxu0 0.0
    %445 = vmatprep.mubr.f32.mxu0 0.0
    %446 = vmatmul.mubr.f32.gmra.mrb[0].mxu0 %v379
    %v447 = vpop.f32.mrb[0].mxu0
    %v448 = vadd.f32 %v156, %v447
    %v449 = vpop.f32.mrb[0].mxu0
    %450 = vdwg.mxu0
    %v451 = vmax.f32 %v448, 0.0
    %v452 = vld [vmem:[%s9] sm:$0xff]
    %v453 = vld [vmem:[%s9 + $0x8] sm:$0xff]
    %v454 = vld [vmem:[%s9 + $0x10] sm:$0xff]
    %v455 = vld [vmem:[%s9 + $0x18] sm:$0xff]
    %v456 = vld [vmem:[%s10] sm:$0x1]
    %v458 = vlaneseq
    %v459 = vshrl.u32 %v458, 7
    %v460 = vsub.s32 0, %v459
    %v461 = vrot.slane %v456, %v460
    %vm463 = vcmask 261120
    %v465 = vsel %vm463, %v451, 0
    %467 = vmatprep.subr.mxu0 0.0
    %468 = vmatpush1.msra.mxu0 %v452
    %469 = vmatprep.subr.mxu0 0.0
    %470 = vmatpush1.msra.mxu0 %v453
    %471 = vmatprep.subr.mxu0 0.0
    %472 = vmatpush1.msra.mxu0 %v454
    %473 = vmatprep.subr.mxu0 0.0
    %474 = vmatpush1.msra.mxu0 %v455
    %475 = vmatprep.subr.mxu0 0.0
    %476 = vmatpush1.msra.mxu0 0.0
    %477 = vmatprep.subr.mxu0 0.0
    %478 = vmatpush1.msra.mxu0 0.0
    %479 = vmatprep.subr.mxu0 0.0
    %480 = vmatpush1.msra.mxu0 0.0
    %481 = vmatprep.subr.mxu0 0.0
    %482 = vmatpush1.msra.mxu0 0.0
    %483 = vmatprep.subr.mxu0 0.0
    %484 = vmatpush1.msra.mxu0 0.0
    %485 = vmatprep.subr.mxu0 0.0
    %486 = vmatpush1.msra.mxu0 0.0
    %487 = vmatprep.subr.mxu0 0.0
    %488 = vmatpush1.msra.mxu0 0.0
    %489 = vmatprep.subr.mxu0 0.0
    %490 = vmatpush1.msra.mxu0 0.0
    %491 = vmatprep.subr.mxu0 0.0
    %492 = vmatpush1.msra.mxu0 0.0
    %493 = vmatprep.subr.mxu0 0.0
    %494 = vmatpush1.msra.mxu0 0.0
    %495 = vmatprep.subr.mxu0 0.0
    %496 = vmatpush1.msra.mxu0 0.0
    %497 = vmatprep.subr.mxu0 0.0
    %498 = vmatpush1.msra.mxu0 0.0
    %499 = vmatprep.subr.mxu0 0.0
    %500 = vmatpush1.msra.mxu0 0.0
    %501 = vmatprep.subr.mxu0 0.0
    %502 = vmatpush1.msra.mxu0 0.0
    %503 = vmatprep.subr.mxu0 0.0
    %504 = vmatpush1.msra.mxu0 0.0
    %505 = vmatprep.subr.mxu0 0.0
    %506 = vmatpush1.msra.mxu0 0.0
    %507 = vmatprep.subr.mxu0 0.0
    %508 = vmatpush1.msra.mxu0 0.0
    %509 = vmatprep.subr.mxu0 0.0
    %510 = vmatpush1.msra.mxu0 0.0
    %511 = vmatprep.subr.mxu0 0.0
    %512 = vmatpush1.msra.mxu0 0.0
    %513 = vmatprep.subr.mxu0 0.0
    %514 = vmatpush1.msra.mxu0 0.0
    %515 = vmatprep.subr.mxu0 0.0
    %516 = vmatpush1.msra.mxu0 0.0
    %517 = vmatprep.subr.mxu0 0.0
    %518 = vmatpush1.msra.mxu0 0.0
    %519 = vmatprep.subr.mxu0 0.0
    %520 = vmatpush1.msra.mxu0 0.0
    %521 = vmatprep.subr.mxu0 0.0
    %522 = vmatpush1.msra.mxu0 0.0
    %523 = vmatprep.subr.mxu0 0.0
    %524 = vmatpush1.msra.mxu0 0.0
    %525 = vmatprep.subr.mxu0 0.0
    %526 = vmatpush1.msra.mxu0 0.0
    %527 = vmatprep.subr.mxu0 0.0
    %528 = vmatpush1.msra.mxu0 0.0
    %529 = vmatprep.subr.mxu0 0.0
    %530 = vmatpush1.msra.mxu0 0.0
    %531 = vmatprep.mubr.f32.mxu0 0.0
    %532 = vmatmul.mubr.f32.gmra.mrb[0].mxu0 %v465
    %v533 = vpop.f32.mrb[0].mxu0
    %v534 = vadd.f32 %v461, %v533
    %v535 = vpop.f32.mrb[0].mxu0
    %536 = vdwg.mxu0
    %v537 = vmax.f32 %v534, 0.0
    %v538 = vld [vmem:[%s11] sm:$0xff]
    %v539 = vld [vmem:[%s11 + $0x8] sm:$0xff]
    %v540 = vld [vmem:[%s11 + $0x10] sm:$0xff]
    %v541 = vld [vmem:[%s11 + $0x18] sm:$0xff]
    %v542 = vld [vmem:[%s12] sm:$0x1]
    %v544 = vlaneseq
    %v545 = vshrl.u32 %v544, 7
    %v546 = vsub.s32 0, %v545
    %v547 = vrot.slane %v542, %v546
    %v550 = vsel %vm463, %v537, 0
    %552 = vmatprep.subr.mxu0 0.0
    %553 = vmatpush1.msra.mxu0 %v538
    %554 = vmatprep.subr.mxu0 0.0
    %555 = vmatpush1.msra.mxu0 %v539
    %556 = vmatprep.subr.mxu0 0.0
    %557 = vmatpush1.msra.mxu0 %v540
    %558 = vmatprep.subr.mxu0 0.0
    %559 = vmatpush1.msra.mxu0 %v541
    %560 = vmatprep.subr.mxu0 0.0
    %561 = vmatpush1.msra.mxu0 0.0
    %562 = vmatprep.subr.mxu0 0.0
    %563 = vmatpush1.msra.mxu0 0.0
    %564 = vmatprep.subr.mxu0 0.0
    %565 = vmatpush1.msra.mxu0 0.0
    %566 = vmatprep.subr.mxu0 0.0
    %567 = vmatpush1.msra.mxu0 0.0
    %568 = vmatprep.subr.mxu0 0.0
    %569 = vmatpush1.msra.mxu0 0.0
    %570 = vmatprep.subr.mxu0 0.0
    %571 = vmatpush1.msra.mxu0 0.0
    %572 = vmatprep.subr.mxu0 0.0
    %573 = vmatpush1.msra.mxu0 0.0
    %574 = vmatprep.subr.mxu0 0.0
    %575 = vmatpush1.msra.mxu0 0.0
    %576 = vmatprep.subr.mxu0 0.0
    %577 = vmatpush1.msra.mxu0 0.0
    %578 = vmatprep.subr.mxu0 0.0
    %579 = vmatpush1.msra.mxu0 0.0
    %580 = vmatprep.subr.mxu0 0.0
    %581 = vmatpush1.msra.mxu0 0.0
    %582 = vmatprep.subr.mxu0 0.0
    %583 = vmatpush1.msra.mxu0 0.0
    %584 = vmatprep.subr.mxu0 0.0
    %585 = vmatpush1.msra.mxu0 0.0
    %586 = vmatprep.subr.mxu0 0.0
    %587 = vmatpush1.msra.mxu0 0.0
    %588 = vmatprep.subr.mxu0 0.0
    %589 = vmatpush1.msra.mxu0 0.0
    %590 = vmatprep.subr.mxu0 0.0
    %591 = vmatpush1.msra.mxu0 0.0
    %592 = vmatprep.subr.mxu0 0.0
    %593 = vmatpush1.msra.mxu0 0.0
    %594 = vmatprep.subr.mxu0 0.0
    %595 = vmatpush1.msra.mxu0 0.0
    %596 = vmatprep.subr.mxu0 0.0
    %597 = vmatpush1.msra.mxu0 0.0
    %598 = vmatprep.subr.mxu0 0.0
    %599 = vmatpush1.msra.mxu0 0.0
    %600 = vmatprep.subr.mxu0 0.0
    %601 = vmatpush1.msra.mxu0 0.0
    %602 = vmatprep.subr.mxu0 0.0
    %603 = vmatpush1.msra.mxu0 0.0
    %604 = vmatprep.subr.mxu0 0.0
    %605 = vmatpush1.msra.mxu0 0.0
    %606 = vmatprep.subr.mxu0 0.0
    %607 = vmatpush1.msra.mxu0 0.0
    %608 = vmatprep.subr.mxu0 0.0
    %609 = vmatpush1.msra.mxu0 0.0
    %610 = vmatprep.subr.mxu0 0.0
    %611 = vmatpush1.msra.mxu0 0.0
    %612 = vmatprep.subr.mxu0 0.0
    %613 = vmatpush1.msra.mxu0 0.0
    %614 = vmatprep.subr.mxu0 0.0
    %615 = vmatpush1.msra.mxu0 0.0
    %616 = vmatprep.mubr.f32.mxu0 0.0
    %617 = vmatmul.mubr.f32.gmra.mrb[0].mxu0 %v550
    %v618 = vpop.f32.mrb[0].mxu0
    %v619 = vadd.f32 %v547, %v618
    %v620 = vpop.f32.mrb[0].mxu0
    %621 = vdwg.mxu0
    %v622 = vld [vmem:[%s14] sm:$0xff]
    %v623 = vld [vmem:[%s14 + $0x8] sm:$0xff]
    %624 = vmatprep.subr.mxu0 0.0
    %625 = vmatpush1.msra.mxu0 %v622
    %626 = vmatprep.subr.mxu0 0.0
    %627 = vmatpush1.msra.mxu0 %v623
    %628 = vmatprep.subr.mxu0 0.0
    %629 = vmatpush1.msra.mxu0 0.0
    %630 = vmatprep.subr.mxu0 0.0
    %631 = vmatpush1.msra.mxu0 0.0
    %632 = vmatprep.subr.mxu0 0.0
    %633 = vmatpush1.msra.mxu0 0.0
    %634 = vmatprep.subr.mxu0 0.0
    %635 = vmatpush1.msra.mxu0 0.0
    %636 = vmatprep.subr.mxu0 0.0
    %637 = vmatpush1.msra.mxu0 0.0
    %638 = vmatprep.subr.mxu0 0.0
    %639 = vmatpush1.msra.mxu0 0.0
    %640 = vmatprep.subr.mxu0 0.0
    %641 = vmatpush1.msra.mxu0 0.0
    %642 = vmatprep.subr.mxu0 0.0
    %643 = vmatpush1.msra.mxu0 0.0
    %644 = vmatprep.subr.mxu0 0.0
    %645 = vmatpush1.msra.mxu0 0.0
    %646 = vmatprep.subr.mxu0 0.0
    %647 = vmatpush1.msra.mxu0 0.0
    %648 = vmatprep.subr.mxu0 0.0
    %649 = vmatpush1.msra.mxu0 0.0
    %650 = vmatprep.subr.mxu0 0.0
    %651 = vmatpush1.msra.mxu0 0.0
    %652 = vmatprep.subr.mxu0 0.0
    %653 = vmatpush1.msra.mxu0 0.0
    %654 = vmatprep.subr.mxu0 0.0
    %655 = vmatpush1.msra.mxu0 0.0
    %656 = vmatprep.subr.mxu0 0.0
    %657 = vmatpush1.msra.mxu0 0.0
    %658 = vmatprep.subr.mxu0 0.0
    %659 = vmatpush1.msra.mxu0 0.0
    %660 = vmatprep.subr.mxu0 0.0
    %661 = vmatpush1.msra.mxu0 0.0
    %662 = vmatprep.subr.mxu0 0.0
    %663 = vmatpush1.msra.mxu0 0.0
    %664 = vmatprep.subr.mxu0 0.0
    %665 = vmatpush1.msra.mxu0 0.0
    %666 = vmatprep.subr.mxu0 0.0
    %667 = vmatpush1.msra.mxu0 0.0
    %668 = vmatprep.subr.mxu0 0.0
    %669 = vmatpush1.msra.mxu0 0.0
    %670 = vmatprep.subr.mxu0 0.0
    %671 = vmatpush1.msra.mxu0 0.0
    %672 = vmatprep.subr.mxu0 0.0
    %673 = vmatpush1.msra.mxu0 0.0
    %674 = vmatprep.subr.mxu0 0.0
    %675 = vmatpush1.msra.mxu0 0.0
    %676 = vmatprep.subr.mxu0 0.0
    %677 = vmatpush1.msra.mxu0 0.0
    %678 = vmatprep.subr.mxu0 0.0
    %679 = vmatpush1.msra.mxu0 0.0
    %680 = vmatprep.subr.mxu0 0.0
    %681 = vmatpush1.msra.mxu0 0.0
    %682 = vmatprep.subr.mxu0 0.0
    %683 = vmatpush1.msra.mxu0 0.0
    %684 = vmatprep.subr.mxu0 0.0
    %685 = vmatpush1.msra.mxu0 0.0
    %686 = vmatprep.subr.mxu0 0.0
    %687 = vmatpush1.msra.mxu0 0.0
    %688 = vmatprep.mubr.f32.mxu0 0.0
    %689 = vmatmul.mubr.f32.gmra.mrb[0].mxu0 %v379
    %v690 = vpop.f32.mrb[0].mxu0
    %v691 = vadd.f32 %v237, %v690
    %v692 = vpop.f32.mrb[0].mxu0
    %693 = vdwg.mxu0
    %v694 = vmax.f32 %v691, 0.0
    %v695 = vld [vmem:[%s16] sm:$0xff]
    %v696 = vld [vmem:[#allocation2] sm:$0x1]
    %v698 = vlaneseq
    %v699 = vshrl.u32 %v698, 7
    %v700 = vsub.s32 0, %v699
    %v701 = vrot.slane %v696, %v700
    %vm703 = vcmask 64512
    %v705 = vsel %vm703, %v694, 0
    %707 = vmatprep.subr.mxu0 0.0
    %708 = vmatpush1.msra.mxu0 %v695
    %709 = vmatprep.subr.mxu0 0.0
    %710 = vmatpush1.msra.mxu0 0.0
    %711 = vmatprep.subr.mxu0 0.0
    %712 = vmatpush1.msra.mxu0 0.0
    %713 = vmatprep.subr.mxu0 0.0
    %714 = vmatpush1.msra.mxu0 0.0
    %715 = vmatprep.subr.mxu0 0.0
    %716 = vmatpush1.msra.mxu0 0.0
    %717 = vmatprep.subr.mxu0 0.0
    %718 = vmatpush1.msra.mxu0 0.0
    %719 = vmatprep.subr.mxu0 0.0
    %720 = vmatpush1.msra.mxu0 0.0
    %721 = vmatprep.subr.mxu0 0.0
    %722 = vmatpush1.msra.mxu0 0.0
    %723 = vmatprep.subr.mxu0 0.0
    %724 = vmatpush1.msra.mxu0 0.0
    %725 = vmatprep.subr.mxu0 0.0
    %726 = vmatpush1.msra.mxu0 0.0
    %727 = vmatprep.subr.mxu0 0.0
    %728 = vmatpush1.msra.mxu0 0.0
    %729 = vmatprep.subr.mxu0 0.0
    %730 = vmatpush1.msra.mxu0 0.0
    %731 = vmatprep.subr.mxu0 0.0
    %732 = vmatpush1.msra.mxu0 0.0
    %733 = vmatprep.subr.mxu0 0.0
    %734 = vmatpush1.msra.mxu0 0.0
    %735 = vmatprep.subr.mxu0 0.0
    %736 = vmatpush1.msra.mxu0 0.0
    %737 = vmatprep.subr.mxu0 0.0
    %738 = vmatpush1.msra.mxu0 0.0
    %739 = vmatprep.subr.mxu0 0.0
    %740 = vmatpush1.msra.mxu0 0.0
    %741 = vmatprep.subr.mxu0 0.0
    %742 = vmatpush1.msra.mxu0 0.0
    %743 = vmatprep.subr.mxu0 0.0
    %744 = vmatpush1.msra.mxu0 0.0
    %745 = vmatprep.subr.mxu0 0.0
    %746 = vmatpush1.msra.mxu0 0.0
    %747 = vmatprep.subr.mxu0 0.0
    %748 = vmatpush1.msra.mxu0 0.0
    %749 = vmatprep.subr.mxu0 0.0
    %750 = vmatpush1.msra.mxu0 0.0
    %751 = vmatprep.subr.mxu0 0.0
    %752 = vmatpush1.msra.mxu0 0.0
    %753 = vmatprep.subr.mxu0 0.0
    %754 = vmatpush1.msra.mxu0 0.0
    %755 = vmatprep.subr.mxu0 0.0
    %756 = vmatpush1.msra.mxu0 0.0
    %757 = vmatprep.subr.mxu0 0.0
    %758 = vmatpush1.msra.mxu0 0.0
    %759 = vmatprep.subr.mxu0 0.0
    %760 = vmatpush1.msra.mxu0 0.0
    %761 = vmatprep.subr.mxu0 0.0
    %762 = vmatpush1.msra.mxu0 0.0
    %763 = vmatprep.subr.mxu0 0.0
    %764 = vmatpush1.msra.mxu0 0.0
    %765 = vmatprep.subr.mxu0 0.0
    %766 = vmatpush1.msra.mxu0 0.0
    %767 = vmatprep.subr.mxu0 0.0
    %768 = vmatpush1.msra.mxu0 0.0
    %769 = vmatprep.subr.mxu0 0.0
    %770 = vmatpush1.msra.mxu0 0.0
    %771 = vmatprep.mubr.f32.mxu0 0.0
    %772 = vmatmul.mubr.f32.gmra.mrb[0].mxu0 %v705
    %v773 = vpop.f32.mrb[0].mxu0
    %v774 = vadd.f32 %v701, %v773
    %v775 = vpop.f32.mrb[0].mxu0
    %776 = vdwg.mxu0
    %v777 = vrcp.pop 6.0
    %v778 = vmul.f32 %v774, %v777
    %v779 = vadd.f32 %v778, 0.5
    %v780 = vmax.f32 %v779, 0.0
    %v781 = vmin.f32 %v780, 1.0
    %v782 = vadd.f32 %v781, %v243
    %784 = vset.pattern.permute.xlu0 0
    %785 = vperm.xlu0 %784, %v782
    %v786 = vpop.permute.xlu0 %785
    %v789 = vlaneseq
    %v790 = vshrl.u32 %v789, 7
    %v791 = vsub.s32 0, %v790
    %v792 = vrot.slane %v244, %v791
    %v794 = vsub.f32 %v786, %v792
    %v795 = vmul.f32 %v794, %v794
    %v796 = vsub.f32 0.0, %v795
    %v797 = vrcp.pop 0.024
    %v798 = vmul.f32 %v796, %v797
    %v799 = vmul.f32 %v798, 1.442695
    %v800 = vpow.pop %v799
    %vm801 = vcmask 60416
    %v802 = vsel %vm801, %v800, 0.0
    %803 = vadd.xlane.f32.xlu0 %v802
    %v804 = vpop.xlane.xlu0 %803
    %v805 = vmul.f32 %v619, %v800
    %v806 = vld [vmem:[%s19] sm:$0xff]
    %v807 = vld [vmem:[%s19 + $0x8] sm:$0xff]
    %v808 = vld [vmem:[%s19 + $0x10] sm:$0xff]
    %v809 = vld [vmem:[%s19 + $0x18] sm:$0xff]
    %v811 = vsel %vm463, %v805, 0
    %813 = vmatprep.subr.mxu0 0.0
    %814 = vmatpush1.msra.mxu0 %v806
    %815 = vmatprep.subr.mxu0 0.0
    %816 = vmatpush1.msra.mxu0 %v807
    %817 = vmatprep.subr.mxu0 0.0
    %818 = vmatpush1.msra.mxu0 %v808
    %819 = vmatprep.subr.mxu0 0.0
    %820 = vmatpush1.msra.mxu0 %v809
    %821 = vmatprep.subr.mxu0 0.0
    %822 = vmatpush1.msra.mxu0 0.0
    %823 = vmatprep.subr.mxu0 0.0
    %824 = vmatpush1.msra.mxu0 0.0
    %825 = vmatprep.subr.mxu0 0.0
    %826 = vmatpush1.msra.mxu0 0.0
    %827 = vmatprep.subr.mxu0 0.0
    %828 = vmatpush1.msra.mxu0 0.0
    %829 = vmatprep.subr.mxu0 0.0
    %830 = vmatpush1.msra.mxu0 0.0
    %831 = vmatprep.subr.mxu0 0.0
    %832 = vmatpush1.msra.mxu0 0.0
    %833 = vmatprep.subr.mxu0 0.0
    %834 = vmatpush1.msra.mxu0 0.0
    %835 = vmatprep.subr.mxu0 0.0
    %836 = vmatpush1.msra.mxu0 0.0
    %837 = vmatprep.subr.mxu0 0.0
    %838 = vmatpush1.msra.mxu0 0.0
    %839 = vmatprep.subr.mxu0 0.0
    %840 = vmatpush1.msra.mxu0 0.0
    %841 = vmatprep.subr.mxu0 0.0
    %842 = vmatpush1.msra.mxu0 0.0
    %843 = vmatprep.subr.mxu0 0.0
    %844 = vmatpush1.msra.mxu0 0.0
    %845 = vmatprep.subr.mxu0 0.0
    %846 = vmatpush1.msra.mxu0 0.0
    %847 = vmatprep.subr.mxu0 0.0
    %848 = vmatpush1.msra.mxu0 0.0
    %849 = vmatprep.subr.mxu0 0.0
    %850 = vmatpush1.msra.mxu0 0.0
    %851 = vmatprep.subr.mxu0 0.0
    %852 = vmatpush1.msra.mxu0 0.0
    %853 = vmatprep.subr.mxu0 0.0
    %854 = vmatpush1.msra.mxu0 0.0
    %855 = vmatprep.subr.mxu0 0.0
    %856 = vmatpush1.msra.mxu0 0.0
    %857 = vmatprep.subr.mxu0 0.0
    %858 = vmatpush1.msra.mxu0 0.0
    %859 = vmatprep.subr.mxu0 0.0
    %860 = vmatpush1.msra.mxu0 0.0
    %861 = vmatprep.subr.mxu0 0.0
    %862 = vmatpush1.msra.mxu0 0.0
    %863 = vmatprep.subr.mxu0 0.0
    %864 = vmatpush1.msra.mxu0 0.0
    %865 = vmatprep.subr.mxu0 0.0
    %866 = vmatpush1.msra.mxu0 0.0
    %867 = vmatprep.subr.mxu0 0.0
    %868 = vmatpush1.msra.mxu0 0.0
    %869 = vmatprep.subr.mxu0 0.0
    %870 = vmatpush1.msra.mxu0 0.0
    %871 = vmatprep.subr.mxu0 0.0
    %872 = vmatpush1.msra.mxu0 0.0
    %873 = vmatprep.subr.mxu0 0.0
    %874 = vmatpush1.msra.mxu0 0.0
    %875 = vmatprep.subr.mxu0 0.0
    %876 = vmatpush1.msra.mxu0 0.0
    %877 = vmatprep.mubr.f32.mxu0 0.0
    %878 = vmatmul.mubr.f32.gmra.mrb[0].mxu0 %v811
    %v879 = vpop.f32.mrb[0].mxu0
    %v880 = vadd.f32 0.0, %v879
    %v881 = vpop.f32.mrb[0].mxu0
    %882 = vdwg.mxu0
    %v883 = vrcp.pop %v804
    %v884 = vmul.f32 %v880, %v883
    %vm885 = vcmask 27648
    %886 = vst.msk [vmem:[%s20] sm:$0xf] %vm885, %v884
    %vm887 = vcmask 3072
    %888 = vst.msk [vmem:[%s21] sm:$0xf] %vm887, %v782
    %vm889 = vcmask 257024
    %890 = vst.msk [vmem:[%s22] sm:$0xf] %vm889, %v619
    %s891 = scalar_lea.vmem %s0, 4
    %v892 = vld [vmem:[%s891] sm:$0xf]
    %893 = vrot.lane.b32.xlu0 %v372, 116
    %v894 = vpop.permute.xlu0 %893
    %v896 = vsel %vm251, %v892, %v894
    %v897 = vld [vmem:[%s4] sm:$0xff]
    %v898 = vld [vmem:[%s4 + $0x8] sm:$0xff]
    %v899 = vld [vmem:[%s4 + $0x10] sm:$0xf]
    %v900 = vld [vmem:[%s5] sm:$0x1]
    %v902 = vlaneseq
    %v903 = vshrl.u32 %v902, 7
    %v904 = vsub.s32 0, %v903
    %v905 = vrot.slane %v900, %v904
    %v908 = vsel %vm263, %v896, 0
    %v911 = vsel %vm267, %v899, 0
    %913 = vmatprep.subr.mxu0 0.0
    %914 = vmatpush1.msra.mxu0 %v897
    %915 = vmatprep.subr.mxu0 0.0
    %916 = vmatpush1.msra.mxu0 %v898
    %917 = vmatprep.subr.mxu0 0.0
    %918 = vmatpush1.msra.mxu0 %v911
    %919 = vmatprep.subr.mxu0 0.0
    %920 = vmatpush1.msra.mxu0 0.0
    %921 = vmatprep.subr.mxu0 0.0
    %922 = vmatpush1.msra.mxu0 0.0
    %923 = vmatprep.subr.mxu0 0.0
    %924 = vmatpush1.msra.mxu0 0.0
    %925 = vmatprep.subr.mxu0 0.0
    %926 = vmatpush1.msra.mxu0 0.0
    %927 = vmatprep.subr.mxu0 0.0
    %928 = vmatpush1.msra.mxu0 0.0
    %929 = vmatprep.subr.mxu0 0.0
    %930 = vmatpush1.msra.mxu0 0.0
    %931 = vmatprep.subr.mxu0 0.0
    %932 = vmatpush1.msra.mxu0 0.0
    %933 = vmatprep.subr.mxu0 0.0
    %934 = vmatpush1.msra.mxu0 0.0
    %935 = vmatprep.subr.mxu0 0.0
    %936 = vmatpush1.msra.mxu0 0.0
    %937 = vmatprep.subr.mxu0 0.0
    %938 = vmatpush1.msra.mxu0 0.0
    %939 = vmatprep.subr.mxu0 0.0
    %940 = vmatpush1.msra.mxu0 0.0
    %941 = vmatprep.subr.mxu0 0.0
    %942 = vmatpush1.msra.mxu0 0.0
    %943 = vmatprep.subr.mxu0 0.0
    %944 = vmatpush1.msra.mxu0 0.0
    %945 = vmatprep.subr.mxu0 0.0
    %946 = vmatpush1.msra.mxu0 0.0
    %947 = vmatprep.subr.mxu0 0.0
    %948 = vmatpush1.msra.mxu0 0.0
    %949 = vmatprep.subr.mxu0 0.0
    %950 = vmatpush1.msra.mxu0 0.0
    %951 = vmatprep.subr.mxu0 0.0
    %952 = vmatpush1.msra.mxu0 0.0
    %953 = vmatprep.subr.mxu0 0.0
    %954 = vmatpush1.msra.mxu0 0.0
    %955 = vmatprep.subr.mxu0 0.0
    %956 = vmatpush1.msra.mxu0 0.0
    %957 = vmatprep.subr.mxu0 0.0
    %958 = vmatpush1.msra.mxu0 0.0
    %959 = vmatprep.subr.mxu0 0.0
    %960 = vmatpush1.msra.mxu0 0.0
    %961 = vmatprep.subr.mxu0 0.0
    %962 = vmatpush1.msra.mxu0 0.0
    %963 = vmatprep.subr.mxu0 0.0
    %964 = vmatpush1.msra.mxu0 0.0
    %965 = vmatprep.subr.mxu0 0.0
    %966 = vmatpush1.msra.mxu0 0.0
    %967 = vmatprep.subr.mxu0 0.0
    %968 = vmatpush1.msra.mxu0 0.0
    %969 = vmatprep.subr.mxu0 0.0
    %970 = vmatpush1.msra.mxu0 0.0
    %971 = vmatprep.subr.mxu0 0.0
    %972 = vmatpush1.msra.mxu0 0.0
    %973 = vmatprep.subr.mxu0 0.0
    %974 = vmatpush1.msra.mxu0 0.0
    %975 = vmatprep.subr.mxu0 0.0
    %976 = vmatpush1.msra.mxu0 0.0
    %977 = vmatprep.mubr.f32.mxu0 0.0
    %978 = vmatmul.mubr.f32.gmra.mrb[0].mxu0 %v908
    %v979 = vpop.f32.mrb[0].mxu0
    %v980 = vadd.f32 %v905, %v979
    %v981 = vpop.f32.mrb[0].mxu0
    %982 = vdwg.mxu0
    %984 = vrot.lane.b32.xlu0 %v980, 80
    %v985 = vpop.permute.xlu0 %984
    %v987 = vadd.f32 %v980, %v985
    %v988 = vxor.u32 %v987, 2147483648
    %v989 = vmul.f32 %v988, 1.442695
    %v990 = vpow.pop %v989
    %v991 = vadd.f32 %v990, 1.0
    %v992 = vrcp.pop %v991
    %v993 = vmul.f32 1.0, %v992
    %994 = vrot.lane.b32.xlu0 %v980, 48
    %v995 = vpop.permute.xlu0 %994
    %v997 = vmul.f32 %v993, %v995
    %999 = vrot.lane.b32.xlu0 %v997, 32
    %v1000 = vpop.permute.xlu0 %999
    %v1002 = vadd.f32 %v980, %v1000
    %v1003 = vtanh.pop %v1002
    %v1004 = vsub.f32 1.0, %v993
    %1006 = vrot.lane.b32.xlu0 %v1003, 112
    %v1007 = vpop.permute.xlu0 %1006
    %v1009 = vmul.f32 %v1004, %v1007
    %v1010 = vmul.f32 %v993, %v372
    %v1011 = vadd.f32 %v1009, %v1010
    %v1012 = vld [vmem:[%s7] sm:$0xff]
    %v1013 = vld [vmem:[%s7 + $0x8] sm:$0xff]
    %1015 = vrot.lane.b32.xlu0 %v1011, 112
    %v1016 = vpop.permute.xlu0 %1015
    %v1017 = vsel %vm378, %v1016, 0
    %1019 = vmatprep.subr.mxu0 0.0
    %1020 = vmatpush1.msra.mxu0 %v1012
    %1021 = vmatprep.subr.mxu0 0.0
    %1022 = vmatpush1.msra.mxu0 %v1013
    %1023 = vmatprep.subr.mxu0 0.0
    %1024 = vmatpush1.msra.mxu0 0.0
    %1025 = vmatprep.subr.mxu0 0.0
    %1026 = vmatpush1.msra.mxu0 0.0
    %1027 = vmatprep.subr.mxu0 0.0
    %1028 = vmatpush1.msra.mxu0 0.0
    %1029 = vmatprep.subr.mxu0 0.0
    %1030 = vmatpush1.msra.mxu0 0.0
    %1031 = vmatprep.subr.mxu0 0.0
    %1032 = vmatpush1.msra.mxu0 0.0
    %1033 = vmatprep.subr.mxu0 0.0
    %1034 = vmatpush1.msra.mxu0 0.0
    %1035 = vmatprep.subr.mxu0 0.0
    %1036 = vmatpush1.msra.mxu0 0.0
    %1037 = vmatprep.subr.mxu0 0.0
    %1038 = vmatpush1.msra.mxu0 0.0
    %1039 = vmatprep.subr.mxu0 0.0
    %1040 = vmatpush1.msra.mxu0 0.0
    %1041 = vmatprep.subr.mxu0 0.0
    %1042 = vmatpush1.msra.mxu0 0.0
    %1043 = vmatprep.subr.mxu0 0.0
    %1044 = vmatpush1.msra.mxu0 0.0
    %1045 = vmatprep.subr.mxu0 0.0
    %1046 = vmatpush1.msra.mxu0 0.0
    %1047 = vmatprep.subr.mxu0 0.0
    %1048 = vmatpush1.msra.mxu0 0.0
    %1049 = vmatprep.subr.mxu0 0.0
    %1050 = vmatpush1.msra.mxu0 0.0
    %1051 = vmatprep.subr.mxu0 0.0
    %1052 = vmatpush1.msra.mxu0 0.0
    %1053 = vmatprep.subr.mxu0 0.0
    %1054 = vmatpush1.msra.mxu0 0.0
    %1055 = vmatprep.subr.mxu0 0.0
    %1056 = vmatpush1.msra.mxu0 0.0
    %1057 = vmatprep.subr.mxu0 0.0
    %1058 = vmatpush1.msra.mxu0 0.0
    %1059 = vmatprep.subr.mxu0 0.0
    %1060 = vmatpush1.msra.mxu0 0.0
    %1061 = vmatprep.subr.mxu0 0.0
    %1062 = vmatpush1.msra.mxu0 0.0
    %1063 = vmatprep.subr.mxu0 0.0
    %1064 = vmatpush1.msra.mxu0 0.0
    %1065 = vmatprep.subr.mxu0 0.0
    %1066 = vmatpush1.msra.mxu0 0.0
    %1067 = vmatprep.subr.mxu0 0.0
    %1068 = vmatpush1.msra.mxu0 0.0
    %1069 = vmatprep.subr.mxu0 0.0
    %1070 = vmatpush1.msra.mxu0 0.0
    %1071 = vmatprep.subr.mxu0 0.0
    %1072 = vmatpush1.msra.mxu0 0.0
    %1073 = vmatprep.subr.mxu0 0.0
    %1074 = vmatpush1.msra.mxu0 0.0
    %1075 = vmatprep.subr.mxu0 0.0
    %1076 = vmatpush1.msra.mxu0 0.0
    %1077 = vmatprep.subr.mxu0 0.0
    %1078 = vmatpush1.msra.mxu0 0.0
    %1079 = vmatprep.subr.mxu0 0.0
    %1080 = vmatpush1.msra.mxu0 0.0
    %1081 = vmatprep.subr.mxu0 0.0
    %1082 = vmatpush1.msra.mxu0 0.0
    %1083 = vmatprep.mubr.f32.mxu0 0.0
    %1084 = vmatmul.mubr.f32.gmra.mrb[0].mxu0 %v1017
    %v1085 = vpop.f32.mrb[0].mxu0
    %v1086 = vadd.f32 %v156, %v1085
    %v1087 = vpop.f32.mrb[0].mxu0
    %1088 = vdwg.mxu0
    %v1089 = vmax.f32 %v1086, 0.0
    %v1090 = vld [vmem:[%s9] sm:$0xff]
    %v1091 = vld [vmem:[%s9 + $0x8] sm:$0xff]
    %v1092 = vld [vmem:[%s9 + $0x10] sm:$0xff]
    %v1093 = vld [vmem:[%s9 + $0x18] sm:$0xff]
    %v1094 = vld [vmem:[%s10] sm:$0x1]
    %v1096 = vlaneseq
    %v1097 = vshrl.u32 %v1096, 7
    %v1098 = vsub.s32 0, %v1097
    %v1099 = vrot.slane %v1094, %v1098
    %v1102 = vsel %vm463, %v1089, 0
    %1104 = vmatprep.subr.mxu0 0.0
    %1105 = vmatpush1.msra.mxu0 %v1090
    %1106 = vmatprep.subr.mxu0 0.0
    %1107 = vmatpush1.msra.mxu0 %v1091
    %1108 = vmatprep.subr.mxu0 0.0
    %1109 = vmatpush1.msra.mxu0 %v1092
    %1110 = vmatprep.subr.mxu0 0.0
    %1111 = vmatpush1.msra.mxu0 %v1093
    %1112 = vmatprep.subr.mxu0 0.0
    %1113 = vmatpush1.msra.mxu0 0.0
    %1114 = vmatprep.subr.mxu0 0.0
    %1115 = vmatpush1.msra.mxu0 0.0
    %1116 = vmatprep.subr.mxu0 0.0
    %1117 = vmatpush1.msra.mxu0 0.0
    %1118 = vmatprep.subr.mxu0 0.0
    %1119 = vmatpush1.msra.mxu0 0.0
    %1120 = vmatprep.subr.mxu0 0.0
    %1121 = vmatpush1.msra.mxu0 0.0
    %1122 = vmatprep.subr.mxu0 0.0
    %1123 = vmatpush1.msra.mxu0 0.0
    %1124 = vmatprep.subr.mxu0 0.0
    %1125 = vmatpush1.msra.mxu0 0.0
    %1126 = vmatprep.subr.mxu0 0.0
    %1127 = vmatpush1.msra.mxu0 0.0
    %1128 = vmatprep.subr.mxu0 0.0
    %1129 = vmatpush1.msra.mxu0 0.0
    %1130 = vmatprep.subr.mxu0 0.0
    %1131 = vmatpush1.msra.mxu0 0.0
    %1132 = vmatprep.subr.mxu0 0.0
    %1133 = vmatpush1.msra.mxu0 0.0
    %1134 = vmatprep.subr.mxu0 0.0
    %1135 = vmatpush1.msra.mxu0 0.0
    %1136 = vmatprep.subr.mxu0 0.0
    %1137 = vmatpush1.msra.mxu0 0.0
    %1138 = vmatprep.subr.mxu0 0.0
    %1139 = vmatpush1.msra.mxu0 0.0
    %1140 = vmatprep.subr.mxu0 0.0
    %1141 = vmatpush1.msra.mxu0 0.0
    %1142 = vmatprep.subr.mxu0 0.0
    %1143 = vmatpush1.msra.mxu0 0.0
    %1144 = vmatprep.subr.mxu0 0.0
    %1145 = vmatpush1.msra.mxu0 0.0
    %1146 = vmatprep.subr.mxu0 0.0
    %1147 = vmatpush1.msra.mxu0 0.0
    %1148 = vmatprep.subr.mxu0 0.0
    %1149 = vmatpush1.msra.mxu0 0.0
    %1150 = vmatprep.subr.mxu0 0.0
    %1151 = vmatpush1.msra.mxu0 0.0
    %1152 = vmatprep.subr.mxu0 0.0
    %1153 = vmatpush1.msra.mxu0 0.0
    %1154 = vmatprep.subr.mxu0 0.0
    %1155 = vmatpush1.msra.mxu0 0.0
    %1156 = vmatprep.subr.mxu0 0.0
    %1157 = vmatpush1.msra.mxu0 0.0
    %1158 = vmatprep.subr.mxu0 0.0
    %1159 = vmatpush1.msra.mxu0 0.0
    %1160 = vmatprep.subr.mxu0 0.0
    %1161 = vmatpush1.msra.mxu0 0.0
    %1162 = vmatprep.subr.mxu0 0.0
    %1163 = vmatpush1.msra.mxu0 0.0
    %1164 = vmatprep.subr.mxu0 0.0
    %1165 = vmatpush1.msra.mxu0 0.0
    %1166 = vmatprep.subr.mxu0 0.0
    %1167 = vmatpush1.msra.mxu0 0.0
    %1168 = vmatprep.mubr.f32.mxu0 0.0
    %1169 = vmatmul.mubr.f32.gmra.mrb[0].mxu0 %v1102
    %v1170 = vpop.f32.mrb[0].mxu0
    %v1171 = vadd.f32 %v1099, %v1170
    %v1172 = vpop.f32.mrb[0].mxu0
    %1173 = vdwg.mxu0
    %v1174 = vmax.f32 %v1171, 0.0
    %v1175 = vld [vmem:[%s11] sm:$0xff]
    %v1176 = vld [vmem:[%s11 + $0x8] sm:$0xff]
    %v1177 = vld [vmem:[%s11 + $0x10] sm:$0xff]
    %v1178 = vld [vmem:[%s11 + $0x18] sm:$0xff]
    %v1179 = vld [vmem:[%s12] sm:$0x1]
    %v1181 = vlaneseq
    %v1182 = vshrl.u32 %v1181, 7
    %v1183 = vsub.s32 0, %v1182
    %v1184 = vrot.slane %v1179, %v1183
    %v1187 = vsel %vm463, %v1174, 0
    %1189 = vmatprep.subr.mxu0 0.0
    %1190 = vmatpush1.msra.mxu0 %v1175
    %1191 = vmatprep.subr.mxu0 0.0
    %1192 = vmatpush1.msra.mxu0 %v1176
    %1193 = vmatprep.subr.mxu0 0.0
    %1194 = vmatpush1.msra.mxu0 %v1177
    %1195 = vmatprep.subr.mxu0 0.0
    %1196 = vmatpush1.msra.mxu0 %v1178
    %1197 = vmatprep.subr.mxu0 0.0
    %1198 = vmatpush1.msra.mxu0 0.0
    %1199 = vmatprep.subr.mxu0 0.0
    %1200 = vmatpush1.msra.mxu0 0.0
    %1201 = vmatprep.subr.mxu0 0.0
    %1202 = vmatpush1.msra.mxu0 0.0
    %1203 = vmatprep.subr.mxu0 0.0
    %1204 = vmatpush1.msra.mxu0 0.0
    %1205 = vmatprep.subr.mxu0 0.0
    %1206 = vmatpush1.msra.mxu0 0.0
    %1207 = vmatprep.subr.mxu0 0.0
    %1208 = vmatpush1.msra.mxu0 0.0
    %1209 = vmatprep.subr.mxu0 0.0
    %1210 = vmatpush1.msra.mxu0 0.0
    %1211 = vmatprep.subr.mxu0 0.0
    %1212 = vmatpush1.msra.mxu0 0.0
    %1213 = vmatprep.subr.mxu0 0.0
    %1214 = vmatpush1.msra.mxu0 0.0
    %1215 = vmatprep.subr.mxu0 0.0
    %1216 = vmatpush1.msra.mxu0 0.0
    %1217 = vmatprep.subr.mxu0 0.0
    %1218 = vmatpush1.msra.mxu0 0.0
    %1219 = vmatprep.subr.mxu0 0.0
    %1220 = vmatpush1.msra.mxu0 0.0
    %1221 = vmatprep.subr.mxu0 0.0
    %1222 = vmatpush1.msra.mxu0 0.0
    %1223 = vmatprep.subr.mxu0 0.0
    %1224 = vmatpush1.msra.mxu0 0.0
    %1225 = vmatprep.subr.mxu0 0.0
    %1226 = vmatpush1.msra.mxu0 0.0
    %1227 = vmatprep.subr.mxu0 0.0
    %1228 = vmatpush1.msra.mxu0 0.0
    %1229 = vmatprep.subr.mxu0 0.0
    %1230 = vmatpush1.msra.mxu0 0.0
    %1231 = vmatprep.subr.mxu0 0.0
    %1232 = vmatpush1.msra.mxu0 0.0
    %1233 = vmatprep.subr.mxu0 0.0
    %1234 = vmatpush1.msra.mxu0 0.0
    %1235 = vmatprep.subr.mxu0 0.0
    %1236 = vmatpush1.msra.mxu0 0.0
    %1237 = vmatprep.subr.mxu0 0.0
    %1238 = vmatpush1.msra.mxu0 0.0
    %1239 = vmatprep.subr.mxu0 0.0
    %1240 = vmatpush1.msra.mxu0 0.0
    %1241 = vmatprep.subr.mxu0 0.0
    %1242 = vmatpush1.msra.mxu0 0.0
    %1243 = vmatprep.subr.mxu0 0.0
    %1244 = vmatpush1.msra.mxu0 0.0
    %1245 = vmatprep.subr.mxu0 0.0
    %1246 = vmatpush1.msra.mxu0 0.0
    %1247 = vmatprep.subr.mxu0 0.0
    %1248 = vmatpush1.msra.mxu0 0.0
    %1249 = vmatprep.subr.mxu0 0.0
    %1250 = vmatpush1.msra.mxu0 0.0
    %1251 = vmatprep.subr.mxu0 0.0
    %1252 = vmatpush1.msra.mxu0 0.0
    %1253 = vmatprep.mubr.f32.mxu0 0.0
    %1254 = vmatmul.mubr.f32.gmra.mrb[0].mxu0 %v1187
    %v1255 = vpop.f32.mrb[0].mxu0
    %v1256 = vadd.f32 %v1184, %v1255
    %v1257 = vpop.f32.mrb[0].mxu0
    %1258 = vdwg.mxu0
    %v1259 = vld [vmem:[%s14] sm:$0xff]
    %v1260 = vld [vmem:[%s14 + $0x8] sm:$0xff]
    %1261 = vmatprep.subr.mxu0 0.0
    %1262 = vmatpush1.msra.mxu0 %v1259
    %1263 = vmatprep.subr.mxu0 0.0
    %1264 = vmatpush1.msra.mxu0 %v1260
    %1265 = vmatprep.subr.mxu0 0.0
    %1266 = vmatpush1.msra.mxu0 0.0
    %1267 = vmatprep.subr.mxu0 0.0
    %1268 = vmatpush1.msra.mxu0 0.0
    %1269 = vmatprep.subr.mxu0 0.0
    %1270 = vmatpush1.msra.mxu0 0.0
    %1271 = vmatprep.subr.mxu0 0.0
    %1272 = vmatpush1.msra.mxu0 0.0
    %1273 = vmatprep.subr.mxu0 0.0
    %1274 = vmatpush1.msra.mxu0 0.0
    %1275 = vmatprep.subr.mxu0 0.0
    %1276 = vmatpush1.msra.mxu0 0.0
    %1277 = vmatprep.subr.mxu0 0.0
    %1278 = vmatpush1.msra.mxu0 0.0
    %1279 = vmatprep.subr.mxu0 0.0
    %1280 = vmatpush1.msra.mxu0 0.0
    %1281 = vmatprep.subr.mxu0 0.0
    %1282 = vmatpush1.msra.mxu0 0.0
    %1283 = vmatprep.subr.mxu0 0.0
    %1284 = vmatpush1.msra.mxu0 0.0
    %1285 = vmatprep.subr.mxu0 0.0
    %1286 = vmatpush1.msra.mxu0 0.0
    %1287 = vmatprep.subr.mxu0 0.0
    %1288 = vmatpush1.msra.mxu0 0.0
    %1289 = vmatprep.subr.mxu0 0.0
    %1290 = vmatpush1.msra.mxu0 0.0
    %1291 = vmatprep.subr.mxu0 0.0
    %1292 = vmatpush1.msra.mxu0 0.0
    %1293 = vmatprep.subr.mxu0 0.0
    %1294 = vmatpush1.msra.mxu0 0.0
    %1295 = vmatprep.subr.mxu0 0.0
    %1296 = vmatpush1.msra.mxu0 0.0
    %1297 = vmatprep.subr.mxu0 0.0
    %1298 = vmatpush1.msra.mxu0 0.0
    %1299 = vmatprep.subr.mxu0 0.0
    %1300 = vmatpush1.msra.mxu0 0.0
    %1301 = vmatprep.subr.mxu0 0.0
    %1302 = vmatpush1.msra.mxu0 0.0
    %1303 = vmatprep.subr.mxu0 0.0
    %1304 = vmatpush1.msra.mxu0 0.0
    %1305 = vmatprep.subr.mxu0 0.0
    %1306 = vmatpush1.msra.mxu0 0.0
    %1307 = vmatprep.subr.mxu0 0.0
    %1308 = vmatpush1.msra.mxu0 0.0
    %1309 = vmatprep.subr.mxu0 0.0
    %1310 = vmatpush1.msra.mxu0 0.0
    %1311 = vmatprep.subr.mxu0 0.0
    %1312 = vmatpush1.msra.mxu0 0.0
    %1313 = vmatprep.subr.mxu0 0.0
    %1314 = vmatpush1.msra.mxu0 0.0
    %1315 = vmatprep.subr.mxu0 0.0
    %1316 = vmatpush1.msra.mxu0 0.0
    %1317 = vmatprep.subr.mxu0 0.0
    %1318 = vmatpush1.msra.mxu0 0.0
    %1319 = vmatprep.subr.mxu0 0.0
    %1320 = vmatpush1.msra.mxu0 0.0
    %1321 = vmatprep.subr.mxu0 0.0
    %1322 = vmatpush1.msra.mxu0 0.0
    %1323 = vmatprep.subr.mxu0 0.0
    %1324 = vmatpush1.msra.mxu0 0.0
    %1325 = vmatprep.mubr.f32.mxu0 0.0
    %1326 = vmatmul.mubr.f32.gmra.mrb[0].mxu0 %v1017
    %v1327 = vpop.f32.mrb[0].mxu0
    %v1328 = vadd.f32 %v237, %v1327
    %v1329 = vpop.f32.mrb[0].mxu0
    %1330 = vdwg.mxu0
    %v1331 = vmax.f32 %v1328, 0.0
    %v1332 = vld [vmem:[%s16] sm:$0xff]
    %v1333 = vld [vmem:[#allocation2] sm:$0x1]
    %v1335 = vlaneseq
    %v1336 = vshrl.u32 %v1335, 7
    %v1337 = vsub.s32 0, %v1336
    %v1338 = vrot.slane %v1333, %v1337
    %v1341 = vsel %vm703, %v1331, 0
    %1343 = vmatprep.subr.mxu0 0.0
    %1344 = vmatpush1.msra.mxu0 %v1332
    %1345 = vmatprep.subr.mxu0 0.0
    %1346 = vmatpush1.msra.mxu0 0.0
    %1347 = vmatprep.subr.mxu0 0.0
    %1348 = vmatpush1.msra.mxu0 0.0
    %1349 = vmatprep.subr.mxu0 0.0
    %1350 = vmatpush1.msra.mxu0 0.0
    %1351 = vmatprep.subr.mxu0 0.0
    %1352 = vmatpush1.msra.mxu0 0.0
    %1353 = vmatprep.subr.mxu0 0.0
    %1354 = vmatpush1.msra.mxu0 0.0
    %1355 = vmatprep.subr.mxu0 0.0
    %1356 = vmatpush1.msra.mxu0 0.0
    %1357 = vmatprep.subr.mxu0 0.0
    %1358 = vmatpush1.msra.mxu0 0.0
    %1359 = vmatprep.subr.mxu0 0.0
    %1360 = vmatpush1.msra.mxu0 0.0
    %1361 = vmatprep.subr.mxu0 0.0
    %1362 = vmatpush1.msra.mxu0 0.0
    %1363 = vmatprep.subr.mxu0 0.0
    %1364 = vmatpush1.msra.mxu0 0.0
    %1365 = vmatprep.subr.mxu0 0.0
    %1366 = vmatpush1.msra.mxu0 0.0
    %1367 = vmatprep.subr.mxu0 0.0
    %1368 = vmatpush1.msra.mxu0 0.0
    %1369 = vmatprep.subr.mxu0 0.0
    %1370 = vmatpush1.msra.mxu0 0.0
    %1371 = vmatprep.subr.mxu0 0.0
    %1372 = vmatpush1.msra.mxu0 0.0
    %1373 = vmatprep.subr.mxu0 0.0
    %1374 = vmatpush1.msra.mxu0 0.0
    %1375 = vmatprep.subr.mxu0 0.0
    %1376 = vmatpush1.msra.mxu0 0.0
    %1377 = vmatprep.subr.mxu0 0.0
    %1378 = vmatpush1.msra.mxu0 0.0
    %1379 = vmatprep.subr.mxu0 0.0
    %1380 = vmatpush1.msra.mxu0 0.0
    %1381 = vmatprep.subr.mxu0 0.0
    %1382 = vmatpush1.msra.mxu0 0.0
    %1383 = vmatprep.subr.mxu0 0.0
    %1384 = vmatpush1.msra.mxu0 0.0
    %1385 = vmatprep.subr.mxu0 0.0
    %1386 = vmatpush1.msra.mxu0 0.0
    %1387 = vmatprep.subr.mxu0 0.0
    %1388 = vmatpush1.msra.mxu0 0.0
    %1389 = vmatprep.subr.mxu0 0.0
    %1390 = vmatpush1.msra.mxu0 0.0
    %1391 = vmatprep.subr.mxu0 0.0
    %1392 = vmatpush1.msra.mxu0 0.0
    %1393 = vmatprep.subr.mxu0 0.0
    %1394 = vmatpush1.msra.mxu0 0.0
    %1395 = vmatprep.subr.mxu0 0.0
    %1396 = vmatpush1.msra.mxu0 0.0
    %1397 = vmatprep.subr.mxu0 0.0
    %1398 = vmatpush1.msra.mxu0 0.0
    %1399 = vmatprep.subr.mxu0 0.0
    %1400 = vmatpush1.msra.mxu0 0.0
    %1401 = vmatprep.subr.mxu0 0.0
    %1402 = vmatpush1.msra.mxu0 0.0
    %1403 = vmatprep.subr.mxu0 0.0
    %1404 = vmatpush1.msra.mxu0 0.0
    %1405 = vmatprep.subr.mxu0 0.0
    %1406 = vmatpush1.msra.mxu0 0.0
    %1407 = vmatprep.mubr.f32.mxu0 0.0
    %1408 = vmatmul.mubr.f32.gmra.mrb[0].mxu0 %v1341
    %v1409 = vpop.f32.mrb[0].mxu0
    %v1410 = vadd.f32 %v1338, %v1409
    %v1411 = vpop.f32.mrb[0].mxu0
    %1412 = vdwg.mxu0
    %v1413 = vmul.f32 %v1410, %v777
    %v1414 = vadd.f32 %v1413, 0.5
    %v1415 = vmax.f32 %v1414, 0.0
    %v1416 = vmin.f32 %v1415, 1.0
    %v1417 = vadd.f32 %v1416, %v243
    %1419 = vset.pattern.permute.xlu0 0
    %1420 = vperm.xlu0 %1419, %v1417
    %v1421 = vpop.permute.xlu0 %1420
    %v1423 = vsub.f32 %v1421, %v792
    %v1424 = vmul.f32 %v1423, %v1423
    %v1425 = vsub.f32 0.0, %v1424
    %v1426 = vmul.f32 %v1425, %v797
    %v1427 = vmul.f32 %v1426, 1.442695
    %v1428 = vpow.pop %v1427
    %v1429 = vsel %vm801, %v1428, 0.0
    %1430 = vadd.xlane.f32.xlu0 %v1429
    %v1431 = vpop.xlane.xlu0 %1430
    %v1432 = vmul.f32 %v1256, %v1428
    %v1433 = vld [vmem:[%s19] sm:$0xff]
    %v1434 = vld [vmem:[%s19 + $0x8] sm:$0xff]
    %v1435 = vld [vmem:[%s19 + $0x10] sm:$0xff]
    %v1436 = vld [vmem:[%s19 + $0x18] sm:$0xff]
    %v1438 = vsel %vm463, %v1432, 0
    %1440 = vmatprep.subr.mxu0 0.0
    %1441 = vmatpush1.msra.mxu0 %v1433
    %1442 = vmatprep.subr.mxu0 0.0
    %1443 = vmatpush1.msra.mxu0 %v1434
    %1444 = vmatprep.subr.mxu0 0.0
    %1445 = vmatpush1.msra.mxu0 %v1435
    %1446 = vmatprep.subr.mxu0 0.0
    %1447 = vmatpush1.msra.mxu0 %v1436
    %1448 = vmatprep.subr.mxu0 0.0
    %1449 = vmatpush1.msra.mxu0 0.0
    %1450 = vmatprep.subr.mxu0 0.0
    %1451 = vmatpush1.msra.mxu0 0.0
    %1452 = vmatprep.subr.mxu0 0.0
    %1453 = vmatpush1.msra.mxu0 0.0
    %1454 = vmatprep.subr.mxu0 0.0
    %1455 = vmatpush1.msra.mxu0 0.0
    %1456 = vmatprep.subr.mxu0 0.0
    %1457 = vmatpush1.msra.mxu0 0.0
    %1458 = vmatprep.subr.mxu0 0.0
    %1459 = vmatpush1.msra.mxu0 0.0
    %1460 = vmatprep.subr.mxu0 0.0
    %1461 = vmatpush1.msra.mxu0 0.0
    %1462 = vmatprep.subr.mxu0 0.0
    %1463 = vmatpush1.msra.mxu0 0.0
    %1464 = vmatprep.subr.mxu0 0.0
    %1465 = vmatpush1.msra.mxu0 0.0
    %1466 = vmatprep.subr.mxu0 0.0
    %1467 = vmatpush1.msra.mxu0 0.0
    %1468 = vmatprep.subr.mxu0 0.0
    %1469 = vmatpush1.msra.mxu0 0.0
    %1470 = vmatprep.subr.mxu0 0.0
    %1471 = vmatpush1.msra.mxu0 0.0
    %1472 = vmatprep.subr.mxu0 0.0
    %1473 = vmatpush1.msra.mxu0 0.0
    %1474 = vmatprep.subr.mxu0 0.0
    %1475 = vmatpush1.msra.mxu0 0.0
    %1476 = vmatprep.subr.mxu0 0.0
    %1477 = vmatpush1.msra.mxu0 0.0
    %1478 = vmatprep.subr.mxu0 0.0
    %1479 = vmatpush1.msra.mxu0 0.0
    %1480 = vmatprep.subr.mxu0 0.0
    %1481 = vmatpush1.msra.mxu0 0.0
    %1482 = vmatprep.subr.mxu0 0.0
    %1483 = vmatpush1.msra.mxu0 0.0
    %1484 = vmatprep.subr.mxu0 0.0
    %1485 = vmatpush1.msra.mxu0 0.0
    %1486 = vmatprep.subr.mxu0 0.0
    %1487 = vmatpush1.msra.mxu0 0.0
    %1488 = vmatprep.subr.mxu0 0.0
    %1489 = vmatpush1.msra.mxu0 0.0
    %1490 = vmatprep.subr.mxu0 0.0
    %1491 = vmatpush1.msra.mxu0 0.0
    %1492 = vmatprep.subr.mxu0 0.0
    %1493 = vmatpush1.msra.mxu0 0.0
    %1494 = vmatprep.subr.mxu0 0.0
    %1495 = vmatpush1.msra.mxu0 0.0
    %1496 = vmatprep.subr.mxu0 0.0
    %1497 = vmatpush1.msra.mxu0 0.0
    %1498 = vmatprep.subr.mxu0 0.0
    %1499 = vmatpush1.msra.mxu0 0.0
    %1500 = vmatprep.subr.mxu0 0.0
    %1501 = vmatpush1.msra.mxu0 0.0
    %1502 = vmatprep.subr.mxu0 0.0
    %1503 = vmatpush1.msra.mxu0 0.0
    %1504 = vmatprep.mubr.f32.mxu0 0.0
    %1505 = vmatmul.mubr.f32.gmra.mrb[0].mxu0 %v1438
    %v1506 = vpop.f32.mrb[0].mxu0
    %v1507 = vadd.f32 0.0, %v1506
    %v1508 = vpop.f32.mrb[0].mxu0
    %1509 = vdwg.mxu0
    %v1510 = vrcp.pop %v1431
    %v1511 = vmul.f32 %v1507, %v1510
    %s1512 = scalar_lea.vmem %s20, 4
    %1513 = vst.msk [vmem:[%s1512] sm:$0xf] %vm885, %v1511
    %s1514 = scalar_lea.vmem %s21, 4
    %1515 = vst.msk [vmem:[%s1514] sm:$0xf] %vm887, %v1417
    %s1516 = scalar_lea.vmem %s22, 4
    %1517 = vst.msk [vmem:[%s1516] sm:$0xf] %vm889, %v1256
    %s1518 = scalar_lea.vmem %s0, 8
    %v1519 = vld [vmem:[%s1518] sm:$0xf]
    %1520 = vrot.lane.b32.xlu0 %v1011, 116
    %v1521 = vpop.permute.xlu0 %1520
    %v1523 = vsel %vm251, %v1519, %v1521
    %v1524 = vld [vmem:[%s4] sm:$0xff]
    %v1525 = vld [vmem:[%s4 + $0x8] sm:$0xff]
    %v1526 = vld [vmem:[%s4 + $0x10] sm:$0xf]
    %v1527 = vld [vmem:[%s5] sm:$0x1]
    %v1529 = vlaneseq
    %v1530 = vshrl.u32 %v1529, 7
    %v1531 = vsub.s32 0, %v1530
    %v1532 = vrot.slane %v1527, %v1531
    %v1535 = vsel %vm263, %v1523, 0
    %v1538 = vsel %vm267, %v1526, 0
    %1540 = vmatprep.subr.mxu0 0.0
    %1541 = vmatpush1.msra.mxu0 %v1524
    %1542 = vmatprep.subr.mxu0 0.0
    %1543 = vmatpush1.msra.mxu0 %v1525
    %1544 = vmatprep.subr.mxu0 0.0
    %1545 = vmatpush1.msra.mxu0 %v1538
    %1546 = vmatprep.subr.mxu0 0.0
    %1547 = vmatpush1.msra.mxu0 0.0
    %1548 = vmatprep.subr.mxu0 0.0
    %1549 = vmatpush1.msra.mxu0 0.0
    %1550 = vmatprep.subr.mxu0 0.0
    %1551 = vmatpush1.msra.mxu0 0.0
    %1552 = vmatprep.subr.mxu0 0.0
    %1553 = vmatpush1.msra.mxu0 0.0
    %1554 = vmatprep.subr.mxu0 0.0
    %1555 = vmatpush1.msra.mxu0 0.0
    %1556 = vmatprep.subr.mxu0 0.0
    %1557 = vmatpush1.msra.mxu0 0.0
    %1558 = vmatprep.subr.mxu0 0.0
    %1559 = vmatpush1.msra.mxu0 0.0
    %1560 = vmatprep.subr.mxu0 0.0
    %1561 = vmatpush1.msra.mxu0 0.0
    %1562 = vmatprep.subr.mxu0 0.0
    %1563 = vmatpush1.msra.mxu0 0.0
    %1564 = vmatprep.subr.mxu0 0.0
    %1565 = vmatpush1.msra.mxu0 0.0
    %1566 = vmatprep.subr.mxu0 0.0
    %1567 = vmatpush1.msra.mxu0 0.0
    %1568 = vmatprep.subr.mxu0 0.0
    %1569 = vmatpush1.msra.mxu0 0.0
    %1570 = vmatprep.subr.mxu0 0.0
    %1571 = vmatpush1.msra.mxu0 0.0
    %1572 = vmatprep.subr.mxu0 0.0
    %1573 = vmatpush1.msra.mxu0 0.0
    %1574 = vmatprep.subr.mxu0 0.0
    %1575 = vmatpush1.msra.mxu0 0.0
    %1576 = vmatprep.subr.mxu0 0.0
    %1577 = vmatpush1.msra.mxu0 0.0
    %1578 = vmatprep.subr.mxu0 0.0
    %1579 = vmatpush1.msra.mxu0 0.0
    %1580 = vmatprep.subr.mxu0 0.0
    %1581 = vmatpush1.msra.mxu0 0.0
    %1582 = vmatprep.subr.mxu0 0.0
    %1583 = vmatpush1.msra.mxu0 0.0
    %1584 = vmatprep.subr.mxu0 0.0
    %1585 = vmatpush1.msra.mxu0 0.0
    %1586 = vmatprep.subr.mxu0 0.0
    %1587 = vmatpush1.msra.mxu0 0.0
    %1588 = vmatprep.subr.mxu0 0.0
    %1589 = vmatpush1.msra.mxu0 0.0
    %1590 = vmatprep.subr.mxu0 0.0
    %1591 = vmatpush1.msra.mxu0 0.0
    %1592 = vmatprep.subr.mxu0 0.0
    %1593 = vmatpush1.msra.mxu0 0.0
    %1594 = vmatprep.subr.mxu0 0.0
    %1595 = vmatpush1.msra.mxu0 0.0
    %1596 = vmatprep.subr.mxu0 0.0
    %1597 = vmatpush1.msra.mxu0 0.0
    %1598 = vmatprep.subr.mxu0 0.0
    %1599 = vmatpush1.msra.mxu0 0.0
    %1600 = vmatprep.subr.mxu0 0.0
    %1601 = vmatpush1.msra.mxu0 0.0
    %1602 = vmatprep.subr.mxu0 0.0
    %1603 = vmatpush1.msra.mxu0 0.0
    %1604 = vmatprep.mubr.f32.mxu0 0.0
    %1605 = vmatmul.mubr.f32.gmra.mrb[0].mxu0 %v1535
    %v1606 = vpop.f32.mrb[0].mxu0
    %v1607 = vadd.f32 %v1532, %v1606
    %v1608 = vpop.f32.mrb[0].mxu0
    %1609 = vdwg.mxu0
    %1611 = vrot.lane.b32.xlu0 %v1607, 80
    %v1612 = vpop.permute.xlu0 %1611
    %v1614 = vadd.f32 %v1607, %v1612
    %v1615 = vxor.u32 %v1614, 2147483648
    %v1616 = vmul.f32 %v1615, 1.442695
    %v1617 = vpow.pop %v1616
    %v1618 = vadd.f32 %v1617, 1.0
    %v1619 = vrcp.pop %v1618
    %v1620 = vmul.f32 1.0, %v1619
    %1621 = vrot.lane.b32.xlu0 %v1607, 48
    %v1622 = vpop.permute.xlu0 %1621
    %v1624 = vmul.f32 %v1620, %v1622
    %1626 = vrot.lane.b32.xlu0 %v1624, 32
    %v1627 = vpop.permute.xlu0 %1626
    %v1629 = vadd.f32 %v1607, %v1627
    %v1630 = vtanh.pop %v1629
    %v1631 = vsub.f32 1.0, %v1620
    %1633 = vrot.lane.b32.xlu0 %v1630, 112
    %v1634 = vpop.permute.xlu0 %1633
    %v1636 = vmul.f32 %v1631, %v1634
    %v1637 = vmul.f32 %v1620, %v1011
    %v1638 = vadd.f32 %v1636, %v1637
    %v1639 = vld [vmem:[%s7] sm:$0xff]
    %v1640 = vld [vmem:[%s7 + $0x8] sm:$0xff]
    %1642 = vrot.lane.b32.xlu0 %v1638, 112
    %v1643 = vpop.permute.xlu0 %1642
    %v1644 = vsel %vm378, %v1643, 0
    %1646 = vmatprep.subr.mxu0 0.0
    %1647 = vmatpush1.msra.mxu0 %v1639
    %1648 = vmatprep.subr.mxu0 0.0
    %1649 = vmatpush1.msra.mxu0 %v1640
    %1650 = vmatprep.subr.mxu0 0.0
    %1651 = vmatpush1.msra.mxu0 0.0
    %1652 = vmatprep.subr.mxu0 0.0
    %1653 = vmatpush1.msra.mxu0 0.0
    %1654 = vmatprep.subr.mxu0 0.0
    %1655 = vmatpush1.msra.mxu0 0.0
    %1656 = vmatprep.subr.mxu0 0.0
    %1657 = vmatpush1.msra.mxu0 0.0
    %1658 = vmatprep.subr.mxu0 0.0
    %1659 = vmatpush1.msra.mxu0 0.0
    %1660 = vmatprep.subr.mxu0 0.0
    %1661 = vmatpush1.msra.mxu0 0.0
    %1662 = vmatprep.subr.mxu0 0.0
    %1663 = vmatpush1.msra.mxu0 0.0
    %1664 = vmatprep.subr.mxu0 0.0
    %1665 = vmatpush1.msra.mxu0 0.0
    %1666 = vmatprep.subr.mxu0 0.0
    %1667 = vmatpush1.msra.mxu0 0.0
    %1668 = vmatprep.subr.mxu0 0.0
    %1669 = vmatpush1.msra.mxu0 0.0
    %1670 = vmatprep.subr.mxu0 0.0
    %1671 = vmatpush1.msra.mxu0 0.0
    %1672 = vmatprep.subr.mxu0 0.0
    %1673 = vmatpush1.msra.mxu0 0.0
    %1674 = vmatprep.subr.mxu0 0.0
    %1675 = vmatpush1.msra.mxu0 0.0
    %1676 = vmatprep.subr.mxu0 0.0
    %1677 = vmatpush1.msra.mxu0 0.0
    %1678 = vmatprep.subr.mxu0 0.0
    %1679 = vmatpush1.msra.mxu0 0.0
    %1680 = vmatprep.subr.mxu0 0.0
    %1681 = vmatpush1.msra.mxu0 0.0
    %1682 = vmatprep.subr.mxu0 0.0
    %1683 = vmatpush1.msra.mxu0 0.0
    %1684 = vmatprep.subr.mxu0 0.0
    %1685 = vmatpush1.msra.mxu0 0.0
    %1686 = vmatprep.subr.mxu0 0.0
    %1687 = vmatpush1.msra.mxu0 0.0
    %1688 = vmatprep.subr.mxu0 0.0
    %1689 = vmatpush1.msra.mxu0 0.0
    %1690 = vmatprep.subr.mxu0 0.0
    %1691 = vmatpush1.msra.mxu0 0.0
    %1692 = vmatprep.subr.mxu0 0.0
    %1693 = vmatpush1.msra.mxu0 0.0
    %1694 = vmatprep.subr.mxu0 0.0
    %1695 = vmatpush1.msra.mxu0 0.0
    %1696 = vmatprep.subr.mxu0 0.0
    %1697 = vmatpush1.msra.mxu0 0.0
    %1698 = vmatprep.subr.mxu0 0.0
    %1699 = vmatpush1.msra.mxu0 0.0
    %1700 = vmatprep.subr.mxu0 0.0
    %1701 = vmatpush1.msra.mxu0 0.0
    %1702 = vmatprep.subr.mxu0 0.0
    %1703 = vmatpush1.msra.mxu0 0.0
    %1704 = vmatprep.subr.mxu0 0.0
    %1705 = vmatpush1.msra.mxu0 0.0
    %1706 = vmatprep.subr.mxu0 0.0
    %1707 = vmatpush1.msra.mxu0 0.0
    %1708 = vmatprep.subr.mxu0 0.0
    %1709 = vmatpush1.msra.mxu0 0.0
    %1710 = vmatprep.mubr.f32.mxu0 0.0
    %1711 = vmatmul.mubr.f32.gmra.mrb[0].mxu0 %v1644
    %v1712 = vpop.f32.mrb[0].mxu0
    %v1713 = vadd.f32 %v156, %v1712
    %v1714 = vpop.f32.mrb[0].mxu0
    %1715 = vdwg.mxu0
    %v1716 = vmax.f32 %v1713, 0.0
    %v1717 = vld [vmem:[%s9] sm:$0xff]
    %v1718 = vld [vmem:[%s9 + $0x8] sm:$0xff]
    %v1719 = vld [vmem:[%s9 + $0x10] sm:$0xff]
    %v1720 = vld [vmem:[%s9 + $0x18] sm:$0xff]
    %v1721 = vld [vmem:[%s10] sm:$0x1]
    %v1723 = vlaneseq
    %v1724 = vshrl.u32 %v1723, 7
    %v1725 = vsub.s32 0, %v1724
    %v1726 = vrot.slane %v1721, %v1725
    %v1729 = vsel %vm463, %v1716, 0
    %1731 = vmatprep.subr.mxu0 0.0
    %1732 = vmatpush1.msra.mxu0 %v1717
    %1733 = vmatprep.subr.mxu0 0.0
    %1734 = vmatpush1.msra.mxu0 %v1718
    %1735 = vmatprep.subr.mxu0 0.0
    %1736 = vmatpush1.msra.mxu0 %v1719
    %1737 = vmatprep.subr.mxu0 0.0
    %1738 = vmatpush1.msra.mxu0 %v1720
    %1739 = vmatprep.subr.mxu0 0.0
    %1740 = vmatpush1.msra.mxu0 0.0
    %1741 = vmatprep.subr.mxu0 0.0
    %1742 = vmatpush1.msra.mxu0 0.0
    %1743 = vmatprep.subr.mxu0 0.0
    %1744 = vmatpush1.msra.mxu0 0.0
    %1745 = vmatprep.subr.mxu0 0.0
    %1746 = vmatpush1.msra.mxu0 0.0
    %1747 = vmatprep.subr.mxu0 0.0
    %1748 = vmatpush1.msra.mxu0 0.0
    %1749 = vmatprep.subr.mxu0 0.0
    %1750 = vmatpush1.msra.mxu0 0.0
    %1751 = vmatprep.subr.mxu0 0.0
    %1752 = vmatpush1.msra.mxu0 0.0
    %1753 = vmatprep.subr.mxu0 0.0
    %1754 = vmatpush1.msra.mxu0 0.0
    %1755 = vmatprep.subr.mxu0 0.0
    %1756 = vmatpush1.msra.mxu0 0.0
    %1757 = vmatprep.subr.mxu0 0.0
    %1758 = vmatpush1.msra.mxu0 0.0
    %1759 = vmatprep.subr.mxu0 0.0
    %1760 = vmatpush1.msra.mxu0 0.0
    %1761 = vmatprep.subr.mxu0 0.0
    %1762 = vmatpush1.msra.mxu0 0.0
    %1763 = vmatprep.subr.mxu0 0.0
    %1764 = vmatpush1.msra.mxu0 0.0
    %1765 = vmatprep.subr.mxu0 0.0
    %1766 = vmatpush1.msra.mxu0 0.0
    %1767 = vmatprep.subr.mxu0 0.0
    %1768 = vmatpush1.msra.mxu0 0.0
    %1769 = vmatprep.subr.mxu0 0.0
    %1770 = vmatpush1.msra.mxu0 0.0
    %1771 = vmatprep.subr.mxu0 0.0
    %1772 = vmatpush1.msra.mxu0 0.0
    %1773 = vmatprep.subr.mxu0 0.0
    %1774 = vmatpush1.msra.mxu0 0.0
    %1775 = vmatprep.subr.mxu0 0.0
    %1776 = vmatpush1.msra.mxu0 0.0
    %1777 = vmatprep.subr.mxu0 0.0
    %1778 = vmatpush1.msra.mxu0 0.0
    %1779 = vmatprep.subr.mxu0 0.0
    %1780 = vmatpush1.msra.mxu0 0.0
    %1781 = vmatprep.subr.mxu0 0.0
    %1782 = vmatpush1.msra.mxu0 0.0
    %1783 = vmatprep.subr.mxu0 0.0
    %1784 = vmatpush1.msra.mxu0 0.0
    %1785 = vmatprep.subr.mxu0 0.0
    %1786 = vmatpush1.msra.mxu0 0.0
    %1787 = vmatprep.subr.mxu0 0.0
    %1788 = vmatpush1.msra.mxu0 0.0
    %1789 = vmatprep.subr.mxu0 0.0
    %1790 = vmatpush1.msra.mxu0 0.0
    %1791 = vmatprep.subr.mxu0 0.0
    %1792 = vmatpush1.msra.mxu0 0.0
    %1793 = vmatprep.subr.mxu0 0.0
    %1794 = vmatpush1.msra.mxu0 0.0
    %1795 = vmatprep.mubr.f32.mxu0 0.0
    %1796 = vmatmul.mubr.f32.gmra.mrb[0].mxu0 %v1729
    %v1797 = vpop.f32.mrb[0].mxu0
    %v1798 = vadd.f32 %v1726, %v1797
    %v1799 = vpop.f32.mrb[0].mxu0
    %1800 = vdwg.mxu0
    %v1801 = vmax.f32 %v1798, 0.0
    %v1802 = vld [vmem:[%s11] sm:$0xff]
    %v1803 = vld [vmem:[%s11 + $0x8] sm:$0xff]
    %v1804 = vld [vmem:[%s11 + $0x10] sm:$0xff]
    %v1805 = vld [vmem:[%s11 + $0x18] sm:$0xff]
    %v1806 = vld [vmem:[%s12] sm:$0x1]
    %v1808 = vlaneseq
    %v1809 = vshrl.u32 %v1808, 7
    %v1810 = vsub.s32 0, %v1809
    %v1811 = vrot.slane %v1806, %v1810
    %v1814 = vsel %vm463, %v1801, 0
    %1816 = vmatprep.subr.mxu0 0.0
    %1817 = vmatpush1.msra.mxu0 %v1802
    %1818 = vmatprep.subr.mxu0 0.0
    %1819 = vmatpush1.msra.mxu0 %v1803
    %1820 = vmatprep.subr.mxu0 0.0
    %1821 = vmatpush1.msra.mxu0 %v1804
    %1822 = vmatprep.subr.mxu0 0.0
    %1823 = vmatpush1.msra.mxu0 %v1805
    %1824 = vmatprep.subr.mxu0 0.0
    %1825 = vmatpush1.msra.mxu0 0.0
    %1826 = vmatprep.subr.mxu0 0.0
    %1827 = vmatpush1.msra.mxu0 0.0
    %1828 = vmatprep.subr.mxu0 0.0
    %1829 = vmatpush1.msra.mxu0 0.0
    %1830 = vmatprep.subr.mxu0 0.0
    %1831 = vmatpush1.msra.mxu0 0.0
    %1832 = vmatprep.subr.mxu0 0.0
    %1833 = vmatpush1.msra.mxu0 0.0
    %1834 = vmatprep.subr.mxu0 0.0
    %1835 = vmatpush1.msra.mxu0 0.0
    %1836 = vmatprep.subr.mxu0 0.0
    %1837 = vmatpush1.msra.mxu0 0.0
    %1838 = vmatprep.subr.mxu0 0.0
    %1839 = vmatpush1.msra.mxu0 0.0
    %1840 = vmatprep.subr.mxu0 0.0
    %1841 = vmatpush1.msra.mxu0 0.0
    %1842 = vmatprep.subr.mxu0 0.0
    %1843 = vmatpush1.msra.mxu0 0.0
    %1844 = vmatprep.subr.mxu0 0.0
    %1845 = vmatpush1.msra.mxu0 0.0
    %1846 = vmatprep.subr.mxu0 0.0
    %1847 = vmatpush1.msra.mxu0 0.0
    %1848 = vmatprep.subr.mxu0 0.0
    %1849 = vmatpush1.msra.mxu0 0.0
    %1850 = vmatprep.subr.mxu0 0.0
    %1851 = vmatpush1.msra.mxu0 0.0
    %1852 = vmatprep.subr.mxu0 0.0
    %1853 = vmatpush1.msra.mxu0 0.0
    %1854 = vmatprep.subr.mxu0 0.0
    %1855 = vmatpush1.msra.mxu0 0.0
    %1856 = vmatprep.subr.mxu0 0.0
    %1857 = vmatpush1.msra.mxu0 0.0
    %1858 = vmatprep.subr.mxu0 0.0
    %1859 = vmatpush1.msra.mxu0 0.0
    %1860 = vmatprep.subr.mxu0 0.0
    %1861 = vmatpush1.msra.mxu0 0.0
    %1862 = vmatprep.subr.mxu0 0.0
    %1863 = vmatpush1.msra.mxu0 0.0
    %1864 = vmatprep.subr.mxu0 0.0
    %1865 = vmatpush1.msra.mxu0 0.0
    %1866 = vmatprep.subr.mxu0 0.0
    %1867 = vmatpush1.msra.mxu0 0.0
    %1868 = vmatprep.subr.mxu0 0.0
    %1869 = vmatpush1.msra.mxu0 0.0
    %1870 = vmatprep.subr.mxu0 0.0
    %1871 = vmatpush1.msra.mxu0 0.0
    %1872 = vmatprep.subr.mxu0 0.0
    %1873 = vmatpush1.msra.mxu0 0.0
    %1874 = vmatprep.subr.mxu0 0.0
    %1875 = vmatpush1.msra.mxu0 0.0
    %1876 = vmatprep.subr.mxu0 0.0
    %1877 = vmatpush1.msra.mxu0 0.0
    %1878 = vmatprep.subr.mxu0 0.0
    %1879 = vmatpush1.msra.mxu0 0.0
    %1880 = vmatprep.mubr.f32.mxu0 0.0
    %1881 = vmatmul.mubr.f32.gmra.mrb[0].mxu0 %v1814
    %v1882 = vpop.f32.mrb[0].mxu0
    %v1883 = vadd.f32 %v1811, %v1882
    %v1884 = vpop.f32.mrb[0].mxu0
    %1885 = vdwg.mxu0
    %v1886 = vld [vmem:[%s14] sm:$0xff]
    %v1887 = vld [vmem:[%s14 + $0x8] sm:$0xff]
    %1888 = vmatprep.subr.mxu0 0.0
    %1889 = vmatpush1.msra.mxu0 %v1886
    %1890 = vmatprep.subr.mxu0 0.0
    %1891 = vmatpush1.msra.mxu0 %v1887
    %1892 = vmatprep.subr.mxu0 0.0
    %1893 = vmatpush1.msra.mxu0 0.0
    %1894 = vmatprep.subr.mxu0 0.0
    %1895 = vmatpush1.msra.mxu0 0.0
    %1896 = vmatprep.subr.mxu0 0.0
    %1897 = vmatpush1.msra.mxu0 0.0
    %1898 = vmatprep.subr.mxu0 0.0
    %1899 = vmatpush1.msra.mxu0 0.0
    %1900 = vmatprep.subr.mxu0 0.0
    %1901 = vmatpush1.msra.mxu0 0.0
    %1902 = vmatprep.subr.mxu0 0.0
    %1903 = vmatpush1.msra.mxu0 0.0
    %1904 = vmatprep.subr.mxu0 0.0
    %1905 = vmatpush1.msra.mxu0 0.0
    %1906 = vmatprep.subr.mxu0 0.0
    %1907 = vmatpush1.msra.mxu0 0.0
    %1908 = vmatprep.subr.mxu0 0.0
    %1909 = vmatpush1.msra.mxu0 0.0
    %1910 = vmatprep.subr.mxu0 0.0
    %1911 = vmatpush1.msra.mxu0 0.0
    %1912 = vmatprep.subr.mxu0 0.0
    %1913 = vmatpush1.msra.mxu0 0.0
    %1914 = vmatprep.subr.mxu0 0.0
    %1915 = vmatpush1.msra.mxu0 0.0
    %1916 = vmatprep.subr.mxu0 0.0
    %1917 = vmatpush1.msra.mxu0 0.0
    %1918 = vmatprep.subr.mxu0 0.0
    %1919 = vmatpush1.msra.mxu0 0.0
    %1920 = vmatprep.subr.mxu0 0.0
    %1921 = vmatpush1.msra.mxu0 0.0
    %1922 = vmatprep.subr.mxu0 0.0
    %1923 = vmatpush1.msra.mxu0 0.0
    %1924 = vmatprep.subr.mxu0 0.0
    %1925 = vmatpush1.msra.mxu0 0.0
    %1926 = vmatprep.subr.mxu0 0.0
    %1927 = vmatpush1.msra.mxu0 0.0
    %1928 = vmatprep.subr.mxu0 0.0
    %1929 = vmatpush1.msra.mxu0 0.0
    %1930 = vmatprep.subr.mxu0 0.0
    %1931 = vmatpush1.msra.mxu0 0.0
    %1932 = vmatprep.subr.mxu0 0.0
    %1933 = vmatpush1.msra.mxu0 0.0
    %1934 = vmatprep.subr.mxu0 0.0
    %1935 = vmatpush1.msra.mxu0 0.0
    %1936 = vmatprep.subr.mxu0 0.0
    %1937 = vmatpush1.msra.mxu0 0.0
    %1938 = vmatprep.subr.mxu0 0.0
    %1939 = vmatpush1.msra.mxu0 0.0
    %1940 = vmatprep.subr.mxu0 0.0
    %1941 = vmatpush1.msra.mxu0 0.0
    %1942 = vmatprep.subr.mxu0 0.0
    %1943 = vmatpush1.msra.mxu0 0.0
    %1944 = vmatprep.subr.mxu0 0.0
    %1945 = vmatpush1.msra.mxu0 0.0
    %1946 = vmatprep.subr.mxu0 0.0
    %1947 = vmatpush1.msra.mxu0 0.0
    %1948 = vmatprep.subr.mxu0 0.0
    %1949 = vmatpush1.msra.mxu0 0.0
    %1950 = vmatprep.subr.mxu0 0.0
    %1951 = vmatpush1.msra.mxu0 0.0
    %1952 = vmatprep.mubr.f32.mxu0 0.0
    %1953 = vmatmul.mubr.f32.gmra.mrb[0].mxu0 %v1644
    %v1954 = vpop.f32.mrb[0].mxu0
    %v1955 = vadd.f32 %v237, %v1954
    %v1956 = vpop.f32.mrb[0].mxu0
    %1957 = vdwg.mxu0
    %v1958 = vmax.f32 %v1955, 0.0
    %v1959 = vld [vmem:[%s16] sm:$0xff]
    %v1960 = vld [vmem:[#allocation2] sm:$0x1]
    %v1962 = vlaneseq
    %v1963 = vshrl.u32 %v1962, 7
    %v1964 = vsub.s32 0, %v1963
    %v1965 = vrot.slane %v1960, %v1964
    %v1968 = vsel %vm703, %v1958, 0
    %1970 = vmatprep.subr.mxu0 0.0
    %1971 = vmatpush1.msra.mxu0 %v1959
    %1972 = vmatprep.subr.mxu0 0.0
    %1973 = vmatpush1.msra.mxu0 0.0
    %1974 = vmatprep.subr.mxu0 0.0
    %1975 = vmatpush1.msra.mxu0 0.0
    %1976 = vmatprep.subr.mxu0 0.0
    %1977 = vmatpush1.msra.mxu0 0.0
    %1978 = vmatprep.subr.mxu0 0.0
    %1979 = vmatpush1.msra.mxu0 0.0
    %1980 = vmatprep.subr.mxu0 0.0
    %1981 = vmatpush1.msra.mxu0 0.0
    %1982 = vmatprep.subr.mxu0 0.0
    %1983 = vmatpush1.msra.mxu0 0.0
    %1984 = vmatprep.subr.mxu0 0.0
    %1985 = vmatpush1.msra.mxu0 0.0
    %1986 = vmatprep.subr.mxu0 0.0
    %1987 = vmatpush1.msra.mxu0 0.0
    %1988 = vmatprep.subr.mxu0 0.0
    %1989 = vmatpush1.msra.mxu0 0.0
    %1990 = vmatprep.subr.mxu0 0.0
    %1991 = vmatpush1.msra.mxu0 0.0
    %1992 = vmatprep.subr.mxu0 0.0
    %1993 = vmatpush1.msra.mxu0 0.0
    %1994 = vmatprep.subr.mxu0 0.0
    %1995 = vmatpush1.msra.mxu0 0.0
    %1996 = vmatprep.subr.mxu0 0.0
    %1997 = vmatpush1.msra.mxu0 0.0
    %1998 = vmatprep.subr.mxu0 0.0
    %1999 = vmatpush1.msra.mxu0 0.0
    %2000 = vmatprep.subr.mxu0 0.0
    %2001 = vmatpush1.msra.mxu0 0.0
    %2002 = vmatprep.subr.mxu0 0.0
    %2003 = vmatpush1.msra.mxu0 0.0
    %2004 = vmatprep.subr.mxu0 0.0
    %2005 = vmatpush1.msra.mxu0 0.0
    %2006 = vmatprep.subr.mxu0 0.0
    %2007 = vmatpush1.msra.mxu0 0.0
    %2008 = vmatprep.subr.mxu0 0.0
    %2009 = vmatpush1.msra.mxu0 0.0
    %2010 = vmatprep.subr.mxu0 0.0
    %2011 = vmatpush1.msra.mxu0 0.0
    %2012 = vmatprep.subr.mxu0 0.0
    %2013 = vmatpush1.msra.mxu0 0.0
    %2014 = vmatprep.subr.mxu0 0.0
    %2015 = vmatpush1.msra.mxu0 0.0
    %2016 = vmatprep.subr.mxu0 0.0
    %2017 = vmatpush1.msra.mxu0 0.0
    %2018 = vmatprep.subr.mxu0 0.0
    %2019 = vmatpush1.msra.mxu0 0.0
    %2020 = vmatprep.subr.mxu0 0.0
    %2021 = vmatpush1.msra.mxu0 0.0
    %2022 = vmatprep.subr.mxu0 0.0
    %2023 = vmatpush1.msra.mxu0 0.0
    %2024 = vmatprep.subr.mxu0 0.0
    %2025 = vmatpush1.msra.mxu0 0.0
    %2026 = vmatprep.subr.mxu0 0.0
    %2027 = vmatpush1.msra.mxu0 0.0
    %2028 = vmatprep.subr.mxu0 0.0
    %2029 = vmatpush1.msra.mxu0 0.0
    %2030 = vmatprep.subr.mxu0 0.0
    %2031 = vmatpush1.msra.mxu0 0.0
    %2032 = vmatprep.subr.mxu0 0.0
    %2033 = vmatpush1.msra.mxu0 0.0
    %2034 = vmatprep.mubr.f32.mxu0 0.0
    %2035 = vmatmul.mubr.f32.gmra.mrb[0].mxu0 %v1968
    %v2036 = vpop.f32.mrb[0].mxu0
    %v2037 = vadd.f32 %v1965, %v2036
    %v2038 = vpop.f32.mrb[0].mxu0
    %2039 = vdwg.mxu0
    %v2040 = vmul.f32 %v2037, %v777
    %v2041 = vadd.f32 %v2040, 0.5
    %v2042 = vmax.f32 %v2041, 0.0
    %v2043 = vmin.f32 %v2042, 1.0
    %v2044 = vadd.f32 %v2043, %v243
    %2046 = vset.pattern.permute.xlu0 0
    %2047 = vperm.xlu0 %2046, %v2044
    %v2048 = vpop.permute.xlu0 %2047
    %v2050 = vsub.f32 %v2048, %v792
    %v2051 = vmul.f32 %v2050, %v2050
    %v2052 = vsub.f32 0.0, %v2051
    %v2053 = vmul.f32 %v2052, %v797
    %v2054 = vmul.f32 %v2053, 1.442695
    %v2055 = vpow.pop %v2054
    %v2056 = vsel %vm801, %v2055, 0.0
    %2057 = vadd.xlane.f32.xlu0 %v2056
    %v2058 = vpop.xlane.xlu0 %2057
    %v2059 = vmul.f32 %v1883, %v2055
    %v2060 = vld [vmem:[%s19] sm:$0xff]
    %v2061 = vld [vmem:[%s19 + $0x8] sm:$0xff]
    %v2062 = vld [vmem:[%s19 + $0x10] sm:$0xff]
    %v2063 = vld [vmem:[%s19 + $0x18] sm:$0xff]
    %v2065 = vsel %vm463, %v2059, 0
    %2067 = vmatprep.subr.mxu0 0.0
    %2068 = vmatpush1.msra.mxu0 %v2060
    %2069 = vmatprep.subr.mxu0 0.0
    %2070 = vmatpush1.msra.mxu0 %v2061
    %2071 = vmatprep.subr.mxu0 0.0
    %2072 = vmatpush1.msra.mxu0 %v2062
    %2073 = vmatprep.subr.mxu0 0.0
    %2074 = vmatpush1.msra.mxu0 %v2063
    %2075 = vmatprep.subr.mxu0 0.0
    %2076 = vmatpush1.msra.mxu0 0.0
    %2077 = vmatprep.subr.mxu0 0.0
    %2078 = vmatpush1.msra.mxu0 0.0
    %2079 = vmatprep.subr.mxu0 0.0
    %2080 = vmatpush1.msra.mxu0 0.0
    %2081 = vmatprep.subr.mxu0 0.0
    %2082 = vmatpush1.msra.mxu0 0.0
    %2083 = vmatprep.subr.mxu0 0.0
    %2084 = vmatpush1.msra.mxu0 0.0
    %2085 = vmatprep.subr.mxu0 0.0
    %2086 = vmatpush1.msra.mxu0 0.0
    %2087 = vmatprep.subr.mxu0 0.0
    %2088 = vmatpush1.msra.mxu0 0.0
    %2089 = vmatprep.subr.mxu0 0.0
    %2090 = vmatpush1.msra.mxu0 0.0
    %2091 = vmatprep.subr.mxu0 0.0
    %2092 = vmatpush1.msra.mxu0 0.0
    %2093 = vmatprep.subr.mxu0 0.0
    %2094 = vmatpush1.msra.mxu0 0.0
    %2095 = vmatprep.subr.mxu0 0.0
    %2096 = vmatpush1.msra.mxu0 0.0
    %2097 = vmatprep.subr.mxu0 0.0
    %2098 = vmatpush1.msra.mxu0 0.0
    %2099 = vmatprep.subr.mxu0 0.0
    %2100 = vmatpush1.msra.mxu0 0.0
    %2101 = vmatprep.subr.mxu0 0.0
    %2102 = vmatpush1.msra.mxu0 0.0
    %2103 = vmatprep.subr.mxu0 0.0
    %2104 = vmatpush1.msra.mxu0 0.0
    %2105 = vmatprep.subr.mxu0 0.0
    %2106 = vmatpush1.msra.mxu0 0.0
    %2107 = vmatprep.subr.mxu0 0.0
    %2108 = vmatpush1.msra.mxu0 0.0
    %2109 = vmatprep.subr.mxu0 0.0
    %2110 = vmatpush1.msra.mxu0 0.0
    %2111 = vmatprep.subr.mxu0 0.0
    %2112 = vmatpush1.msra.mxu0 0.0
    %2113 = vmatprep.subr.mxu0 0.0
    %2114 = vmatpush1.msra.mxu0 0.0
    %2115 = vmatprep.subr.mxu0 0.0
    %2116 = vmatpush1.msra.mxu0 0.0
    %2117 = vmatprep.subr.mxu0 0.0
    %2118 = vmatpush1.msra.mxu0 0.0
    %2119 = vmatprep.subr.mxu0 0.0
    %2120 = vmatpush1.msra.mxu0 0.0
    %2121 = vmatprep.subr.mxu0 0.0
    %2122 = vmatpush1.msra.mxu0 0.0
    %2123 = vmatprep.subr.mxu0 0.0
    %2124 = vmatpush1.msra.mxu0 0.0
    %2125 = vmatprep.subr.mxu0 0.0
    %2126 = vmatpush1.msra.mxu0 0.0
    %2127 = vmatprep.subr.mxu0 0.0
    %2128 = vmatpush1.msra.mxu0 0.0
    %2129 = vmatprep.subr.mxu0 0.0
    %2130 = vmatpush1.msra.mxu0 0.0
    %2131 = vmatprep.mubr.f32.mxu0 0.0
    %2132 = vmatmul.mubr.f32.gmra.mrb[0].mxu0 %v2065
    %v2133 = vpop.f32.mrb[0].mxu0
    %v2134 = vadd.f32 0.0, %v2133
    %v2135 = vpop.f32.mrb[0].mxu0
    %2136 = vdwg.mxu0
    %v2137 = vrcp.pop %v2058
    %v2138 = vmul.f32 %v2134, %v2137
    %s2139 = scalar_lea.vmem %s20, 8
    %2140 = vst.msk [vmem:[%s2139] sm:$0xf] %vm885, %v2138
    %s2141 = scalar_lea.vmem %s21, 8
    %2142 = vst.msk [vmem:[%s2141] sm:$0xf] %vm887, %v2044
    %s2143 = scalar_lea.vmem %s22, 8
    %2144 = vst.msk [vmem:[%s2143] sm:$0xf] %vm889, %v1883
    %s2145 = scalar_lea.vmem %s0, 12
    %v2146 = vld [vmem:[%s2145] sm:$0xf]
    %2147 = vrot.lane.b32.xlu0 %v1638, 116
    %v2148 = vpop.permute.xlu0 %2147
    %v2150 = vsel %vm251, %v2146, %v2148
    %v2151 = vld [vmem:[%s4] sm:$0xff]
    %v2152 = vld [vmem:[%s4 + $0x8] sm:$0xff]
    %v2153 = vld [vmem:[%s4 + $0x10] sm:$0xf]
    %v2154 = vld [vmem:[%s5] sm:$0x1]
    %v2156 = vlaneseq
    %v2157 = vshrl.u32 %v2156, 7
    %v2158 = vsub.s32 0, %v2157
    %v2159 = vrot.slane %v2154, %v2158
    %v2162 = vsel %vm263, %v2150, 0
    %v2165 = vsel %vm267, %v2153, 0
    %2167 = vmatprep.subr.mxu0 0.0
    %2168 = vmatpush1.msra.mxu0 %v2151
    %2169 = vmatprep.subr.mxu0 0.0
    %2170 = vmatpush1.msra.mxu0 %v2152
    %2171 = vmatprep.subr.mxu0 0.0
    %2172 = vmatpush1.msra.mxu0 %v2165
    %2173 = vmatprep.subr.mxu0 0.0
    %2174 = vmatpush1.msra.mxu0 0.0
    %2175 = vmatprep.subr.mxu0 0.0
    %2176 = vmatpush1.msra.mxu0 0.0
    %2177 = vmatprep.subr.mxu0 0.0
    %2178 = vmatpush1.msra.mxu0 0.0
    %2179 = vmatprep.subr.mxu0 0.0
    %2180 = vmatpush1.msra.mxu0 0.0
    %2181 = vmatprep.subr.mxu0 0.0
    %2182 = vmatpush1.msra.mxu0 0.0
    %2183 = vmatprep.subr.mxu0 0.0
    %2184 = vmatpush1.msra.mxu0 0.0
    %2185 = vmatprep.subr.mxu0 0.0
    %2186 = vmatpush1.msra.mxu0 0.0
    %2187 = vmatprep.subr.mxu0 0.0
    %2188 = vmatpush1.msra.mxu0 0.0
    %2189 = vmatprep.subr.mxu0 0.0
    %2190 = vmatpush1.msra.mxu0 0.0
    %2191 = vmatprep.subr.mxu0 0.0
    %2192 = vmatpush1.msra.mxu0 0.0
    %2193 = vmatprep.subr.mxu0 0.0
    %2194 = vmatpush1.msra.mxu0 0.0
    %2195 = vmatprep.subr.mxu0 0.0
    %2196 = vmatpush1.msra.mxu0 0.0
    %2197 = vmatprep.subr.mxu0 0.0
    %2198 = vmatpush1.msra.mxu0 0.0
    %2199 = vmatprep.subr.mxu0 0.0
    %2200 = vmatpush1.msra.mxu0 0.0
    %2201 = vmatprep.subr.mxu0 0.0
    %2202 = vmatpush1.msra.mxu0 0.0
    %2203 = vmatprep.subr.mxu0 0.0
    %2204 = vmatpush1.msra.mxu0 0.0
    %2205 = vmatprep.subr.mxu0 0.0
    %2206 = vmatpush1.msra.mxu0 0.0
    %2207 = vmatprep.subr.mxu0 0.0
    %2208 = vmatpush1.msra.mxu0 0.0
    %2209 = vmatprep.subr.mxu0 0.0
    %2210 = vmatpush1.msra.mxu0 0.0
    %2211 = vmatprep.subr.mxu0 0.0
    %2212 = vmatpush1.msra.mxu0 0.0
    %2213 = vmatprep.subr.mxu0 0.0
    %2214 = vmatpush1.msra.mxu0 0.0
    %2215 = vmatprep.subr.mxu0 0.0
    %2216 = vmatpush1.msra.mxu0 0.0
    %2217 = vmatprep.subr.mxu0 0.0
    %2218 = vmatpush1.msra.mxu0 0.0
    %2219 = vmatprep.subr.mxu0 0.0
    %2220 = vmatpush1.msra.mxu0 0.0
    %2221 = vmatprep.subr.mxu0 0.0
    %2222 = vmatpush1.msra.mxu0 0.0
    %2223 = vmatprep.subr.mxu0 0.0
    %2224 = vmatpush1.msra.mxu0 0.0
    %2225 = vmatprep.subr.mxu0 0.0
    %2226 = vmatpush1.msra.mxu0 0.0
    %2227 = vmatprep.subr.mxu0 0.0
    %2228 = vmatpush1.msra.mxu0 0.0
    %2229 = vmatprep.subr.mxu0 0.0
    %2230 = vmatpush1.msra.mxu0 0.0
    %2231 = vmatprep.mubr.f32.mxu0 0.0
    %2232 = vmatmul.mubr.f32.gmra.mrb[0].mxu0 %v2162
    %v2233 = vpop.f32.mrb[0].mxu0
    %v2234 = vadd.f32 %v2159, %v2233
    %v2235 = vpop.f32.mrb[0].mxu0
    %2236 = vdwg.mxu0
    %2238 = vrot.lane.b32.xlu0 %v2234, 80
    %v2239 = vpop.permute.xlu0 %2238
    %v2241 = vadd.f32 %v2234, %v2239
    %v2242 = vxor.u32 %v2241, 2147483648
    %v2243 = vmul.f32 %v2242, 1.442695
    %v2244 = vpow.pop %v2243
    %v2245 = vadd.f32 %v2244, 1.0
    %v2246 = vrcp.pop %v2245
    %v2247 = vmul.f32 1.0, %v2246
    %2248 = vrot.lane.b32.xlu0 %v2234, 48
    %v2249 = vpop.permute.xlu0 %2248
    %v2251 = vmul.f32 %v2247, %v2249
    %2253 = vrot.lane.b32.xlu0 %v2251, 32
    %v2254 = vpop.permute.xlu0 %2253
    %v2256 = vadd.f32 %v2234, %v2254
    %v2257 = vtanh.pop %v2256
    %v2258 = vsub.f32 1.0, %v2247
    %2260 = vrot.lane.b32.xlu0 %v2257, 112
    %v2261 = vpop.permute.xlu0 %2260
    %v2263 = vmul.f32 %v2258, %v2261
    %v2264 = vmul.f32 %v2247, %v1638
    %v2265 = vadd.f32 %v2263, %v2264
    %v2266 = vld [vmem:[%s7] sm:$0xff]
    %v2267 = vld [vmem:[%s7 + $0x8] sm:$0xff]
    %2269 = vrot.lane.b32.xlu0 %v2265, 112
    %v2270 = vpop.permute.xlu0 %2269
    %v2271 = vsel %vm378, %v2270, 0
    %2273 = vmatprep.subr.mxu0 0.0
    %2274 = vmatpush1.msra.mxu0 %v2266
    %2275 = vmatprep.subr.mxu0 0.0
    %2276 = vmatpush1.msra.mxu0 %v2267
    %2277 = vmatprep.subr.mxu0 0.0
    %2278 = vmatpush1.msra.mxu0 0.0
    %2279 = vmatprep.subr.mxu0 0.0
    %2280 = vmatpush1.msra.mxu0 0.0
    %2281 = vmatprep.subr.mxu0 0.0
    %2282 = vmatpush1.msra.mxu0 0.0
    %2283 = vmatprep.subr.mxu0 0.0
    %2284 = vmatpush1.msra.mxu0 0.0
    %2285 = vmatprep.subr.mxu0 0.0
    %2286 = vmatpush1.msra.mxu0 0.0
    %2287 = vmatprep.subr.mxu0 0.0
    %2288 = vmatpush1.msra.mxu0 0.0
    %2289 = vmatprep.subr.mxu0 0.0
    %2290 = vmatpush1.msra.mxu0 0.0
    %2291 = vmatprep.subr.mxu0 0.0
    %2292 = vmatpush1.msra.mxu0 0.0
    %2293 = vmatprep.subr.mxu0 0.0
    %2294 = vmatpush1.msra.mxu0 0.0
    %2295 = vmatprep.subr.mxu0 0.0
    %2296 = vmatpush1.msra.mxu0 0.0
    %2297 = vmatprep.subr.mxu0 0.0
    %2298 = vmatpush1.msra.mxu0 0.0
    %2299 = vmatprep.subr.mxu0 0.0
    %2300 = vmatpush1.msra.mxu0 0.0
    %2301 = vmatprep.subr.mxu0 0.0
    %2302 = vmatpush1.msra.mxu0 0.0
    %2303 = vmatprep.subr.mxu0 0.0
    %2304 = vmatpush1.msra.mxu0 0.0
    %2305 = vmatprep.subr.mxu0 0.0
    %2306 = vmatpush1.msra.mxu0 0.0
    %2307 = vmatprep.subr.mxu0 0.0
    %2308 = vmatpush1.msra.mxu0 0.0
    %2309 = vmatprep.subr.mxu0 0.0
    %2310 = vmatpush1.msra.mxu0 0.0
    %2311 = vmatprep.subr.mxu0 0.0
    %2312 = vmatpush1.msra.mxu0 0.0
    %2313 = vmatprep.subr.mxu0 0.0
    %2314 = vmatpush1.msra.mxu0 0.0
    %2315 = vmatprep.subr.mxu0 0.0
    %2316 = vmatpush1.msra.mxu0 0.0
    %2317 = vmatprep.subr.mxu0 0.0
    %2318 = vmatpush1.msra.mxu0 0.0
    %2319 = vmatprep.subr.mxu0 0.0
    %2320 = vmatpush1.msra.mxu0 0.0
    %2321 = vmatprep.subr.mxu0 0.0
    %2322 = vmatpush1.msra.mxu0 0.0
    %2323 = vmatprep.subr.mxu0 0.0
    %2324 = vmatpush1.msra.mxu0 0.0
    %2325 = vmatprep.subr.mxu0 0.0
    %2326 = vmatpush1.msra.mxu0 0.0
    %2327 = vmatprep.subr.mxu0 0.0
    %2328 = vmatpush1.msra.mxu0 0.0
    %2329 = vmatprep.subr.mxu0 0.0
    %2330 = vmatpush1.msra.mxu0 0.0
    %2331 = vmatprep.subr.mxu0 0.0
    %2332 = vmatpush1.msra.mxu0 0.0
    %2333 = vmatprep.subr.mxu0 0.0
    %2334 = vmatpush1.msra.mxu0 0.0
    %2335 = vmatprep.subr.mxu0 0.0
    %2336 = vmatpush1.msra.mxu0 0.0
    %2337 = vmatprep.mubr.f32.mxu0 0.0
    %2338 = vmatmul.mubr.f32.gmra.mrb[0].mxu0 %v2271
    %v2339 = vpop.f32.mrb[0].mxu0
    %v2340 = vadd.f32 %v156, %v2339
    %v2341 = vpop.f32.mrb[0].mxu0
    %2342 = vdwg.mxu0
    %v2343 = vmax.f32 %v2340, 0.0
    %v2344 = vld [vmem:[%s9] sm:$0xff]
    %v2345 = vld [vmem:[%s9 + $0x8] sm:$0xff]
    %v2346 = vld [vmem:[%s9 + $0x10] sm:$0xff]
    %v2347 = vld [vmem:[%s9 + $0x18] sm:$0xff]
    %v2348 = vld [vmem:[%s10] sm:$0x1]
    %v2350 = vlaneseq
    %v2351 = vshrl.u32 %v2350, 7
    %v2352 = vsub.s32 0, %v2351
    %v2353 = vrot.slane %v2348, %v2352
    %v2356 = vsel %vm463, %v2343, 0
    %2358 = vmatprep.subr.mxu0 0.0
    %2359 = vmatpush1.msra.mxu0 %v2344
    %2360 = vmatprep.subr.mxu0 0.0
    %2361 = vmatpush1.msra.mxu0 %v2345
    %2362 = vmatprep.subr.mxu0 0.0
    %2363 = vmatpush1.msra.mxu0 %v2346
    %2364 = vmatprep.subr.mxu0 0.0
    %2365 = vmatpush1.msra.mxu0 %v2347
    %2366 = vmatprep.subr.mxu0 0.0
    %2367 = vmatpush1.msra.mxu0 0.0
    %2368 = vmatprep.subr.mxu0 0.0
    %2369 = vmatpush1.msra.mxu0 0.0
    %2370 = vmatprep.subr.mxu0 0.0
    %2371 = vmatpush1.msra.mxu0 0.0
    %2372 = vmatprep.subr.mxu0 0.0
    %2373 = vmatpush1.msra.mxu0 0.0
    %2374 = vmatprep.subr.mxu0 0.0
    %2375 = vmatpush1.msra.mxu0 0.0
    %2376 = vmatprep.subr.mxu0 0.0
    %2377 = vmatpush1.msra.mxu0 0.0
    %2378 = vmatprep.subr.mxu0 0.0
    %2379 = vmatpush1.msra.mxu0 0.0
    %2380 = vmatprep.subr.mxu0 0.0
    %2381 = vmatpush1.msra.mxu0 0.0
    %2382 = vmatprep.subr.mxu0 0.0
    %2383 = vmatpush1.msra.mxu0 0.0
    %2384 = vmatprep.subr.mxu0 0.0
    %2385 = vmatpush1.msra.mxu0 0.0
    %2386 = vmatprep.subr.mxu0 0.0
    %2387 = vmatpush1.msra.mxu0 0.0
    %2388 = vmatprep.subr.mxu0 0.0
    %2389 = vmatpush1.msra.mxu0 0.0
    %2390 = vmatprep.subr.mxu0 0.0
    %2391 = vmatpush1.msra.mxu0 0.0
    %2392 = vmatprep.subr.mxu0 0.0
    %2393 = vmatpush1.msra.mxu0 0.0
    %2394 = vmatprep.subr.mxu0 0.0
    %2395 = vmatpush1.msra.mxu0 0.0
    %2396 = vmatprep.subr.mxu0 0.0
    %2397 = vmatpush1.msra.mxu0 0.0
    %2398 = vmatprep.subr.mxu0 0.0
    %2399 = vmatpush1.msra.mxu0 0.0
    %2400 = vmatprep.subr.mxu0 0.0
    %2401 = vmatpush1.msra.mxu0 0.0
    %2402 = vmatprep.subr.mxu0 0.0
    %2403 = vmatpush1.msra.mxu0 0.0
    %2404 = vmatprep.subr.mxu0 0.0
    %2405 = vmatpush1.msra.mxu0 0.0
    %2406 = vmatprep.subr.mxu0 0.0
    %2407 = vmatpush1.msra.mxu0 0.0
    %2408 = vmatprep.subr.mxu0 0.0
    %2409 = vmatpush1.msra.mxu0 0.0
    %2410 = vmatprep.subr.mxu0 0.0
    %2411 = vmatpush1.msra.mxu0 0.0
    %2412 = vmatprep.subr.mxu0 0.0
    %2413 = vmatpush1.msra.mxu0 0.0
    %2414 = vmatprep.subr.mxu0 0.0
    %2415 = vmatpush1.msra.mxu0 0.0
    %2416 = vmatprep.subr.mxu0 0.0
    %2417 = vmatpush1.msra.mxu0 0.0
    %2418 = vmatprep.subr.mxu0 0.0
    %2419 = vmatpush1.msra.mxu0 0.0
    %2420 = vmatprep.subr.mxu0 0.0
    %2421 = vmatpush1.msra.mxu0 0.0
    %2422 = vmatprep.mubr.f32.mxu0 0.0
    %2423 = vmatmul.mubr.f32.gmra.mrb[0].mxu0 %v2356
    %v2424 = vpop.f32.mrb[0].mxu0
    %v2425 = vadd.f32 %v2353, %v2424
    %v2426 = vpop.f32.mrb[0].mxu0
    %2427 = vdwg.mxu0
    %v2428 = vmax.f32 %v2425, 0.0
    %v2429 = vld [vmem:[%s11] sm:$0xff]
    %v2430 = vld [vmem:[%s11 + $0x8] sm:$0xff]
    %v2431 = vld [vmem:[%s11 + $0x10] sm:$0xff]
    %v2432 = vld [vmem:[%s11 + $0x18] sm:$0xff]
    %v2433 = vld [vmem:[%s12] sm:$0x1]
    %v2435 = vlaneseq
    %v2436 = vshrl.u32 %v2435, 7
    %v2437 = vsub.s32 0, %v2436
    %v2438 = vrot.slane %v2433, %v2437
    %v2441 = vsel %vm463, %v2428, 0
    %2443 = vmatprep.subr.mxu0 0.0
    %2444 = vmatpush1.msra.mxu0 %v2429
    %2445 = vmatprep.subr.mxu0 0.0
    %2446 = vmatpush1.msra.mxu0 %v2430
    %2447 = vmatprep.subr.mxu0 0.0
    %2448 = vmatpush1.msra.mxu0 %v2431
    %2449 = vmatprep.subr.mxu0 0.0
    %2450 = vmatpush1.msra.mxu0 %v2432
    %2451 = vmatprep.subr.mxu0 0.0
    %2452 = vmatpush1.msra.mxu0 0.0
    %2453 = vmatprep.subr.mxu0 0.0
    %2454 = vmatpush1.msra.mxu0 0.0
    %2455 = vmatprep.subr.mxu0 0.0
    %2456 = vmatpush1.msra.mxu0 0.0
    %2457 = vmatprep.subr.mxu0 0.0
    %2458 = vmatpush1.msra.mxu0 0.0
    %2459 = vmatprep.subr.mxu0 0.0
    %2460 = vmatpush1.msra.mxu0 0.0
    %2461 = vmatprep.subr.mxu0 0.0
    %2462 = vmatpush1.msra.mxu0 0.0
    %2463 = vmatprep.subr.mxu0 0.0
    %2464 = vmatpush1.msra.mxu0 0.0
    %2465 = vmatprep.subr.mxu0 0.0
    %2466 = vmatpush1.msra.mxu0 0.0
    %2467 = vmatprep.subr.mxu0 0.0
    %2468 = vmatpush1.msra.mxu0 0.0
    %2469 = vmatprep.subr.mxu0 0.0
    %2470 = vmatpush1.msra.mxu0 0.0
    %2471 = vmatprep.subr.mxu0 0.0
    %2472 = vmatpush1.msra.mxu0 0.0
    %2473 = vmatprep.subr.mxu0 0.0
    %2474 = vmatpush1.msra.mxu0 0.0
    %2475 = vmatprep.subr.mxu0 0.0
    %2476 = vmatpush1.msra.mxu0 0.0
    %2477 = vmatprep.subr.mxu0 0.0
    %2478 = vmatpush1.msra.mxu0 0.0
    %2479 = vmatprep.subr.mxu0 0.0
    %2480 = vmatpush1.msra.mxu0 0.0
    %2481 = vmatprep.subr.mxu0 0.0
    %2482 = vmatpush1.msra.mxu0 0.0
    %2483 = vmatprep.subr.mxu0 0.0
    %2484 = vmatpush1.msra.mxu0 0.0
    %2485 = vmatprep.subr.mxu0 0.0
    %2486 = vmatpush1.msra.mxu0 0.0
    %2487 = vmatprep.subr.mxu0 0.0
    %2488 = vmatpush1.msra.mxu0 0.0
    %2489 = vmatprep.subr.mxu0 0.0
    %2490 = vmatpush1.msra.mxu0 0.0
    %2491 = vmatprep.subr.mxu0 0.0
    %2492 = vmatpush1.msra.mxu0 0.0
    %2493 = vmatprep.subr.mxu0 0.0
    %2494 = vmatpush1.msra.mxu0 0.0
    %2495 = vmatprep.subr.mxu0 0.0
    %2496 = vmatpush1.msra.mxu0 0.0
    %2497 = vmatprep.subr.mxu0 0.0
    %2498 = vmatpush1.msra.mxu0 0.0
    %2499 = vmatprep.subr.mxu0 0.0
    %2500 = vmatpush1.msra.mxu0 0.0
    %2501 = vmatprep.subr.mxu0 0.0
    %2502 = vmatpush1.msra.mxu0 0.0
    %2503 = vmatprep.subr.mxu0 0.0
    %2504 = vmatpush1.msra.mxu0 0.0
    %2505 = vmatprep.subr.mxu0 0.0
    %2506 = vmatpush1.msra.mxu0 0.0
    %2507 = vmatprep.mubr.f32.mxu0 0.0
    %2508 = vmatmul.mubr.f32.gmra.mrb[0].mxu0 %v2441
    %v2509 = vpop.f32.mrb[0].mxu0
    %v2510 = vadd.f32 %v2438, %v2509
    %v2511 = vpop.f32.mrb[0].mxu0
    %2512 = vdwg.mxu0
    %v2513 = vld [vmem:[%s14] sm:$0xff]
    %v2514 = vld [vmem:[%s14 + $0x8] sm:$0xff]
    %2515 = vmatprep.subr.mxu0 0.0
    %2516 = vmatpush1.msra.mxu0 %v2513
    %2517 = vmatprep.subr.mxu0 0.0
    %2518 = vmatpush1.msra.mxu0 %v2514
    %2519 = vmatprep.subr.mxu0 0.0
    %2520 = vmatpush1.msra.mxu0 0.0
    %2521 = vmatprep.subr.mxu0 0.0
    %2522 = vmatpush1.msra.mxu0 0.0
    %2523 = vmatprep.subr.mxu0 0.0
    %2524 = vmatpush1.msra.mxu0 0.0
    %2525 = vmatprep.subr.mxu0 0.0
    %2526 = vmatpush1.msra.mxu0 0.0
    %2527 = vmatprep.subr.mxu0 0.0
    %2528 = vmatpush1.msra.mxu0 0.0
    %2529 = vmatprep.subr.mxu0 0.0
    %2530 = vmatpush1.msra.mxu0 0.0
    %2531 = vmatprep.subr.mxu0 0.0
    %2532 = vmatpush1.msra.mxu0 0.0
    %2533 = vmatprep.subr.mxu0 0.0
    %2534 = vmatpush1.msra.mxu0 0.0
    %2535 = vmatprep.subr.mxu0 0.0
    %2536 = vmatpush1.msra.mxu0 0.0
    %2537 = vmatprep.subr.mxu0 0.0
    %2538 = vmatpush1.msra.mxu0 0.0
    %2539 = vmatprep.subr.mxu0 0.0
    %2540 = vmatpush1.msra.mxu0 0.0
    %2541 = vmatprep.subr.mxu0 0.0
    %2542 = vmatpush1.msra.mxu0 0.0
    %2543 = vmatprep.subr.mxu0 0.0
    %2544 = vmatpush1.msra.mxu0 0.0
    %2545 = vmatprep.subr.mxu0 0.0
    %2546 = vmatpush1.msra.mxu0 0.0
    %2547 = vmatprep.subr.mxu0 0.0
    %2548 = vmatpush1.msra.mxu0 0.0
    %2549 = vmatprep.subr.mxu0 0.0
    %2550 = vmatpush1.msra.mxu0 0.0
    %2551 = vmatprep.subr.mxu0 0.0
    %2552 = vmatpush1.msra.mxu0 0.0
    %2553 = vmatprep.subr.mxu0 0.0
    %2554 = vmatpush1.msra.mxu0 0.0
    %2555 = vmatprep.subr.mxu0 0.0
    %2556 = vmatpush1.msra.mxu0 0.0
    %2557 = vmatprep.subr.mxu0 0.0
    %2558 = vmatpush1.msra.mxu0 0.0
    %2559 = vmatprep.subr.mxu0 0.0
    %2560 = vmatpush1.msra.mxu0 0.0
    %2561 = vmatprep.subr.mxu0 0.0
    %2562 = vmatpush1.msra.mxu0 0.0
    %2563 = vmatprep.subr.mxu0 0.0
    %2564 = vmatpush1.msra.mxu0 0.0
    %2565 = vmatprep.subr.mxu0 0.0
    %2566 = vmatpush1.msra.mxu0 0.0
    %2567 = vmatprep.subr.mxu0 0.0
    %2568 = vmatpush1.msra.mxu0 0.0
    %2569 = vmatprep.subr.mxu0 0.0
    %2570 = vmatpush1.msra.mxu0 0.0
    %2571 = vmatprep.subr.mxu0 0.0
    %2572 = vmatpush1.msra.mxu0 0.0
    %2573 = vmatprep.subr.mxu0 0.0
    %2574 = vmatpush1.msra.mxu0 0.0
    %2575 = vmatprep.subr.mxu0 0.0
    %2576 = vmatpush1.msra.mxu0 0.0
    %2577 = vmatprep.subr.mxu0 0.0
    %2578 = vmatpush1.msra.mxu0 0.0
    %2579 = vmatprep.mubr.f32.mxu0 0.0
    %2580 = vmatmul.mubr.f32.gmra.mrb[0].mxu0 %v2271
    %v2581 = vpop.f32.mrb[0].mxu0
    %v2582 = vadd.f32 %v237, %v2581
    %v2583 = vpop.f32.mrb[0].mxu0
    %2584 = vdwg.mxu0
    %v2585 = vmax.f32 %v2582, 0.0
    %v2586 = vld [vmem:[%s16] sm:$0xff]
    %v2587 = vld [vmem:[#allocation2] sm:$0x1]
    %v2589 = vlaneseq
    %v2590 = vshrl.u32 %v2589, 7
    %v2591 = vsub.s32 0, %v2590
    %v2592 = vrot.slane %v2587, %v2591
    %v2595 = vsel %vm703, %v2585, 0
    %2597 = vmatprep.subr.mxu0 0.0
    %2598 = vmatpush1.msra.mxu0 %v2586
    %2599 = vmatprep.subr.mxu0 0.0
    %2600 = vmatpush1.msra.mxu0 0.0
    %2601 = vmatprep.subr.mxu0 0.0
    %2602 = vmatpush1.msra.mxu0 0.0
    %2603 = vmatprep.subr.mxu0 0.0
    %2604 = vmatpush1.msra.mxu0 0.0
    %2605 = vmatprep.subr.mxu0 0.0
    %2606 = vmatpush1.msra.mxu0 0.0
    %2607 = vmatprep.subr.mxu0 0.0
    %2608 = vmatpush1.msra.mxu0 0.0
    %2609 = vmatprep.subr.mxu0 0.0
    %2610 = vmatpush1.msra.mxu0 0.0
    %2611 = vmatprep.subr.mxu0 0.0
    %2612 = vmatpush1.msra.mxu0 0.0
    %2613 = vmatprep.subr.mxu0 0.0
    %2614 = vmatpush1.msra.mxu0 0.0
    %2615 = vmatprep.subr.mxu0 0.0
    %2616 = vmatpush1.msra.mxu0 0.0
    %2617 = vmatprep.subr.mxu0 0.0
    %2618 = vmatpush1.msra.mxu0 0.0
    %2619 = vmatprep.subr.mxu0 0.0
    %2620 = vmatpush1.msra.mxu0 0.0
    %2621 = vmatprep.subr.mxu0 0.0
    %2622 = vmatpush1.msra.mxu0 0.0
    %2623 = vmatprep.subr.mxu0 0.0
    %2624 = vmatpush1.msra.mxu0 0.0
    %2625 = vmatprep.subr.mxu0 0.0
    %2626 = vmatpush1.msra.mxu0 0.0
    %2627 = vmatprep.subr.mxu0 0.0
    %2628 = vmatpush1.msra.mxu0 0.0
    %2629 = vmatprep.subr.mxu0 0.0
    %2630 = vmatpush1.msra.mxu0 0.0
    %2631 = vmatprep.subr.mxu0 0.0
    %2632 = vmatpush1.msra.mxu0 0.0
    %2633 = vmatprep.subr.mxu0 0.0
    %2634 = vmatpush1.msra.mxu0 0.0
    %2635 = vmatprep.subr.mxu0 0.0
    %2636 = vmatpush1.msra.mxu0 0.0
    %2637 = vmatprep.subr.mxu0 0.0
    %2638 = vmatpush1.msra.mxu0 0.0
    %2639 = vmatprep.subr.mxu0 0.0
    %2640 = vmatpush1.msra.mxu0 0.0
    %2641 = vmatprep.subr.mxu0 0.0
    %2642 = vmatpush1.msra.mxu0 0.0
    %2643 = vmatprep.subr.mxu0 0.0
    %2644 = vmatpush1.msra.mxu0 0.0
    %2645 = vmatprep.subr.mxu0 0.0
    %2646 = vmatpush1.msra.mxu0 0.0
    %2647 = vmatprep.subr.mxu0 0.0
    %2648 = vmatpush1.msra.mxu0 0.0
    %2649 = vmatprep.subr.mxu0 0.0
    %2650 = vmatpush1.msra.mxu0 0.0
    %2651 = vmatprep.subr.mxu0 0.0
    %2652 = vmatpush1.msra.mxu0 0.0
    %2653 = vmatprep.subr.mxu0 0.0
    %2654 = vmatpush1.msra.mxu0 0.0
    %2655 = vmatprep.subr.mxu0 0.0
    %2656 = vmatpush1.msra.mxu0 0.0
    %2657 = vmatprep.subr.mxu0 0.0
    %2658 = vmatpush1.msra.mxu0 0.0
    %2659 = vmatprep.subr.mxu0 0.0
    %2660 = vmatpush1.msra.mxu0 0.0
    %2661 = vmatprep.mubr.f32.mxu0 0.0
    %2662 = vmatmul.mubr.f32.gmra.mrb[0].mxu0 %v2595
    %v2663 = vpop.f32.mrb[0].mxu0
    %v2664 = vadd.f32 %v2592, %v2663
    %v2665 = vpop.f32.mrb[0].mxu0
    %2666 = vdwg.mxu0
    %v2667 = vmul.f32 %v2664, %v777
    %v2668 = vadd.f32 %v2667, 0.5
    %v2669 = vmax.f32 %v2668, 0.0
    %v2670 = vmin.f32 %v2669, 1.0
    %v2671 = vadd.f32 %v2670, %v243
    %2673 = vset.pattern.permute.xlu0 0
    %2674 = vperm.xlu0 %2673, %v2671
    %v2675 = vpop.permute.xlu0 %2674
    %v2677 = vsub.f32 %v2675, %v792
    %v2678 = vmul.f32 %v2677, %v2677
    %v2679 = vsub.f32 0.0, %v2678
    %v2680 = vmul.f32 %v2679, %v797
    %v2681 = vmul.f32 %v2680, 1.442695
    %v2682 = vpow.pop %v2681
    %v2683 = vsel %vm801, %v2682, 0.0
    %2684 = vadd.xlane.f32.xlu0 %v2683
    %v2685 = vpop.xlane.xlu0 %2684
    %v2686 = vmul.f32 %v2510, %v2682
    %v2687 = vld [vmem:[%s19] sm:$0xff]
    %v2688 = vld [vmem:[%s19 + $0x8] sm:$0xff]
    %v2689 = vld [vmem:[%s19 + $0x10] sm:$0xff]
    %v2690 = vld [vmem:[%s19 + $0x18] sm:$0xff]
    %v2692 = vsel %vm463, %v2686, 0
    %2694 = vmatprep.subr.mxu0 0.0
    %2695 = vmatpush1.msra.mxu0 %v2687
    %2696 = vmatprep.subr.mxu0 0.0
    %2697 = vmatpush1.msra.mxu0 %v2688
    %2698 = vmatprep.subr.mxu0 0.0
    %2699 = vmatpush1.msra.mxu0 %v2689
    %2700 = vmatprep.subr.mxu0 0.0
    %2701 = vmatpush1.msra.mxu0 %v2690
    %2702 = vmatprep.subr.mxu0 0.0
    %2703 = vmatpush1.msra.mxu0 0.0
    %2704 = vmatprep.subr.mxu0 0.0
    %2705 = vmatpush1.msra.mxu0 0.0
    %2706 = vmatprep.subr.mxu0 0.0
    %2707 = vmatpush1.msra.mxu0 0.0
    %2708 = vmatprep.subr.mxu0 0.0
    %2709 = vmatpush1.msra.mxu0 0.0
    %2710 = vmatprep.subr.mxu0 0.0
    %2711 = vmatpush1.msra.mxu0 0.0
    %2712 = vmatprep.subr.mxu0 0.0
    %2713 = vmatpush1.msra.mxu0 0.0
    %2714 = vmatprep.subr.mxu0 0.0
    %2715 = vmatpush1.msra.mxu0 0.0
    %2716 = vmatprep.subr.mxu0 0.0
    %2717 = vmatpush1.msra.mxu0 0.0
    %2718 = vmatprep.subr.mxu0 0.0
    %2719 = vmatpush1.msra.mxu0 0.0
    %2720 = vmatprep.subr.mxu0 0.0
    %2721 = vmatpush1.msra.mxu0 0.0
    %2722 = vmatprep.subr.mxu0 0.0
    %2723 = vmatpush1.msra.mxu0 0.0
    %2724 = vmatprep.subr.mxu0 0.0
    %2725 = vmatpush1.msra.mxu0 0.0
    %2726 = vmatprep.subr.mxu0 0.0
    %2727 = vmatpush1.msra.mxu0 0.0
    %2728 = vmatprep.subr.mxu0 0.0
    %2729 = vmatpush1.msra.mxu0 0.0
    %2730 = vmatprep.subr.mxu0 0.0
    %2731 = vmatpush1.msra.mxu0 0.0
    %2732 = vmatprep.subr.mxu0 0.0
    %2733 = vmatpush1.msra.mxu0 0.0
    %2734 = vmatprep.subr.mxu0 0.0
    %2735 = vmatpush1.msra.mxu0 0.0
    %2736 = vmatprep.subr.mxu0 0.0
    %2737 = vmatpush1.msra.mxu0 0.0
    %2738 = vmatprep.subr.mxu0 0.0
    %2739 = vmatpush1.msra.mxu0 0.0
    %2740 = vmatprep.subr.mxu0 0.0
    %2741 = vmatpush1.msra.mxu0 0.0
    %2742 = vmatprep.subr.mxu0 0.0
    %2743 = vmatpush1.msra.mxu0 0.0
    %2744 = vmatprep.subr.mxu0 0.0
    %2745 = vmatpush1.msra.mxu0 0.0
    %2746 = vmatprep.subr.mxu0 0.0
    %2747 = vmatpush1.msra.mxu0 0.0
    %2748 = vmatprep.subr.mxu0 0.0
    %2749 = vmatpush1.msra.mxu0 0.0
    %2750 = vmatprep.subr.mxu0 0.0
    %2751 = vmatpush1.msra.mxu0 0.0
    %2752 = vmatprep.subr.mxu0 0.0
    %2753 = vmatpush1.msra.mxu0 0.0
    %2754 = vmatprep.subr.mxu0 0.0
    %2755 = vmatpush1.msra.mxu0 0.0
    %2756 = vmatprep.subr.mxu0 0.0
    %2757 = vmatpush1.msra.mxu0 0.0
    %2758 = vmatprep.mubr.f32.mxu0 0.0
    %2759 = vmatmul.mubr.f32.gmra.mrb[0].mxu0 %v2692
    %v2760 = vpop.f32.mrb[0].mxu0
    %v2761 = vadd.f32 0.0, %v2760
    %v2762 = vpop.f32.mrb[0].mxu0
    %2763 = vdwg.mxu0
    %v2764 = vrcp.pop %v2685
    %v2765 = vmul.f32 %v2761, %v2764
    %s2766 = scalar_lea.vmem %s20, 12
    %2767 = vst.msk [vmem:[%s2766] sm:$0xf] %vm885, %v2765
    %s2768 = scalar_lea.vmem %s21, 12
    %2769 = vst.msk [vmem:[%s2768] sm:$0xf] %vm887, %v2671
    %s2770 = scalar_lea.vmem %s22, 12
    %2771 = vst.msk [vmem:[%s2770] sm:$0xf] %vm889, %v2510
    %s2772 = scalar_lea.vmem %s0, 16
    %v2773 = vld [vmem:[%s2772] sm:$0xf]
    %2774 = vrot.lane.b32.xlu0 %v2265, 116
    %v2775 = vpop.permute.xlu0 %2774
    %v2777 = vsel %vm251, %v2773, %v2775
    %v2778 = vld [vmem:[%s4] sm:$0xff]
    %v2779 = vld [vmem:[%s4 + $0x8] sm:$0xff]
    %v2780 = vld [vmem:[%s4 + $0x10] sm:$0xf]
    %v2781 = vld [vmem:[%s5] sm:$0x1]
    %v2783 = vlaneseq
    %v2784 = vshrl.u32 %v2783, 7
    %v2785 = vsub.s32 0, %v2784
    %v2786 = vrot.slane %v2781, %v2785
    %v2789 = vsel %vm263, %v2777, 0
    %v2792 = vsel %vm267, %v2780, 0
    %2794 = vmatprep.subr.mxu0 0.0
    %2795 = vmatpush1.msra.mxu0 %v2778
    %2796 = vmatprep.subr.mxu0 0.0
    %2797 = vmatpush1.msra.mxu0 %v2779
    %2798 = vmatprep.subr.mxu0 0.0
    %2799 = vmatpush1.msra.mxu0 %v2792
    %2800 = vmatprep.subr.mxu0 0.0
    %2801 = vmatpush1.msra.mxu0 0.0
    %2802 = vmatprep.subr.mxu0 0.0
    %2803 = vmatpush1.msra.mxu0 0.0
    %2804 = vmatprep.subr.mxu0 0.0
    %2805 = vmatpush1.msra.mxu0 0.0
    %2806 = vmatprep.subr.mxu0 0.0
    %2807 = vmatpush1.msra.mxu0 0.0
    %2808 = vmatprep.subr.mxu0 0.0
    %2809 = vmatpush1.msra.mxu0 0.0
    %2810 = vmatprep.subr.mxu0 0.0
    %2811 = vmatpush1.msra.mxu0 0.0
    %2812 = vmatprep.subr.mxu0 0.0
    %2813 = vmatpush1.msra.mxu0 0.0
    %2814 = vmatprep.subr.mxu0 0.0
    %2815 = vmatpush1.msra.mxu0 0.0
    %2816 = vmatprep.subr.mxu0 0.0
    %2817 = vmatpush1.msra.mxu0 0.0
    %2818 = vmatprep.subr.mxu0 0.0
    %2819 = vmatpush1.msra.mxu0 0.0
    %2820 = vmatprep.subr.mxu0 0.0
    %2821 = vmatpush1.msra.mxu0 0.0
    %2822 = vmatprep.subr.mxu0 0.0
    %2823 = vmatpush1.msra.mxu0 0.0
    %2824 = vmatprep.subr.mxu0 0.0
    %2825 = vmatpush1.msra.mxu0 0.0
    %2826 = vmatprep.subr.mxu0 0.0
    %2827 = vmatpush1.msra.mxu0 0.0
    %2828 = vmatprep.subr.mxu0 0.0
    %2829 = vmatpush1.msra.mxu0 0.0
    %2830 = vmatprep.subr.mxu0 0.0
    %2831 = vmatpush1.msra.mxu0 0.0
    %2832 = vmatprep.subr.mxu0 0.0
    %2833 = vmatpush1.msra.mxu0 0.0
    %2834 = vmatprep.subr.mxu0 0.0
    %2835 = vmatpush1.msra.mxu0 0.0
    %2836 = vmatprep.subr.mxu0 0.0
    %2837 = vmatpush1.msra.mxu0 0.0
    %2838 = vmatprep.subr.mxu0 0.0
    %2839 = vmatpush1.msra.mxu0 0.0
    %2840 = vmatprep.subr.mxu0 0.0
    %2841 = vmatpush1.msra.mxu0 0.0
    %2842 = vmatprep.subr.mxu0 0.0
    %2843 = vmatpush1.msra.mxu0 0.0
    %2844 = vmatprep.subr.mxu0 0.0
    %2845 = vmatpush1.msra.mxu0 0.0
    %2846 = vmatprep.subr.mxu0 0.0
    %2847 = vmatpush1.msra.mxu0 0.0
    %2848 = vmatprep.subr.mxu0 0.0
    %2849 = vmatpush1.msra.mxu0 0.0
    %2850 = vmatprep.subr.mxu0 0.0
    %2851 = vmatpush1.msra.mxu0 0.0
    %2852 = vmatprep.subr.mxu0 0.0
    %2853 = vmatpush1.msra.mxu0 0.0
    %2854 = vmatprep.subr.mxu0 0.0
    %2855 = vmatpush1.msra.mxu0 0.0
    %2856 = vmatprep.subr.mxu0 0.0
    %2857 = vmatpush1.msra.mxu0 0.0
    %2858 = vmatprep.mubr.f32.mxu0 0.0
    %2859 = vmatmul.mubr.f32.gmra.mrb[0].mxu0 %v2789
    %v2860 = vpop.f32.mrb[0].mxu0
    %v2861 = vadd.f32 %v2786, %v2860
    %v2862 = vpop.f32.mrb[0].mxu0
    %2863 = vdwg.mxu0
    %2865 = vrot.lane.b32.xlu0 %v2861, 80
    %v2866 = vpop.permute.xlu0 %2865
    %v2868 = vadd.f32 %v2861, %v2866
    %v2869 = vxor.u32 %v2868, 2147483648
    %v2870 = vmul.f32 %v2869, 1.442695
    %v2871 = vpow.pop %v2870
    %v2872 = vadd.f32 %v2871, 1.0
    %v2873 = vrcp.pop %v2872
    %v2874 = vmul.f32 1.0, %v2873
    %2875 = vrot.lane.b32.xlu0 %v2861, 48
    %v2876 = vpop.permute.xlu0 %2875
    %v2878 = vmul.f32 %v2874, %v2876
    %2880 = vrot.lane.b32.xlu0 %v2878, 32
    %v2881 = vpop.permute.xlu0 %2880
    %v2883 = vadd.f32 %v2861, %v2881
    %v2884 = vtanh.pop %v2883
    %v2885 = vsub.f32 1.0, %v2874
    %2887 = vrot.lane.b32.xlu0 %v2884, 112
    %v2888 = vpop.permute.xlu0 %2887
    %v2890 = vmul.f32 %v2885, %v2888
    %v2891 = vmul.f32 %v2874, %v2265
    %v2892 = vadd.f32 %v2890, %v2891
    %v2893 = vld [vmem:[%s7] sm:$0xff]
    %v2894 = vld [vmem:[%s7 + $0x8] sm:$0xff]
    %2896 = vrot.lane.b32.xlu0 %v2892, 112
    %v2897 = vpop.permute.xlu0 %2896
    %v2898 = vsel %vm378, %v2897, 0
    %2900 = vmatprep.subr.mxu0 0.0
    %2901 = vmatpush1.msra.mxu0 %v2893
    %2902 = vmatprep.subr.mxu0 0.0
    %2903 = vmatpush1.msra.mxu0 %v2894
    %2904 = vmatprep.subr.mxu0 0.0
    %2905 = vmatpush1.msra.mxu0 0.0
    %2906 = vmatprep.subr.mxu0 0.0
    %2907 = vmatpush1.msra.mxu0 0.0
    %2908 = vmatprep.subr.mxu0 0.0
    %2909 = vmatpush1.msra.mxu0 0.0
    %2910 = vmatprep.subr.mxu0 0.0
    %2911 = vmatpush1.msra.mxu0 0.0
    %2912 = vmatprep.subr.mxu0 0.0
    %2913 = vmatpush1.msra.mxu0 0.0
    %2914 = vmatprep.subr.mxu0 0.0
    %2915 = vmatpush1.msra.mxu0 0.0
    %2916 = vmatprep.subr.mxu0 0.0
    %2917 = vmatpush1.msra.mxu0 0.0
    %2918 = vmatprep.subr.mxu0 0.0
    %2919 = vmatpush1.msra.mxu0 0.0
    %2920 = vmatprep.subr.mxu0 0.0
    %2921 = vmatpush1.msra.mxu0 0.0
    %2922 = vmatprep.subr.mxu0 0.0
    %2923 = vmatpush1.msra.mxu0 0.0
    %2924 = vmatprep.subr.mxu0 0.0
    %2925 = vmatpush1.msra.mxu0 0.0
    %2926 = vmatprep.subr.mxu0 0.0
    %2927 = vmatpush1.msra.mxu0 0.0
    %2928 = vmatprep.subr.mxu0 0.0
    %2929 = vmatpush1.msra.mxu0 0.0
    %2930 = vmatprep.subr.mxu0 0.0
    %2931 = vmatpush1.msra.mxu0 0.0
    %2932 = vmatprep.subr.mxu0 0.0
    %2933 = vmatpush1.msra.mxu0 0.0
    %2934 = vmatprep.subr.mxu0 0.0
    %2935 = vmatpush1.msra.mxu0 0.0
    %2936 = vmatprep.subr.mxu0 0.0
    %2937 = vmatpush1.msra.mxu0 0.0
    %2938 = vmatprep.subr.mxu0 0.0
    %2939 = vmatpush1.msra.mxu0 0.0
    %2940 = vmatprep.subr.mxu0 0.0
    %2941 = vmatpush1.msra.mxu0 0.0
    %2942 = vmatprep.subr.mxu0 0.0
    %2943 = vmatpush1.msra.mxu0 0.0
    %2944 = vmatprep.subr.mxu0 0.0
    %2945 = vmatpush1.msra.mxu0 0.0
    %2946 = vmatprep.subr.mxu0 0.0
    %2947 = vmatpush1.msra.mxu0 0.0
    %2948 = vmatprep.subr.mxu0 0.0
    %2949 = vmatpush1.msra.mxu0 0.0
    %2950 = vmatprep.subr.mxu0 0.0
    %2951 = vmatpush1.msra.mxu0 0.0
    %2952 = vmatprep.subr.mxu0 0.0
    %2953 = vmatpush1.msra.mxu0 0.0
    %2954 = vmatprep.subr.mxu0 0.0
    %2955 = vmatpush1.msra.mxu0 0.0
    %2956 = vmatprep.subr.mxu0 0.0
    %2957 = vmatpush1.msra.mxu0 0.0
    %2958 = vmatprep.subr.mxu0 0.0
    %2959 = vmatpush1.msra.mxu0 0.0
    %2960 = vmatprep.subr.mxu0 0.0
    %2961 = vmatpush1.msra.mxu0 0.0
    %2962 = vmatprep.subr.mxu0 0.0
    %2963 = vmatpush1.msra.mxu0 0.0
    %2964 = vmatprep.mubr.f32.mxu0 0.0
    %2965 = vmatmul.mubr.f32.gmra.mrb[0].mxu0 %v2898
    %v2966 = vpop.f32.mrb[0].mxu0
    %v2967 = vadd.f32 %v156, %v2966
    %v2968 = vpop.f32.mrb[0].mxu0
    %2969 = vdwg.mxu0
    %v2970 = vmax.f32 %v2967, 0.0
    %v2971 = vld [vmem:[%s9] sm:$0xff]
    %v2972 = vld [vmem:[%s9 + $0x8] sm:$0xff]
    %v2973 = vld [vmem:[%s9 + $0x10] sm:$0xff]
    %v2974 = vld [vmem:[%s9 + $0x18] sm:$0xff]
    %v2975 = vld [vmem:[%s10] sm:$0x1]
    %v2977 = vlaneseq
    %v2978 = vshrl.u32 %v2977, 7
    %v2979 = vsub.s32 0, %v2978
    %v2980 = vrot.slane %v2975, %v2979
    %v2983 = vsel %vm463, %v2970, 0
    %2985 = vmatprep.subr.mxu0 0.0
    %2986 = vmatpush1.msra.mxu0 %v2971
    %2987 = vmatprep.subr.mxu0 0.0
    %2988 = vmatpush1.msra.mxu0 %v2972
    %2989 = vmatprep.subr.mxu0 0.0
    %2990 = vmatpush1.msra.mxu0 %v2973
    %2991 = vmatprep.subr.mxu0 0.0
    %2992 = vmatpush1.msra.mxu0 %v2974
    %2993 = vmatprep.subr.mxu0 0.0
    %2994 = vmatpush1.msra.mxu0 0.0
    %2995 = vmatprep.subr.mxu0 0.0
    %2996 = vmatpush1.msra.mxu0 0.0
    %2997 = vmatprep.subr.mxu0 0.0
    %2998 = vmatpush1.msra.mxu0 0.0
    %2999 = vmatprep.subr.mxu0 0.0
    %3000 = vmatpush1.msra.mxu0 0.0
    %3001 = vmatprep.subr.mxu0 0.0
    %3002 = vmatpush1.msra.mxu0 0.0
    %3003 = vmatprep.subr.mxu0 0.0
    %3004 = vmatpush1.msra.mxu0 0.0
    %3005 = vmatprep.subr.mxu0 0.0
    %3006 = vmatpush1.msra.mxu0 0.0
    %3007 = vmatprep.subr.mxu0 0.0
    %3008 = vmatpush1.msra.mxu0 0.0
    %3009 = vmatprep.subr.mxu0 0.0
    %3010 = vmatpush1.msra.mxu0 0.0
    %3011 = vmatprep.subr.mxu0 0.0
    %3012 = vmatpush1.msra.mxu0 0.0
    %3013 = vmatprep.subr.mxu0 0.0
    %3014 = vmatpush1.msra.mxu0 0.0
    %3015 = vmatprep.subr.mxu0 0.0
    %3016 = vmatpush1.msra.mxu0 0.0
    %3017 = vmatprep.subr.mxu0 0.0
    %3018 = vmatpush1.msra.mxu0 0.0
    %3019 = vmatprep.subr.mxu0 0.0
    %3020 = vmatpush1.msra.mxu0 0.0
    %3021 = vmatprep.subr.mxu0 0.0
    %3022 = vmatpush1.msra.mxu0 0.0
    %3023 = vmatprep.subr.mxu0 0.0
    %3024 = vmatpush1.msra.mxu0 0.0
    %3025 = vmatprep.subr.mxu0 0.0
    %3026 = vmatpush1.msra.mxu0 0.0
    %3027 = vmatprep.subr.mxu0 0.0
    %3028 = vmatpush1.msra.mxu0 0.0
    %3029 = vmatprep.subr.mxu0 0.0
    %3030 = vmatpush1.msra.mxu0 0.0
    %3031 = vmatprep.subr.mxu0 0.0
    %3032 = vmatpush1.msra.mxu0 0.0
    %3033 = vmatprep.subr.mxu0 0.0
    %3034 = vmatpush1.msra.mxu0 0.0
    %3035 = vmatprep.subr.mxu0 0.0
    %3036 = vmatpush1.msra.mxu0 0.0
    %3037 = vmatprep.subr.mxu0 0.0
    %3038 = vmatpush1.msra.mxu0 0.0
    %3039 = vmatprep.subr.mxu0 0.0
    %3040 = vmatpush1.msra.mxu0 0.0
    %3041 = vmatprep.subr.mxu0 0.0
    %3042 = vmatpush1.msra.mxu0 0.0
    %3043 = vmatprep.subr.mxu0 0.0
    %3044 = vmatpush1.msra.mxu0 0.0
    %3045 = vmatprep.subr.mxu0 0.0
    %3046 = vmatpush1.msra.mxu0 0.0
    %3047 = vmatprep.subr.mxu0 0.0
    %3048 = vmatpush1.msra.mxu0 0.0
    %3049 = vmatprep.mubr.f32.mxu0 0.0
    %3050 = vmatmul.mubr.f32.gmra.mrb[0].mxu0 %v2983
    %v3051 = vpop.f32.mrb[0].mxu0
    %v3052 = vadd.f32 %v2980, %v3051
    %v3053 = vpop.f32.mrb[0].mxu0
    %3054 = vdwg.mxu0
    %v3055 = vmax.f32 %v3052, 0.0
    %v3056 = vld [vmem:[%s11] sm:$0xff]
    %v3057 = vld [vmem:[%s11 + $0x8] sm:$0xff]
    %v3058 = vld [vmem:[%s11 + $0x10] sm:$0xff]
    %v3059 = vld [vmem:[%s11 + $0x18] sm:$0xff]
    %v3060 = vld [vmem:[%s12] sm:$0x1]
    %v3062 = vlaneseq
    %v3063 = vshrl.u32 %v3062, 7
    %v3064 = vsub.s32 0, %v3063
    %v3065 = vrot.slane %v3060, %v3064
    %v3068 = vsel %vm463, %v3055, 0
    %3070 = vmatprep.subr.mxu0 0.0
    %3071 = vmatpush1.msra.mxu0 %v3056
    %3072 = vmatprep.subr.mxu0 0.0
    %3073 = vmatpush1.msra.mxu0 %v3057
    %3074 = vmatprep.subr.mxu0 0.0
    %3075 = vmatpush1.msra.mxu0 %v3058
    %3076 = vmatprep.subr.mxu0 0.0
    %3077 = vmatpush1.msra.mxu0 %v3059
    %3078 = vmatprep.subr.mxu0 0.0
    %3079 = vmatpush1.msra.mxu0 0.0
    %3080 = vmatprep.subr.mxu0 0.0
    %3081 = vmatpush1.msra.mxu0 0.0
    %3082 = vmatprep.subr.mxu0 0.0
    %3083 = vmatpush1.msra.mxu0 0.0
    %3084 = vmatprep.subr.mxu0 0.0
    %3085 = vmatpush1.msra.mxu0 0.0
    %3086 = vmatprep.subr.mxu0 0.0
    %3087 = vmatpush1.msra.mxu0 0.0
    %3088 = vmatprep.subr.mxu0 0.0
    %3089 = vmatpush1.msra.mxu0 0.0
    %3090 = vmatprep.subr.mxu0 0.0
    %3091 = vmatpush1.msra.mxu0 0.0
    %3092 = vmatprep.subr.mxu0 0.0
    %3093 = vmatpush1.msra.mxu0 0.0
    %3094 = vmatprep.subr.mxu0 0.0
    %3095 = vmatpush1.msra.mxu0 0.0
    %3096 = vmatprep.subr.mxu0 0.0
    %3097 = vmatpush1.msra.mxu0 0.0
    %3098 = vmatprep.subr.mxu0 0.0
    %3099 = vmatpush1.msra.mxu0 0.0
    %3100 = vmatprep.subr.mxu0 0.0
    %3101 = vmatpush1.msra.mxu0 0.0
    %3102 = vmatprep.subr.mxu0 0.0
    %3103 = vmatpush1.msra.mxu0 0.0
    %3104 = vmatprep.subr.mxu0 0.0
    %3105 = vmatpush1.msra.mxu0 0.0
    %3106 = vmatprep.subr.mxu0 0.0
    %3107 = vmatpush1.msra.mxu0 0.0
    %3108 = vmatprep.subr.mxu0 0.0
    %3109 = vmatpush1.msra.mxu0 0.0
    %3110 = vmatprep.subr.mxu0 0.0
    %3111 = vmatpush1.msra.mxu0 0.0
    %3112 = vmatprep.subr.mxu0 0.0
    %3113 = vmatpush1.msra.mxu0 0.0
    %3114 = vmatprep.subr.mxu0 0.0
    %3115 = vmatpush1.msra.mxu0 0.0
    %3116 = vmatprep.subr.mxu0 0.0
    %3117 = vmatpush1.msra.mxu0 0.0
    %3118 = vmatprep.subr.mxu0 0.0
    %3119 = vmatpush1.msra.mxu0 0.0
    %3120 = vmatprep.subr.mxu0 0.0
    %3121 = vmatpush1.msra.mxu0 0.0
    %3122 = vmatprep.subr.mxu0 0.0
    %3123 = vmatpush1.msra.mxu0 0.0
    %3124 = vmatprep.subr.mxu0 0.0
    %3125 = vmatpush1.msra.mxu0 0.0
    %3126 = vmatprep.subr.mxu0 0.0
    %3127 = vmatpush1.msra.mxu0 0.0
    %3128 = vmatprep.subr.mxu0 0.0
    %3129 = vmatpush1.msra.mxu0 0.0
    %3130 = vmatprep.subr.mxu0 0.0
    %3131 = vmatpush1.msra.mxu0 0.0
    %3132 = vmatprep.subr.mxu0 0.0
    %3133 = vmatpush1.msra.mxu0 0.0
    %3134 = vmatprep.mubr.f32.mxu0 0.0
    %3135 = vmatmul.mubr.f32.gmra.mrb[0].mxu0 %v3068
    %v3136 = vpop.f32.mrb[0].mxu0
    %v3137 = vadd.f32 %v3065, %v3136
    %v3138 = vpop.f32.mrb[0].mxu0
    %3139 = vdwg.mxu0
    %v3140 = vld [vmem:[%s14] sm:$0xff]
    %v3141 = vld [vmem:[%s14 + $0x8] sm:$0xff]
    %3142 = vmatprep.subr.mxu0 0.0
    %3143 = vmatpush1.msra.mxu0 %v3140
    %3144 = vmatprep.subr.mxu0 0.0
    %3145 = vmatpush1.msra.mxu0 %v3141
    %3146 = vmatprep.subr.mxu0 0.0
    %3147 = vmatpush1.msra.mxu0 0.0
    %3148 = vmatprep.subr.mxu0 0.0
    %3149 = vmatpush1.msra.mxu0 0.0
    %3150 = vmatprep.subr.mxu0 0.0
    %3151 = vmatpush1.msra.mxu0 0.0
    %3152 = vmatprep.subr.mxu0 0.0
    %3153 = vmatpush1.msra.mxu0 0.0
    %3154 = vmatprep.subr.mxu0 0.0
    %3155 = vmatpush1.msra.mxu0 0.0
    %3156 = vmatprep.subr.mxu0 0.0
    %3157 = vmatpush1.msra.mxu0 0.0
    %3158 = vmatprep.subr.mxu0 0.0
    %3159 = vmatpush1.msra.mxu0 0.0
    %3160 = vmatprep.subr.mxu0 0.0
    %3161 = vmatpush1.msra.mxu0 0.0
    %3162 = vmatprep.subr.mxu0 0.0
    %3163 = vmatpush1.msra.mxu0 0.0
    %3164 = vmatprep.subr.mxu0 0.0
    %3165 = vmatpush1.msra.mxu0 0.0
    %3166 = vmatprep.subr.mxu0 0.0
    %3167 = vmatpush1.msra.mxu0 0.0
    %3168 = vmatprep.subr.mxu0 0.0
    %3169 = vmatpush1.msra.mxu0 0.0
    %3170 = vmatprep.subr.mxu0 0.0
    %3171 = vmatpush1.msra.mxu0 0.0
    %3172 = vmatprep.subr.mxu0 0.0
    %3173 = vmatpush1.msra.mxu0 0.0
    %3174 = vmatprep.subr.mxu0 0.0
    %3175 = vmatpush1.msra.mxu0 0.0
    %3176 = vmatprep.subr.mxu0 0.0
    %3177 = vmatpush1.msra.mxu0 0.0
    %3178 = vmatprep.subr.mxu0 0.0
    %3179 = vmatpush1.msra.mxu0 0.0
    %3180 = vmatprep.subr.mxu0 0.0
    %3181 = vmatpush1.msra.mxu0 0.0
    %3182 = vmatprep.subr.mxu0 0.0
    %3183 = vmatpush1.msra.mxu0 0.0
    %3184 = vmatprep.subr.mxu0 0.0
    %3185 = vmatpush1.msra.mxu0 0.0
    %3186 = vmatprep.subr.mxu0 0.0
    %3187 = vmatpush1.msra.mxu0 0.0
    %3188 = vmatprep.subr.mxu0 0.0
    %3189 = vmatpush1.msra.mxu0 0.0
    %3190 = vmatprep.subr.mxu0 0.0
    %3191 = vmatpush1.msra.mxu0 0.0
    %3192 = vmatprep.subr.mxu0 0.0
    %3193 = vmatpush1.msra.mxu0 0.0
    %3194 = vmatprep.subr.mxu0 0.0
    %3195 = vmatpush1.msra.mxu0 0.0
    %3196 = vmatprep.subr.mxu0 0.0
    %3197 = vmatpush1.msra.mxu0 0.0
    %3198 = vmatprep.subr.mxu0 0.0
    %3199 = vmatpush1.msra.mxu0 0.0
    %3200 = vmatprep.subr.mxu0 0.0
    %3201 = vmatpush1.msra.mxu0 0.0
    %3202 = vmatprep.subr.mxu0 0.0
    %3203 = vmatpush1.msra.mxu0 0.0
    %3204 = vmatprep.subr.mxu0 0.0
    %3205 = vmatpush1.msra.mxu0 0.0
    %3206 = vmatprep.mubr.f32.mxu0 0.0
    %3207 = vmatmul.mubr.f32.gmra.mrb[0].mxu0 %v2898
    %v3208 = vpop.f32.mrb[0].mxu0
    %v3209 = vadd.f32 %v237, %v3208
    %v3210 = vpop.f32.mrb[0].mxu0
    %3211 = vdwg.mxu0
    %v3212 = vmax.f32 %v3209, 0.0
    %v3213 = vld [vmem:[%s16] sm:$0xff]
    %v3214 = vld [vmem:[#allocation2] sm:$0x1]
    %v3216 = vlaneseq
    %v3217 = vshrl.u32 %v3216, 7
    %v3218 = vsub.s32 0, %v3217
    %v3219 = vrot.slane %v3214, %v3218
    %v3222 = vsel %vm703, %v3212, 0
    %3224 = vmatprep.subr.mxu0 0.0
    %3225 = vmatpush1.msra.mxu0 %v3213
    %3226 = vmatprep.subr.mxu0 0.0
    %3227 = vmatpush1.msra.mxu0 0.0
    %3228 = vmatprep.subr.mxu0 0.0
    %3229 = vmatpush1.msra.mxu0 0.0
    %3230 = vmatprep.subr.mxu0 0.0
    %3231 = vmatpush1.msra.mxu0 0.0
    %3232 = vmatprep.subr.mxu0 0.0
    %3233 = vmatpush1.msra.mxu0 0.0
    %3234 = vmatprep.subr.mxu0 0.0
    %3235 = vmatpush1.msra.mxu0 0.0
    %3236 = vmatprep.subr.mxu0 0.0
    %3237 = vmatpush1.msra.mxu0 0.0
    %3238 = vmatprep.subr.mxu0 0.0
    %3239 = vmatpush1.msra.mxu0 0.0
    %3240 = vmatprep.subr.mxu0 0.0
    %3241 = vmatpush1.msra.mxu0 0.0
    %3242 = vmatprep.subr.mxu0 0.0
    %3243 = vmatpush1.msra.mxu0 0.0
    %3244 = vmatprep.subr.mxu0 0.0
    %3245 = vmatpush1.msra.mxu0 0.0
    %3246 = vmatprep.subr.mxu0 0.0
    %3247 = vmatpush1.msra.mxu0 0.0
    %3248 = vmatprep.subr.mxu0 0.0
    %3249 = vmatpush1.msra.mxu0 0.0
    %3250 = vmatprep.subr.mxu0 0.0
    %3251 = vmatpush1.msra.mxu0 0.0
    %3252 = vmatprep.subr.mxu0 0.0
    %3253 = vmatpush1.msra.mxu0 0.0
    %3254 = vmatprep.subr.mxu0 0.0
    %3255 = vmatpush1.msra.mxu0 0.0
    %3256 = vmatprep.subr.mxu0 0.0
    %3257 = vmatpush1.msra.mxu0 0.0
    %3258 = vmatprep.subr.mxu0 0.0
    %3259 = vmatpush1.msra.mxu0 0.0
    %3260 = vmatprep.subr.mxu0 0.0
    %3261 = vmatpush1.msra.mxu0 0.0
    %3262 = vmatprep.subr.mxu0 0.0
    %3263 = vmatpush1.msra.mxu0 0.0
    %3264 = vmatprep.subr.mxu0 0.0
    %3265 = vmatpush1.msra.mxu0 0.0
    %3266 = vmatprep.subr.mxu0 0.0
    %3267 = vmatpush1.msra.mxu0 0.0
    %3268 = vmatprep.subr.mxu0 0.0
    %3269 = vmatpush1.msra.mxu0 0.0
    %3270 = vmatprep.subr.mxu0 0.0
    %3271 = vmatpush1.msra.mxu0 0.0
    %3272 = vmatprep.subr.mxu0 0.0
    %3273 = vmatpush1.msra.mxu0 0.0
    %3274 = vmatprep.subr.mxu0 0.0
    %3275 = vmatpush1.msra.mxu0 0.0
    %3276 = vmatprep.subr.mxu0 0.0
    %3277 = vmatpush1.msra.mxu0 0.0
    %3278 = vmatprep.subr.mxu0 0.0
    %3279 = vmatpush1.msra.mxu0 0.0
    %3280 = vmatprep.subr.mxu0 0.0
    %3281 = vmatpush1.msra.mxu0 0.0
    %3282 = vmatprep.subr.mxu0 0.0
    %3283 = vmatpush1.msra.mxu0 0.0
    %3284 = vmatprep.subr.mxu0 0.0
    %3285 = vmatpush1.msra.mxu0 0.0
    %3286 = vmatprep.subr.mxu0 0.0
    %3287 = vmatpush1.msra.mxu0 0.0
    %3288 = vmatprep.mubr.f32.mxu0 0.0
    %3289 = vmatmul.mubr.f32.gmra.mrb[0].mxu0 %v3222
    %v3290 = vpop.f32.mrb[0].mxu0
    %v3291 = vadd.f32 %v3219, %v3290
    %v3292 = vpop.f32.mrb[0].mxu0
    %3293 = vdwg.mxu0
    %v3294 = vmul.f32 %v3291, %v777
    %v3295 = vadd.f32 %v3294, 0.5
    %v3296 = vmax.f32 %v3295, 0.0
    %v3297 = vmin.f32 %v3296, 1.0
    %v3298 = vadd.f32 %v3297, %v243
    %3300 = vset.pattern.permute.xlu0 0
    %3301 = vperm.xlu0 %3300, %v3298
    %v3302 = vpop.permute.xlu0 %3301
    %v3304 = vsub.f32 %v3302, %v792
    %v3305 = vmul.f32 %v3304, %v3304
    %v3306 = vsub.f32 0.0, %v3305
    %v3307 = vmul.f32 %v3306, %v797
    %v3308 = vmul.f32 %v3307, 1.442695
    %v3309 = vpow.pop %v3308
    %v3310 = vsel %vm801, %v3309, 0.0
    %3311 = vadd.xlane.f32.xlu0 %v3310
    %v3312 = vpop.xlane.xlu0 %3311
    %v3313 = vmul.f32 %v3137, %v3309
    %v3314 = vld [vmem:[%s19] sm:$0xff]
    %v3315 = vld [vmem:[%s19 + $0x8] sm:$0xff]
    %v3316 = vld [vmem:[%s19 + $0x10] sm:$0xff]
    %v3317 = vld [vmem:[%s19 + $0x18] sm:$0xff]
    %v3319 = vsel %vm463, %v3313, 0
    %3321 = vmatprep.subr.mxu0 0.0
    %3322 = vmatpush1.msra.mxu0 %v3314
    %3323 = vmatprep.subr.mxu0 0.0
    %3324 = vmatpush1.msra.mxu0 %v3315
    %3325 = vmatprep.subr.mxu0 0.0
    %3326 = vmatpush1.msra.mxu0 %v3316
    %3327 = vmatprep.subr.mxu0 0.0
    %3328 = vmatpush1.msra.mxu0 %v3317
    %3329 = vmatprep.subr.mxu0 0.0
    %3330 = vmatpush1.msra.mxu0 0.0
    %3331 = vmatprep.subr.mxu0 0.0
    %3332 = vmatpush1.msra.mxu0 0.0
    %3333 = vmatprep.subr.mxu0 0.0
    %3334 = vmatpush1.msra.mxu0 0.0
    %3335 = vmatprep.subr.mxu0 0.0
    %3336 = vmatpush1.msra.mxu0 0.0
    %3337 = vmatprep.subr.mxu0 0.0
    %3338 = vmatpush1.msra.mxu0 0.0
    %3339 = vmatprep.subr.mxu0 0.0
    %3340 = vmatpush1.msra.mxu0 0.0
    %3341 = vmatprep.subr.mxu0 0.0
    %3342 = vmatpush1.msra.mxu0 0.0
    %3343 = vmatprep.subr.mxu0 0.0
    %3344 = vmatpush1.msra.mxu0 0.0
    %3345 = vmatprep.subr.mxu0 0.0
    %3346 = vmatpush1.msra.mxu0 0.0
    %3347 = vmatprep.subr.mxu0 0.0
    %3348 = vmatpush1.msra.mxu0 0.0
    %3349 = vmatprep.subr.mxu0 0.0
    %3350 = vmatpush1.msra.mxu0 0.0
    %3351 = vmatprep.subr.mxu0 0.0
    %3352 = vmatpush1.msra.mxu0 0.0
    %3353 = vmatprep.subr.mxu0 0.0
    %3354 = vmatpush1.msra.mxu0 0.0
    %3355 = vmatprep.subr.mxu0 0.0
    %3356 = vmatpush1.msra.mxu0 0.0
    %3357 = vmatprep.subr.mxu0 0.0
    %3358 = vmatpush1.msra.mxu0 0.0
    %3359 = vmatprep.subr.mxu0 0.0
    %3360 = vmatpush1.msra.mxu0 0.0
    %3361 = vmatprep.subr.mxu0 0.0
    %3362 = vmatpush1.msra.mxu0 0.0
    %3363 = vmatprep.subr.mxu0 0.0
    %3364 = vmatpush1.msra.mxu0 0.0
    %3365 = vmatprep.subr.mxu0 0.0
    %3366 = vmatpush1.msra.mxu0 0.0
    %3367 = vmatprep.subr.mxu0 0.0
    %3368 = vmatpush1.msra.mxu0 0.0
    %3369 = vmatprep.subr.mxu0 0.0
    %3370 = vmatpush1.msra.mxu0 0.0
    %3371 = vmatprep.subr.mxu0 0.0
    %3372 = vmatpush1.msra.mxu0 0.0
    %3373 = vmatprep.subr.mxu0 0.0
    %3374 = vmatpush1.msra.mxu0 0.0
    %3375 = vmatprep.subr.mxu0 0.0
    %3376 = vmatpush1.msra.mxu0 0.0
    %3377 = vmatprep.subr.mxu0 0.0
    %3378 = vmatpush1.msra.mxu0 0.0
    %3379 = vmatprep.subr.mxu0 0.0
    %3380 = vmatpush1.msra.mxu0 0.0
    %3381 = vmatprep.subr.mxu0 0.0
    %3382 = vmatpush1.msra.mxu0 0.0
    %3383 = vmatprep.subr.mxu0 0.0
    %3384 = vmatpush1.msra.mxu0 0.0
    %3385 = vmatprep.mubr.f32.mxu0 0.0
    %3386 = vmatmul.mubr.f32.gmra.mrb[0].mxu0 %v3319
    %v3387 = vpop.f32.mrb[0].mxu0
    %v3388 = vadd.f32 0.0, %v3387
    %v3389 = vpop.f32.mrb[0].mxu0
    %3390 = vdwg.mxu0
    %v3391 = vrcp.pop %v3312
    %v3392 = vmul.f32 %v3388, %v3391
    %s3393 = scalar_lea.vmem %s20, 16
    %3394 = vst.msk [vmem:[%s3393] sm:$0xf] %vm885, %v3392
    %s3395 = scalar_lea.vmem %s21, 16
    %3396 = vst.msk [vmem:[%s3395] sm:$0xf] %vm887, %v3298
    %s3397 = scalar_lea.vmem %s22, 16
    %3398 = vst.msk [vmem:[%s3397] sm:$0xf] %vm889, %v3137
    %s3399 = scalar_lea.vmem %s0, 20
    %v3400 = vld [vmem:[%s3399] sm:$0xf]
    %3401 = vrot.lane.b32.xlu0 %v2892, 116
    %v3402 = vpop.permute.xlu0 %3401
    %v3404 = vsel %vm251, %v3400, %v3402
    %v3405 = vld [vmem:[%s4] sm:$0xff]
    %v3406 = vld [vmem:[%s4 + $0x8] sm:$0xff]
    %v3407 = vld [vmem:[%s4 + $0x10] sm:$0xf]
    %v3408 = vld [vmem:[%s5] sm:$0x1]
    %v3410 = vlaneseq
    %v3411 = vshrl.u32 %v3410, 7
    %v3412 = vsub.s32 0, %v3411
    %v3413 = vrot.slane %v3408, %v3412
    %v3416 = vsel %vm263, %v3404, 0
    %v3419 = vsel %vm267, %v3407, 0
    %3421 = vmatprep.subr.mxu0 0.0
    %3422 = vmatpush1.msra.mxu0 %v3405
    %3423 = vmatprep.subr.mxu0 0.0
    %3424 = vmatpush1.msra.mxu0 %v3406
    %3425 = vmatprep.subr.mxu0 0.0
    %3426 = vmatpush1.msra.mxu0 %v3419
    %3427 = vmatprep.subr.mxu0 0.0
    %3428 = vmatpush1.msra.mxu0 0.0
    %3429 = vmatprep.subr.mxu0 0.0
    %3430 = vmatpush1.msra.mxu0 0.0
    %3431 = vmatprep.subr.mxu0 0.0
    %3432 = vmatpush1.msra.mxu0 0.0
    %3433 = vmatprep.subr.mxu0 0.0
    %3434 = vmatpush1.msra.mxu0 0.0
    %3435 = vmatprep.subr.mxu0 0.0
    %3436 = vmatpush1.msra.mxu0 0.0
    %3437 = vmatprep.subr.mxu0 0.0
    %3438 = vmatpush1.msra.mxu0 0.0
    %3439 = vmatprep.subr.mxu0 0.0
    %3440 = vmatpush1.msra.mxu0 0.0
    %3441 = vmatprep.subr.mxu0 0.0
    %3442 = vmatpush1.msra.mxu0 0.0
    %3443 = vmatprep.subr.mxu0 0.0
    %3444 = vmatpush1.msra.mxu0 0.0
    %3445 = vmatprep.subr.mxu0 0.0
    %3446 = vmatpush1.msra.mxu0 0.0
    %3447 = vmatprep.subr.mxu0 0.0
    %3448 = vmatpush1.msra.mxu0 0.0
    %3449 = vmatprep.subr.mxu0 0.0
    %3450 = vmatpush1.msra.mxu0 0.0
    %3451 = vmatprep.subr.mxu0 0.0
    %3452 = vmatpush1.msra.mxu0 0.0
    %3453 = vmatprep.subr.mxu0 0.0
    %3454 = vmatpush1.msra.mxu0 0.0
    %3455 = vmatprep.subr.mxu0 0.0
    %3456 = vmatpush1.msra.mxu0 0.0
    %3457 = vmatprep.subr.mxu0 0.0
    %3458 = vmatpush1.msra.mxu0 0.0
    %3459 = vmatprep.subr.mxu0 0.0
    %3460 = vmatpush1.msra.mxu0 0.0
    %3461 = vmatprep.subr.mxu0 0.0
    %3462 = vmatpush1.msra.mxu0 0.0
    %3463 = vmatprep.subr.mxu0 0.0
    %3464 = vmatpush1.msra.mxu0 0.0
    %3465 = vmatprep.subr.mxu0 0.0
    %3466 = vmatpush1.msra.mxu0 0.0
    %3467 = vmatprep.subr.mxu0 0.0
    %3468 = vmatpush1.msra.mxu0 0.0
    %3469 = vmatprep.subr.mxu0 0.0
    %3470 = vmatpush1.msra.mxu0 0.0
    %3471 = vmatprep.subr.mxu0 0.0
    %3472 = vmatpush1.msra.mxu0 0.0
    %3473 = vmatprep.subr.mxu0 0.0
    %3474 = vmatpush1.msra.mxu0 0.0
    %3475 = vmatprep.subr.mxu0 0.0
    %3476 = vmatpush1.msra.mxu0 0.0
    %3477 = vmatprep.subr.mxu0 0.0
    %3478 = vmatpush1.msra.mxu0 0.0
    %3479 = vmatprep.subr.mxu0 0.0
    %3480 = vmatpush1.msra.mxu0 0.0
    %3481 = vmatprep.subr.mxu0 0.0
    %3482 = vmatpush1.msra.mxu0 0.0
    %3483 = vmatprep.subr.mxu0 0.0
    %3484 = vmatpush1.msra.mxu0 0.0
    %3485 = vmatprep.mubr.f32.mxu0 0.0
    %3486 = vmatmul.mubr.f32.gmra.mrb[0].mxu0 %v3416
    %v3487 = vpop.f32.mrb[0].mxu0
    %v3488 = vadd.f32 %v3413, %v3487
    %v3489 = vpop.f32.mrb[0].mxu0
    %3490 = vdwg.mxu0
    %3492 = vrot.lane.b32.xlu0 %v3488, 80
    %v3493 = vpop.permute.xlu0 %3492
    %v3495 = vadd.f32 %v3488, %v3493
    %v3496 = vxor.u32 %v3495, 2147483648
    %v3497 = vmul.f32 %v3496, 1.442695
    %v3498 = vpow.pop %v3497
    %v3499 = vadd.f32 %v3498, 1.0
    %v3500 = vrcp.pop %v3499
    %v3501 = vmul.f32 1.0, %v3500
    %3502 = vrot.lane.b32.xlu0 %v3488, 48
    %v3503 = vpop.permute.xlu0 %3502
    %v3505 = vmul.f32 %v3501, %v3503
    %3507 = vrot.lane.b32.xlu0 %v3505, 32
    %v3508 = vpop.permute.xlu0 %3507
    %v3510 = vadd.f32 %v3488, %v3508
    %v3511 = vtanh.pop %v3510
    %v3512 = vsub.f32 1.0, %v3501
    %3514 = vrot.lane.b32.xlu0 %v3511, 112
    %v3515 = vpop.permute.xlu0 %3514
    %v3517 = vmul.f32 %v3512, %v3515
    %v3518 = vmul.f32 %v3501, %v2892
    %v3519 = vadd.f32 %v3517, %v3518
    %v3520 = vld [vmem:[%s7] sm:$0xff]
    %v3521 = vld [vmem:[%s7 + $0x8] sm:$0xff]
    %3523 = vrot.lane.b32.xlu0 %v3519, 112
    %v3524 = vpop.permute.xlu0 %3523
    %v3525 = vsel %vm378, %v3524, 0
    %3527 = vmatprep.subr.mxu0 0.0
    %3528 = vmatpush1.msra.mxu0 %v3520
    %3529 = vmatprep.subr.mxu0 0.0
    %3530 = vmatpush1.msra.mxu0 %v3521
    %3531 = vmatprep.subr.mxu0 0.0
    %3532 = vmatpush1.msra.mxu0 0.0
    %3533 = vmatprep.subr.mxu0 0.0
    %3534 = vmatpush1.msra.mxu0 0.0
    %3535 = vmatprep.subr.mxu0 0.0
    %3536 = vmatpush1.msra.mxu0 0.0
    %3537 = vmatprep.subr.mxu0 0.0
    %3538 = vmatpush1.msra.mxu0 0.0
    %3539 = vmatprep.subr.mxu0 0.0
    %3540 = vmatpush1.msra.mxu0 0.0
    %3541 = vmatprep.subr.mxu0 0.0
    %3542 = vmatpush1.msra.mxu0 0.0
    %3543 = vmatprep.subr.mxu0 0.0
    %3544 = vmatpush1.msra.mxu0 0.0
    %3545 = vmatprep.subr.mxu0 0.0
    %3546 = vmatpush1.msra.mxu0 0.0
    %3547 = vmatprep.subr.mxu0 0.0
    %3548 = vmatpush1.msra.mxu0 0.0
    %3549 = vmatprep.subr.mxu0 0.0
    %3550 = vmatpush1.msra.mxu0 0.0
    %3551 = vmatprep.subr.mxu0 0.0
    %3552 = vmatpush1.msra.mxu0 0.0
    %3553 = vmatprep.subr.mxu0 0.0
    %3554 = vmatpush1.msra.mxu0 0.0
    %3555 = vmatprep.subr.mxu0 0.0
    %3556 = vmatpush1.msra.mxu0 0.0
    %3557 = vmatprep.subr.mxu0 0.0
    %3558 = vmatpush1.msra.mxu0 0.0
    %3559 = vmatprep.subr.mxu0 0.0
    %3560 = vmatpush1.msra.mxu0 0.0
    %3561 = vmatprep.subr.mxu0 0.0
    %3562 = vmatpush1.msra.mxu0 0.0
    %3563 = vmatprep.subr.mxu0 0.0
    %3564 = vmatpush1.msra.mxu0 0.0
    %3565 = vmatprep.subr.mxu0 0.0
    %3566 = vmatpush1.msra.mxu0 0.0
    %3567 = vmatprep.subr.mxu0 0.0
    %3568 = vmatpush1.msra.mxu0 0.0
    %3569 = vmatprep.subr.mxu0 0.0
    %3570 = vmatpush1.msra.mxu0 0.0
    %3571 = vmatprep.subr.mxu0 0.0
    %3572 = vmatpush1.msra.mxu0 0.0
    %3573 = vmatprep.subr.mxu0 0.0
    %3574 = vmatpush1.msra.mxu0 0.0
    %3575 = vmatprep.subr.mxu0 0.0
    %3576 = vmatpush1.msra.mxu0 0.0
    %3577 = vmatprep.subr.mxu0 0.0
    %3578 = vmatpush1.msra.mxu0 0.0
    %3579 = vmatprep.subr.mxu0 0.0
    %3580 = vmatpush1.msra.mxu0 0.0
    %3581 = vmatprep.subr.mxu0 0.0
    %3582 = vmatpush1.msra.mxu0 0.0
    %3583 = vmatprep.subr.mxu0 0.0
    %3584 = vmatpush1.msra.mxu0 0.0
    %3585 = vmatprep.subr.mxu0 0.0
    %3586 = vmatpush1.msra.mxu0 0.0
    %3587 = vmatprep.subr.mxu0 0.0
    %3588 = vmatpush1.msra.mxu0 0.0
    %3589 = vmatprep.subr.mxu0 0.0
    %3590 = vmatpush1.msra.mxu0 0.0
    %3591 = vmatprep.mubr.f32.mxu0 0.0
    %3592 = vmatmul.mubr.f32.gmra.mrb[0].mxu0 %v3525
    %v3593 = vpop.f32.mrb[0].mxu0
    %v3594 = vadd.f32 %v156, %v3593
    %v3595 = vpop.f32.mrb[0].mxu0
    %3596 = vdwg.mxu0
    %v3597 = vmax.f32 %v3594, 0.0
    %v3598 = vld [vmem:[%s9] sm:$0xff]
    %v3599 = vld [vmem:[%s9 + $0x8] sm:$0xff]
    %v3600 = vld [vmem:[%s9 + $0x10] sm:$0xff]
    %v3601 = vld [vmem:[%s9 + $0x18] sm:$0xff]
    %v3602 = vld [vmem:[%s10] sm:$0x1]
    %v3604 = vlaneseq
    %v3605 = vshrl.u32 %v3604, 7
    %v3606 = vsub.s32 0, %v3605
    %v3607 = vrot.slane %v3602, %v3606
    %v3610 = vsel %vm463, %v3597, 0
    %3612 = vmatprep.subr.mxu0 0.0
    %3613 = vmatpush1.msra.mxu0 %v3598
    %3614 = vmatprep.subr.mxu0 0.0
    %3615 = vmatpush1.msra.mxu0 %v3599
    %3616 = vmatprep.subr.mxu0 0.0
    %3617 = vmatpush1.msra.mxu0 %v3600
    %3618 = vmatprep.subr.mxu0 0.0
    %3619 = vmatpush1.msra.mxu0 %v3601
    %3620 = vmatprep.subr.mxu0 0.0
    %3621 = vmatpush1.msra.mxu0 0.0
    %3622 = vmatprep.subr.mxu0 0.0
    %3623 = vmatpush1.msra.mxu0 0.0
    %3624 = vmatprep.subr.mxu0 0.0
    %3625 = vmatpush1.msra.mxu0 0.0
    %3626 = vmatprep.subr.mxu0 0.0
    %3627 = vmatpush1.msra.mxu0 0.0
    %3628 = vmatprep.subr.mxu0 0.0
    %3629 = vmatpush1.msra.mxu0 0.0
    %3630 = vmatprep.subr.mxu0 0.0
    %3631 = vmatpush1.msra.mxu0 0.0
    %3632 = vmatprep.subr.mxu0 0.0
    %3633 = vmatpush1.msra.mxu0 0.0
    %3634 = vmatprep.subr.mxu0 0.0
    %3635 = vmatpush1.msra.mxu0 0.0
    %3636 = vmatprep.subr.mxu0 0.0
    %3637 = vmatpush1.msra.mxu0 0.0
    %3638 = vmatprep.subr.mxu0 0.0
    %3639 = vmatpush1.msra.mxu0 0.0
    %3640 = vmatprep.subr.mxu0 0.0
    %3641 = vmatpush1.msra.mxu0 0.0
    %3642 = vmatprep.subr.mxu0 0.0
    %3643 = vmatpush1.msra.mxu0 0.0
    %3644 = vmatprep.subr.mxu0 0.0
    %3645 = vmatpush1.msra.mxu0 0.0
    %3646 = vmatprep.subr.mxu0 0.0
    %3647 = vmatpush1.msra.mxu0 0.0
    %3648 = vmatprep.subr.mxu0 0.0
    %3649 = vmatpush1.msra.mxu0 0.0
    %3650 = vmatprep.subr.mxu0 0.0
    %3651 = vmatpush1.msra.mxu0 0.0
    %3652 = vmatprep.subr.mxu0 0.0
    %3653 = vmatpush1.msra.mxu0 0.0
    %3654 = vmatprep.subr.mxu0 0.0
    %3655 = vmatpush1.msra.mxu0 0.0
    %3656 = vmatprep.subr.mxu0 0.0
    %3657 = vmatpush1.msra.mxu0 0.0
    %3658 = vmatprep.subr.mxu0 0.0
    %3659 = vmatpush1.msra.mxu0 0.0
    %3660 = vmatprep.subr.mxu0 0.0
    %3661 = vmatpush1.msra.mxu0 0.0
    %3662 = vmatprep.subr.mxu0 0.0
    %3663 = vmatpush1.msra.mxu0 0.0
    %3664 = vmatprep.subr.mxu0 0.0
    %3665 = vmatpush1.msra.mxu0 0.0
    %3666 = vmatprep.subr.mxu0 0.0
    %3667 = vmatpush1.msra.mxu0 0.0
    %3668 = vmatprep.subr.mxu0 0.0
    %3669 = vmatpush1.msra.mxu0 0.0
    %3670 = vmatprep.subr.mxu0 0.0
    %3671 = vmatpush1.msra.mxu0 0.0
    %3672 = vmatprep.subr.mxu0 0.0
    %3673 = vmatpush1.msra.mxu0 0.0
    %3674 = vmatprep.subr.mxu0 0.0
    %3675 = vmatpush1.msra.mxu0 0.0
    %3676 = vmatprep.mubr.f32.mxu0 0.0
    %3677 = vmatmul.mubr.f32.gmra.mrb[0].mxu0 %v3610
    %v3678 = vpop.f32.mrb[0].mxu0
    %v3679 = vadd.f32 %v3607, %v3678
    %v3680 = vpop.f32.mrb[0].mxu0
    %3681 = vdwg.mxu0
    %v3682 = vmax.f32 %v3679, 0.0
    %v3683 = vld [vmem:[%s11] sm:$0xff]
    %v3684 = vld [vmem:[%s11 + $0x8] sm:$0xff]
    %v3685 = vld [vmem:[%s11 + $0x10] sm:$0xff]
    %v3686 = vld [vmem:[%s11 + $0x18] sm:$0xff]
    %v3687 = vld [vmem:[%s12] sm:$0x1]
    %v3689 = vlaneseq
    %v3690 = vshrl.u32 %v3689, 7
    %v3691 = vsub.s32 0, %v3690
    %v3692 = vrot.slane %v3687, %v3691
    %v3695 = vsel %vm463, %v3682, 0
    %3697 = vmatprep.subr.mxu0 0.0
    %3698 = vmatpush1.msra.mxu0 %v3683
    %3699 = vmatprep.subr.mxu0 0.0
    %3700 = vmatpush1.msra.mxu0 %v3684
    %3701 = vmatprep.subr.mxu0 0.0
    %3702 = vmatpush1.msra.mxu0 %v3685
    %3703 = vmatprep.subr.mxu0 0.0
    %3704 = vmatpush1.msra.mxu0 %v3686
    %3705 = vmatprep.subr.mxu0 0.0
    %3706 = vmatpush1.msra.mxu0 0.0
    %3707 = vmatprep.subr.mxu0 0.0
    %3708 = vmatpush1.msra.mxu0 0.0
    %3709 = vmatprep.subr.mxu0 0.0
    %3710 = vmatpush1.msra.mxu0 0.0
    %3711 = vmatprep.subr.mxu0 0.0
    %3712 = vmatpush1.msra.mxu0 0.0
    %3713 = vmatprep.subr.mxu0 0.0
    %3714 = vmatpush1.msra.mxu0 0.0
    %3715 = vmatprep.subr.mxu0 0.0
    %3716 = vmatpush1.msra.mxu0 0.0
    %3717 = vmatprep.subr.mxu0 0.0
    %3718 = vmatpush1.msra.mxu0 0.0
    %3719 = vmatprep.subr.mxu0 0.0
    %3720 = vmatpush1.msra.mxu0 0.0
    %3721 = vmatprep.subr.mxu0 0.0
    %3722 = vmatpush1.msra.mxu0 0.0
    %3723 = vmatprep.subr.mxu0 0.0
    %3724 = vmatpush1.msra.mxu0 0.0
    %3725 = vmatprep.subr.mxu0 0.0
    %3726 = vmatpush1.msra.mxu0 0.0
    %3727 = vmatprep.subr.mxu0 0.0
    %3728 = vmatpush1.msra.mxu0 0.0
    %3729 = vmatprep.subr.mxu0 0.0
    %3730 = vmatpush1.msra.mxu0 0.0
    %3731 = vmatprep.subr.mxu0 0.0
    %3732 = vmatpush1.msra.mxu0 0.0
    %3733 = vmatprep.subr.mxu0 0.0
    %3734 = vmatpush1.msra.mxu0 0.0
    %3735 = vmatprep.subr.mxu0 0.0
    %3736 = vmatpush1.msra.mxu0 0.0
    %3737 = vmatprep.subr.mxu0 0.0
    %3738 = vmatpush1.msra.mxu0 0.0
    %3739 = vmatprep.subr.mxu0 0.0
    %3740 = vmatpush1.msra.mxu0 0.0
    %3741 = vmatprep.subr.mxu0 0.0
    %3742 = vmatpush1.msra.mxu0 0.0
    %3743 = vmatprep.subr.mxu0 0.0
    %3744 = vmatpush1.msra.mxu0 0.0
    %3745 = vmatprep.subr.mxu0 0.0
    %3746 = vmatpush1.msra.mxu0 0.0
    %3747 = vmatprep.subr.mxu0 0.0
    %3748 = vmatpush1.msra.mxu0 0.0
    %3749 = vmatprep.subr.mxu0 0.0
    %3750 = vmatpush1.msra.mxu0 0.0
    %3751 = vmatprep.subr.mxu0 0.0
    %3752 = vmatpush1.msra.mxu0 0.0
    %3753 = vmatprep.subr.mxu0 0.0
    %3754 = vmatpush1.msra.mxu0 0.0
    %3755 = vmatprep.subr.mxu0 0.0
    %3756 = vmatpush1.msra.mxu0 0.0
    %3757 = vmatprep.subr.mxu0 0.0
    %3758 = vmatpush1.msra.mxu0 0.0
    %3759 = vmatprep.subr.mxu0 0.0
    %3760 = vmatpush1.msra.mxu0 0.0
    %3761 = vmatprep.mubr.f32.mxu0 0.0
    %3762 = vmatmul.mubr.f32.gmra.mrb[0].mxu0 %v3695
    %v3763 = vpop.f32.mrb[0].mxu0
    %v3764 = vadd.f32 %v3692, %v3763
    %v3765 = vpop.f32.mrb[0].mxu0
    %3766 = vdwg.mxu0
    %v3767 = vld [vmem:[%s14] sm:$0xff]
    %v3768 = vld [vmem:[%s14 + $0x8] sm:$0xff]
    %3769 = vmatprep.subr.mxu0 0.0
    %3770 = vmatpush1.msra.mxu0 %v3767
    %3771 = vmatprep.subr.mxu0 0.0
    %3772 = vmatpush1.msra.mxu0 %v3768
    %3773 = vmatprep.subr.mxu0 0.0
    %3774 = vmatpush1.msra.mxu0 0.0
    %3775 = vmatprep.subr.mxu0 0.0
    %3776 = vmatpush1.msra.mxu0 0.0
    %3777 = vmatprep.subr.mxu0 0.0
    %3778 = vmatpush1.msra.mxu0 0.0
    %3779 = vmatprep.subr.mxu0 0.0
    %3780 = vmatpush1.msra.mxu0 0.0
    %3781 = vmatprep.subr.mxu0 0.0
    %3782 = vmatpush1.msra.mxu0 0.0
    %3783 = vmatprep.subr.mxu0 0.0
    %3784 = vmatpush1.msra.mxu0 0.0
    %3785 = vmatprep.subr.mxu0 0.0
    %3786 = vmatpush1.msra.mxu0 0.0
    %3787 = vmatprep.subr.mxu0 0.0
    %3788 = vmatpush1.msra.mxu0 0.0
    %3789 = vmatprep.subr.mxu0 0.0
    %3790 = vmatpush1.msra.mxu0 0.0
    %3791 = vmatprep.subr.mxu0 0.0
    %3792 = vmatpush1.msra.mxu0 0.0
    %3793 = vmatprep.subr.mxu0 0.0
    %3794 = vmatpush1.msra.mxu0 0.0
    %3795 = vmatprep.subr.mxu0 0.0
    %3796 = vmatpush1.msra.mxu0 0.0
    %3797 = vmatprep.subr.mxu0 0.0
    %3798 = vmatpush1.msra.mxu0 0.0
    %3799 = vmatprep.subr.mxu0 0.0
    %3800 = vmatpush1.msra.mxu0 0.0
    %3801 = vmatprep.subr.mxu0 0.0
    %3802 = vmatpush1.msra.mxu0 0.0
    %3803 = vmatprep.subr.mxu0 0.0
    %3804 = vmatpush1.msra.mxu0 0.0
    %3805 = vmatprep.subr.mxu0 0.0
    %3806 = vmatpush1.msra.mxu0 0.0
    %3807 = vmatprep.subr.mxu0 0.0
    %3808 = vmatpush1.msra.mxu0 0.0
    %3809 = vmatprep.subr.mxu0 0.0
    %3810 = vmatpush1.msra.mxu0 0.0
    %3811 = vmatprep.subr.mxu0 0.0
    %3812 = vmatpush1.msra.mxu0 0.0
    %3813 = vmatprep.subr.mxu0 0.0
    %3814 = vmatpush1.msra.mxu0 0.0
    %3815 = vmatprep.subr.mxu0 0.0
    %3816 = vmatpush1.msra.mxu0 0.0
    %3817 = vmatprep.subr.mxu0 0.0
    %3818 = vmatpush1.msra.mxu0 0.0
    %3819 = vmatprep.subr.mxu0 0.0
    %3820 = vmatpush1.msra.mxu0 0.0
    %3821 = vmatprep.subr.mxu0 0.0
    %3822 = vmatpush1.msra.mxu0 0.0
    %3823 = vmatprep.subr.mxu0 0.0
    %3824 = vmatpush1.msra.mxu0 0.0
    %3825 = vmatprep.subr.mxu0 0.0
    %3826 = vmatpush1.msra.mxu0 0.0
    %3827 = vmatprep.subr.mxu0 0.0
    %3828 = vmatpush1.msra.mxu0 0.0
    %3829 = vmatprep.subr.mxu0 0.0
    %3830 = vmatpush1.msra.mxu0 0.0
    %3831 = vmatprep.subr.mxu0 0.0
    %3832 = vmatpush1.msra.mxu0 0.0
    %3833 = vmatprep.mubr.f32.mxu0 0.0
    %3834 = vmatmul.mubr.f32.gmra.mrb[0].mxu0 %v3525
    %v3835 = vpop.f32.mrb[0].mxu0
    %v3836 = vadd.f32 %v237, %v3835
    %v3837 = vpop.f32.mrb[0].mxu0
    %3838 = vdwg.mxu0
    %v3839 = vmax.f32 %v3836, 0.0
    %v3840 = vld [vmem:[%s16] sm:$0xff]
    %v3841 = vld [vmem:[#allocation2] sm:$0x1]
    %v3843 = vlaneseq
    %v3844 = vshrl.u32 %v3843, 7
    %v3845 = vsub.s32 0, %v3844
    %v3846 = vrot.slane %v3841, %v3845
    %v3849 = vsel %vm703, %v3839, 0
    %3851 = vmatprep.subr.mxu0 0.0
    %3852 = vmatpush1.msra.mxu0 %v3840
    %3853 = vmatprep.subr.mxu0 0.0
    %3854 = vmatpush1.msra.mxu0 0.0
    %3855 = vmatprep.subr.mxu0 0.0
    %3856 = vmatpush1.msra.mxu0 0.0
    %3857 = vmatprep.subr.mxu0 0.0
    %3858 = vmatpush1.msra.mxu0 0.0
    %3859 = vmatprep.subr.mxu0 0.0
    %3860 = vmatpush1.msra.mxu0 0.0
    %3861 = vmatprep.subr.mxu0 0.0
    %3862 = vmatpush1.msra.mxu0 0.0
    %3863 = vmatprep.subr.mxu0 0.0
    %3864 = vmatpush1.msra.mxu0 0.0
    %3865 = vmatprep.subr.mxu0 0.0
    %3866 = vmatpush1.msra.mxu0 0.0
    %3867 = vmatprep.subr.mxu0 0.0
    %3868 = vmatpush1.msra.mxu0 0.0
    %3869 = vmatprep.subr.mxu0 0.0
    %3870 = vmatpush1.msra.mxu0 0.0
    %3871 = vmatprep.subr.mxu0 0.0
    %3872 = vmatpush1.msra.mxu0 0.0
    %3873 = vmatprep.subr.mxu0 0.0
    %3874 = vmatpush1.msra.mxu0 0.0
    %3875 = vmatprep.subr.mxu0 0.0
    %3876 = vmatpush1.msra.mxu0 0.0
    %3877 = vmatprep.subr.mxu0 0.0
    %3878 = vmatpush1.msra.mxu0 0.0
    %3879 = vmatprep.subr.mxu0 0.0
    %3880 = vmatpush1.msra.mxu0 0.0
    %3881 = vmatprep.subr.mxu0 0.0
    %3882 = vmatpush1.msra.mxu0 0.0
    %3883 = vmatprep.subr.mxu0 0.0
    %3884 = vmatpush1.msra.mxu0 0.0
    %3885 = vmatprep.subr.mxu0 0.0
    %3886 = vmatpush1.msra.mxu0 0.0
    %3887 = vmatprep.subr.mxu0 0.0
    %3888 = vmatpush1.msra.mxu0 0.0
    %3889 = vmatprep.subr.mxu0 0.0
    %3890 = vmatpush1.msra.mxu0 0.0
    %3891 = vmatprep.subr.mxu0 0.0
    %3892 = vmatpush1.msra.mxu0 0.0
    %3893 = vmatprep.subr.mxu0 0.0
    %3894 = vmatpush1.msra.mxu0 0.0
    %3895 = vmatprep.subr.mxu0 0.0
    %3896 = vmatpush1.msra.mxu0 0.0
    %3897 = vmatprep.subr.mxu0 0.0
    %3898 = vmatpush1.msra.mxu0 0.0
    %3899 = vmatprep.subr.mxu0 0.0
    %3900 = vmatpush1.msra.mxu0 0.0
    %3901 = vmatprep.subr.mxu0 0.0
    %3902 = vmatpush1.msra.mxu0 0.0
    %3903 = vmatprep.subr.mxu0 0.0
    %3904 = vmatpush1.msra.mxu0 0.0
    %3905 = vmatprep.subr.mxu0 0.0
    %3906 = vmatpush1.msra.mxu0 0.0
    %3907 = vmatprep.subr.mxu0 0.0
    %3908 = vmatpush1.msra.mxu0 0.0
    %3909 = vmatprep.subr.mxu0 0.0
    %3910 = vmatpush1.msra.mxu0 0.0
    %3911 = vmatprep.subr.mxu0 0.0
    %3912 = vmatpush1.msra.mxu0 0.0
    %3913 = vmatprep.subr.mxu0 0.0
    %3914 = vmatpush1.msra.mxu0 0.0
    %3915 = vmatprep.mubr.f32.mxu0 0.0
    %3916 = vmatmul.mubr.f32.gmra.mrb[0].mxu0 %v3849
    %v3917 = vpop.f32.mrb[0].mxu0
    %v3918 = vadd.f32 %v3846, %v3917
    %v3919 = vpop.f32.mrb[0].mxu0
    %3920 = vdwg.mxu0
    %v3921 = vmul.f32 %v3918, %v777
    %v3922 = vadd.f32 %v3921, 0.5
    %v3923 = vmax.f32 %v3922, 0.0
    %v3924 = vmin.f32 %v3923, 1.0
    %v3925 = vadd.f32 %v3924, %v243
    %3927 = vset.pattern.permute.xlu0 0
    %3928 = vperm.xlu0 %3927, %v3925
    %v3929 = vpop.permute.xlu0 %3928
    %v3931 = vsub.f32 %v3929, %v792
    %v3932 = vmul.f32 %v3931, %v3931
    %v3933 = vsub.f32 0.0, %v3932
    %v3934 = vmul.f32 %v3933, %v797
    %v3935 = vmul.f32 %v3934, 1.442695
    %v3936 = vpow.pop %v3935
    %v3937 = vsel %vm801, %v3936, 0.0
    %3938 = vadd.xlane.f32.xlu0 %v3937
    %v3939 = vpop.xlane.xlu0 %3938
    %v3940 = vmul.f32 %v3764, %v3936
    %v3941 = vld [vmem:[%s19] sm:$0xff]
    %v3942 = vld [vmem:[%s19 + $0x8] sm:$0xff]
    %v3943 = vld [vmem:[%s19 + $0x10] sm:$0xff]
    %v3944 = vld [vmem:[%s19 + $0x18] sm:$0xff]
    %v3946 = vsel %vm463, %v3940, 0
    %3948 = vmatprep.subr.mxu0 0.0
    %3949 = vmatpush1.msra.mxu0 %v3941
    %3950 = vmatprep.subr.mxu0 0.0
    %3951 = vmatpush1.msra.mxu0 %v3942
    %3952 = vmatprep.subr.mxu0 0.0
    %3953 = vmatpush1.msra.mxu0 %v3943
    %3954 = vmatprep.subr.mxu0 0.0
    %3955 = vmatpush1.msra.mxu0 %v3944
    %3956 = vmatprep.subr.mxu0 0.0
    %3957 = vmatpush1.msra.mxu0 0.0
    %3958 = vmatprep.subr.mxu0 0.0
    %3959 = vmatpush1.msra.mxu0 0.0
    %3960 = vmatprep.subr.mxu0 0.0
    %3961 = vmatpush1.msra.mxu0 0.0
    %3962 = vmatprep.subr.mxu0 0.0
    %3963 = vmatpush1.msra.mxu0 0.0
    %3964 = vmatprep.subr.mxu0 0.0
    %3965 = vmatpush1.msra.mxu0 0.0
    %3966 = vmatprep.subr.mxu0 0.0
    %3967 = vmatpush1.msra.mxu0 0.0
    %3968 = vmatprep.subr.mxu0 0.0
    %3969 = vmatpush1.msra.mxu0 0.0
    %3970 = vmatprep.subr.mxu0 0.0
    %3971 = vmatpush1.msra.mxu0 0.0
    %3972 = vmatprep.subr.mxu0 0.0
    %3973 = vmatpush1.msra.mxu0 0.0
    %3974 = vmatprep.subr.mxu0 0.0
    %3975 = vmatpush1.msra.mxu0 0.0
    %3976 = vmatprep.subr.mxu0 0.0
    %3977 = vmatpush1.msra.mxu0 0.0
    %3978 = vmatprep.subr.mxu0 0.0
    %3979 = vmatpush1.msra.mxu0 0.0
    %3980 = vmatprep.subr.mxu0 0.0
    %3981 = vmatpush1.msra.mxu0 0.0
    %3982 = vmatprep.subr.mxu0 0.0
    %3983 = vmatpush1.msra.mxu0 0.0
    %3984 = vmatprep.subr.mxu0 0.0
    %3985 = vmatpush1.msra.mxu0 0.0
    %3986 = vmatprep.subr.mxu0 0.0
    %3987 = vmatpush1.msra.mxu0 0.0
    %3988 = vmatprep.subr.mxu0 0.0
    %3989 = vmatpush1.msra.mxu0 0.0
    %3990 = vmatprep.subr.mxu0 0.0
    %3991 = vmatpush1.msra.mxu0 0.0
    %3992 = vmatprep.subr.mxu0 0.0
    %3993 = vmatpush1.msra.mxu0 0.0
    %3994 = vmatprep.subr.mxu0 0.0
    %3995 = vmatpush1.msra.mxu0 0.0
    %3996 = vmatprep.subr.mxu0 0.0
    %3997 = vmatpush1.msra.mxu0 0.0
    %3998 = vmatprep.subr.mxu0 0.0
    %3999 = vmatpush1.msra.mxu0 0.0
    %4000 = vmatprep.subr.mxu0 0.0
    %4001 = vmatpush1.msra.mxu0 0.0
    %4002 = vmatprep.subr.mxu0 0.0
    %4003 = vmatpush1.msra.mxu0 0.0
    %4004 = vmatprep.subr.mxu0 0.0
    %4005 = vmatpush1.msra.mxu0 0.0
    %4006 = vmatprep.subr.mxu0 0.0
    %4007 = vmatpush1.msra.mxu0 0.0
    %4008 = vmatprep.subr.mxu0 0.0
    %4009 = vmatpush1.msra.mxu0 0.0
    %4010 = vmatprep.subr.mxu0 0.0
    %4011 = vmatpush1.msra.mxu0 0.0
    %4012 = vmatprep.mubr.f32.mxu0 0.0
    %4013 = vmatmul.mubr.f32.gmra.mrb[0].mxu0 %v3946
    %v4014 = vpop.f32.mrb[0].mxu0
    %v4015 = vadd.f32 0.0, %v4014
    %v4016 = vpop.f32.mrb[0].mxu0
    %4017 = vdwg.mxu0
    %v4018 = vrcp.pop %v3939
    %v4019 = vmul.f32 %v4015, %v4018
    %s4020 = scalar_lea.vmem %s20, 20
    %4021 = vst.msk [vmem:[%s4020] sm:$0xf] %vm885, %v4019
    %s4022 = scalar_lea.vmem %s21, 20
    %4023 = vst.msk [vmem:[%s4022] sm:$0xf] %vm887, %v3925
    %s4024 = scalar_lea.vmem %s22, 20
    %4025 = vst.msk [vmem:[%s4024] sm:$0xf] %vm889, %v3764
    %s4026 = scalar_lea.vmem %s0, 24
    %v4027 = vld [vmem:[%s4026] sm:$0xf]
    %4028 = vrot.lane.b32.xlu0 %v3519, 116
    %v4029 = vpop.permute.xlu0 %4028
    %v4031 = vsel %vm251, %v4027, %v4029
    %v4032 = vld [vmem:[%s4] sm:$0xff]
    %v4033 = vld [vmem:[%s4 + $0x8] sm:$0xff]
    %v4034 = vld [vmem:[%s4 + $0x10] sm:$0xf]
    %v4035 = vld [vmem:[%s5] sm:$0x1]
    %v4037 = vlaneseq
    %v4038 = vshrl.u32 %v4037, 7
    %v4039 = vsub.s32 0, %v4038
    %v4040 = vrot.slane %v4035, %v4039
    %v4043 = vsel %vm263, %v4031, 0
    %v4046 = vsel %vm267, %v4034, 0
    %4048 = vmatprep.subr.mxu0 0.0
    %4049 = vmatpush1.msra.mxu0 %v4032
    %4050 = vmatprep.subr.mxu0 0.0
    %4051 = vmatpush1.msra.mxu0 %v4033
    %4052 = vmatprep.subr.mxu0 0.0
    %4053 = vmatpush1.msra.mxu0 %v4046
    %4054 = vmatprep.subr.mxu0 0.0
    %4055 = vmatpush1.msra.mxu0 0.0
    %4056 = vmatprep.subr.mxu0 0.0
    %4057 = vmatpush1.msra.mxu0 0.0
    %4058 = vmatprep.subr.mxu0 0.0
    %4059 = vmatpush1.msra.mxu0 0.0
    %4060 = vmatprep.subr.mxu0 0.0
    %4061 = vmatpush1.msra.mxu0 0.0
    %4062 = vmatprep.subr.mxu0 0.0
    %4063 = vmatpush1.msra.mxu0 0.0
    %4064 = vmatprep.subr.mxu0 0.0
    %4065 = vmatpush1.msra.mxu0 0.0
    %4066 = vmatprep.subr.mxu0 0.0
    %4067 = vmatpush1.msra.mxu0 0.0
    %4068 = vmatprep.subr.mxu0 0.0
    %4069 = vmatpush1.msra.mxu0 0.0
    %4070 = vmatprep.subr.mxu0 0.0
    %4071 = vmatpush1.msra.mxu0 0.0
    %4072 = vmatprep.subr.mxu0 0.0
    %4073 = vmatpush1.msra.mxu0 0.0
    %4074 = vmatprep.subr.mxu0 0.0
    %4075 = vmatpush1.msra.mxu0 0.0
    %4076 = vmatprep.subr.mxu0 0.0
    %4077 = vmatpush1.msra.mxu0 0.0
    %4078 = vmatprep.subr.mxu0 0.0
    %4079 = vmatpush1.msra.mxu0 0.0
    %4080 = vmatprep.subr.mxu0 0.0
    %4081 = vmatpush1.msra.mxu0 0.0
    %4082 = vmatprep.subr.mxu0 0.0
    %4083 = vmatpush1.msra.mxu0 0.0
    %4084 = vmatprep.subr.mxu0 0.0
    %4085 = vmatpush1.msra.mxu0 0.0
    %4086 = vmatprep.subr.mxu0 0.0
    %4087 = vmatpush1.msra.mxu0 0.0
    %4088 = vmatprep.subr.mxu0 0.0
    %4089 = vmatpush1.msra.mxu0 0.0
    %4090 = vmatprep.subr.mxu0 0.0
    %4091 = vmatpush1.msra.mxu0 0.0
    %4092 = vmatprep.subr.mxu0 0.0
    %4093 = vmatpush1.msra.mxu0 0.0
    %4094 = vmatprep.subr.mxu0 0.0
    %4095 = vmatpush1.msra.mxu0 0.0
    %4096 = vmatprep.subr.mxu0 0.0
    %4097 = vmatpush1.msra.mxu0 0.0
    %4098 = vmatprep.subr.mxu0 0.0
    %4099 = vmatpush1.msra.mxu0 0.0
    %4100 = vmatprep.subr.mxu0 0.0
    %4101 = vmatpush1.msra.mxu0 0.0
    %4102 = vmatprep.subr.mxu0 0.0
    %4103 = vmatpush1.msra.mxu0 0.0
    %4104 = vmatprep.subr.mxu0 0.0
    %4105 = vmatpush1.msra.mxu0 0.0
    %4106 = vmatprep.subr.mxu0 0.0
    %4107 = vmatpush1.msra.mxu0 0.0
    %4108 = vmatprep.subr.mxu0 0.0
    %4109 = vmatpush1.msra.mxu0 0.0
    %4110 = vmatprep.subr.mxu0 0.0
    %4111 = vmatpush1.msra.mxu0 0.0
    %4112 = vmatprep.mubr.f32.mxu0 0.0
    %4113 = vmatmul.mubr.f32.gmra.mrb[0].mxu0 %v4043
    %v4114 = vpop.f32.mrb[0].mxu0
    %v4115 = vadd.f32 %v4040, %v4114
    %v4116 = vpop.f32.mrb[0].mxu0
    %4117 = vdwg.mxu0
    %4119 = vrot.lane.b32.xlu0 %v4115, 80
    %v4120 = vpop.permute.xlu0 %4119
    %v4122 = vadd.f32 %v4115, %v4120
    %v4123 = vxor.u32 %v4122, 2147483648
    %v4124 = vmul.f32 %v4123, 1.442695
    %v4125 = vpow.pop %v4124
    %v4126 = vadd.f32 %v4125, 1.0
    %v4127 = vrcp.pop %v4126
    %v4128 = vmul.f32 1.0, %v4127
    %4129 = vrot.lane.b32.xlu0 %v4115, 48
    %v4130 = vpop.permute.xlu0 %4129
    %v4132 = vmul.f32 %v4128, %v4130
    %4134 = vrot.lane.b32.xlu0 %v4132, 32
    %v4135 = vpop.permute.xlu0 %4134
    %v4137 = vadd.f32 %v4115, %v4135
    %v4138 = vtanh.pop %v4137
    %v4139 = vsub.f32 1.0, %v4128
    %4141 = vrot.lane.b32.xlu0 %v4138, 112
    %v4142 = vpop.permute.xlu0 %4141
    %v4144 = vmul.f32 %v4139, %v4142
    %v4145 = vmul.f32 %v4128, %v3519
    %v4146 = vadd.f32 %v4144, %v4145
    %v4147 = vld [vmem:[%s7] sm:$0xff]
    %v4148 = vld [vmem:[%s7 + $0x8] sm:$0xff]
    %4150 = vrot.lane.b32.xlu0 %v4146, 112
    %v4151 = vpop.permute.xlu0 %4150
    %v4152 = vsel %vm378, %v4151, 0
    %4154 = vmatprep.subr.mxu0 0.0
    %4155 = vmatpush1.msra.mxu0 %v4147
    %4156 = vmatprep.subr.mxu0 0.0
    %4157 = vmatpush1.msra.mxu0 %v4148
    %4158 = vmatprep.subr.mxu0 0.0
    %4159 = vmatpush1.msra.mxu0 0.0
    %4160 = vmatprep.subr.mxu0 0.0
    %4161 = vmatpush1.msra.mxu0 0.0
    %4162 = vmatprep.subr.mxu0 0.0
    %4163 = vmatpush1.msra.mxu0 0.0
    %4164 = vmatprep.subr.mxu0 0.0
    %4165 = vmatpush1.msra.mxu0 0.0
    %4166 = vmatprep.subr.mxu0 0.0
    %4167 = vmatpush1.msra.mxu0 0.0
    %4168 = vmatprep.subr.mxu0 0.0
    %4169 = vmatpush1.msra.mxu0 0.0
    %4170 = vmatprep.subr.mxu0 0.0
    %4171 = vmatpush1.msra.mxu0 0.0
    %4172 = vmatprep.subr.mxu0 0.0
    %4173 = vmatpush1.msra.mxu0 0.0
    %4174 = vmatprep.subr.mxu0 0.0
    %4175 = vmatpush1.msra.mxu0 0.0
    %4176 = vmatprep.subr.mxu0 0.0
    %4177 = vmatpush1.msra.mxu0 0.0
    %4178 = vmatprep.subr.mxu0 0.0
    %4179 = vmatpush1.msra.mxu0 0.0
    %4180 = vmatprep.subr.mxu0 0.0
    %4181 = vmatpush1.msra.mxu0 0.0
    %4182 = vmatprep.subr.mxu0 0.0
    %4183 = vmatpush1.msra.mxu0 0.0
    %4184 = vmatprep.subr.mxu0 0.0
    %4185 = vmatpush1.msra.mxu0 0.0
    %4186 = vmatprep.subr.mxu0 0.0
    %4187 = vmatpush1.msra.mxu0 0.0
    %4188 = vmatprep.subr.mxu0 0.0
    %4189 = vmatpush1.msra.mxu0 0.0
    %4190 = vmatprep.subr.mxu0 0.0
    %4191 = vmatpush1.msra.mxu0 0.0
    %4192 = vmatprep.subr.mxu0 0.0
    %4193 = vmatpush1.msra.mxu0 0.0
    %4194 = vmatprep.subr.mxu0 0.0
    %4195 = vmatpush1.msra.mxu0 0.0
    %4196 = vmatprep.subr.mxu0 0.0
    %4197 = vmatpush1.msra.mxu0 0.0
    %4198 = vmatprep.subr.mxu0 0.0
    %4199 = vmatpush1.msra.mxu0 0.0
    %4200 = vmatprep.subr.mxu0 0.0
    %4201 = vmatpush1.msra.mxu0 0.0
    %4202 = vmatprep.subr.mxu0 0.0
    %4203 = vmatpush1.msra.mxu0 0.0
    %4204 = vmatprep.subr.mxu0 0.0
    %4205 = vmatpush1.msra.mxu0 0.0
    %4206 = vmatprep.subr.mxu0 0.0
    %4207 = vmatpush1.msra.mxu0 0.0
    %4208 = vmatprep.subr.mxu0 0.0
    %4209 = vmatpush1.msra.mxu0 0.0
    %4210 = vmatprep.subr.mxu0 0.0
    %4211 = vmatpush1.msra.mxu0 0.0
    %4212 = vmatprep.subr.mxu0 0.0
    %4213 = vmatpush1.msra.mxu0 0.0
    %4214 = vmatprep.subr.mxu0 0.0
    %4215 = vmatpush1.msra.mxu0 0.0
    %4216 = vmatprep.subr.mxu0 0.0
    %4217 = vmatpush1.msra.mxu0 0.0
    %4218 = vmatprep.mubr.f32.mxu0 0.0
    %4219 = vmatmul.mubr.f32.gmra.mrb[0].mxu0 %v4152
    %v4220 = vpop.f32.mrb[0].mxu0
    %v4221 = vadd.f32 %v156, %v4220
    %v4222 = vpop.f32.mrb[0].mxu0
    %4223 = vdwg.mxu0
    %v4224 = vmax.f32 %v4221, 0.0
    %v4225 = vld [vmem:[%s9] sm:$0xff]
    %v4226 = vld [vmem:[%s9 + $0x8] sm:$0xff]
    %v4227 = vld [vmem:[%s9 + $0x10] sm:$0xff]
    %v4228 = vld [vmem:[%s9 + $0x18] sm:$0xff]
    %v4229 = vld [vmem:[%s10] sm:$0x1]
    %v4231 = vlaneseq
    %v4232 = vshrl.u32 %v4231, 7
    %v4233 = vsub.s32 0, %v4232
    %v4234 = vrot.slane %v4229, %v4233
    %v4237 = vsel %vm463, %v4224, 0
    %4239 = vmatprep.subr.mxu0 0.0
    %4240 = vmatpush1.msra.mxu0 %v4225
    %4241 = vmatprep.subr.mxu0 0.0
    %4242 = vmatpush1.msra.mxu0 %v4226
    %4243 = vmatprep.subr.mxu0 0.0
    %4244 = vmatpush1.msra.mxu0 %v4227
    %4245 = vmatprep.subr.mxu0 0.0
    %4246 = vmatpush1.msra.mxu0 %v4228
    %4247 = vmatprep.subr.mxu0 0.0
    %4248 = vmatpush1.msra.mxu0 0.0
    %4249 = vmatprep.subr.mxu0 0.0
    %4250 = vmatpush1.msra.mxu0 0.0
    %4251 = vmatprep.subr.mxu0 0.0
    %4252 = vmatpush1.msra.mxu0 0.0
    %4253 = vmatprep.subr.mxu0 0.0
    %4254 = vmatpush1.msra.mxu0 0.0
    %4255 = vmatprep.subr.mxu0 0.0
    %4256 = vmatpush1.msra.mxu0 0.0
    %4257 = vmatprep.subr.mxu0 0.0
    %4258 = vmatpush1.msra.mxu0 0.0
    %4259 = vmatprep.subr.mxu0 0.0
    %4260 = vmatpush1.msra.mxu0 0.0
    %4261 = vmatprep.subr.mxu0 0.0
    %4262 = vmatpush1.msra.mxu0 0.0
    %4263 = vmatprep.subr.mxu0 0.0
    %4264 = vmatpush1.msra.mxu0 0.0
    %4265 = vmatprep.subr.mxu0 0.0
    %4266 = vmatpush1.msra.mxu0 0.0
    %4267 = vmatprep.subr.mxu0 0.0
    %4268 = vmatpush1.msra.mxu0 0.0
    %4269 = vmatprep.subr.mxu0 0.0
    %4270 = vmatpush1.msra.mxu0 0.0
    %4271 = vmatprep.subr.mxu0 0.0
    %4272 = vmatpush1.msra.mxu0 0.0
    %4273 = vmatprep.subr.mxu0 0.0
    %4274 = vmatpush1.msra.mxu0 0.0
    %4275 = vmatprep.subr.mxu0 0.0
    %4276 = vmatpush1.msra.mxu0 0.0
    %4277 = vmatprep.subr.mxu0 0.0
    %4278 = vmatpush1.msra.mxu0 0.0
    %4279 = vmatprep.subr.mxu0 0.0
    %4280 = vmatpush1.msra.mxu0 0.0
    %4281 = vmatprep.subr.mxu0 0.0
    %4282 = vmatpush1.msra.mxu0 0.0
    %4283 = vmatprep.subr.mxu0 0.0
    %4284 = vmatpush1.msra.mxu0 0.0
    %4285 = vmatprep.subr.mxu0 0.0
    %4286 = vmatpush1.msra.mxu0 0.0
    %4287 = vmatprep.subr.mxu0 0.0
    %4288 = vmatpush1.msra.mxu0 0.0
    %4289 = vmatprep.subr.mxu0 0.0
    %4290 = vmatpush1.msra.mxu0 0.0
    %4291 = vmatprep.subr.mxu0 0.0
    %4292 = vmatpush1.msra.mxu0 0.0
    %4293 = vmatprep.subr.mxu0 0.0
    %4294 = vmatpush1.msra.mxu0 0.0
    %4295 = vmatprep.subr.mxu0 0.0
    %4296 = vmatpush1.msra.mxu0 0.0
    %4297 = vmatprep.subr.mxu0 0.0
    %4298 = vmatpush1.msra.mxu0 0.0
    %4299 = vmatprep.subr.mxu0 0.0
    %4300 = vmatpush1.msra.mxu0 0.0
    %4301 = vmatprep.subr.mxu0 0.0
    %4302 = vmatpush1.msra.mxu0 0.0
    %4303 = vmatprep.mubr.f32.mxu0 0.0
    %4304 = vmatmul.mubr.f32.gmra.mrb[0].mxu0 %v4237
    %v4305 = vpop.f32.mrb[0].mxu0
    %v4306 = vadd.f32 %v4234, %v4305
    %v4307 = vpop.f32.mrb[0].mxu0
    %4308 = vdwg.mxu0
    %v4309 = vmax.f32 %v4306, 0.0
    %v4310 = vld [vmem:[%s11] sm:$0xff]
    %v4311 = vld [vmem:[%s11 + $0x8] sm:$0xff]
    %v4312 = vld [vmem:[%s11 + $0x10] sm:$0xff]
    %v4313 = vld [vmem:[%s11 + $0x18] sm:$0xff]
    %v4314 = vld [vmem:[%s12] sm:$0x1]
    %v4316 = vlaneseq
    %v4317 = vshrl.u32 %v4316, 7
    %v4318 = vsub.s32 0, %v4317
    %v4319 = vrot.slane %v4314, %v4318
    %v4322 = vsel %vm463, %v4309, 0
    %4324 = vmatprep.subr.mxu0 0.0
    %4325 = vmatpush1.msra.mxu0 %v4310
    %4326 = vmatprep.subr.mxu0 0.0
    %4327 = vmatpush1.msra.mxu0 %v4311
    %4328 = vmatprep.subr.mxu0 0.0
    %4329 = vmatpush1.msra.mxu0 %v4312
    %4330 = vmatprep.subr.mxu0 0.0
    %4331 = vmatpush1.msra.mxu0 %v4313
    %4332 = vmatprep.subr.mxu0 0.0
    %4333 = vmatpush1.msra.mxu0 0.0
    %4334 = vmatprep.subr.mxu0 0.0
    %4335 = vmatpush1.msra.mxu0 0.0
    %4336 = vmatprep.subr.mxu0 0.0
    %4337 = vmatpush1.msra.mxu0 0.0
    %4338 = vmatprep.subr.mxu0 0.0
    %4339 = vmatpush1.msra.mxu0 0.0
    %4340 = vmatprep.subr.mxu0 0.0
    %4341 = vmatpush1.msra.mxu0 0.0
    %4342 = vmatprep.subr.mxu0 0.0
    %4343 = vmatpush1.msra.mxu0 0.0
    %4344 = vmatprep.subr.mxu0 0.0
    %4345 = vmatpush1.msra.mxu0 0.0
    %4346 = vmatprep.subr.mxu0 0.0
    %4347 = vmatpush1.msra.mxu0 0.0
    %4348 = vmatprep.subr.mxu0 0.0
    %4349 = vmatpush1.msra.mxu0 0.0
    %4350 = vmatprep.subr.mxu0 0.0
    %4351 = vmatpush1.msra.mxu0 0.0
    %4352 = vmatprep.subr.mxu0 0.0
    %4353 = vmatpush1.msra.mxu0 0.0
    %4354 = vmatprep.subr.mxu0 0.0
    %4355 = vmatpush1.msra.mxu0 0.0
    %4356 = vmatprep.subr.mxu0 0.0
    %4357 = vmatpush1.msra.mxu0 0.0
    %4358 = vmatprep.subr.mxu0 0.0
    %4359 = vmatpush1.msra.mxu0 0.0
    %4360 = vmatprep.subr.mxu0 0.0
    %4361 = vmatpush1.msra.mxu0 0.0
    %4362 = vmatprep.subr.mxu0 0.0
    %4363 = vmatpush1.msra.mxu0 0.0
    %4364 = vmatprep.subr.mxu0 0.0
    %4365 = vmatpush1.msra.mxu0 0.0
    %4366 = vmatprep.subr.mxu0 0.0
    %4367 = vmatpush1.msra.mxu0 0.0
    %4368 = vmatprep.subr.mxu0 0.0
    %4369 = vmatpush1.msra.mxu0 0.0
    %4370 = vmatprep.subr.mxu0 0.0
    %4371 = vmatpush1.msra.mxu0 0.0
    %4372 = vmatprep.subr.mxu0 0.0
    %4373 = vmatpush1.msra.mxu0 0.0
    %4374 = vmatprep.subr.mxu0 0.0
    %4375 = vmatpush1.msra.mxu0 0.0
    %4376 = vmatprep.subr.mxu0 0.0
    %4377 = vmatpush1.msra.mxu0 0.0
    %4378 = vmatprep.subr.mxu0 0.0
    %4379 = vmatpush1.msra.mxu0 0.0
    %4380 = vmatprep.subr.mxu0 0.0
    %4381 = vmatpush1.msra.mxu0 0.0
    %4382 = vmatprep.subr.mxu0 0.0
    %4383 = vmatpush1.msra.mxu0 0.0
    %4384 = vmatprep.subr.mxu0 0.0
    %4385 = vmatpush1.msra.mxu0 0.0
    %4386 = vmatprep.subr.mxu0 0.0
    %4387 = vmatpush1.msra.mxu0 0.0
    %4388 = vmatprep.mubr.f32.mxu0 0.0
    %4389 = vmatmul.mubr.f32.gmra.mrb[0].mxu0 %v4322
    %v4390 = vpop.f32.mrb[0].mxu0
    %v4391 = vadd.f32 %v4319, %v4390
    %v4392 = vpop.f32.mrb[0].mxu0
    %4393 = vdwg.mxu0
    %v4394 = vld [vmem:[%s14] sm:$0xff]
    %v4395 = vld [vmem:[%s14 + $0x8] sm:$0xff]
    %4396 = vmatprep.subr.mxu0 0.0
    %4397 = vmatpush1.msra.mxu0 %v4394
    %4398 = vmatprep.subr.mxu0 0.0
    %4399 = vmatpush1.msra.mxu0 %v4395
    %4400 = vmatprep.subr.mxu0 0.0
    %4401 = vmatpush1.msra.mxu0 0.0
    %4402 = vmatprep.subr.mxu0 0.0
    %4403 = vmatpush1.msra.mxu0 0.0
    %4404 = vmatprep.subr.mxu0 0.0
    %4405 = vmatpush1.msra.mxu0 0.0
    %4406 = vmatprep.subr.mxu0 0.0
    %4407 = vmatpush1.msra.mxu0 0.0
    %4408 = vmatprep.subr.mxu0 0.0
    %4409 = vmatpush1.msra.mxu0 0.0
    %4410 = vmatprep.subr.mxu0 0.0
    %4411 = vmatpush1.msra.mxu0 0.0
    %4412 = vmatprep.subr.mxu0 0.0
    %4413 = vmatpush1.msra.mxu0 0.0
    %4414 = vmatprep.subr.mxu0 0.0
    %4415 = vmatpush1.msra.mxu0 0.0
    %4416 = vmatprep.subr.mxu0 0.0
    %4417 = vmatpush1.msra.mxu0 0.0
    %4418 = vmatprep.subr.mxu0 0.0
    %4419 = vmatpush1.msra.mxu0 0.0
    %4420 = vmatprep.subr.mxu0 0.0
    %4421 = vmatpush1.msra.mxu0 0.0
    %4422 = vmatprep.subr.mxu0 0.0
    %4423 = vmatpush1.msra.mxu0 0.0
    %4424 = vmatprep.subr.mxu0 0.0
    %4425 = vmatpush1.msra.mxu0 0.0
    %4426 = vmatprep.subr.mxu0 0.0
    %4427 = vmatpush1.msra.mxu0 0.0
    %4428 = vmatprep.subr.mxu0 0.0
    %4429 = vmatpush1.msra.mxu0 0.0
    %4430 = vmatprep.subr.mxu0 0.0
    %4431 = vmatpush1.msra.mxu0 0.0
    %4432 = vmatprep.subr.mxu0 0.0
    %4433 = vmatpush1.msra.mxu0 0.0
    %4434 = vmatprep.subr.mxu0 0.0
    %4435 = vmatpush1.msra.mxu0 0.0
    %4436 = vmatprep.subr.mxu0 0.0
    %4437 = vmatpush1.msra.mxu0 0.0
    %4438 = vmatprep.subr.mxu0 0.0
    %4439 = vmatpush1.msra.mxu0 0.0
    %4440 = vmatprep.subr.mxu0 0.0
    %4441 = vmatpush1.msra.mxu0 0.0
    %4442 = vmatprep.subr.mxu0 0.0
    %4443 = vmatpush1.msra.mxu0 0.0
    %4444 = vmatprep.subr.mxu0 0.0
    %4445 = vmatpush1.msra.mxu0 0.0
    %4446 = vmatprep.subr.mxu0 0.0
    %4447 = vmatpush1.msra.mxu0 0.0
    %4448 = vmatprep.subr.mxu0 0.0
    %4449 = vmatpush1.msra.mxu0 0.0
    %4450 = vmatprep.subr.mxu0 0.0
    %4451 = vmatpush1.msra.mxu0 0.0
    %4452 = vmatprep.subr.mxu0 0.0
    %4453 = vmatpush1.msra.mxu0 0.0
    %4454 = vmatprep.subr.mxu0 0.0
    %4455 = vmatpush1.msra.mxu0 0.0
    %4456 = vmatprep.subr.mxu0 0.0
    %4457 = vmatpush1.msra.mxu0 0.0
    %4458 = vmatprep.subr.mxu0 0.0
    %4459 = vmatpush1.msra.mxu0 0.0
    %4460 = vmatprep.mubr.f32.mxu0 0.0
    %4461 = vmatmul.mubr.f32.gmra.mrb[0].mxu0 %v4152
    %v4462 = vpop.f32.mrb[0].mxu0
    %v4463 = vadd.f32 %v237, %v4462
    %v4464 = vpop.f32.mrb[0].mxu0
    %4465 = vdwg.mxu0
    %v4466 = vmax.f32 %v4463, 0.0
    %v4467 = vld [vmem:[%s16] sm:$0xff]
    %v4468 = vld [vmem:[#allocation2] sm:$0x1]
    %v4470 = vlaneseq
    %v4471 = vshrl.u32 %v4470, 7
    %v4472 = vsub.s32 0, %v4471
    %v4473 = vrot.slane %v4468, %v4472
    %v4476 = vsel %vm703, %v4466, 0
    %4478 = vmatprep.subr.mxu0 0.0
    %4479 = vmatpush1.msra.mxu0 %v4467
    %4480 = vmatprep.subr.mxu0 0.0
    %4481 = vmatpush1.msra.mxu0 0.0
    %4482 = vmatprep.subr.mxu0 0.0
    %4483 = vmatpush1.msra.mxu0 0.0
    %4484 = vmatprep.subr.mxu0 0.0
    %4485 = vmatpush1.msra.mxu0 0.0
    %4486 = vmatprep.subr.mxu0 0.0
    %4487 = vmatpush1.msra.mxu0 0.0
    %4488 = vmatprep.subr.mxu0 0.0
    %4489 = vmatpush1.msra.mxu0 0.0
    %4490 = vmatprep.subr.mxu0 0.0
    %4491 = vmatpush1.msra.mxu0 0.0
    %4492 = vmatprep.subr.mxu0 0.0
    %4493 = vmatpush1.msra.mxu0 0.0
    %4494 = vmatprep.subr.mxu0 0.0
    %4495 = vmatpush1.msra.mxu0 0.0
    %4496 = vmatprep.subr.mxu0 0.0
    %4497 = vmatpush1.msra.mxu0 0.0
    %4498 = vmatprep.subr.mxu0 0.0
    %4499 = vmatpush1.msra.mxu0 0.0
    %4500 = vmatprep.subr.mxu0 0.0
    %4501 = vmatpush1.msra.mxu0 0.0
    %4502 = vmatprep.subr.mxu0 0.0
    %4503 = vmatpush1.msra.mxu0 0.0
    %4504 = vmatprep.subr.mxu0 0.0
    %4505 = vmatpush1.msra.mxu0 0.0
    %4506 = vmatprep.subr.mxu0 0.0
    %4507 = vmatpush1.msra.mxu0 0.0
    %4508 = vmatprep.subr.mxu0 0.0
    %4509 = vmatpush1.msra.mxu0 0.0
    %4510 = vmatprep.subr.mxu0 0.0
    %4511 = vmatpush1.msra.mxu0 0.0
    %4512 = vmatprep.subr.mxu0 0.0
    %4513 = vmatpush1.msra.mxu0 0.0
    %4514 = vmatprep.subr.mxu0 0.0
    %4515 = vmatpush1.msra.mxu0 0.0
    %4516 = vmatprep.subr.mxu0 0.0
    %4517 = vmatpush1.msra.mxu0 0.0
    %4518 = vmatprep.subr.mxu0 0.0
    %4519 = vmatpush1.msra.mxu0 0.0
    %4520 = vmatprep.subr.mxu0 0.0
    %4521 = vmatpush1.msra.mxu0 0.0
    %4522 = vmatprep.subr.mxu0 0.0
    %4523 = vmatpush1.msra.mxu0 0.0
    %4524 = vmatprep.subr.mxu0 0.0
    %4525 = vmatpush1.msra.mxu0 0.0
    %4526 = vmatprep.subr.mxu0 0.0
    %4527 = vmatpush1.msra.mxu0 0.0
    %4528 = vmatprep.subr.mxu0 0.0
    %4529 = vmatpush1.msra.mxu0 0.0
    %4530 = vmatprep.subr.mxu0 0.0
    %4531 = vmatpush1.msra.mxu0 0.0
    %4532 = vmatprep.subr.mxu0 0.0
    %4533 = vmatpush1.msra.mxu0 0.0
    %4534 = vmatprep.subr.mxu0 0.0
    %4535 = vmatpush1.msra.mxu0 0.0
    %4536 = vmatprep.subr.mxu0 0.0
    %4537 = vmatpush1.msra.mxu0 0.0
    %4538 = vmatprep.subr.mxu0 0.0
    %4539 = vmatpush1.msra.mxu0 0.0
    %4540 = vmatprep.subr.mxu0 0.0
    %4541 = vmatpush1.msra.mxu0 0.0
    %4542 = vmatprep.mubr.f32.mxu0 0.0
    %4543 = vmatmul.mubr.f32.gmra.mrb[0].mxu0 %v4476
    %v4544 = vpop.f32.mrb[0].mxu0
    %v4545 = vadd.f32 %v4473, %v4544
    %v4546 = vpop.f32.mrb[0].mxu0
    %4547 = vdwg.mxu0
    %v4548 = vmul.f32 %v4545, %v777
    %v4549 = vadd.f32 %v4548, 0.5
    %v4550 = vmax.f32 %v4549, 0.0
    %v4551 = vmin.f32 %v4550, 1.0
    %v4552 = vadd.f32 %v4551, %v243
    %4554 = vset.pattern.permute.xlu0 0
    %4555 = vperm.xlu0 %4554, %v4552
    %v4556 = vpop.permute.xlu0 %4555
    %v4558 = vsub.f32 %v4556, %v792
    %v4559 = vmul.f32 %v4558, %v4558
    %v4560 = vsub.f32 0.0, %v4559
    %v4561 = vmul.f32 %v4560, %v797
    %v4562 = vmul.f32 %v4561, 1.442695
    %v4563 = vpow.pop %v4562
    %v4564 = vsel %vm801, %v4563, 0.0
    %4565 = vadd.xlane.f32.xlu0 %v4564
    %v4566 = vpop.xlane.xlu0 %4565
    %v4567 = vmul.f32 %v4391, %v4563
    %v4568 = vld [vmem:[%s19] sm:$0xff]
    %v4569 = vld [vmem:[%s19 + $0x8] sm:$0xff]
    %v4570 = vld [vmem:[%s19 + $0x10] sm:$0xff]
    %v4571 = vld [vmem:[%s19 + $0x18] sm:$0xff]
    %v4573 = vsel %vm463, %v4567, 0
    %4575 = vmatprep.subr.mxu0 0.0
    %4576 = vmatpush1.msra.mxu0 %v4568
    %4577 = vmatprep.subr.mxu0 0.0
    %4578 = vmatpush1.msra.mxu0 %v4569
    %4579 = vmatprep.subr.mxu0 0.0
    %4580 = vmatpush1.msra.mxu0 %v4570
    %4581 = vmatprep.subr.mxu0 0.0
    %4582 = vmatpush1.msra.mxu0 %v4571
    %4583 = vmatprep.subr.mxu0 0.0
    %4584 = vmatpush1.msra.mxu0 0.0
    %4585 = vmatprep.subr.mxu0 0.0
    %4586 = vmatpush1.msra.mxu0 0.0
    %4587 = vmatprep.subr.mxu0 0.0
    %4588 = vmatpush1.msra.mxu0 0.0
    %4589 = vmatprep.subr.mxu0 0.0
    %4590 = vmatpush1.msra.mxu0 0.0
    %4591 = vmatprep.subr.mxu0 0.0
    %4592 = vmatpush1.msra.mxu0 0.0
    %4593 = vmatprep.subr.mxu0 0.0
    %4594 = vmatpush1.msra.mxu0 0.0
    %4595 = vmatprep.subr.mxu0 0.0
    %4596 = vmatpush1.msra.mxu0 0.0
    %4597 = vmatprep.subr.mxu0 0.0
    %4598 = vmatpush1.msra.mxu0 0.0
    %4599 = vmatprep.subr.mxu0 0.0
    %4600 = vmatpush1.msra.mxu0 0.0
    %4601 = vmatprep.subr.mxu0 0.0
    %4602 = vmatpush1.msra.mxu0 0.0
    %4603 = vmatprep.subr.mxu0 0.0
    %4604 = vmatpush1.msra.mxu0 0.0
    %4605 = vmatprep.subr.mxu0 0.0
    %4606 = vmatpush1.msra.mxu0 0.0
    %4607 = vmatprep.subr.mxu0 0.0
    %4608 = vmatpush1.msra.mxu0 0.0
    %4609 = vmatprep.subr.mxu0 0.0
    %4610 = vmatpush1.msra.mxu0 0.0
    %4611 = vmatprep.subr.mxu0 0.0
    %4612 = vmatpush1.msra.mxu0 0.0
    %4613 = vmatprep.subr.mxu0 0.0
    %4614 = vmatpush1.msra.mxu0 0.0
    %4615 = vmatprep.subr.mxu0 0.0
    %4616 = vmatpush1.msra.mxu0 0.0
    %4617 = vmatprep.subr.mxu0 0.0
    %4618 = vmatpush1.msra.mxu0 0.0
    %4619 = vmatprep.subr.mxu0 0.0
    %4620 = vmatpush1.msra.mxu0 0.0
    %4621 = vmatprep.subr.mxu0 0.0
    %4622 = vmatpush1.msra.mxu0 0.0
    %4623 = vmatprep.subr.mxu0 0.0
    %4624 = vmatpush1.msra.mxu0 0.0
    %4625 = vmatprep.subr.mxu0 0.0
    %4626 = vmatpush1.msra.mxu0 0.0
    %4627 = vmatprep.subr.mxu0 0.0
    %4628 = vmatpush1.msra.mxu0 0.0
    %4629 = vmatprep.subr.mxu0 0.0
    %4630 = vmatpush1.msra.mxu0 0.0
    %4631 = vmatprep.subr.mxu0 0.0
    %4632 = vmatpush1.msra.mxu0 0.0
    %4633 = vmatprep.subr.mxu0 0.0
    %4634 = vmatpush1.msra.mxu0 0.0
    %4635 = vmatprep.subr.mxu0 0.0
    %4636 = vmatpush1.msra.mxu0 0.0
    %4637 = vmatprep.subr.mxu0 0.0
    %4638 = vmatpush1.msra.mxu0 0.0
    %4639 = vmatprep.mubr.f32.mxu0 0.0
    %4640 = vmatmul.mubr.f32.gmra.mrb[0].mxu0 %v4573
    %v4641 = vpop.f32.mrb[0].mxu0
    %v4642 = vadd.f32 0.0, %v4641
    %v4643 = vpop.f32.mrb[0].mxu0
    %4644 = vdwg.mxu0
    %v4645 = vrcp.pop %v4566
    %v4646 = vmul.f32 %v4642, %v4645
    %s4647 = scalar_lea.vmem %s20, 24
    %4648 = vst.msk [vmem:[%s4647] sm:$0xf] %vm885, %v4646
    %s4649 = scalar_lea.vmem %s21, 24
    %4650 = vst.msk [vmem:[%s4649] sm:$0xf] %vm887, %v4552
    %s4651 = scalar_lea.vmem %s22, 24
    %4652 = vst.msk [vmem:[%s4651] sm:$0xf] %vm889, %v4391
    %s4653 = scalar_lea.vmem %s0, 28
    %v4654 = vld [vmem:[%s4653] sm:$0xf]
    %4655 = vrot.lane.b32.xlu0 %v4146, 116
    %v4656 = vpop.permute.xlu0 %4655
    %v4658 = vsel %vm251, %v4654, %v4656
    %v4659 = vld [vmem:[%s4] sm:$0xff]
    %v4660 = vld [vmem:[%s4 + $0x8] sm:$0xff]
    %v4661 = vld [vmem:[%s4 + $0x10] sm:$0xf]
    %v4662 = vld [vmem:[%s5] sm:$0x1]
    %v4664 = vlaneseq
    %v4665 = vshrl.u32 %v4664, 7
    %v4666 = vsub.s32 0, %v4665
    %v4667 = vrot.slane %v4662, %v4666
    %v4670 = vsel %vm263, %v4658, 0
    %v4673 = vsel %vm267, %v4661, 0
    %4675 = vmatprep.subr.mxu0 0.0
    %4676 = vmatpush1.msra.mxu0 %v4659
    %4677 = vmatprep.subr.mxu0 0.0
    %4678 = vmatpush1.msra.mxu0 %v4660
    %4679 = vmatprep.subr.mxu0 0.0
    %4680 = vmatpush1.msra.mxu0 %v4673
    %4681 = vmatprep.subr.mxu0 0.0
    %4682 = vmatpush1.msra.mxu0 0.0
    %4683 = vmatprep.subr.mxu0 0.0
    %4684 = vmatpush1.msra.mxu0 0.0
    %4685 = vmatprep.subr.mxu0 0.0
    %4686 = vmatpush1.msra.mxu0 0.0
    %4687 = vmatprep.subr.mxu0 0.0
    %4688 = vmatpush1.msra.mxu0 0.0
    %4689 = vmatprep.subr.mxu0 0.0
    %4690 = vmatpush1.msra.mxu0 0.0
    %4691 = vmatprep.subr.mxu0 0.0
    %4692 = vmatpush1.msra.mxu0 0.0
    %4693 = vmatprep.subr.mxu0 0.0
    %4694 = vmatpush1.msra.mxu0 0.0
    %4695 = vmatprep.subr.mxu0 0.0
    %4696 = vmatpush1.msra.mxu0 0.0
    %4697 = vmatprep.subr.mxu0 0.0
    %4698 = vmatpush1.msra.mxu0 0.0
    %4699 = vmatprep.subr.mxu0 0.0
    %4700 = vmatpush1.msra.mxu0 0.0
    %4701 = vmatprep.subr.mxu0 0.0
    %4702 = vmatpush1.msra.mxu0 0.0
    %4703 = vmatprep.subr.mxu0 0.0
    %4704 = vmatpush1.msra.mxu0 0.0
    %4705 = vmatprep.subr.mxu0 0.0
    %4706 = vmatpush1.msra.mxu0 0.0
    %4707 = vmatprep.subr.mxu0 0.0
    %4708 = vmatpush1.msra.mxu0 0.0
    %4709 = vmatprep.subr.mxu0 0.0
    %4710 = vmatpush1.msra.mxu0 0.0
    %4711 = vmatprep.subr.mxu0 0.0
    %4712 = vmatpush1.msra.mxu0 0.0
    %4713 = vmatprep.subr.mxu0 0.0
    %4714 = vmatpush1.msra.mxu0 0.0
    %4715 = vmatprep.subr.mxu0 0.0
    %4716 = vmatpush1.msra.mxu0 0.0
    %4717 = vmatprep.subr.mxu0 0.0
    %4718 = vmatpush1.msra.mxu0 0.0
    %4719 = vmatprep.subr.mxu0 0.0
    %4720 = vmatpush1.msra.mxu0 0.0
    %4721 = vmatprep.subr.mxu0 0.0
    %4722 = vmatpush1.msra.mxu0 0.0
    %4723 = vmatprep.subr.mxu0 0.0
    %4724 = vmatpush1.msra.mxu0 0.0
    %4725 = vmatprep.subr.mxu0 0.0
    %4726 = vmatpush1.msra.mxu0 0.0
    %4727 = vmatprep.subr.mxu0 0.0
    %4728 = vmatpush1.msra.mxu0 0.0
    %4729 = vmatprep.subr.mxu0 0.0
    %4730 = vmatpush1.msra.mxu0 0.0
    %4731 = vmatprep.subr.mxu0 0.0
    %4732 = vmatpush1.msra.mxu0 0.0
    %4733 = vmatprep.subr.mxu0 0.0
    %4734 = vmatpush1.msra.mxu0 0.0
    %4735 = vmatprep.subr.mxu0 0.0
    %4736 = vmatpush1.msra.mxu0 0.0
    %4737 = vmatprep.subr.mxu0 0.0
    %4738 = vmatpush1.msra.mxu0 0.0
    %4739 = vmatprep.mubr.f32.mxu0 0.0
    %4740 = vmatmul.mubr.f32.gmra.mrb[0].mxu0 %v4670
    %v4741 = vpop.f32.mrb[0].mxu0
    %v4742 = vadd.f32 %v4667, %v4741
    %v4743 = vpop.f32.mrb[0].mxu0
    %4744 = vdwg.mxu0
    %4746 = vrot.lane.b32.xlu0 %v4742, 80
    %v4747 = vpop.permute.xlu0 %4746
    %v4749 = vadd.f32 %v4742, %v4747
    %v4750 = vxor.u32 %v4749, 2147483648
    %v4751 = vmul.f32 %v4750, 1.442695
    %v4752 = vpow.pop %v4751
    %v4753 = vadd.f32 %v4752, 1.0
    %v4754 = vrcp.pop %v4753
    %v4755 = vmul.f32 1.0, %v4754
    %4756 = vrot.lane.b32.xlu0 %v4742, 48
    %v4757 = vpop.permute.xlu0 %4756
    %v4759 = vmul.f32 %v4755, %v4757
    %4761 = vrot.lane.b32.xlu0 %v4759, 32
    %v4762 = vpop.permute.xlu0 %4761
    %v4764 = vadd.f32 %v4742, %v4762
    %v4765 = vtanh.pop %v4764
    %v4766 = vsub.f32 1.0, %v4755
    %4768 = vrot.lane.b32.xlu0 %v4765, 112
    %v4769 = vpop.permute.xlu0 %4768
    %v4771 = vmul.f32 %v4766, %v4769
    %v4772 = vmul.f32 %v4755, %v4146
    %v4773 = vadd.f32 %v4771, %v4772
    %v4774 = vld [vmem:[%s7] sm:$0xff]
    %v4775 = vld [vmem:[%s7 + $0x8] sm:$0xff]
    %4777 = vrot.lane.b32.xlu0 %v4773, 112
    %v4778 = vpop.permute.xlu0 %4777
    %v4779 = vsel %vm378, %v4778, 0
    %4781 = vmatprep.subr.mxu0 0.0
    %4782 = vmatpush1.msra.mxu0 %v4774
    %4783 = vmatprep.subr.mxu0 0.0
    %4784 = vmatpush1.msra.mxu0 %v4775
    %4785 = vmatprep.subr.mxu0 0.0
    %4786 = vmatpush1.msra.mxu0 0.0
    %4787 = vmatprep.subr.mxu0 0.0
    %4788 = vmatpush1.msra.mxu0 0.0
    %4789 = vmatprep.subr.mxu0 0.0
    %4790 = vmatpush1.msra.mxu0 0.0
    %4791 = vmatprep.subr.mxu0 0.0
    %4792 = vmatpush1.msra.mxu0 0.0
    %4793 = vmatprep.subr.mxu0 0.0
    %4794 = vmatpush1.msra.mxu0 0.0
    %4795 = vmatprep.subr.mxu0 0.0
    %4796 = vmatpush1.msra.mxu0 0.0
    %4797 = vmatprep.subr.mxu0 0.0
    %4798 = vmatpush1.msra.mxu0 0.0
    %4799 = vmatprep.subr.mxu0 0.0
    %4800 = vmatpush1.msra.mxu0 0.0
    %4801 = vmatprep.subr.mxu0 0.0
    %4802 = vmatpush1.msra.mxu0 0.0
    %4803 = vmatprep.subr.mxu0 0.0
    %4804 = vmatpush1.msra.mxu0 0.0
    %4805 = vmatprep.subr.mxu0 0.0
    %4806 = vmatpush1.msra.mxu0 0.0
    %4807 = vmatprep.subr.mxu0 0.0
    %4808 = vmatpush1.msra.mxu0 0.0
    %4809 = vmatprep.subr.mxu0 0.0
    %4810 = vmatpush1.msra.mxu0 0.0
    %4811 = vmatprep.subr.mxu0 0.0
    %4812 = vmatpush1.msra.mxu0 0.0
    %4813 = vmatprep.subr.mxu0 0.0
    %4814 = vmatpush1.msra.mxu0 0.0
    %4815 = vmatprep.subr.mxu0 0.0
    %4816 = vmatpush1.msra.mxu0 0.0
    %4817 = vmatprep.subr.mxu0 0.0
    %4818 = vmatpush1.msra.mxu0 0.0
    %4819 = vmatprep.subr.mxu0 0.0
    %4820 = vmatpush1.msra.mxu0 0.0
    %4821 = vmatprep.subr.mxu0 0.0
    %4822 = vmatpush1.msra.mxu0 0.0
    %4823 = vmatprep.subr.mxu0 0.0
    %4824 = vmatpush1.msra.mxu0 0.0
    %4825 = vmatprep.subr.mxu0 0.0
    %4826 = vmatpush1.msra.mxu0 0.0
    %4827 = vmatprep.subr.mxu0 0.0
    %4828 = vmatpush1.msra.mxu0 0.0
    %4829 = vmatprep.subr.mxu0 0.0
    %4830 = vmatpush1.msra.mxu0 0.0
    %4831 = vmatprep.subr.mxu0 0.0
    %4832 = vmatpush1.msra.mxu0 0.0
    %4833 = vmatprep.subr.mxu0 0.0
    %4834 = vmatpush1.msra.mxu0 0.0
    %4835 = vmatprep.subr.mxu0 0.0
    %4836 = vmatpush1.msra.mxu0 0.0
    %4837 = vmatprep.subr.mxu0 0.0
    %4838 = vmatpush1.msra.mxu0 0.0
    %4839 = vmatprep.subr.mxu0 0.0
    %4840 = vmatpush1.msra.mxu0 0.0
    %4841 = vmatprep.subr.mxu0 0.0
    %4842 = vmatpush1.msra.mxu0 0.0
    %4843 = vmatprep.subr.mxu0 0.0
    %4844 = vmatpush1.msra.mxu0 0.0
    %4845 = vmatprep.mubr.f32.mxu0 0.0
    %4846 = vmatmul.mubr.f32.gmra.mrb[0].mxu0 %v4779
    %v4847 = vpop.f32.mrb[0].mxu0
    %v4848 = vadd.f32 %v156, %v4847
    %v4849 = vpop.f32.mrb[0].mxu0
    %4850 = vdwg.mxu0
    %v4851 = vmax.f32 %v4848, 0.0
    %v4852 = vld [vmem:[%s9] sm:$0xff]
    %v4853 = vld [vmem:[%s9 + $0x8] sm:$0xff]
    %v4854 = vld [vmem:[%s9 + $0x10] sm:$0xff]
    %v4855 = vld [vmem:[%s9 + $0x18] sm:$0xff]
    %v4856 = vld [vmem:[%s10] sm:$0x1]
    %v4858 = vlaneseq
    %v4859 = vshrl.u32 %v4858, 7
    %v4860 = vsub.s32 0, %v4859
    %v4861 = vrot.slane %v4856, %v4860
    %v4864 = vsel %vm463, %v4851, 0
    %4866 = vmatprep.subr.mxu0 0.0
    %4867 = vmatpush1.msra.mxu0 %v4852
    %4868 = vmatprep.subr.mxu0 0.0
    %4869 = vmatpush1.msra.mxu0 %v4853
    %4870 = vmatprep.subr.mxu0 0.0
    %4871 = vmatpush1.msra.mxu0 %v4854
    %4872 = vmatprep.subr.mxu0 0.0
    %4873 = vmatpush1.msra.mxu0 %v4855
    %4874 = vmatprep.subr.mxu0 0.0
    %4875 = vmatpush1.msra.mxu0 0.0
    %4876 = vmatprep.subr.mxu0 0.0
    %4877 = vmatpush1.msra.mxu0 0.0
    %4878 = vmatprep.subr.mxu0 0.0
    %4879 = vmatpush1.msra.mxu0 0.0
    %4880 = vmatprep.subr.mxu0 0.0
    %4881 = vmatpush1.msra.mxu0 0.0
    %4882 = vmatprep.subr.mxu0 0.0
    %4883 = vmatpush1.msra.mxu0 0.0
    %4884 = vmatprep.subr.mxu0 0.0
    %4885 = vmatpush1.msra.mxu0 0.0
    %4886 = vmatprep.subr.mxu0 0.0
    %4887 = vmatpush1.msra.mxu0 0.0
    %4888 = vmatprep.subr.mxu0 0.0
    %4889 = vmatpush1.msra.mxu0 0.0
    %4890 = vmatprep.subr.mxu0 0.0
    %4891 = vmatpush1.msra.mxu0 0.0
    %4892 = vmatprep.subr.mxu0 0.0
    %4893 = vmatpush1.msra.mxu0 0.0
    %4894 = vmatprep.subr.mxu0 0.0
    %4895 = vmatpush1.msra.mxu0 0.0
    %4896 = vmatprep.subr.mxu0 0.0
    %4897 = vmatpush1.msra.mxu0 0.0
    %4898 = vmatprep.subr.mxu0 0.0
    %4899 = vmatpush1.msra.mxu0 0.0
    %4900 = vmatprep.subr.mxu0 0.0
    %4901 = vmatpush1.msra.mxu0 0.0
    %4902 = vmatprep.subr.mxu0 0.0
    %4903 = vmatpush1.msra.mxu0 0.0
    %4904 = vmatprep.subr.mxu0 0.0
    %4905 = vmatpush1.msra.mxu0 0.0
    %4906 = vmatprep.subr.mxu0 0.0
    %4907 = vmatpush1.msra.mxu0 0.0
    %4908 = vmatprep.subr.mxu0 0.0
    %4909 = vmatpush1.msra.mxu0 0.0
    %4910 = vmatprep.subr.mxu0 0.0
    %4911 = vmatpush1.msra.mxu0 0.0
    %4912 = vmatprep.subr.mxu0 0.0
    %4913 = vmatpush1.msra.mxu0 0.0
    %4914 = vmatprep.subr.mxu0 0.0
    %4915 = vmatpush1.msra.mxu0 0.0
    %4916 = vmatprep.subr.mxu0 0.0
    %4917 = vmatpush1.msra.mxu0 0.0
    %4918 = vmatprep.subr.mxu0 0.0
    %4919 = vmatpush1.msra.mxu0 0.0
    %4920 = vmatprep.subr.mxu0 0.0
    %4921 = vmatpush1.msra.mxu0 0.0
    %4922 = vmatprep.subr.mxu0 0.0
    %4923 = vmatpush1.msra.mxu0 0.0
    %4924 = vmatprep.subr.mxu0 0.0
    %4925 = vmatpush1.msra.mxu0 0.0
    %4926 = vmatprep.subr.mxu0 0.0
    %4927 = vmatpush1.msra.mxu0 0.0
    %4928 = vmatprep.subr.mxu0 0.0
    %4929 = vmatpush1.msra.mxu0 0.0
    %4930 = vmatprep.mubr.f32.mxu0 0.0
    %4931 = vmatmul.mubr.f32.gmra.mrb[0].mxu0 %v4864
    %v4932 = vpop.f32.mrb[0].mxu0
    %v4933 = vadd.f32 %v4861, %v4932
    %v4934 = vpop.f32.mrb[0].mxu0
    %4935 = vdwg.mxu0
    %v4936 = vmax.f32 %v4933, 0.0
    %v4937 = vld [vmem:[%s11] sm:$0xff]
    %v4938 = vld [vmem:[%s11 + $0x8] sm:$0xff]
    %v4939 = vld [vmem:[%s11 + $0x10] sm:$0xff]
    %v4940 = vld [vmem:[%s11 + $0x18] sm:$0xff]
    %v4941 = vld [vmem:[%s12] sm:$0x1]
    %v4943 = vlaneseq
    %v4944 = vshrl.u32 %v4943, 7
    %v4945 = vsub.s32 0, %v4944
    %v4946 = vrot.slane %v4941, %v4945
    %v4949 = vsel %vm463, %v4936, 0
    %4951 = vmatprep.subr.mxu0 0.0
    %4952 = vmatpush1.msra.mxu0 %v4937
    %4953 = vmatprep.subr.mxu0 0.0
    %4954 = vmatpush1.msra.mxu0 %v4938
    %4955 = vmatprep.subr.mxu0 0.0
    %4956 = vmatpush1.msra.mxu0 %v4939
    %4957 = vmatprep.subr.mxu0 0.0
    %4958 = vmatpush1.msra.mxu0 %v4940
    %4959 = vmatprep.subr.mxu0 0.0
    %4960 = vmatpush1.msra.mxu0 0.0
    %4961 = vmatprep.subr.mxu0 0.0
    %4962 = vmatpush1.msra.mxu0 0.0
    %4963 = vmatprep.subr.mxu0 0.0
    %4964 = vmatpush1.msra.mxu0 0.0
    %4965 = vmatprep.subr.mxu0 0.0
    %4966 = vmatpush1.msra.mxu0 0.0
    %4967 = vmatprep.subr.mxu0 0.0
    %4968 = vmatpush1.msra.mxu0 0.0
    %4969 = vmatprep.subr.mxu0 0.0
    %4970 = vmatpush1.msra.mxu0 0.0
    %4971 = vmatprep.subr.mxu0 0.0
    %4972 = vmatpush1.msra.mxu0 0.0
    %4973 = vmatprep.subr.mxu0 0.0
    %4974 = vmatpush1.msra.mxu0 0.0
    %4975 = vmatprep.subr.mxu0 0.0
    %4976 = vmatpush1.msra.mxu0 0.0
    %4977 = vmatprep.subr.mxu0 0.0
    %4978 = vmatpush1.msra.mxu0 0.0
    %4979 = vmatprep.subr.mxu0 0.0
    %4980 = vmatpush1.msra.mxu0 0.0
    %4981 = vmatprep.subr.mxu0 0.0
    %4982 = vmatpush1.msra.mxu0 0.0
    %4983 = vmatprep.subr.mxu0 0.0
    %4984 = vmatpush1.msra.mxu0 0.0
    %4985 = vmatprep.subr.mxu0 0.0
    %4986 = vmatpush1.msra.mxu0 0.0
    %4987 = vmatprep.subr.mxu0 0.0
    %4988 = vmatpush1.msra.mxu0 0.0
    %4989 = vmatprep.subr.mxu0 0.0
    %4990 = vmatpush1.msra.mxu0 0.0
    %4991 = vmatprep.subr.mxu0 0.0
    %4992 = vmatpush1.msra.mxu0 0.0
    %4993 = vmatprep.subr.mxu0 0.0
    %4994 = vmatpush1.msra.mxu0 0.0
    %4995 = vmatprep.subr.mxu0 0.0
    %4996 = vmatpush1.msra.mxu0 0.0
    %4997 = vmatprep.subr.mxu0 0.0
    %4998 = vmatpush1.msra.mxu0 0.0
    %4999 = vmatprep.subr.mxu0 0.0
    %5000 = vmatpush1.msra.mxu0 0.0
    %5001 = vmatprep.subr.mxu0 0.0
    %5002 = vmatpush1.msra.mxu0 0.0
    %5003 = vmatprep.subr.mxu0 0.0
    %5004 = vmatpush1.msra.mxu0 0.0
    %5005 = vmatprep.subr.mxu0 0.0
    %5006 = vmatpush1.msra.mxu0 0.0
    %5007 = vmatprep.subr.mxu0 0.0
    %5008 = vmatpush1.msra.mxu0 0.0
    %5009 = vmatprep.subr.mxu0 0.0
    %5010 = vmatpush1.msra.mxu0 0.0
    %5011 = vmatprep.subr.mxu0 0.0
    %5012 = vmatpush1.msra.mxu0 0.0
    %5013 = vmatprep.subr.mxu0 0.0
    %5014 = vmatpush1.msra.mxu0 0.0
    %5015 = vmatprep.mubr.f32.mxu0 0.0
    %5016 = vmatmul.mubr.f32.gmra.mrb[0].mxu0 %v4949
    %v5017 = vpop.f32.mrb[0].mxu0
    %v5018 = vadd.f32 %v4946, %v5017
    %v5019 = vpop.f32.mrb[0].mxu0
    %5020 = vdwg.mxu0
    %v5021 = vld [vmem:[%s14] sm:$0xff]
    %v5022 = vld [vmem:[%s14 + $0x8] sm:$0xff]
    %5023 = vmatprep.subr.mxu0 0.0
    %5024 = vmatpush1.msra.mxu0 %v5021
    %5025 = vmatprep.subr.mxu0 0.0
    %5026 = vmatpush1.msra.mxu0 %v5022
    %5027 = vmatprep.subr.mxu0 0.0
    %5028 = vmatpush1.msra.mxu0 0.0
    %5029 = vmatprep.subr.mxu0 0.0
    %5030 = vmatpush1.msra.mxu0 0.0
    %5031 = vmatprep.subr.mxu0 0.0
    %5032 = vmatpush1.msra.mxu0 0.0
    %5033 = vmatprep.subr.mxu0 0.0
    %5034 = vmatpush1.msra.mxu0 0.0
    %5035 = vmatprep.subr.mxu0 0.0
    %5036 = vmatpush1.msra.mxu0 0.0
    %5037 = vmatprep.subr.mxu0 0.0
    %5038 = vmatpush1.msra.mxu0 0.0
    %5039 = vmatprep.subr.mxu0 0.0
    %5040 = vmatpush1.msra.mxu0 0.0
    %5041 = vmatprep.subr.mxu0 0.0
    %5042 = vmatpush1.msra.mxu0 0.0
    %5043 = vmatprep.subr.mxu0 0.0
    %5044 = vmatpush1.msra.mxu0 0.0
    %5045 = vmatprep.subr.mxu0 0.0
    %5046 = vmatpush1.msra.mxu0 0.0
    %5047 = vmatprep.subr.mxu0 0.0
    %5048 = vmatpush1.msra.mxu0 0.0
    %5049 = vmatprep.subr.mxu0 0.0
    %5050 = vmatpush1.msra.mxu0 0.0
    %5051 = vmatprep.subr.mxu0 0.0
    %5052 = vmatpush1.msra.mxu0 0.0
    %5053 = vmatprep.subr.mxu0 0.0
    %5054 = vmatpush1.msra.mxu0 0.0
    %5055 = vmatprep.subr.mxu0 0.0
    %5056 = vmatpush1.msra.mxu0 0.0
    %5057 = vmatprep.subr.mxu0 0.0
    %5058 = vmatpush1.msra.mxu0 0.0
    %5059 = vmatprep.subr.mxu0 0.0
    %5060 = vmatpush1.msra.mxu0 0.0
    %5061 = vmatprep.subr.mxu0 0.0
    %5062 = vmatpush1.msra.mxu0 0.0
    %5063 = vmatprep.subr.mxu0 0.0
    %5064 = vmatpush1.msra.mxu0 0.0
    %5065 = vmatprep.subr.mxu0 0.0
    %5066 = vmatpush1.msra.mxu0 0.0
    %5067 = vmatprep.subr.mxu0 0.0
    %5068 = vmatpush1.msra.mxu0 0.0
    %5069 = vmatprep.subr.mxu0 0.0
    %5070 = vmatpush1.msra.mxu0 0.0
    %5071 = vmatprep.subr.mxu0 0.0
    %5072 = vmatpush1.msra.mxu0 0.0
    %5073 = vmatprep.subr.mxu0 0.0
    %5074 = vmatpush1.msra.mxu0 0.0
    %5075 = vmatprep.subr.mxu0 0.0
    %5076 = vmatpush1.msra.mxu0 0.0
    %5077 = vmatprep.subr.mxu0 0.0
    %5078 = vmatpush1.msra.mxu0 0.0
    %5079 = vmatprep.subr.mxu0 0.0
    %5080 = vmatpush1.msra.mxu0 0.0
    %5081 = vmatprep.subr.mxu0 0.0
    %5082 = vmatpush1.msra.mxu0 0.0
    %5083 = vmatprep.subr.mxu0 0.0
    %5084 = vmatpush1.msra.mxu0 0.0
    %5085 = vmatprep.subr.mxu0 0.0
    %5086 = vmatpush1.msra.mxu0 0.0
    %5087 = vmatprep.mubr.f32.mxu0 0.0
    %5088 = vmatmul.mubr.f32.gmra.mrb[0].mxu0 %v4779
    %v5089 = vpop.f32.mrb[0].mxu0
    %v5090 = vadd.f32 %v237, %v5089
    %v5091 = vpop.f32.mrb[0].mxu0
    %5092 = vdwg.mxu0
    %v5093 = vmax.f32 %v5090, 0.0
    %v5094 = vld [vmem:[%s16] sm:$0xff]
    %v5095 = vld [vmem:[#allocation2] sm:$0x1]
    %v5097 = vlaneseq
    %v5098 = vshrl.u32 %v5097, 7
    %v5099 = vsub.s32 0, %v5098
    %v5100 = vrot.slane %v5095, %v5099
    %v5103 = vsel %vm703, %v5093, 0
    %5105 = vmatprep.subr.mxu0 0.0
    %5106 = vmatpush1.msra.mxu0 %v5094
    %5107 = vmatprep.subr.mxu0 0.0
    %5108 = vmatpush1.msra.mxu0 0.0
    %5109 = vmatprep.subr.mxu0 0.0
    %5110 = vmatpush1.msra.mxu0 0.0
    %5111 = vmatprep.subr.mxu0 0.0
    %5112 = vmatpush1.msra.mxu0 0.0
    %5113 = vmatprep.subr.mxu0 0.0
    %5114 = vmatpush1.msra.mxu0 0.0
    %5115 = vmatprep.subr.mxu0 0.0
    %5116 = vmatpush1.msra.mxu0 0.0
    %5117 = vmatprep.subr.mxu0 0.0
    %5118 = vmatpush1.msra.mxu0 0.0
    %5119 = vmatprep.subr.mxu0 0.0
    %5120 = vmatpush1.msra.mxu0 0.0
    %5121 = vmatprep.subr.mxu0 0.0
    %5122 = vmatpush1.msra.mxu0 0.0
    %5123 = vmatprep.subr.mxu0 0.0
    %5124 = vmatpush1.msra.mxu0 0.0
    %5125 = vmatprep.subr.mxu0 0.0
    %5126 = vmatpush1.msra.mxu0 0.0
    %5127 = vmatprep.subr.mxu0 0.0
    %5128 = vmatpush1.msra.mxu0 0.0
    %5129 = vmatprep.subr.mxu0 0.0
    %5130 = vmatpush1.msra.mxu0 0.0
    %5131 = vmatprep.subr.mxu0 0.0
    %5132 = vmatpush1.msra.mxu0 0.0
    %5133 = vmatprep.subr.mxu0 0.0
    %5134 = vmatpush1.msra.mxu0 0.0
    %5135 = vmatprep.subr.mxu0 0.0
    %5136 = vmatpush1.msra.mxu0 0.0
    %5137 = vmatprep.subr.mxu0 0.0
    %5138 = vmatpush1.msra.mxu0 0.0
    %5139 = vmatprep.subr.mxu0 0.0
    %5140 = vmatpush1.msra.mxu0 0.0
    %5141 = vmatprep.subr.mxu0 0.0
    %5142 = vmatpush1.msra.mxu0 0.0
    %5143 = vmatprep.subr.mxu0 0.0
    %5144 = vmatpush1.msra.mxu0 0.0
    %5145 = vmatprep.subr.mxu0 0.0
    %5146 = vmatpush1.msra.mxu0 0.0
    %5147 = vmatprep.subr.mxu0 0.0
    %5148 = vmatpush1.msra.mxu0 0.0
    %5149 = vmatprep.subr.mxu0 0.0
    %5150 = vmatpush1.msra.mxu0 0.0
    %5151 = vmatprep.subr.mxu0 0.0
    %5152 = vmatpush1.msra.mxu0 0.0
    %5153 = vmatprep.subr.mxu0 0.0
    %5154 = vmatpush1.msra.mxu0 0.0
    %5155 = vmatprep.subr.mxu0 0.0
    %5156 = vmatpush1.msra.mxu0 0.0
    %5157 = vmatprep.subr.mxu0 0.0
    %5158 = vmatpush1.msra.mxu0 0.0
    %5159 = vmatprep.subr.mxu0 0.0
    %5160 = vmatpush1.msra.mxu0 0.0
    %5161 = vmatprep.subr.mxu0 0.0
    %5162 = vmatpush1.msra.mxu0 0.0
    %5163 = vmatprep.subr.mxu0 0.0
    %5164 = vmatpush1.msra.mxu0 0.0
    %5165 = vmatprep.subr.mxu0 0.0
    %5166 = vmatpush1.msra.mxu0 0.0
    %5167 = vmatprep.subr.mxu0 0.0
    %5168 = vmatpush1.msra.mxu0 0.0
    %5169 = vmatprep.mubr.f32.mxu0 0.0
    %5170 = vmatmul.mubr.f32.gmra.mrb[0].mxu0 %v5103
    %v5171 = vpop.f32.mrb[0].mxu0
    %v5172 = vadd.f32 %v5100, %v5171
    %v5173 = vpop.f32.mrb[0].mxu0
    %5174 = vdwg.mxu0
    %v5175 = vmul.f32 %v5172, %v777
    %v5176 = vadd.f32 %v5175, 0.5
    %v5177 = vmax.f32 %v5176, 0.0
    %v5178 = vmin.f32 %v5177, 1.0
    %v5179 = vadd.f32 %v5178, %v243
    %5181 = vset.pattern.permute.xlu0 0
    %5182 = vperm.xlu0 %5181, %v5179
    %v5183 = vpop.permute.xlu0 %5182
    %v5185 = vsub.f32 %v5183, %v792
    %v5186 = vmul.f32 %v5185, %v5185
    %v5187 = vsub.f32 0.0, %v5186
    %v5188 = vmul.f32 %v5187, %v797
    %v5189 = vmul.f32 %v5188, 1.442695
    %v5190 = vpow.pop %v5189
    %v5191 = vsel %vm801, %v5190, 0.0
    %5192 = vadd.xlane.f32.xlu0 %v5191
    %v5193 = vpop.xlane.xlu0 %5192
    %v5194 = vmul.f32 %v5018, %v5190
    %v5195 = vld [vmem:[%s19] sm:$0xff]
    %v5196 = vld [vmem:[%s19 + $0x8] sm:$0xff]
    %v5197 = vld [vmem:[%s19 + $0x10] sm:$0xff]
    %v5198 = vld [vmem:[%s19 + $0x18] sm:$0xff]
    %v5200 = vsel %vm463, %v5194, 0
    %5202 = vmatprep.subr.mxu0 0.0
    %5203 = vmatpush1.msra.mxu0 %v5195
    %5204 = vmatprep.subr.mxu0 0.0
    %5205 = vmatpush1.msra.mxu0 %v5196
    %5206 = vmatprep.subr.mxu0 0.0
    %5207 = vmatpush1.msra.mxu0 %v5197
    %5208 = vmatprep.subr.mxu0 0.0
    %5209 = vmatpush1.msra.mxu0 %v5198
    %5210 = vmatprep.subr.mxu0 0.0
    %5211 = vmatpush1.msra.mxu0 0.0
    %5212 = vmatprep.subr.mxu0 0.0
    %5213 = vmatpush1.msra.mxu0 0.0
    %5214 = vmatprep.subr.mxu0 0.0
    %5215 = vmatpush1.msra.mxu0 0.0
    %5216 = vmatprep.subr.mxu0 0.0
    %5217 = vmatpush1.msra.mxu0 0.0
    %5218 = vmatprep.subr.mxu0 0.0
    %5219 = vmatpush1.msra.mxu0 0.0
    %5220 = vmatprep.subr.mxu0 0.0
    %5221 = vmatpush1.msra.mxu0 0.0
    %5222 = vmatprep.subr.mxu0 0.0
    %5223 = vmatpush1.msra.mxu0 0.0
    %5224 = vmatprep.subr.mxu0 0.0
    %5225 = vmatpush1.msra.mxu0 0.0
    %5226 = vmatprep.subr.mxu0 0.0
    %5227 = vmatpush1.msra.mxu0 0.0
    %5228 = vmatprep.subr.mxu0 0.0
    %5229 = vmatpush1.msra.mxu0 0.0
    %5230 = vmatprep.subr.mxu0 0.0
    %5231 = vmatpush1.msra.mxu0 0.0
    %5232 = vmatprep.subr.mxu0 0.0
    %5233 = vmatpush1.msra.mxu0 0.0
    %5234 = vmatprep.subr.mxu0 0.0
    %5235 = vmatpush1.msra.mxu0 0.0
    %5236 = vmatprep.subr.mxu0 0.0
    %5237 = vmatpush1.msra.mxu0 0.0
    %5238 = vmatprep.subr.mxu0 0.0
    %5239 = vmatpush1.msra.mxu0 0.0
    %5240 = vmatprep.subr.mxu0 0.0
    %5241 = vmatpush1.msra.mxu0 0.0
    %5242 = vmatprep.subr.mxu0 0.0
    %5243 = vmatpush1.msra.mxu0 0.0
    %5244 = vmatprep.subr.mxu0 0.0
    %5245 = vmatpush1.msra.mxu0 0.0
    %5246 = vmatprep.subr.mxu0 0.0
    %5247 = vmatpush1.msra.mxu0 0.0
    %5248 = vmatprep.subr.mxu0 0.0
    %5249 = vmatpush1.msra.mxu0 0.0
    %5250 = vmatprep.subr.mxu0 0.0
    %5251 = vmatpush1.msra.mxu0 0.0
    %5252 = vmatprep.subr.mxu0 0.0
    %5253 = vmatpush1.msra.mxu0 0.0
    %5254 = vmatprep.subr.mxu0 0.0
    %5255 = vmatpush1.msra.mxu0 0.0
    %5256 = vmatprep.subr.mxu0 0.0
    %5257 = vmatpush1.msra.mxu0 0.0
    %5258 = vmatprep.subr.mxu0 0.0
    %5259 = vmatpush1.msra.mxu0 0.0
    %5260 = vmatprep.subr.mxu0 0.0
    %5261 = vmatpush1.msra.mxu0 0.0
    %5262 = vmatprep.subr.mxu0 0.0
    %5263 = vmatpush1.msra.mxu0 0.0
    %5264 = vmatprep.subr.mxu0 0.0
    %5265 = vmatpush1.msra.mxu0 0.0
    %5266 = vmatprep.mubr.f32.mxu0 0.0
    %5267 = vmatmul.mubr.f32.gmra.mrb[0].mxu0 %v5200
    %v5268 = vpop.f32.mrb[0].mxu0
    %v5269 = vadd.f32 0.0, %v5268
    %v5270 = vpop.f32.mrb[0].mxu0
    %5271 = vdwg.mxu0
    %v5272 = vrcp.pop %v5193
    %v5273 = vmul.f32 %v5269, %v5272
    %s5274 = scalar_lea.vmem %s20, 28
    %5275 = vst.msk [vmem:[%s5274] sm:$0xf] %vm885, %v5273
    %s5276 = scalar_lea.vmem %s21, 28
    %5277 = vst.msk [vmem:[%s5276] sm:$0xf] %vm887, %v5179
    %s5278 = scalar_lea.vmem %s22, 28
    %5279 = vst.msk [vmem:[%s5278] sm:$0xf] %vm889, %v5018
    %vm5281 = vcmask 125952
    %5282 = vst.msk [vmem:[#allocation3] sm:$0xf] %vm5281, %v4778
    // Predicated region
    $region82: #{feedback_controller_forward.1} parent=1 // pred_check
      _
    $region83: #{feedback_controller_forward.1} parent=1 // pred_check_branch
      %5284 = sbr.rel (0) target = $region85
    $region84: #{feedback_controller_forward.1} parent=1 // pred_region
      _
    $region85: #{feedback_controller_forward.1} parent=1 // pred_fallthru
      _
    // Predicated region
    $region86: #{feedback_controller_forward.1} parent=1 // pred_check
      _
    $region87: #{feedback_controller_forward.1} parent=1 // pred_check_branch
      %5286 = sbr.rel (0) target = $region89
    $region88: #{feedback_controller_forward.1} parent=1 // pred_region
      _
    $region89: #{feedback_controller_forward.1} parent=1 // pred_fallthru
      _
    // Predicated region
    $region90: #{feedback_controller_forward.1} parent=1 // pred_check
      _
    $region91: #{feedback_controller_forward.1} parent=1 // pred_check_branch
      %5288 = sbr.rel (0) target = $region93
    $region92: #{feedback_controller_forward.1} parent=1 // pred_region
      _
    $region93: #{feedback_controller_forward.1} parent=1 // pred_fallthru
      _
    // Predicated region
    $region94: #{feedback_controller_forward.1} parent=1 // pred_check
      _
    $region95: #{feedback_controller_forward.1} parent=1 // pred_check_branch
      %5290 = sbr.rel (0) target = $region97
    $region96: #{feedback_controller_forward.1} parent=1 // pred_region
      %s5292 = ssub.s32 64, 64
      %5293 = vsyncadd [#allocation4], %s5292
      %s5295 = sshll.u32 [#allocation3], 4
      %s5296 = int_to_ptr.vmem [resolvable:$true] %s5295
      %5298 = dma.vmem_to_hbm [thread:$0]  %s5296, 64, %s23, [#allocation4]
    $region97: #{feedback_controller_forward.1} parent=1 // pred_fallthru
      _
    // Predicated region
    $region98: #{feedback_controller_forward.1} parent=1 // pred_check
      _
    $region99: #{feedback_controller_forward.1} parent=1 // pred_check_branch
      %5300 = sbr.rel (0) target = $region101
    $region100: #{feedback_controller_forward.1} parent=1 // pred_region
      _
    $region101: #{feedback_controller_forward.1} parent=1 // pred_fallthru
      _
    // Predicated region
    $region102: #{feedback_controller_forward.1} parent=1 // pred_check
      _
    $region103: #{feedback_controller_forward.1} parent=1 // pred_check_branch
      %5302 = sbr.rel (0) target = $region105
    $region104: #{feedback_controller_forward.1} parent=1 // pred_region
      _
    $region105: #{feedback_controller_forward.1} parent=1 // pred_fallthru
      _
    // Predicated region
    $region106: #{feedback_controller_forward.1} parent=1 // pred_check
      _
    $region107: #{feedback_controller_forward.1} parent=1 // pred_check_branch
      %5304 = sbr.rel (0) target = $region109
    $region108: #{feedback_controller_forward.1} parent=1 // pred_region
      _
    $region109: #{feedback_controller_forward.1} parent=1 // pred_fallthru
      _
    // Predicated region
    $region110: #{feedback_controller_forward.1} parent=1 // pred_check
      _
    $region111: #{feedback_controller_forward.1} parent=1 // pred_check_branch
      %5306 = sbr.rel (0) target = $region113
    $region112: #{feedback_controller_forward.1} parent=1 // pred_region
      %5307 = dma.done [#allocation4], 64
    $region113: #{feedback_controller_forward.1} parent=1 // pred_fallthru
      _
    %5308 = vsyncpa [#allocation4], 1

</llo_original>
